<compile_context>
chip_gen: v7x
topology: tpu7x:2x2x1
jax: 0.10.0
libtpu: 0.0.40
codegen_flags: <defaults>
</compile_context>

<pallas_src>
import jax
import jax.numpy as jnp
from jax.experimental import pallas as pl
from jax.experimental.pallas import tpu as pltpu

K = 3       # conv kernel size
PAD = 1     # conv padding
CIN_P = 8   # layer-1 input channels zero-padded to 8


# ------------------------------- fused kernel -------------------------------

def _fused_forward_kernel(x_ref, w1_ref, w2_ref, w3_ref, vec_ref,
                          w1r_ref, b1_ref, wf2_ref, wf3_ref, b3_ref,
                          o_ref, y_ref, a2_ref, a3_ref):
    f32 = jnp.float32
    bf16 = jnp.bfloat16

    BB = o_ref.shape[0]            # samples per grid step
    H = y_ref.shape[1]             # hidden channels (64)
    S1 = x_ref.shape[0] // BB      # per-sample stride of layer-1 input (= L+2)
    L1 = S1 - 2                    # 168
    P1 = L1 // 2                   # 84  (pooled length after layer 1)
    S2 = P1 + 2                    # 86
    P2 = P1 // 2                   # 42
    S3 = P2 + 2                    # 44
    P3 = P2 // 2                   # 21

    def conv_bn_relu(src_ref, m, w_ref, shift):
        # y[r] = relu(sum_k src[r+k] @ W_k + shift) over the whole flat block:
        # 3 contiguous-tap accumulating matmuls, bf16 operands, f32 accumulation.
        acc = jnp.dot(src_ref[pl.ds(0, m), :].astype(bf16), w_ref[0],
                      preferred_element_type=f32)
        acc = acc + jnp.dot(src_ref[pl.ds(1, m), :].astype(bf16), w_ref[1],
                            preferred_element_type=f32)
        acc = acc + jnp.dot(src_ref[pl.ds(2, m), :].astype(bf16), w_ref[2],
                            preferred_element_type=f32)
        return jnp.maximum(acc + shift, 0.0)

    def pool_restride(src_stride, pooled_len, dst_ref, dst_stride):
        # MaxPool1d(2) fused with the copy into the next layer's padded buffer:
        # per sample, max the two conv-output parities, write [0; data; 0].
        @pl.loop(0, BB)
        def _(b):
            src = pl.multiple_of(b * src_stride, 2)
            dst = pl.multiple_of(b * dst_stride, 2)
            ev = y_ref[pl.ds(src, pooled_len, stride=2), :]
            od = y_ref[pl.ds(src + 1, pooled_len, stride=2), :]
            dst_ref[pl.ds(dst, 1), :] = jnp.zeros((1, H), f32)
            dst_ref[pl.ds(dst + 1, pooled_len), :] = jnp.maximum(ev, od)
            dst_ref[pl.ds(dst + 1 + pooled_len, 1), :] = jnp.zeros((1, H), f32)

    # ---------------- conv stack (all VMEM resident) ----------------
    m1 = BB * S1 - 2
    y_ref[pl.ds(0, m1), :] = conv_bn_relu(x_ref, m1, w1_ref, vec_ref[0:1, :])
    pool_restride(S1, P1, a2_ref, S2)

    m2 = BB * S2 - 2
    y_ref[pl.ds(0, m2), :] = conv_bn_relu(a2_ref, m2, w2_ref, vec_ref[1:2, :])
    pool_restride(S2, P2, a3_ref, S3)

    m3 = BB * S3 - 2
    y_ref[pl.ds(0, m3), :] = conv_bn_relu(a3_ref, m3, w3_ref, vec_ref[2:3, :])

    # ---------------- MLP head ----------------
    # fc1: the last MaxPool is fused into the contraction.  For each pooled
    # position l, a stride-S3 read gathers all BB samples' conv-3 outputs, the
    # two parities are maxed, and an independent (BB,H)x(H,2H) dot accumulates
    # into one f32 (BB, 2H) tile (no M=1 serial chain).
    # TODO(synk): nn.Dropout has no deterministic Pallas equivalent; identity (eval).
    h1 = jnp.zeros((BB, 2 * H), f32)
    for l in range(P3):
        ev = y_ref[pl.ds(2 * l, BB, stride=S3), :]
        od = y_ref[pl.ds(2 * l + 1, BB, stride=S3), :]
        p = jnp.maximum(ev, od).astype(bf16)
        h1 = h1 + jnp.dot(p, w1r_ref[pl.ds(l * H, H), :],
                          preferred_element_type=f32)
    h1 = jnp.maximum(h1 + b1_ref[...], 0.0)

    # fc2 + ReLU
    h2 = jnp.dot(h1.astype(bf16), wf2_ref[...], preferred_element_type=f32)
    h2 = jnp.maximum(h2 + vec_ref[3:4, :], 0.0)

    # LayerNorm(H), eps=1e-5 (f32)
    mean = jnp.mean(h2, axis=-1, keepdims=True)
    cent = h2 - mean
    var = jnp.mean(cent * cent, axis=-1, keepdims=True)
    h2n = cent * jax.lax.rsqrt(var + 1e-5)
    h2n = h2n * vec_ref[4:5, :] + vec_ref[5:6, :]

    # fc3
    out = jnp.dot(h2n.astype(bf16), wf3_ref[...], preferred_element_type=f32)
    o_ref[...] = (out + b3_ref[...]).astype(o_ref.dtype)


# ------------------------------- host wrapper -------------------------------

def forward(x, params, *, block_batch=64):
    """x: (B, L, Cin) float32 — same convention as the PyTorch module input.
    Returns (B, target_len, 1)."""
    w1, w2, w3, vec, w1r, b1, wf2, wf3, b3 = params
    B, L, Cin = x.shape
    H = w2.shape[2]
    T = wf3.shape[1]
    cin_p = w1.shape[1]
    assert L % 8 == 0 and Cin <= cin_p
    assert (L // 8) * H == w1r.shape[0], "seq_len must match fc1's flatten size"

    # Samples per grid step: multiple of 8, and keep >=2 grid steps when
    # possible so v7x's two TensorCores both get work.
    bb = (min(block_batch, max(B // 2, 8)) // 8) * 8
    bb = max(bb, 8)
    b_pad = pl.cdiv(B, bb) * bb
    S1 = L + 2

    # Host glue: batch pad, conv zero-padding, channel pad to 8, flat layout
    # (per-sample stride S1 along the sublane axis).
    xp = jnp.pad(x, ((0, b_pad - B), (PAD, PAD), (0, cin_p - Cin)))
    xp = xp.reshape(b_pad * S1, cin_p)

    grid_spec = pltpu.PrefetchScalarGridSpec(
        num_scalar_prefetch=0,
        grid=(b_pad // bb,),
        in_specs=[
            pl.BlockSpec((bb * S1, cin_p), lambda i: (i, 0)),
            pl.BlockSpec(w1.shape, lambda i: (0, 0, 0)),
            pl.BlockSpec(w2.shape, lambda i: (0, 0, 0)),
            pl.BlockSpec(w3.shape, lambda i: (0, 0, 0)),
            pl.BlockSpec(vec.shape, lambda i: (0, 0)),
            pl.BlockSpec(w1r.shape, lambda i: (0, 0)),
            pl.BlockSpec(b1.shape, lambda i: (0, 0)),
            pl.BlockSpec(wf2.shape, lambda i: (0, 0)),
            pl.BlockSpec(wf3.shape, lambda i: (0, 0)),
            pl.BlockSpec(b3.shape, lambda i: (0, 0)),
        ],
        out_specs=pl.BlockSpec((bb, T), lambda i: (i, 0)),
        scratch_shapes=[
            pltpu.VMEM((bb * S1, H), jnp.float32),            # conv outputs (reused)
            pltpu.VMEM((bb * (L // 2 + 2), H), jnp.float32),  # padded layer-2 input
            pltpu.VMEM((bb * (L // 4 + 2), H), jnp.float32),  # padded layer-3 input
        ],
    )
    out = pl.pallas_call(
        _fused_forward_kernel,
        out_shape=jax.ShapeDtypeStruct((b_pad, T), jnp.float32),
        grid_spec=grid_spec,
        compiler_params=pltpu.CompilerParams(
            dimension_semantics=("parallel",),
            vmem_limit_bytes=48 * 1024 * 1024),
    )(xp, w1, w2, w3, vec, w1r, b1, wf2, wf3, b3)
    return out[:B].reshape(B, T, 1)                           # unsqueeze(-1)


# ------------------------------- parameters -------------------------------

def _kaiming(key, shape, fan_out):
    return (2.0 / fan_out) ** 0.5 * jax.random.normal(key, shape, dtype=jnp.float32)


def init_params(key, *, input_channels=1, hidden=64, num_layers=3,
                seq_len=168, target=48):
    assert num_layers == 3
    eps = 1e-5
    keys = jax.random.split(key, num_layers + 3)

    conv_w, conv_shift = [], []
    for i in range(num_layers):
        cin = input_channels if i == 0 else hidden
        w = _kaiming(keys[i], (K, cin, hidden), hidden * K)      # fan_out = Cout*K
        b = jnp.zeros((hidden,), jnp.float32)
        # BatchNorm1d eval stats (fresh init: mean=0, var=1, gamma=1, beta=0)
        # folded into conv weight/shift.  Use trained running stats when porting.
        gamma = jnp.ones((hidden,), jnp.float32)
        beta = jnp.zeros((hidden,), jnp.float32)
        rmean = jnp.zeros((hidden,), jnp.float32)
        rvar = jnp.ones((hidden,), jnp.float32)
        s = gamma / jnp.sqrt(rvar + eps)
        wf = w * s                                                # (K, cin, H)
        shift = b * s + beta - rmean * s
        if i == 0 and cin < CIN_P:
            wf = jnp.pad(wf, ((0, 0), (0, CIN_P - cin), (0, 0)))
        conv_w.append(wf.astype(jnp.bfloat16))                    # (K, CinP, H)
        conv_shift.append(shift.astype(jnp.float32))

    L3 = seq_len // (2 ** num_layers)
    # fc1 weight kept position-major: row l*H + c multiplies pooled feature (c, l).
    # (Porting torch weights: w1r[l*H + c, :] = fc1.weight[:, c * L3 + l].)
    w1r = _kaiming(keys[num_layers], (L3, hidden, 2 * hidden), 2 * hidden)
    w1r = w1r.reshape(L3 * hidden, 2 * hidden).astype(jnp.bfloat16)
    b1 = jnp.zeros((1, 2 * hidden), jnp.float32)
    wfc2 = _kaiming(keys[num_layers + 1], (2 * hidden, hidden), hidden).astype(jnp.bfloat16)
    b2 = jnp.zeros((hidden,), jnp.float32)
    wfc3 = _kaiming(keys[num_layers + 2], (hidden, target), target).astype(jnp.bfloat16)
    b3 = jnp.zeros((1, target), jnp.float32)
    ln_g = jnp.ones((hidden,), jnp.float32)
    ln_b = jnp.zeros((hidden,), jnp.float32)

    # Pack the six (H,) vectors into one f32 operand:
    # rows 0-2: folded conv shifts; 3: fc2 bias; 4: LN gamma; 5: LN beta.
    vec = jnp.stack(conv_shift + [b2, ln_g, ln_b], axis=0)

    return (conv_w[0], conv_w[1], conv_w[2], vec, w1r, b1, wfc2, wfc3, b3)


# ---------------------------------- main ----------------------------------

if __name__ == "__main__":
    B, L, Cin = 16, 168, 1          # L=168 matches the module's flatten-size calc
    hidden, target = 64, 48

    key = jax.random.PRNGKey(0)
    k_x, k_p = jax.random.split(key)
    x = jax.random.normal(k_x, (B, L, Cin), dtype=jnp.float32)
    params = init_params(k_p, input_channels=Cin, hidden=hidden,
                         seq_len=L, target=target)

    fwd = jax.jit(lambda xx: forward(xx, params))   # -> bb=8, grid=(2,)
    y = fwd(x)
    jax.block_until_ready(y)
    assert y.shape == (B, target, 1) and y.dtype == jnp.float32
    assert bool(jnp.all(jnp.isfinite(y)))
    print("KERNEL_OK")
</pallas_src>

<mosaic_0001>
module attributes {stable_mosaic.version = 11 : i64} {
  func.func @_fused_forward_kernel(%arg0: i32, %arg1: memref<1360x8xf32, #tpu.memory_space<vmem>>, %arg2: memref<3x8x64xbf16, #tpu.memory_space<vmem>>, %arg3: memref<3x64x64xbf16, #tpu.memory_space<vmem>>, %arg4: memref<3x64x64xbf16, #tpu.memory_space<vmem>>, %arg5: memref<6x64xf32, #tpu.memory_space<vmem>>, %arg6: memref<1344x128xbf16, #tpu.memory_space<vmem>>, %arg7: memref<1x128xf32, #tpu.memory_space<vmem>>, %arg8: memref<128x64xbf16, #tpu.memory_space<vmem>>, %arg9: memref<64x48xbf16, #tpu.memory_space<vmem>>, %arg10: memref<1x48xf32, #tpu.memory_space<vmem>>, %arg11: memref<8x48xf32, #tpu.memory_space<vmem>>, %arg12: memref<1360x64xf32, #tpu.memory_space<vmem>>, %arg13: memref<688x64xf32, #tpu.memory_space<vmem>>, %arg14: memref<352x64xf32, #tpu.memory_space<vmem>>) attributes {dimension_semantics = [#tpu.dimension_semantics<parallel>], iteration_bounds = array<i64: 2>, scalar_prefetch = 0 : i64, scratch_operands = 3 : i64, tpu.core_type = #tpu.core_type<tc>, window_params = [{transform_indices = @transform_0, window_bounds = array<i64: 1360, 8>}, {pipeline_mode = #tpu.pipeline_mode<synchronous>, transform_indices = @transform_1, window_bounds = array<i64: 3, 8, 64>}, {pipeline_mode = #tpu.pipeline_mode<synchronous>, transform_indices = @transform_2, window_bounds = array<i64: 3, 64, 64>}, {pipeline_mode = #tpu.pipeline_mode<synchronous>, transform_indices = @transform_3, window_bounds = array<i64: 3, 64, 64>}, {pipeline_mode = #tpu.pipeline_mode<synchronous>, transform_indices = @transform_4, window_bounds = array<i64: 6, 64>}, {pipeline_mode = #tpu.pipeline_mode<synchronous>, transform_indices = @transform_5, window_bounds = array<i64: 1344, 128>}, {pipeline_mode = #tpu.pipeline_mode<synchronous>, transform_indices = @transform_6, window_bounds = array<i64: 1, 128>}, {pipeline_mode = #tpu.pipeline_mode<synchronous>, transform_indices = @transform_7, window_bounds = array<i64: 128, 64>}, {pipeline_mode = #tpu.pipeline_mode<synchronous>, transform_indices = @transform_8, window_bounds = array<i64: 64, 48>}, {pipeline_mode = #tpu.pipeline_mode<synchronous>, transform_indices = @transform_9, window_bounds = array<i64: 1, 48>}, {transform_indices = @transform_10, window_bounds = array<i64: 8, 48>}]} {
    %c0 = arith.constant 0 : index
    %c0_0 = arith.constant 0 : index
    %0 = vector.load %arg5[%c0, %c0_0] : memref<6x64xf32, #tpu.memory_space<vmem>>, vector<1x64xf32>
    %c0_1 = arith.constant 0 : index
    %c0_2 = arith.constant 0 : index
    %1 = vector.load %arg1[%c0_1, %c0_2] : memref<1360x8xf32, #tpu.memory_space<vmem>>, vector<1358x8xf32>
    %2 = arith.truncf %1 : vector<1358x8xf32> to vector<1358x8xbf16>
    %c0_3 = arith.constant 0 : index
    %c0_4 = arith.constant 0 : index
    %c0_5 = arith.constant 0 : index
    %3 = vector.load %arg2[%c0_3, %c0_4, %c0_5] : memref<3x8x64xbf16, #tpu.memory_space<vmem>>, vector<1x8x64xbf16>
    %4 = vector.shape_cast %3 : vector<1x8x64xbf16> to vector<8x64xbf16>
    %cst = arith.constant dense<0.000000e+00> : vector<1358x64xf32>
    %5 = tpu.matmul %2, %4, %cst {dimension_numbers = #tpu.dot_dimension_numbers<[1], [0], [0], [1], [0, 0, 1, 1], [], []>} : vector<1358x8xbf16>, vector<8x64xbf16>, vector<1358x64xf32> -> vector<1358x64xf32>
    %c1 = arith.constant 1 : index
    %c0_6 = arith.constant 0 : index
    %6 = vector.load %arg1[%c1, %c0_6] : memref<1360x8xf32, #tpu.memory_space<vmem>>, vector<1358x8xf32>
    %7 = arith.truncf %6 : vector<1358x8xf32> to vector<1358x8xbf16>
    %c1_7 = arith.constant 1 : index
    %c0_8 = arith.constant 0 : index
    %c0_9 = arith.constant 0 : index
    %8 = vector.load %arg2[%c1_7, %c0_8, %c0_9] : memref<3x8x64xbf16, #tpu.memory_space<vmem>>, vector<1x8x64xbf16>
    %9 = vector.shape_cast %8 : vector<1x8x64xbf16> to vector<8x64xbf16>
    %cst_10 = arith.constant dense<0.000000e+00> : vector<1358x64xf32>
    %10 = tpu.matmul %7, %9, %cst_10 {dimension_numbers = #tpu.dot_dimension_numbers<[1], [0], [0], [1], [0, 0, 1, 1], [], []>} : vector<1358x8xbf16>, vector<8x64xbf16>, vector<1358x64xf32> -> vector<1358x64xf32>
    %11 = arith.addf %5, %10 : vector<1358x64xf32>
    %c2 = arith.constant 2 : index
    %c0_11 = arith.constant 0 : index
    %12 = vector.load %arg1[%c2, %c0_11] : memref<1360x8xf32, #tpu.memory_space<vmem>>, vector<1358x8xf32>
    %13 = arith.truncf %12 : vector<1358x8xf32> to vector<1358x8xbf16>
    %c2_12 = arith.constant 2 : index
    %c0_13 = arith.constant 0 : index
    %c0_14 = arith.constant 0 : index
    %14 = vector.load %arg2[%c2_12, %c0_13, %c0_14] : memref<3x8x64xbf16, #tpu.memory_space<vmem>>, vector<1x8x64xbf16>
    %15 = vector.shape_cast %14 : vector<1x8x64xbf16> to vector<8x64xbf16>
    %cst_15 = arith.constant dense<0.000000e+00> : vector<1358x64xf32>
    %16 = tpu.matmul %13, %15, %cst_15 {dimension_numbers = #tpu.dot_dimension_numbers<[1], [0], [0], [1], [0, 0, 1, 1], [], []>} : vector<1358x8xbf16>, vector<8x64xbf16>, vector<1358x64xf32> -> vector<1358x64xf32>
    %17 = arith.addf %11, %16 : vector<1358x64xf32>
    %18 = vector.broadcast %0 : vector<1x64xf32> to vector<1358x64xf32>
    %19 = arith.addf %17, %18 : vector<1358x64xf32>
    %cst_16 = arith.constant 0.000000e+00 : f32
    %20 = vector.broadcast %cst_16 : f32 to vector<1358x64xf32>
    %21 = arith.maximumf %19, %20 : vector<1358x64xf32>
    %c0_17 = arith.constant 0 : index
    %c0_18 = arith.constant 0 : index
    %22 = vector.load %arg12[%c0_17, %c0_18] : memref<1360x64xf32, #tpu.memory_space<vmem>>, vector<1358x64xf32>
    tpu.vector_store %arg12[%c0_17, %c0_18], %21 {strides = array<i32>} : memref<1360x64xf32, #tpu.memory_space<vmem>>, vector<1358x64xf32>,
    %c0_i32 = arith.constant 0 : i32
    %c8_i32 = arith.constant 8 : i32
    %23 = arith.addi %c0_i32, %c8_i32 : i32
    %c1_i32 = arith.constant 1 : i32
    scf.for %arg15 = %c0_i32 to %23 step %c1_i32  : i32 {
      %c1_i32_184 = arith.constant 1 : i32
      %261 = arith.muli %arg15, %c1_i32_184 : i32
      %c0_i32_185 = arith.constant 0 : i32
      %262 = arith.addi %c0_i32_185, %261 : i32
      %c170_i32 = arith.constant 170 : i32
      %263 = arith.muli %262, %c170_i32 : i32
      %264 = tpu.assume_multiple %263, 2 : i32
      %c86_i32 = arith.constant 86 : i32
      %265 = arith.muli %262, %c86_i32 : i32
      %266 = tpu.assume_multiple %265, 2 : i32
      %267 = arith.index_cast %264 : i32 to index
      %c0_186 = arith.constant 0 : index
      %268 = tpu.strided_load %arg12[%267, %c0_186] {strides = array<i32: 2, 1>} : memref<1360x64xf32, #tpu.memory_space<vmem>>, vector<84x64xf32>
      %c1_i32_187 = arith.constant 1 : i32
      %269 = arith.addi %264, %c1_i32_187 : i32
      %270 = arith.index_cast %269 : i32 to index
      %c0_188 = arith.constant 0 : index
      %271 = tpu.strided_load %arg12[%270, %c0_188] {strides = array<i32: 2, 1>} : memref<1360x64xf32, #tpu.memory_space<vmem>>, vector<84x64xf32>
      %cst_189 = arith.constant 0.000000e+00 : f32
      %272 = vector.broadcast %cst_189 : f32 to vector<1x64xf32>
      %273 = arith.index_cast %266 : i32 to index
      %c0_190 = arith.constant 0 : index
      %274 = vector.load %arg13[%273, %c0_190] : memref<688x64xf32, #tpu.memory_space<vmem>>, vector<1x64xf32>
      tpu.vector_store %arg13[%273, %c0_190], %272 {strides = array<i32>} : memref<688x64xf32, #tpu.memory_space<vmem>>, vector<1x64xf32>,
      %275 = arith.maximumf %268, %271 : vector<84x64xf32>
      %c1_i32_191 = arith.constant 1 : i32
      %276 = arith.addi %266, %c1_i32_191 : i32
      %277 = arith.index_cast %276 : i32 to index
      %c0_192 = arith.constant 0 : index
      %278 = vector.load %arg13[%277, %c0_192] : memref<688x64xf32, #tpu.memory_space<vmem>>, vector<84x64xf32>
      tpu.vector_store %arg13[%277, %c0_192], %275 {strides = array<i32>} : memref<688x64xf32, #tpu.memory_space<vmem>>, vector<84x64xf32>,
      %cst_193 = arith.constant 0.000000e+00 : f32
      %279 = vector.broadcast %cst_193 : f32 to vector<1x64xf32>
      %c1_i32_194 = arith.constant 1 : i32
      %280 = arith.addi %266, %c1_i32_194 : i32
      %c84_i32 = arith.constant 84 : i32
      %281 = arith.addi %280, %c84_i32 : i32
      %282 = arith.index_cast %281 : i32 to index
      %c0_195 = arith.constant 0 : index
      %283 = vector.load %arg13[%282, %c0_195] : memref<688x64xf32, #tpu.memory_space<vmem>>, vector<1x64xf32>
      tpu.vector_store %arg13[%282, %c0_195], %279 {strides = array<i32>} : memref<688x64xf32, #tpu.memory_space<vmem>>, vector<1x64xf32>,
    }
    %c8_i32_19 = arith.constant 8 : i32
    %c1_20 = arith.constant 1 : index
    %c0_21 = arith.constant 0 : index
    %24 = vector.load %arg5[%c1_20, %c0_21] : memref<6x64xf32, #tpu.memory_space<vmem>>, vector<1x64xf32>
    %c0_22 = arith.constant 0 : index
    %c0_23 = arith.constant 0 : index
    %25 = vector.load %arg13[%c0_22, %c0_23] : memref<688x64xf32, #tpu.memory_space<vmem>>, vector<686x64xf32>
    %26 = arith.truncf %25 : vector<686x64xf32> to vector<686x64xbf16>
    %c0_24 = arith.constant 0 : index
    %c0_25 = arith.constant 0 : index
    %c0_26 = arith.constant 0 : index
    %27 = vector.load %arg3[%c0_24, %c0_25, %c0_26] : memref<3x64x64xbf16, #tpu.memory_space<vmem>>, vector<1x64x64xbf16>
    %28 = vector.shape_cast %27 : vector<1x64x64xbf16> to vector<64x64xbf16>
    %cst_27 = arith.constant dense<0.000000e+00> : vector<686x64xf32>
    %29 = tpu.matmul %26, %28, %cst_27 {dimension_numbers = #tpu.dot_dimension_numbers<[1], [0], [0], [1], [0, 0, 1, 1], [], []>} : vector<686x64xbf16>, vector<64x64xbf16>, vector<686x64xf32> -> vector<686x64xf32>
    %c1_28 = arith.constant 1 : index
    %c0_29 = arith.constant 0 : index
    %30 = vector.load %arg13[%c1_28, %c0_29] : memref<688x64xf32, #tpu.memory_space<vmem>>, vector<686x64xf32>
    %31 = arith.truncf %30 : vector<686x64xf32> to vector<686x64xbf16>
    %c1_30 = arith.constant 1 : index
    %c0_31 = arith.constant 0 : index
    %c0_32 = arith.constant 0 : index
    %32 = vector.load %arg3[%c1_30, %c0_31, %c0_32] : memref<3x64x64xbf16, #tpu.memory_space<vmem>>, vector<1x64x64xbf16>
    %33 = vector.shape_cast %32 : vector<1x64x64xbf16> to vector<64x64xbf16>
    %cst_33 = arith.constant dense<0.000000e+00> : vector<686x64xf32>
    %34 = tpu.matmul %31, %33, %cst_33 {dimension_numbers = #tpu.dot_dimension_numbers<[1], [0], [0], [1], [0, 0, 1, 1], [], []>} : vector<686x64xbf16>, vector<64x64xbf16>, vector<686x64xf32> -> vector<686x64xf32>
    %35 = arith.addf %29, %34 : vector<686x64xf32>
    %c2_34 = arith.constant 2 : index
    %c0_35 = arith.constant 0 : index
    %36 = vector.load %arg13[%c2_34, %c0_35] : memref<688x64xf32, #tpu.memory_space<vmem>>, vector<686x64xf32>
    %37 = arith.truncf %36 : vector<686x64xf32> to vector<686x64xbf16>
    %c2_36 = arith.constant 2 : index
    %c0_37 = arith.constant 0 : index
    %c0_38 = arith.constant 0 : index
    %38 = vector.load %arg3[%c2_36, %c0_37, %c0_38] : memref<3x64x64xbf16, #tpu.memory_space<vmem>>, vector<1x64x64xbf16>
    %39 = vector.shape_cast %38 : vector<1x64x64xbf16> to vector<64x64xbf16>
    %cst_39 = arith.constant dense<0.000000e+00> : vector<686x64xf32>
    %40 = tpu.matmul %37, %39, %cst_39 {dimension_numbers = #tpu.dot_dimension_numbers<[1], [0], [0], [1], [0, 0, 1, 1], [], []>} : vector<686x64xbf16>, vector<64x64xbf16>, vector<686x64xf32> -> vector<686x64xf32>
    %41 = arith.addf %35, %40 : vector<686x64xf32>
    %42 = vector.broadcast %24 : vector<1x64xf32> to vector<686x64xf32>
    %43 = arith.addf %41, %42 : vector<686x64xf32>
    %cst_40 = arith.constant 0.000000e+00 : f32
    %44 = vector.broadcast %cst_40 : f32 to vector<686x64xf32>
    %45 = arith.maximumf %43, %44 : vector<686x64xf32>
    %c0_41 = arith.constant 0 : index
    %c0_42 = arith.constant 0 : index
    %46 = vector.load %arg12[%c0_41, %c0_42] : memref<1360x64xf32, #tpu.memory_space<vmem>>, vector<686x64xf32>
    tpu.vector_store %arg12[%c0_41, %c0_42], %45 {strides = array<i32>} : memref<1360x64xf32, #tpu.memory_space<vmem>>, vector<686x64xf32>,
    %c0_i32_43 = arith.constant 0 : i32
    %c8_i32_44 = arith.constant 8 : i32
    %47 = arith.addi %c0_i32_43, %c8_i32_44 : i32
    %c1_i32_45 = arith.constant 1 : i32
    scf.for %arg15 = %c0_i32_43 to %47 step %c1_i32_45  : i32 {
      %c1_i32_184 = arith.constant 1 : i32
      %261 = arith.muli %arg15, %c1_i32_184 : i32
      %c0_i32_185 = arith.constant 0 : i32
      %262 = arith.addi %c0_i32_185, %261 : i32
      %c86_i32 = arith.constant 86 : i32
      %263 = arith.muli %262, %c86_i32 : i32
      %264 = tpu.assume_multiple %263, 2 : i32
      %c44_i32 = arith.constant 44 : i32
      %265 = arith.muli %262, %c44_i32 : i32
      %266 = tpu.assume_multiple %265, 2 : i32
      %267 = arith.index_cast %264 : i32 to index
      %c0_186 = arith.constant 0 : index
      %268 = tpu.strided_load %arg12[%267, %c0_186] {strides = array<i32: 2, 1>} : memref<1360x64xf32, #tpu.memory_space<vmem>>, vector<42x64xf32>
      %c1_i32_187 = arith.constant 1 : i32
      %269 = arith.addi %264, %c1_i32_187 : i32
      %270 = arith.index_cast %269 : i32 to index
      %c0_188 = arith.constant 0 : index
      %271 = tpu.strided_load %arg12[%270, %c0_188] {strides = array<i32: 2, 1>} : memref<1360x64xf32, #tpu.memory_space<vmem>>, vector<42x64xf32>
      %cst_189 = arith.constant 0.000000e+00 : f32
      %272 = vector.broadcast %cst_189 : f32 to vector<1x64xf32>
      %273 = arith.index_cast %266 : i32 to index
      %c0_190 = arith.constant 0 : index
      %274 = vector.load %arg14[%273, %c0_190] : memref<352x64xf32, #tpu.memory_space<vmem>>, vector<1x64xf32>
      tpu.vector_store %arg14[%273, %c0_190], %272 {strides = array<i32>} : memref<352x64xf32, #tpu.memory_space<vmem>>, vector<1x64xf32>,
      %275 = arith.maximumf %268, %271 : vector<42x64xf32>
      %c1_i32_191 = arith.constant 1 : i32
      %276 = arith.addi %266, %c1_i32_191 : i32
      %277 = arith.index_cast %276 : i32 to index
      %c0_192 = arith.constant 0 : index
      %278 = vector.load %arg14[%277, %c0_192] : memref<352x64xf32, #tpu.memory_space<vmem>>, vector<42x64xf32>
      tpu.vector_store %arg14[%277, %c0_192], %275 {strides = array<i32>} : memref<352x64xf32, #tpu.memory_space<vmem>>, vector<42x64xf32>,
      %cst_193 = arith.constant 0.000000e+00 : f32
      %279 = vector.broadcast %cst_193 : f32 to vector<1x64xf32>
      %c1_i32_194 = arith.constant 1 : i32
      %280 = arith.addi %266, %c1_i32_194 : i32
      %c42_i32 = arith.constant 42 : i32
      %281 = arith.addi %280, %c42_i32 : i32
      %282 = arith.index_cast %281 : i32 to index
      %c0_195 = arith.constant 0 : index
      %283 = vector.load %arg14[%282, %c0_195] : memref<352x64xf32, #tpu.memory_space<vmem>>, vector<1x64xf32>
      tpu.vector_store %arg14[%282, %c0_195], %279 {strides = array<i32>} : memref<352x64xf32, #tpu.memory_space<vmem>>, vector<1x64xf32>,
    }
    %c8_i32_46 = arith.constant 8 : i32
    %c2_47 = arith.constant 2 : index
    %c0_48 = arith.constant 0 : index
    %48 = vector.load %arg5[%c2_47, %c0_48] : memref<6x64xf32, #tpu.memory_space<vmem>>, vector<1x64xf32>
    %c0_49 = arith.constant 0 : index
    %c0_50 = arith.constant 0 : index
    %49 = vector.load %arg14[%c0_49, %c0_50] : memref<352x64xf32, #tpu.memory_space<vmem>>, vector<350x64xf32>
    %50 = arith.truncf %49 : vector<350x64xf32> to vector<350x64xbf16>
    %c0_51 = arith.constant 0 : index
    %c0_52 = arith.constant 0 : index
    %c0_53 = arith.constant 0 : index
    %51 = vector.load %arg4[%c0_51, %c0_52, %c0_53] : memref<3x64x64xbf16, #tpu.memory_space<vmem>>, vector<1x64x64xbf16>
    %52 = vector.shape_cast %51 : vector<1x64x64xbf16> to vector<64x64xbf16>
    %cst_54 = arith.constant dense<0.000000e+00> : vector<350x64xf32>
    %53 = tpu.matmul %50, %52, %cst_54 {dimension_numbers = #tpu.dot_dimension_numbers<[1], [0], [0], [1], [0, 0, 1, 1], [], []>} : vector<350x64xbf16>, vector<64x64xbf16>, vector<350x64xf32> -> vector<350x64xf32>
    %c1_55 = arith.constant 1 : index
    %c0_56 = arith.constant 0 : index
    %54 = vector.load %arg14[%c1_55, %c0_56] : memref<352x64xf32, #tpu.memory_space<vmem>>, vector<350x64xf32>
    %55 = arith.truncf %54 : vector<350x64xf32> to vector<350x64xbf16>
    %c1_57 = arith.constant 1 : index
    %c0_58 = arith.constant 0 : index
    %c0_59 = arith.constant 0 : index
    %56 = vector.load %arg4[%c1_57, %c0_58, %c0_59] : memref<3x64x64xbf16, #tpu.memory_space<vmem>>, vector<1x64x64xbf16>
    %57 = vector.shape_cast %56 : vector<1x64x64xbf16> to vector<64x64xbf16>
    %cst_60 = arith.constant dense<0.000000e+00> : vector<350x64xf32>
    %58 = tpu.matmul %55, %57, %cst_60 {dimension_numbers = #tpu.dot_dimension_numbers<[1], [0], [0], [1], [0, 0, 1, 1], [], []>} : vector<350x64xbf16>, vector<64x64xbf16>, vector<350x64xf32> -> vector<350x64xf32>
    %59 = arith.addf %53, %58 : vector<350x64xf32>
    %c2_61 = arith.constant 2 : index
    %c0_62 = arith.constant 0 : index
    %60 = vector.load %arg14[%c2_61, %c0_62] : memref<352x64xf32, #tpu.memory_space<vmem>>, vector<350x64xf32>
    %61 = arith.truncf %60 : vector<350x64xf32> to vector<350x64xbf16>
    %c2_63 = arith.constant 2 : index
    %c0_64 = arith.constant 0 : index
    %c0_65 = arith.constant 0 : index
    %62 = vector.load %arg4[%c2_63, %c0_64, %c0_65] : memref<3x64x64xbf16, #tpu.memory_space<vmem>>, vector<1x64x64xbf16>
    %63 = vector.shape_cast %62 : vector<1x64x64xbf16> to vector<64x64xbf16>
    %cst_66 = arith.constant dense<0.000000e+00> : vector<350x64xf32>
    %64 = tpu.matmul %61, %63, %cst_66 {dimension_numbers = #tpu.dot_dimension_numbers<[1], [0], [0], [1], [0, 0, 1, 1], [], []>} : vector<350x64xbf16>, vector<64x64xbf16>, vector<350x64xf32> -> vector<350x64xf32>
    %65 = arith.addf %59, %64 : vector<350x64xf32>
    %66 = vector.broadcast %48 : vector<1x64xf32> to vector<350x64xf32>
    %67 = arith.addf %65, %66 : vector<350x64xf32>
    %cst_67 = arith.constant 0.000000e+00 : f32
    %68 = vector.broadcast %cst_67 : f32 to vector<350x64xf32>
    %69 = arith.maximumf %67, %68 : vector<350x64xf32>
    %c0_68 = arith.constant 0 : index
    %c0_69 = arith.constant 0 : index
    %70 = vector.load %arg12[%c0_68, %c0_69] : memref<1360x64xf32, #tpu.memory_space<vmem>>, vector<350x64xf32>
    tpu.vector_store %arg12[%c0_68, %c0_69], %69 {strides = array<i32>} : memref<1360x64xf32, #tpu.memory_space<vmem>>, vector<350x64xf32>,
    %cst_70 = arith.constant 0.000000e+00 : f32
    %71 = vector.broadcast %cst_70 : f32 to vector<8x128xf32>
    %c0_71 = arith.constant 0 : index
    %c0_72 = arith.constant 0 : index
    %72 = tpu.strided_load %arg12[%c0_71, %c0_72] {strides = array<i32: 44, 1>} : memref<1360x64xf32, #tpu.memory_space<vmem>>, vector<8x64xf32>
    %c1_73 = arith.constant 1 : index
    %c0_74 = arith.constant 0 : index
    %73 = tpu.strided_load %arg12[%c1_73, %c0_74] {strides = array<i32: 44, 1>} : memref<1360x64xf32, #tpu.memory_space<vmem>>, vector<8x64xf32>
    %74 = arith.maximumf %72, %73 : vector<8x64xf32>
    %75 = arith.truncf %74 : vector<8x64xf32> to vector<8x64xbf16>
    %c0_75 = arith.constant 0 : index
    %c0_76 = arith.constant 0 : index
    %76 = vector.load %arg6[%c0_75, %c0_76] : memref<1344x128xbf16, #tpu.memory_space<vmem>>, vector<64x128xbf16>
    %cst_77 = arith.constant dense<0.000000e+00> : vector<8x128xf32>
    %77 = tpu.matmul %75, %76, %cst_77 {dimension_numbers = #tpu.dot_dimension_numbers<[1], [0], [0], [1], [0, 0, 1, 1], [], []>} : vector<8x64xbf16>, vector<64x128xbf16>, vector<8x128xf32> -> vector<8x128xf32>
    %78 = arith.addf %71, %77 : vector<8x128xf32>
    %c2_78 = arith.constant 2 : index
    %c0_79 = arith.constant 0 : index
    %79 = tpu.strided_load %arg12[%c2_78, %c0_79] {strides = array<i32: 44, 1>} : memref<1360x64xf32, #tpu.memory_space<vmem>>, vector<8x64xf32>
    %c3 = arith.constant 3 : index
    %c0_80 = arith.constant 0 : index
    %80 = tpu.strided_load %arg12[%c3, %c0_80] {strides = array<i32: 44, 1>} : memref<1360x64xf32, #tpu.memory_space<vmem>>, vector<8x64xf32>
    %81 = arith.maximumf %79, %80 : vector<8x64xf32>
    %82 = arith.truncf %81 : vector<8x64xf32> to vector<8x64xbf16>
    %c64 = arith.constant 64 : index
    %c0_81 = arith.constant 0 : index
    %83 = vector.load %arg6[%c64, %c0_81] : memref<1344x128xbf16, #tpu.memory_space<vmem>>, vector<64x128xbf16>
    %cst_82 = arith.constant dense<0.000000e+00> : vector<8x128xf32>
    %84 = tpu.matmul %82, %83, %cst_82 {dimension_numbers = #tpu.dot_dimension_numbers<[1], [0], [0], [1], [0, 0, 1, 1], [], []>} : vector<8x64xbf16>, vector<64x128xbf16>, vector<8x128xf32> -> vector<8x128xf32>
    %85 = arith.addf %78, %84 : vector<8x128xf32>
    %c4 = arith.constant 4 : index
    %c0_83 = arith.constant 0 : index
    %86 = tpu.strided_load %arg12[%c4, %c0_83] {strides = array<i32: 44, 1>} : memref<1360x64xf32, #tpu.memory_space<vmem>>, vector<8x64xf32>
    %c5 = arith.constant 5 : index
    %c0_84 = arith.constant 0 : index
    %87 = tpu.strided_load %arg12[%c5, %c0_84] {strides = array<i32: 44, 1>} : memref<1360x64xf32, #tpu.memory_space<vmem>>, vector<8x64xf32>
    %88 = arith.maximumf %86, %87 : vector<8x64xf32>
    %89 = arith.truncf %88 : vector<8x64xf32> to vector<8x64xbf16>
    %c128 = arith.constant 128 : index
    %c0_85 = arith.constant 0 : index
    %90 = vector.load %arg6[%c128, %c0_85] : memref<1344x128xbf16, #tpu.memory_space<vmem>>, vector<64x128xbf16>
    %cst_86 = arith.constant dense<0.000000e+00> : vector<8x128xf32>
    %91 = tpu.matmul %89, %90, %cst_86 {dimension_numbers = #tpu.dot_dimension_numbers<[1], [0], [0], [1], [0, 0, 1, 1], [], []>} : vector<8x64xbf16>, vector<64x128xbf16>, vector<8x128xf32> -> vector<8x128xf32>
    %92 = arith.addf %85, %91 : vector<8x128xf32>
    %c6 = arith.constant 6 : index
    %c0_87 = arith.constant 0 : index
    %93 = tpu.strided_load %arg12[%c6, %c0_87] {strides = array<i32: 44, 1>} : memref<1360x64xf32, #tpu.memory_space<vmem>>, vector<8x64xf32>
    %c7 = arith.constant 7 : index
    %c0_88 = arith.constant 0 : index
    %94 = tpu.strided_load %arg12[%c7, %c0_88] {strides = array<i32: 44, 1>} : memref<1360x64xf32, #tpu.memory_space<vmem>>, vector<8x64xf32>
    %95 = arith.maximumf %93, %94 : vector<8x64xf32>
    %96 = arith.truncf %95 : vector<8x64xf32> to vector<8x64xbf16>
    %c192 = arith.constant 192 : index
    %c0_89 = arith.constant 0 : index
    %97 = vector.load %arg6[%c192, %c0_89] : memref<1344x128xbf16, #tpu.memory_space<vmem>>, vector<64x128xbf16>
    %cst_90 = arith.constant dense<0.000000e+00> : vector<8x128xf32>
    %98 = tpu.matmul %96, %97, %cst_90 {dimension_numbers = #tpu.dot_dimension_numbers<[1], [0], [0], [1], [0, 0, 1, 1], [], []>} : vector<8x64xbf16>, vector<64x128xbf16>, vector<8x128xf32> -> vector<8x128xf32>
    %99 = arith.addf %92, %98 : vector<8x128xf32>
    %c8 = arith.constant 8 : index
    %c0_91 = arith.constant 0 : index
    %100 = tpu.strided_load %arg12[%c8, %c0_91] {strides = array<i32: 44, 1>} : memref<1360x64xf32, #tpu.memory_space<vmem>>, vector<8x64xf32>
    %c9 = arith.constant 9 : index
    %c0_92 = arith.constant 0 : index
    %101 = tpu.strided_load %arg12[%c9, %c0_92] {strides = array<i32: 44, 1>} : memref<1360x64xf32, #tpu.memory_space<vmem>>, vector<8x64xf32>
    %102 = arith.maximumf %100, %101 : vector<8x64xf32>
    %103 = arith.truncf %102 : vector<8x64xf32> to vector<8x64xbf16>
    %c256 = arith.constant 256 : index
    %c0_93 = arith.constant 0 : index
    %104 = vector.load %arg6[%c256, %c0_93] : memref<1344x128xbf16, #tpu.memory_space<vmem>>, vector<64x128xbf16>
    %cst_94 = arith.constant dense<0.000000e+00> : vector<8x128xf32>
    %105 = tpu.matmul %103, %104, %cst_94 {dimension_numbers = #tpu.dot_dimension_numbers<[1], [0], [0], [1], [0, 0, 1, 1], [], []>} : vector<8x64xbf16>, vector<64x128xbf16>, vector<8x128xf32> -> vector<8x128xf32>
    %106 = arith.addf %99, %105 : vector<8x128xf32>
    %c10 = arith.constant 10 : index
    %c0_95 = arith.constant 0 : index
    %107 = tpu.strided_load %arg12[%c10, %c0_95] {strides = array<i32: 44, 1>} : memref<1360x64xf32, #tpu.memory_space<vmem>>, vector<8x64xf32>
    %c11 = arith.constant 11 : index
    %c0_96 = arith.constant 0 : index
    %108 = tpu.strided_load %arg12[%c11, %c0_96] {strides = array<i32: 44, 1>} : memref<1360x64xf32, #tpu.memory_space<vmem>>, vector<8x64xf32>
    %109 = arith.maximumf %107, %108 : vector<8x64xf32>
    %110 = arith.truncf %109 : vector<8x64xf32> to vector<8x64xbf16>
    %c320 = arith.constant 320 : index
    %c0_97 = arith.constant 0 : index
    %111 = vector.load %arg6[%c320, %c0_97] : memref<1344x128xbf16, #tpu.memory_space<vmem>>, vector<64x128xbf16>
    %cst_98 = arith.constant dense<0.000000e+00> : vector<8x128xf32>
    %112 = tpu.matmul %110, %111, %cst_98 {dimension_numbers = #tpu.dot_dimension_numbers<[1], [0], [0], [1], [0, 0, 1, 1], [], []>} : vector<8x64xbf16>, vector<64x128xbf16>, vector<8x128xf32> -> vector<8x128xf32>
    %113 = arith.addf %106, %112 : vector<8x128xf32>
    %c12 = arith.constant 12 : index
    %c0_99 = arith.constant 0 : index
    %114 = tpu.strided_load %arg12[%c12, %c0_99] {strides = array<i32: 44, 1>} : memref<1360x64xf32, #tpu.memory_space<vmem>>, vector<8x64xf32>
    %c13 = arith.constant 13 : index
    %c0_100 = arith.constant 0 : index
    %115 = tpu.strided_load %arg12[%c13, %c0_100] {strides = array<i32: 44, 1>} : memref<1360x64xf32, #tpu.memory_space<vmem>>, vector<8x64xf32>
    %116 = arith.maximumf %114, %115 : vector<8x64xf32>
    %117 = arith.truncf %116 : vector<8x64xf32> to vector<8x64xbf16>
    %c384 = arith.constant 384 : index
    %c0_101 = arith.constant 0 : index
    %118 = vector.load %arg6[%c384, %c0_101] : memref<1344x128xbf16, #tpu.memory_space<vmem>>, vector<64x128xbf16>
    %cst_102 = arith.constant dense<0.000000e+00> : vector<8x128xf32>
    %119 = tpu.matmul %117, %118, %cst_102 {dimension_numbers = #tpu.dot_dimension_numbers<[1], [0], [0], [1], [0, 0, 1, 1], [], []>} : vector<8x64xbf16>, vector<64x128xbf16>, vector<8x128xf32> -> vector<8x128xf32>
    %120 = arith.addf %113, %119 : vector<8x128xf32>
    %c14 = arith.constant 14 : index
    %c0_103 = arith.constant 0 : index
    %121 = tpu.strided_load %arg12[%c14, %c0_103] {strides = array<i32: 44, 1>} : memref<1360x64xf32, #tpu.memory_space<vmem>>, vector<8x64xf32>
    %c15 = arith.constant 15 : index
    %c0_104 = arith.constant 0 : index
    %122 = tpu.strided_load %arg12[%c15, %c0_104] {strides = array<i32: 44, 1>} : memref<1360x64xf32, #tpu.memory_space<vmem>>, vector<8x64xf32>
    %123 = arith.maximumf %121, %122 : vector<8x64xf32>
    %124 = arith.truncf %123 : vector<8x64xf32> to vector<8x64xbf16>
    %c448 = arith.constant 448 : index
    %c0_105 = arith.constant 0 : index
    %125 = vector.load %arg6[%c448, %c0_105] : memref<1344x128xbf16, #tpu.memory_space<vmem>>, vector<64x128xbf16>
    %cst_106 = arith.constant dense<0.000000e+00> : vector<8x128xf32>
    %126 = tpu.matmul %124, %125, %cst_106 {dimension_numbers = #tpu.dot_dimension_numbers<[1], [0], [0], [1], [0, 0, 1, 1], [], []>} : vector<8x64xbf16>, vector<64x128xbf16>, vector<8x128xf32> -> vector<8x128xf32>
    %127 = arith.addf %120, %126 : vector<8x128xf32>
    %c16 = arith.constant 16 : index
    %c0_107 = arith.constant 0 : index
    %128 = tpu.strided_load %arg12[%c16, %c0_107] {strides = array<i32: 44, 1>} : memref<1360x64xf32, #tpu.memory_space<vmem>>, vector<8x64xf32>
    %c17 = arith.constant 17 : index
    %c0_108 = arith.constant 0 : index
    %129 = tpu.strided_load %arg12[%c17, %c0_108] {strides = array<i32: 44, 1>} : memref<1360x64xf32, #tpu.memory_space<vmem>>, vector<8x64xf32>
    %130 = arith.maximumf %128, %129 : vector<8x64xf32>
    %131 = arith.truncf %130 : vector<8x64xf32> to vector<8x64xbf16>
    %c512 = arith.constant 512 : index
    %c0_109 = arith.constant 0 : index
    %132 = vector.load %arg6[%c512, %c0_109] : memref<1344x128xbf16, #tpu.memory_space<vmem>>, vector<64x128xbf16>
    %cst_110 = arith.constant dense<0.000000e+00> : vector<8x128xf32>
    %133 = tpu.matmul %131, %132, %cst_110 {dimension_numbers = #tpu.dot_dimension_numbers<[1], [0], [0], [1], [0, 0, 1, 1], [], []>} : vector<8x64xbf16>, vector<64x128xbf16>, vector<8x128xf32> -> vector<8x128xf32>
    %134 = arith.addf %127, %133 : vector<8x128xf32>
    %c18 = arith.constant 18 : index
    %c0_111 = arith.constant 0 : index
    %135 = tpu.strided_load %arg12[%c18, %c0_111] {strides = array<i32: 44, 1>} : memref<1360x64xf32, #tpu.memory_space<vmem>>, vector<8x64xf32>
    %c19 = arith.constant 19 : index
    %c0_112 = arith.constant 0 : index
    %136 = tpu.strided_load %arg12[%c19, %c0_112] {strides = array<i32: 44, 1>} : memref<1360x64xf32, #tpu.memory_space<vmem>>, vector<8x64xf32>
    %137 = arith.maximumf %135, %136 : vector<8x64xf32>
    %138 = arith.truncf %137 : vector<8x64xf32> to vector<8x64xbf16>
    %c576 = arith.constant 576 : index
    %c0_113 = arith.constant 0 : index
    %139 = vector.load %arg6[%c576, %c0_113] : memref<1344x128xbf16, #tpu.memory_space<vmem>>, vector<64x128xbf16>
    %cst_114 = arith.constant dense<0.000000e+00> : vector<8x128xf32>
    %140 = tpu.matmul %138, %139, %cst_114 {dimension_numbers = #tpu.dot_dimension_numbers<[1], [0], [0], [1], [0, 0, 1, 1], [], []>} : vector<8x64xbf16>, vector<64x128xbf16>, vector<8x128xf32> -> vector<8x128xf32>
    %141 = arith.addf %134, %140 : vector<8x128xf32>
    %c20 = arith.constant 20 : index
    %c0_115 = arith.constant 0 : index
    %142 = tpu.strided_load %arg12[%c20, %c0_115] {strides = array<i32: 44, 1>} : memref<1360x64xf32, #tpu.memory_space<vmem>>, vector<8x64xf32>
    %c21 = arith.constant 21 : index
    %c0_116 = arith.constant 0 : index
    %143 = tpu.strided_load %arg12[%c21, %c0_116] {strides = array<i32: 44, 1>} : memref<1360x64xf32, #tpu.memory_space<vmem>>, vector<8x64xf32>
    %144 = arith.maximumf %142, %143 : vector<8x64xf32>
    %145 = arith.truncf %144 : vector<8x64xf32> to vector<8x64xbf16>
    %c640 = arith.constant 640 : index
    %c0_117 = arith.constant 0 : index
    %146 = vector.load %arg6[%c640, %c0_117] : memref<1344x128xbf16, #tpu.memory_space<vmem>>, vector<64x128xbf16>
    %cst_118 = arith.constant dense<0.000000e+00> : vector<8x128xf32>
    %147 = tpu.matmul %145, %146, %cst_118 {dimension_numbers = #tpu.dot_dimension_numbers<[1], [0], [0], [1], [0, 0, 1, 1], [], []>} : vector<8x64xbf16>, vector<64x128xbf16>, vector<8x128xf32> -> vector<8x128xf32>
    %148 = arith.addf %141, %147 : vector<8x128xf32>
    %c22 = arith.constant 22 : index
    %c0_119 = arith.constant 0 : index
    %149 = tpu.strided_load %arg12[%c22, %c0_119] {strides = array<i32: 44, 1>} : memref<1360x64xf32, #tpu.memory_space<vmem>>, vector<8x64xf32>
    %c23 = arith.constant 23 : index
    %c0_120 = arith.constant 0 : index
    %150 = tpu.strided_load %arg12[%c23, %c0_120] {strides = array<i32: 44, 1>} : memref<1360x64xf32, #tpu.memory_space<vmem>>, vector<8x64xf32>
    %151 = arith.maximumf %149, %150 : vector<8x64xf32>
    %152 = arith.truncf %151 : vector<8x64xf32> to vector<8x64xbf16>
    %c704 = arith.constant 704 : index
    %c0_121 = arith.constant 0 : index
    %153 = vector.load %arg6[%c704, %c0_121] : memref<1344x128xbf16, #tpu.memory_space<vmem>>, vector<64x128xbf16>
    %cst_122 = arith.constant dense<0.000000e+00> : vector<8x128xf32>
    %154 = tpu.matmul %152, %153, %cst_122 {dimension_numbers = #tpu.dot_dimension_numbers<[1], [0], [0], [1], [0, 0, 1, 1], [], []>} : vector<8x64xbf16>, vector<64x128xbf16>, vector<8x128xf32> -> vector<8x128xf32>
    %155 = arith.addf %148, %154 : vector<8x128xf32>
    %c24 = arith.constant 24 : index
    %c0_123 = arith.constant 0 : index
    %156 = tpu.strided_load %arg12[%c24, %c0_123] {strides = array<i32: 44, 1>} : memref<1360x64xf32, #tpu.memory_space<vmem>>, vector<8x64xf32>
    %c25 = arith.constant 25 : index
    %c0_124 = arith.constant 0 : index
    %157 = tpu.strided_load %arg12[%c25, %c0_124] {strides = array<i32: 44, 1>} : memref<1360x64xf32, #tpu.memory_space<vmem>>, vector<8x64xf32>
    %158 = arith.maximumf %156, %157 : vector<8x64xf32>
    %159 = arith.truncf %158 : vector<8x64xf32> to vector<8x64xbf16>
    %c768 = arith.constant 768 : index
    %c0_125 = arith.constant 0 : index
    %160 = vector.load %arg6[%c768, %c0_125] : memref<1344x128xbf16, #tpu.memory_space<vmem>>, vector<64x128xbf16>
    %cst_126 = arith.constant dense<0.000000e+00> : vector<8x128xf32>
    %161 = tpu.matmul %159, %160, %cst_126 {dimension_numbers = #tpu.dot_dimension_numbers<[1], [0], [0], [1], [0, 0, 1, 1], [], []>} : vector<8x64xbf16>, vector<64x128xbf16>, vector<8x128xf32> -> vector<8x128xf32>
    %162 = arith.addf %155, %161 : vector<8x128xf32>
    %c26 = arith.constant 26 : index
    %c0_127 = arith.constant 0 : index
    %163 = tpu.strided_load %arg12[%c26, %c0_127] {strides = array<i32: 44, 1>} : memref<1360x64xf32, #tpu.memory_space<vmem>>, vector<8x64xf32>
    %c27 = arith.constant 27 : index
    %c0_128 = arith.constant 0 : index
    %164 = tpu.strided_load %arg12[%c27, %c0_128] {strides = array<i32: 44, 1>} : memref<1360x64xf32, #tpu.memory_space<vmem>>, vector<8x64xf32>
    %165 = arith.maximumf %163, %164 : vector<8x64xf32>
    %166 = arith.truncf %165 : vector<8x64xf32> to vector<8x64xbf16>
    %c832 = arith.constant 832 : index
    %c0_129 = arith.constant 0 : index
    %167 = vector.load %arg6[%c832, %c0_129] : memref<1344x128xbf16, #tpu.memory_space<vmem>>, vector<64x128xbf16>
    %cst_130 = arith.constant dense<0.000000e+00> : vector<8x128xf32>
    %168 = tpu.matmul %166, %167, %cst_130 {dimension_numbers = #tpu.dot_dimension_numbers<[1], [0], [0], [1], [0, 0, 1, 1], [], []>} : vector<8x64xbf16>, vector<64x128xbf16>, vector<8x128xf32> -> vector<8x128xf32>
    %169 = arith.addf %162, %168 : vector<8x128xf32>
    %c28 = arith.constant 28 : index
    %c0_131 = arith.constant 0 : index
    %170 = tpu.strided_load %arg12[%c28, %c0_131] {strides = array<i32: 44, 1>} : memref<1360x64xf32, #tpu.memory_space<vmem>>, vector<8x64xf32>
    %c29 = arith.constant 29 : index
    %c0_132 = arith.constant 0 : index
    %171 = tpu.strided_load %arg12[%c29, %c0_132] {strides = array<i32: 44, 1>} : memref<1360x64xf32, #tpu.memory_space<vmem>>, vector<8x64xf32>
    %172 = arith.maximumf %170, %171 : vector<8x64xf32>
    %173 = arith.truncf %172 : vector<8x64xf32> to vector<8x64xbf16>
    %c896 = arith.constant 896 : index
    %c0_133 = arith.constant 0 : index
    %174 = vector.load %arg6[%c896, %c0_133] : memref<1344x128xbf16, #tpu.memory_space<vmem>>, vector<64x128xbf16>
    %cst_134 = arith.constant dense<0.000000e+00> : vector<8x128xf32>
    %175 = tpu.matmul %173, %174, %cst_134 {dimension_numbers = #tpu.dot_dimension_numbers<[1], [0], [0], [1], [0, 0, 1, 1], [], []>} : vector<8x64xbf16>, vector<64x128xbf16>, vector<8x128xf32> -> vector<8x128xf32>
    %176 = arith.addf %169, %175 : vector<8x128xf32>
    %c30 = arith.constant 30 : index
    %c0_135 = arith.constant 0 : index
    %177 = tpu.strided_load %arg12[%c30, %c0_135] {strides = array<i32: 44, 1>} : memref<1360x64xf32, #tpu.memory_space<vmem>>, vector<8x64xf32>
    %c31 = arith.constant 31 : index
    %c0_136 = arith.constant 0 : index
    %178 = tpu.strided_load %arg12[%c31, %c0_136] {strides = array<i32: 44, 1>} : memref<1360x64xf32, #tpu.memory_space<vmem>>, vector<8x64xf32>
    %179 = arith.maximumf %177, %178 : vector<8x64xf32>
    %180 = arith.truncf %179 : vector<8x64xf32> to vector<8x64xbf16>
    %c960 = arith.constant 960 : index
    %c0_137 = arith.constant 0 : index
    %181 = vector.load %arg6[%c960, %c0_137] : memref<1344x128xbf16, #tpu.memory_space<vmem>>, vector<64x128xbf16>
    %cst_138 = arith.constant dense<0.000000e+00> : vector<8x128xf32>
    %182 = tpu.matmul %180, %181, %cst_138 {dimension_numbers = #tpu.dot_dimension_numbers<[1], [0], [0], [1], [0, 0, 1, 1], [], []>} : vector<8x64xbf16>, vector<64x128xbf16>, vector<8x128xf32> -> vector<8x128xf32>
    %183 = arith.addf %176, %182 : vector<8x128xf32>
    %c32 = arith.constant 32 : index
    %c0_139 = arith.constant 0 : index
    %184 = tpu.strided_load %arg12[%c32, %c0_139] {strides = array<i32: 44, 1>} : memref<1360x64xf32, #tpu.memory_space<vmem>>, vector<8x64xf32>
    %c33 = arith.constant 33 : index
    %c0_140 = arith.constant 0 : index
    %185 = tpu.strided_load %arg12[%c33, %c0_140] {strides = array<i32: 44, 1>} : memref<1360x64xf32, #tpu.memory_space<vmem>>, vector<8x64xf32>
    %186 = arith.maximumf %184, %185 : vector<8x64xf32>
    %187 = arith.truncf %186 : vector<8x64xf32> to vector<8x64xbf16>
    %c1024 = arith.constant 1024 : index
    %c0_141 = arith.constant 0 : index
    %188 = vector.load %arg6[%c1024, %c0_141] : memref<1344x128xbf16, #tpu.memory_space<vmem>>, vector<64x128xbf16>
    %cst_142 = arith.constant dense<0.000000e+00> : vector<8x128xf32>
    %189 = tpu.matmul %187, %188, %cst_142 {dimension_numbers = #tpu.dot_dimension_numbers<[1], [0], [0], [1], [0, 0, 1, 1], [], []>} : vector<8x64xbf16>, vector<64x128xbf16>, vector<8x128xf32> -> vector<8x128xf32>
    %190 = arith.addf %183, %189 : vector<8x128xf32>
    %c34 = arith.constant 34 : index
    %c0_143 = arith.constant 0 : index
    %191 = tpu.strided_load %arg12[%c34, %c0_143] {strides = array<i32: 44, 1>} : memref<1360x64xf32, #tpu.memory_space<vmem>>, vector<8x64xf32>
    %c35 = arith.constant 35 : index
    %c0_144 = arith.constant 0 : index
    %192 = tpu.strided_load %arg12[%c35, %c0_144] {strides = array<i32: 44, 1>} : memref<1360x64xf32, #tpu.memory_space<vmem>>, vector<8x64xf32>
    %193 = arith.maximumf %191, %192 : vector<8x64xf32>
    %194 = arith.truncf %193 : vector<8x64xf32> to vector<8x64xbf16>
    %c1088 = arith.constant 1088 : index
    %c0_145 = arith.constant 0 : index
    %195 = vector.load %arg6[%c1088, %c0_145] : memref<1344x128xbf16, #tpu.memory_space<vmem>>, vector<64x128xbf16>
    %cst_146 = arith.constant dense<0.000000e+00> : vector<8x128xf32>
    %196 = tpu.matmul %194, %195, %cst_146 {dimension_numbers = #tpu.dot_dimension_numbers<[1], [0], [0], [1], [0, 0, 1, 1], [], []>} : vector<8x64xbf16>, vector<64x128xbf16>, vector<8x128xf32> -> vector<8x128xf32>
    %197 = arith.addf %190, %196 : vector<8x128xf32>
    %c36 = arith.constant 36 : index
    %c0_147 = arith.constant 0 : index
    %198 = tpu.strided_load %arg12[%c36, %c0_147] {strides = array<i32: 44, 1>} : memref<1360x64xf32, #tpu.memory_space<vmem>>, vector<8x64xf32>
    %c37 = arith.constant 37 : index
    %c0_148 = arith.constant 0 : index
    %199 = tpu.strided_load %arg12[%c37, %c0_148] {strides = array<i32: 44, 1>} : memref<1360x64xf32, #tpu.memory_space<vmem>>, vector<8x64xf32>
    %200 = arith.maximumf %198, %199 : vector<8x64xf32>
    %201 = arith.truncf %200 : vector<8x64xf32> to vector<8x64xbf16>
    %c1152 = arith.constant 1152 : index
    %c0_149 = arith.constant 0 : index
    %202 = vector.load %arg6[%c1152, %c0_149] : memref<1344x128xbf16, #tpu.memory_space<vmem>>, vector<64x128xbf16>
    %cst_150 = arith.constant dense<0.000000e+00> : vector<8x128xf32>
    %203 = tpu.matmul %201, %202, %cst_150 {dimension_numbers = #tpu.dot_dimension_numbers<[1], [0], [0], [1], [0, 0, 1, 1], [], []>} : vector<8x64xbf16>, vector<64x128xbf16>, vector<8x128xf32> -> vector<8x128xf32>
    %204 = arith.addf %197, %203 : vector<8x128xf32>
    %c38 = arith.constant 38 : index
    %c0_151 = arith.constant 0 : index
    %205 = tpu.strided_load %arg12[%c38, %c0_151] {strides = array<i32: 44, 1>} : memref<1360x64xf32, #tpu.memory_space<vmem>>, vector<8x64xf32>
    %c39 = arith.constant 39 : index
    %c0_152 = arith.constant 0 : index
    %206 = tpu.strided_load %arg12[%c39, %c0_152] {strides = array<i32: 44, 1>} : memref<1360x64xf32, #tpu.memory_space<vmem>>, vector<8x64xf32>
    %207 = arith.maximumf %205, %206 : vector<8x64xf32>
    %208 = arith.truncf %207 : vector<8x64xf32> to vector<8x64xbf16>
    %c1216 = arith.constant 1216 : index
    %c0_153 = arith.constant 0 : index
    %209 = vector.load %arg6[%c1216, %c0_153] : memref<1344x128xbf16, #tpu.memory_space<vmem>>, vector<64x128xbf16>
    %cst_154 = arith.constant dense<0.000000e+00> : vector<8x128xf32>
    %210 = tpu.matmul %208, %209, %cst_154 {dimension_numbers = #tpu.dot_dimension_numbers<[1], [0], [0], [1], [0, 0, 1, 1], [], []>} : vector<8x64xbf16>, vector<64x128xbf16>, vector<8x128xf32> -> vector<8x128xf32>
    %211 = arith.addf %204, %210 : vector<8x128xf32>
    %c40 = arith.constant 40 : index
    %c0_155 = arith.constant 0 : index
    %212 = tpu.strided_load %arg12[%c40, %c0_155] {strides = array<i32: 44, 1>} : memref<1360x64xf32, #tpu.memory_space<vmem>>, vector<8x64xf32>
    %c41 = arith.constant 41 : index
    %c0_156 = arith.constant 0 : index
    %213 = tpu.strided_load %arg12[%c41, %c0_156] {strides = array<i32: 44, 1>} : memref<1360x64xf32, #tpu.memory_space<vmem>>, vector<8x64xf32>
    %214 = arith.maximumf %212, %213 : vector<8x64xf32>
    %215 = arith.truncf %214 : vector<8x64xf32> to vector<8x64xbf16>
    %c1280 = arith.constant 1280 : index
    %c0_157 = arith.constant 0 : index
    %216 = vector.load %arg6[%c1280, %c0_157] : memref<1344x128xbf16, #tpu.memory_space<vmem>>, vector<64x128xbf16>
    %cst_158 = arith.constant dense<0.000000e+00> : vector<8x128xf32>
    %217 = tpu.matmul %215, %216, %cst_158 {dimension_numbers = #tpu.dot_dimension_numbers<[1], [0], [0], [1], [0, 0, 1, 1], [], []>} : vector<8x64xbf16>, vector<64x128xbf16>, vector<8x128xf32> -> vector<8x128xf32>
    %218 = arith.addf %211, %217 : vector<8x128xf32>
    %c0_159 = arith.constant 0 : index
    %c0_160 = arith.constant 0 : index
    %219 = vector.load %arg7[%c0_159, %c0_160] : memref<1x128xf32, #tpu.memory_space<vmem>>, vector<1x128xf32>
    %220 = vector.broadcast %219 : vector<1x128xf32> to vector<8x128xf32>
    %221 = arith.addf %218, %220 : vector<8x128xf32>
    %cst_161 = arith.constant 0.000000e+00 : f32
    %222 = vector.broadcast %cst_161 : f32 to vector<8x128xf32>
    %223 = arith.maximumf %221, %222 : vector<8x128xf32>
    %224 = arith.truncf %223 : vector<8x128xf32> to vector<8x128xbf16>
    %c0_162 = arith.constant 0 : index
    %c0_163 = arith.constant 0 : index
    %225 = vector.load %arg8[%c0_162, %c0_163] : memref<128x64xbf16, #tpu.memory_space<vmem>>, vector<128x64xbf16>
    %cst_164 = arith.constant dense<0.000000e+00> : vector<8x64xf32>
    %226 = tpu.matmul %224, %225, %cst_164 {dimension_numbers = #tpu.dot_dimension_numbers<[1], [0], [0], [1], [0, 0, 1, 1], [], []>} : vector<8x128xbf16>, vector<128x64xbf16>, vector<8x64xf32> -> vector<8x64xf32>
    %c3_165 = arith.constant 3 : index
    %c0_166 = arith.constant 0 : index
    %227 = vector.load %arg5[%c3_165, %c0_166] : memref<6x64xf32, #tpu.memory_space<vmem>>, vector<1x64xf32>
    %228 = vector.broadcast %227 : vector<1x64xf32> to vector<8x64xf32>
    %229 = arith.addf %226, %228 : vector<8x64xf32>
    %cst_167 = arith.constant 0.000000e+00 : f32
    %230 = vector.broadcast %cst_167 : f32 to vector<8x64xf32>
    %231 = arith.maximumf %229, %230 : vector<8x64xf32>
    %cst_168 = arith.constant dense<0.000000e+00> : vector<8xf32>
    %232 = vector.multi_reduction <add>, %231, %cst_168 [1] : vector<8x64xf32> to vector<8xf32>
    %233 = vector.shape_cast %232 : vector<8xf32> to vector<8x1xf32>
    %cst_169 = arith.constant 6.400000e+01 : f32
    %234 = vector.broadcast %cst_169 : f32 to vector<8x1xf32>
    %235 = arith.divf %233, %234 : vector<8x1xf32>
    %236 = vector.broadcast %235 : vector<8x1xf32> to vector<8x64xf32>
    %237 = arith.subf %231, %236 : vector<8x64xf32>
    %238 = arith.mulf %237, %237 : vector<8x64xf32>
    %cst_170 = arith.constant dense<0.000000e+00> : vector<8xf32>
    %239 = vector.multi_reduction <add>, %238, %cst_170 [1] : vector<8x64xf32> to vector<8xf32>
    %240 = vector.shape_cast %239 : vector<8xf32> to vector<8x1xf32>
    %cst_171 = arith.constant 6.400000e+01 : f32
    %241 = vector.broadcast %cst_171 : f32 to vector<8x1xf32>
    %242 = arith.divf %240, %241 : vector<8x1xf32>
    %cst_172 = arith.constant 9.99999974E-6 : f32
    %243 = vector.broadcast %cst_172 : f32 to vector<8x1xf32>
    %244 = arith.addf %242, %243 : vector<8x1xf32>
    %245 = math.rsqrt %244 : vector<8x1xf32>
    %246 = vector.broadcast %245 : vector<8x1xf32> to vector<8x64xf32>
    %247 = arith.mulf %237, %246 : vector<8x64xf32>
    %c4_173 = arith.constant 4 : index
    %c0_174 = arith.constant 0 : index
    %248 = vector.load %arg5[%c4_173, %c0_174] : memref<6x64xf32, #tpu.memory_space<vmem>>, vector<1x64xf32>
    %249 = vector.broadcast %248 : vector<1x64xf32> to vector<8x64xf32>
    %250 = arith.mulf %247, %249 : vector<8x64xf32>
    %c5_175 = arith.constant 5 : index
    %c0_176 = arith.constant 0 : index
    %251 = vector.load %arg5[%c5_175, %c0_176] : memref<6x64xf32, #tpu.memory_space<vmem>>, vector<1x64xf32>
    %252 = vector.broadcast %251 : vector<1x64xf32> to vector<8x64xf32>
    %253 = arith.addf %250, %252 : vector<8x64xf32>
    %254 = arith.truncf %253 : vector<8x64xf32> to vector<8x64xbf16>
    %c0_177 = arith.constant 0 : index
    %c0_178 = arith.constant 0 : index
    %255 = vector.load %arg9[%c0_177, %c0_178] : memref<64x48xbf16, #tpu.memory_space<vmem>>, vector<64x48xbf16>
    %cst_179 = arith.constant dense<0.000000e+00> : vector<8x48xf32>
    %256 = tpu.matmul %254, %255, %cst_179 {dimension_numbers = #tpu.dot_dimension_numbers<[1], [0], [0], [1], [0, 0, 1, 1], [], []>} : vector<8x64xbf16>, vector<64x48xbf16>, vector<8x48xf32> -> vector<8x48xf32>
    %c0_180 = arith.constant 0 : index
    %c0_181 = arith.constant 0 : index
    %257 = vector.load %arg10[%c0_180, %c0_181] : memref<1x48xf32, #tpu.memory_space<vmem>>, vector<1x48xf32>
    %258 = vector.broadcast %257 : vector<1x48xf32> to vector<8x48xf32>
    %259 = arith.addf %256, %258 : vector<8x48xf32>
    %c0_182 = arith.constant 0 : index
    %c0_183 = arith.constant 0 : index
    %260 = vector.load %arg11[%c0_182, %c0_183] : memref<8x48xf32, #tpu.memory_space<vmem>>, vector<8x48xf32>
    tpu.vector_store %arg11[%c0_182, %c0_183], %259 {strides = array<i32>} : memref<8x48xf32, #tpu.memory_space<vmem>>, vector<8x48xf32>,
    return
  }
  func.func @transform_0(%arg0: i32) -> (i32, i32) {
    %c0_i32 = arith.constant 0 : i32
    %c0_i32_0 = arith.constant 0 : i32
    return %arg0, %c0_i32 : i32, i32
  }
  func.func @transform_1(%arg0: i32) -> (i32, i32, i32) {
    %c0_i32 = arith.constant 0 : i32
    %c0_i32_0 = arith.constant 0 : i32
    %c0_i32_1 = arith.constant 0 : i32
    %c0_i32_2 = arith.constant 0 : i32
    return %c0_i32, %c0_i32_0, %c0_i32_1 : i32, i32, i32
  }
  func.func @transform_2(%arg0: i32) -> (i32, i32, i32) {
    %c0_i32 = arith.constant 0 : i32
    %c0_i32_0 = arith.constant 0 : i32
    %c0_i32_1 = arith.constant 0 : i32
    %c0_i32_2 = arith.constant 0 : i32
    return %c0_i32, %c0_i32_0, %c0_i32_1 : i32, i32, i32
  }
  func.func @transform_3(%arg0: i32) -> (i32, i32, i32) {
    %c0_i32 = arith.constant 0 : i32
    %c0_i32_0 = arith.constant 0 : i32
    %c0_i32_1 = arith.constant 0 : i32
    %c0_i32_2 = arith.constant 0 : i32
    return %c0_i32, %c0_i32_0, %c0_i32_1 : i32, i32, i32
  }
  func.func @transform_4(%arg0: i32) -> (i32, i32) {
    %c0_i32 = arith.constant 0 : i32
    %c0_i32_0 = arith.constant 0 : i32
    %c0_i32_1 = arith.constant 0 : i32
    return %c0_i32, %c0_i32_0 : i32, i32
  }
  func.func @transform_5(%arg0: i32) -> (i32, i32) {
    %c0_i32 = arith.constant 0 : i32
    %c0_i32_0 = arith.constant 0 : i32
    %c0_i32_1 = arith.constant 0 : i32
    return %c0_i32, %c0_i32_0 : i32, i32
  }
  func.func @transform_6(%arg0: i32) -> (i32, i32) {
    %c0_i32 = arith.constant 0 : i32
    %c0_i32_0 = arith.constant 0 : i32
    %c0_i32_1 = arith.constant 0 : i32
    return %c0_i32, %c0_i32_0 : i32, i32
  }
  func.func @transform_7(%arg0: i32) -> (i32, i32) {
    %c0_i32 = arith.constant 0 : i32
    %c0_i32_0 = arith.constant 0 : i32
    %c0_i32_1 = arith.constant 0 : i32
    return %c0_i32, %c0_i32_0 : i32, i32
  }
  func.func @transform_8(%arg0: i32) -> (i32, i32) {
    %c0_i32 = arith.constant 0 : i32
    %c0_i32_0 = arith.constant 0 : i32
    %c0_i32_1 = arith.constant 0 : i32
    return %c0_i32, %c0_i32_0 : i32, i32
  }
  func.func @transform_9(%arg0: i32) -> (i32, i32) {
    %c0_i32 = arith.constant 0 : i32
    %c0_i32_0 = arith.constant 0 : i32
    %c0_i32_1 = arith.constant 0 : i32
    return %c0_i32, %c0_i32_0 : i32, i32
  }
  func.func @transform_10(%arg0: i32) -> (i32, i32) {
    %c0_i32 = arith.constant 0 : i32
    %c0_i32_0 = arith.constant 0 : i32
    return %arg0, %c0_i32 : i32, i32
  }
}

</mosaic_0001>

<llo_original>
// kernel: _lambda_.1
$region0: #{_lambda_.1}
  #allocation0 [shape = 'u32[]', space=smem, size = 0x4, offset = 0x4, fixed_abs, tag = 'smem constant byte address 0x4 - core index']
  #allocation1 [shape = 'u32[144,128]{1,0:T(1,128)}', space=vmem, size = 0x12000, scoped, tag = 'internal scratch']
  #allocation2 [shape = 'f32[1360,64]{1,0:T(8,128)}', space=vmem, size = 0xaa000, scoped, tag = 'scratch operand']
  #allocation3 [shape = 'f32[688,64]{1,0:T(8,128)}', space=vmem, size = 0x56000, scoped, tag = 'scratch operand']
  #allocation4 [shape = 'f32[352,64]{1,0:T(8,128)}', space=vmem, size = 0x2c000, scoped, tag = 'scratch operand']
  %s0 = inlined_call_operand.vmem [shape: f32[2720,8], index: 0, kind: input, shape index: {}]
  %s1 = inlined_call_operand.vmem [shape: bf16[3,8,64], index: 1, kind: input, shape index: {}]
  %s2 = inlined_call_operand.vmem [shape: bf16[3,64,64], index: 2, kind: input, shape index: {}]
  %s3 = inlined_call_operand.vmem [shape: bf16[3,64,64], index: 3, kind: input, shape index: {}]
  %s4 = inlined_call_operand.vmem [shape: f32[6,64], index: 4, kind: input, shape index: {}]
  %s5 = inlined_call_operand.vmem [shape: bf16[1344,128], index: 5, kind: input, shape index: {}]
  %s6 = inlined_call_operand.vmem [shape: f32[1,128], index: 6, kind: input, shape index: {}]
  %s7 = inlined_call_operand.vmem [shape: bf16[128,64], index: 7, kind: input, shape index: {}]
  %s8 = inlined_call_operand.vmem [shape: bf16[64,48], index: 8, kind: input, shape index: {}]
  %s9 = inlined_call_operand.vmem [shape: f32[1,48], index: 9, kind: input, shape index: {}]
  %s10 = inlined_call_operand.hbm [shape: f32[16,48], index: 10, kind: output, shape index: {}]
  %s11 = sld [smem:[#allocation0]]
  $region87: #{_lambda_.1} parent=0
    _
  %s13 = ssub.s32 1, %s11
  %s14 = scalar_select 0, %s13, %s11
  $region1: #{_lambda_.1} parent=0
    #allocation5 [shape = 'u8[8192]{0}', space=vmem, size = 0x2000, scoped, tag = 'output window, operand 0']
    #allocation6 [shape = 's32[2]{0}', space=sflag, size = 0x8, scoped, tag = 'scoped memory for _lambda_.1']
    %15 = vsyncpa [#allocation6], 0
    %s16 = scalar_lea.sflag [#allocation6], 1
    %17 = vsyncpa %s16, 0
    loop: start=0, step=1, limit=4
    $region2: #{_lambda_.1} parent=1 // loop_pre_header
      _
    $region3: #{_lambda_.1} parent=1 // loop_header
      %s19 = sphi 0, %s23
      %p20 = scmp.ge.s32.totalorder %s19, 4
      %s29 = sphi 0, %s31
      %s32 = sphi 0, %s29
      %s33 = sphi 0, %s32
      %s49 = sphi 0, %s33
      %s53 = sphi 0, %s53
      %s55 = sphi 0, %s53
      %s56 = sphi 0, %s55
      %s70 = sphi 0, %s56
      %s74 = sphi 0, %s74
      %s76 = sphi 0, %s74
      %s77 = sphi 0, %s76
      %s91 = sphi 0, %s77
      %s95 = sphi 0, %s95
      %s97 = sphi 0, %s95
      %s98 = sphi 0, %s97
      %s112 = sphi 0, %s98
      %s116 = sphi 0, %s116
      %s118 = sphi 0, %s116
      %s119 = sphi 0, %s118
      %s133 = sphi 0, %s119
      %s137 = sphi 0, %s137
      %s139 = sphi 0, %s137
      %s140 = sphi 0, %s139
      %s154 = sphi 0, %s140
      %s158 = sphi 0, %s158
      %s160 = sphi 0, %s158
      %s161 = sphi 0, %s160
      %s175 = sphi 0, %s161
      %s179 = sphi 0, %s179
      %s181 = sphi 0, %s179
      %s182 = sphi 0, %s181
      %s196 = sphi 0, %s182
      %s200 = sphi 0, %s200
      %s202 = sphi 0, %s200
      %s203 = sphi 0, %s202
      %s217 = sphi 0, %s203
      %s221 = sphi 0, %s221
      %s223 = sphi 0, %s221
      %s224 = sphi 0, %s223
      %s238 = sphi 0, %s224
      %s244 = sphi 0, %s246
      %s247 = sphi 0, %s244
      %s248 = sphi 0, %s247
      %s264 = sphi 0, %s248
    $region4: #{_lambda_.1} parent=1 // loop_header_branch
      %22 = sbr.rel (%p20) target = $region8
    $region5: #{_lambda_.1} parent=1 // loop_body
      %s24 = ssub.s32 %s19, 1
      %s25 = ssub.s32 %s19, 2
      %s26 = sadd.s32 %s19, 1
      %s27 = ssub.s32 %s19, %s26
      %p28 = scmp.eq.s32.totalorder %s27, 0
      %s30 = sadd.s32 %s29, 1
      %s31 = scalar_select %p28, %s29, %s30
      %p34 = pneg %p28
      %p35 = scmp.eq.s32.totalorder %s19, 1
      %p36 = por %p34, %p35
      %p37 = scmp.ne.s32.totalorder %s29, %s32
      %p38 = scmp.eq.s32.totalorder %s19, 0
      %p39 = por %p37, %p38
      %p40 = scmp.ne.s32.totalorder %s29, %s32
      %p41 = scmp.eq.s32.totalorder %s24, 1
      %p42 = por %p40, %p41
      %p43 = scmp.ne.s32.totalorder %s32, %s33
      %p44 = scmp.eq.s32.totalorder %s24, 0
      %p45 = por %p43, %p44
      %p46 = scmp.ne.s32.totalorder %s32, %s33
      %p47 = scmp.eq.s32.totalorder %s25, 1
      %p48 = por %p46, %p47
      %p50 = scmp.ne.s32.totalorder %s33, %s49
      %p51 = scmp.eq.s32.totalorder %s25, 0
      %p52 = por %p50, %p51
      %s54 = sadd.s32 %s53, 1
      %p57 = scmp.eq.s32.totalorder %s19, 1
      %p58 = scmp.ne.s32.totalorder %s53, %s55
      %p59 = scmp.eq.s32.totalorder %s19, 0
      %p60 = por %p58, %p59
      %p61 = scmp.ne.s32.totalorder %s53, %s55
      %p62 = scmp.eq.s32.totalorder %s24, 1
      %p63 = por %p61, %p62
      %p64 = scmp.ne.s32.totalorder %s55, %s56
      %p65 = scmp.eq.s32.totalorder %s24, 0
      %p66 = por %p64, %p65
      %p67 = scmp.ne.s32.totalorder %s55, %s56
      %p68 = scmp.eq.s32.totalorder %s25, 1
      %p69 = por %p67, %p68
      %p71 = scmp.ne.s32.totalorder %s56, %s70
      %p72 = scmp.eq.s32.totalorder %s25, 0
      %p73 = por %p71, %p72
      %s75 = sadd.s32 %s74, 1
      %p78 = scmp.eq.s32.totalorder %s19, 1
      %p79 = scmp.ne.s32.totalorder %s74, %s76
      %p80 = scmp.eq.s32.totalorder %s19, 0
      %p81 = por %p79, %p80
      %p82 = scmp.ne.s32.totalorder %s74, %s76
      %p83 = scmp.eq.s32.totalorder %s24, 1
      %p84 = por %p82, %p83
      %p85 = scmp.ne.s32.totalorder %s76, %s77
      %p86 = scmp.eq.s32.totalorder %s24, 0
      %p87 = por %p85, %p86
      %p88 = scmp.ne.s32.totalorder %s76, %s77
      %p89 = scmp.eq.s32.totalorder %s25, 1
      %p90 = por %p88, %p89
      %p92 = scmp.ne.s32.totalorder %s77, %s91
      %p93 = scmp.eq.s32.totalorder %s25, 0
      %p94 = por %p92, %p93
      %s96 = sadd.s32 %s95, 1
      %p99 = scmp.eq.s32.totalorder %s19, 1
      %p100 = scmp.ne.s32.totalorder %s95, %s97
      %p101 = scmp.eq.s32.totalorder %s19, 0
      %p102 = por %p100, %p101
      %p103 = scmp.ne.s32.totalorder %s95, %s97
      %p104 = scmp.eq.s32.totalorder %s24, 1
      %p105 = por %p103, %p104
      %p106 = scmp.ne.s32.totalorder %s97, %s98
      %p107 = scmp.eq.s32.totalorder %s24, 0
      %p108 = por %p106, %p107
      %p109 = scmp.ne.s32.totalorder %s97, %s98
      %p110 = scmp.eq.s32.totalorder %s25, 1
      %p111 = por %p109, %p110
      %p113 = scmp.ne.s32.totalorder %s98, %s112
      %p114 = scmp.eq.s32.totalorder %s25, 0
      %p115 = por %p113, %p114
      %s117 = sadd.s32 %s116, 1
      %p120 = scmp.eq.s32.totalorder %s19, 1
      %p121 = scmp.ne.s32.totalorder %s116, %s118
      %p122 = scmp.eq.s32.totalorder %s19, 0
      %p123 = por %p121, %p122
      %p124 = scmp.ne.s32.totalorder %s116, %s118
      %p125 = scmp.eq.s32.totalorder %s24, 1
      %p126 = por %p124, %p125
      %p127 = scmp.ne.s32.totalorder %s118, %s119
      %p128 = scmp.eq.s32.totalorder %s24, 0
      %p129 = por %p127, %p128
      %p130 = scmp.ne.s32.totalorder %s118, %s119
      %p131 = scmp.eq.s32.totalorder %s25, 1
      %p132 = por %p130, %p131
      %p134 = scmp.ne.s32.totalorder %s119, %s133
      %p135 = scmp.eq.s32.totalorder %s25, 0
      %p136 = por %p134, %p135
      %s138 = sadd.s32 %s137, 1
      %p141 = scmp.eq.s32.totalorder %s19, 1
      %p142 = scmp.ne.s32.totalorder %s137, %s139
      %p143 = scmp.eq.s32.totalorder %s19, 0
      %p144 = por %p142, %p143
      %p145 = scmp.ne.s32.totalorder %s137, %s139
      %p146 = scmp.eq.s32.totalorder %s24, 1
      %p147 = por %p145, %p146
      %p148 = scmp.ne.s32.totalorder %s139, %s140
      %p149 = scmp.eq.s32.totalorder %s24, 0
      %p150 = por %p148, %p149
      %p151 = scmp.ne.s32.totalorder %s139, %s140
      %p152 = scmp.eq.s32.totalorder %s25, 1
      %p153 = por %p151, %p152
      %p155 = scmp.ne.s32.totalorder %s140, %s154
      %p156 = scmp.eq.s32.totalorder %s25, 0
      %p157 = por %p155, %p156
      %s159 = sadd.s32 %s158, 1
      %p162 = scmp.eq.s32.totalorder %s19, 1
      %p163 = scmp.ne.s32.totalorder %s158, %s160
      %p164 = scmp.eq.s32.totalorder %s19, 0
      %p165 = por %p163, %p164
      %p166 = scmp.ne.s32.totalorder %s158, %s160
      %p167 = scmp.eq.s32.totalorder %s24, 1
      %p168 = por %p166, %p167
      %p169 = scmp.ne.s32.totalorder %s160, %s161
      %p170 = scmp.eq.s32.totalorder %s24, 0
      %p171 = por %p169, %p170
      %p172 = scmp.ne.s32.totalorder %s160, %s161
      %p173 = scmp.eq.s32.totalorder %s25, 1
      %p174 = por %p172, %p173
      %p176 = scmp.ne.s32.totalorder %s161, %s175
      %p177 = scmp.eq.s32.totalorder %s25, 0
      %p178 = por %p176, %p177
      %s180 = sadd.s32 %s179, 1
      %p183 = scmp.eq.s32.totalorder %s19, 1
      %p184 = scmp.ne.s32.totalorder %s179, %s181
      %p185 = scmp.eq.s32.totalorder %s19, 0
      %p186 = por %p184, %p185
      %p187 = scmp.ne.s32.totalorder %s179, %s181
      %p188 = scmp.eq.s32.totalorder %s24, 1
      %p189 = por %p187, %p188
      %p190 = scmp.ne.s32.totalorder %s181, %s182
      %p191 = scmp.eq.s32.totalorder %s24, 0
      %p192 = por %p190, %p191
      %p193 = scmp.ne.s32.totalorder %s181, %s182
      %p194 = scmp.eq.s32.totalorder %s25, 1
      %p195 = por %p193, %p194
      %p197 = scmp.ne.s32.totalorder %s182, %s196
      %p198 = scmp.eq.s32.totalorder %s25, 0
      %p199 = por %p197, %p198
      %s201 = sadd.s32 %s200, 1
      %p204 = scmp.eq.s32.totalorder %s19, 1
      %p205 = scmp.ne.s32.totalorder %s200, %s202
      %p206 = scmp.eq.s32.totalorder %s19, 0
      %p207 = por %p205, %p206
      %p208 = scmp.ne.s32.totalorder %s200, %s202
      %p209 = scmp.eq.s32.totalorder %s24, 1
      %p210 = por %p208, %p209
      %p211 = scmp.ne.s32.totalorder %s202, %s203
      %p212 = scmp.eq.s32.totalorder %s24, 0
      %p213 = por %p211, %p212
      %p214 = scmp.ne.s32.totalorder %s202, %s203
      %p215 = scmp.eq.s32.totalorder %s25, 1
      %p216 = por %p214, %p215
      %p218 = scmp.ne.s32.totalorder %s203, %s217
      %p219 = scmp.eq.s32.totalorder %s25, 0
      %p220 = por %p218, %p219
      %s222 = sadd.s32 %s221, 1
      %p225 = scmp.eq.s32.totalorder %s19, 1
      %p226 = scmp.ne.s32.totalorder %s221, %s223
      %p227 = scmp.eq.s32.totalorder %s19, 0
      %p228 = por %p226, %p227
      %p229 = scmp.ne.s32.totalorder %s221, %s223
      %p230 = scmp.eq.s32.totalorder %s24, 1
      %p231 = por %p229, %p230
      %p232 = scmp.ne.s32.totalorder %s223, %s224
      %p233 = scmp.eq.s32.totalorder %s24, 0
      %p234 = por %p232, %p233
      %p235 = scmp.ne.s32.totalorder %s223, %s224
      %p236 = scmp.eq.s32.totalorder %s25, 1
      %p237 = por %p235, %p236
      %p239 = scmp.ne.s32.totalorder %s224, %s238
      %p240 = scmp.eq.s32.totalorder %s25, 0
      %p241 = por %p239, %p240
      %s242 = ssub.s32 %s19, %s26
      %p243 = scmp.eq.s32.totalorder %s242, 0
      %s245 = sadd.s32 %s244, 1
      %s246 = scalar_select %p243, %s244, %s245
      %p249 = pneg %p243
      %p250 = scmp.eq.s32.totalorder %s19, 1
      %p251 = por %p249, %p250
      %p252 = scmp.ne.s32.totalorder %s244, %s247
      %p253 = scmp.eq.s32.totalorder %s19, 0
      %p254 = por %p252, %p253
      %p255 = scmp.ne.s32.totalorder %s244, %s247
      %p256 = scmp.eq.s32.totalorder %s24, 1
      %p257 = por %p255, %p256
      %p258 = scmp.ne.s32.totalorder %s247, %s248
      %p259 = scmp.eq.s32.totalorder %s24, 0
      %p260 = por %p258, %p259
      %p261 = scmp.ne.s32.totalorder %s247, %s248
      %p262 = scmp.eq.s32.totalorder %s25, 1
      %p263 = por %p261, %p262
      %p265 = scmp.ne.s32.totalorder %s248, %s264
      %p266 = scmp.eq.s32.totalorder %s25, 0
      %p267 = por %p265, %p266
      %p268 = scmp.le.s32.totalorder 1, %s19
      %p269 = scmp.lt.s32.totalorder %s19, 3
      %p270 = pnand %p268, %p269
      %p271 = pneg %p270
      // Predicated region
      $region9: #{_lambda_.1} parent=5 // pred_check
        _
      $region10: #{_lambda_.1} parent=5 // pred_check_branch
        %273 = sbr.rel (%p270) target = $region12
      $region11: #{_lambda_.1} parent=5 // pred_region
        %s274 = ssub.s32 %s19, 1
        // Predicated region
        $region13: #{_lambda_.1} parent=11 // pred_check
          %p275 = pneg %p66
        $region14: #{_lambda_.1} parent=11 // pred_check_branch
          %277 = sbr.rel (%p275) target = $region16
        $region15: #{_lambda_.1} parent=11 // pred_region
          _
        $region16: #{_lambda_.1} parent=11 // pred_fallthru
          _
        // Predicated region
        $region17: #{_lambda_.1} parent=11 // pred_check
          %p278 = pneg %p87
        $region18: #{_lambda_.1} parent=11 // pred_check_branch
          %280 = sbr.rel (%p278) target = $region20
        $region19: #{_lambda_.1} parent=11 // pred_region
          _
        $region20: #{_lambda_.1} parent=11 // pred_fallthru
          _
        // Predicated region
        $region21: #{_lambda_.1} parent=11 // pred_check
          %p281 = pneg %p108
        $region22: #{_lambda_.1} parent=11 // pred_check_branch
          %283 = sbr.rel (%p281) target = $region24
        $region23: #{_lambda_.1} parent=11 // pred_region
          _
        $region24: #{_lambda_.1} parent=11 // pred_fallthru
          _
        // Predicated region
        $region25: #{_lambda_.1} parent=11 // pred_check
          %p284 = pneg %p129
        $region26: #{_lambda_.1} parent=11 // pred_check_branch
          %286 = sbr.rel (%p284) target = $region28
        $region27: #{_lambda_.1} parent=11 // pred_region
          _
        $region28: #{_lambda_.1} parent=11 // pred_fallthru
          _
        // Predicated region
        $region29: #{_lambda_.1} parent=11 // pred_check
          %p287 = pneg %p150
        $region30: #{_lambda_.1} parent=11 // pred_check_branch
          %289 = sbr.rel (%p287) target = $region32
        $region31: #{_lambda_.1} parent=11 // pred_region
          _
        $region32: #{_lambda_.1} parent=11 // pred_fallthru
          _
        // Predicated region
        $region33: #{_lambda_.1} parent=11 // pred_check
          %p290 = pneg %p171
        $region34: #{_lambda_.1} parent=11 // pred_check_branch
          %292 = sbr.rel (%p290) target = $region36
        $region35: #{_lambda_.1} parent=11 // pred_region
          _
        $region36: #{_lambda_.1} parent=11 // pred_fallthru
          _
        // Predicated region
        $region37: #{_lambda_.1} parent=11 // pred_check
          %p293 = pneg %p192
        $region38: #{_lambda_.1} parent=11 // pred_check_branch
          %295 = sbr.rel (%p293) target = $region40
        $region39: #{_lambda_.1} parent=11 // pred_region
          _
        $region40: #{_lambda_.1} parent=11 // pred_fallthru
          _
        // Predicated region
        $region41: #{_lambda_.1} parent=11 // pred_check
          %p296 = pneg %p213
        $region42: #{_lambda_.1} parent=11 // pred_check_branch
          %298 = sbr.rel (%p296) target = $region44
        $region43: #{_lambda_.1} parent=11 // pred_region
          _
        $region44: #{_lambda_.1} parent=11 // pred_fallthru
          _
        // Predicated region
        $region45: #{_lambda_.1} parent=11 // pred_check
          %p299 = pneg %p234
        $region46: #{_lambda_.1} parent=11 // pred_check_branch
          %301 = sbr.rel (%p299) target = $region48
        $region47: #{_lambda_.1} parent=11 // pred_region
          _
        $region48: #{_lambda_.1} parent=11 // pred_fallthru
          _
      $region12: #{_lambda_.1} parent=5 // pred_fallthru
        _
      %p302 = scmp.lt.s32.totalorder %s19, 2
      // Predicated region
      $region49: #{_lambda_.1} parent=5 // pred_check
        %p303 = pneg %p302
      $region50: #{_lambda_.1} parent=5 // pred_check_branch
        %305 = sbr.rel (%p303) target = $region52
      $region51: #{_lambda_.1} parent=5 // pred_region
        // Predicated region
        $region53: #{_lambda_.1} parent=51 // pred_check
          %p306 = pneg %p39
        $region54: #{_lambda_.1} parent=51 // pred_check_branch
          %308 = sbr.rel (%p306) target = $region56
        $region55: #{_lambda_.1} parent=51 // pred_region
          %s309 = smul.u32 170, %s19
          %p310 = scmp.lt.s32.totalorder %s309, 339
          %s311 = scalar_select %p310, %s309, 339
          %s312 = smul.addr %s311, 8
          %s313 = scalar_lea.vmem %s0, %s312
          %s314 = smul.u32 170, %s19
        $region56: #{_lambda_.1} parent=51 // pred_fallthru
          _
      $region52: #{_lambda_.1} parent=5 // pred_fallthru
        _
      %p315 = scmp.le.s32.totalorder 1, %s19
      %p316 = scmp.lt.s32.totalorder %s19, 3
      %p317 = pnand %p315, %p316
      %p318 = pneg %p317
      // Predicated region
      $region57: #{_lambda_.1} parent=5 // pred_check
        _
      $region58: #{_lambda_.1} parent=5 // pred_check_branch
        %320 = sbr.rel (%p317) target = $region60
      $region59: #{_lambda_.1} parent=5 // pred_region
        %s321 = ssub.s32 %s19, 1
        %s322 = smul.u32 170, %s24
        %p323 = scmp.lt.s32.totalorder %s322, 339
        %s324 = scalar_select %p323, %s322, 339
        %s325 = smul.addr %s324, 8
        %s326 = scalar_lea.vmem %s0, %s325
        %p327 = pneg %p45
        %p328 = pneg %p42
        %p329 = pneg %p66
        %p330 = pneg %p63
        %p331 = pneg %p87
        %p332 = pneg %p84
        %p333 = pneg %p108
        %p334 = pneg %p105
        %p335 = pneg %p129
        %p336 = pneg %p126
        %p337 = pneg %p150
        %p338 = pneg %p147
        %p339 = pneg %p171
        %p340 = pneg %p168
        %p341 = pneg %p192
        %p342 = pneg %p189
        %p343 = pneg %p213
        %p344 = pneg %p210
        %p345 = pneg %p234
        %p346 = pneg %p231
        %p347 = pneg %p260
        %p348 = pneg %p257
        %s349 = sand.u32 %s247, 1
        %s350 = scalar_lea.sflag [#allocation6], %s349
        %s351 = sand.u32 %s247, 1
        %s352 = smul.addr %s351, 8
        %s353 = scalar_lea.vmem [#allocation5], %s352
        %s354 = smul.u32 170, %s24
        %p355 = scmp.lt.s32.totalorder %s354, 339
        %s356 = scalar_select %p355, %s354, 339
        %s357 = smul.addr %s356, 8
        %s358 = scalar_lea.vmem %s0, %s357
        %s359 = smul.u32 170, %s24
        %v361 = vld [vmem:[%s4] sm:$0x1]
        %v362 = vld [vmem:[%s358] sm:$0xff]
        %v363 = vld [vmem:[%s358 + $0x8] sm:$0xff]
        %v364 = vld [vmem:[%s358 + $0x10] sm:$0xff]
        %v365 = vld [vmem:[%s358 + $0x18] sm:$0xff]
        %v366 = vld [vmem:[%s358 + $0x20] sm:$0xff]
        %v367 = vld [vmem:[%s358 + $0x28] sm:$0xff]
        %v368 = vld [vmem:[%s358 + $0x30] sm:$0xff]
        %v369 = vld [vmem:[%s358 + $0x38] sm:$0xff]
        %v370 = vld [vmem:[%s358 + $0x40] sm:$0xff]
        %v371 = vld [vmem:[%s358 + $0x48] sm:$0xff]
        %v372 = vld [vmem:[%s358 + $0x50] sm:$0xff]
        %v373 = vld [vmem:[%s358 + $0x58] sm:$0xff]
        %v374 = vld [vmem:[%s358 + $0x60] sm:$0xff]
        %v375 = vld [vmem:[%s358 + $0x68] sm:$0xff]
        %v376 = vld [vmem:[%s358 + $0x70] sm:$0xff]
        %v377 = vld [vmem:[%s358 + $0x78] sm:$0xff]
        %v378 = vld [vmem:[%s358 + $0x80] sm:$0xff]
        %v379 = vld [vmem:[%s358 + $0x88] sm:$0xff]
        %v380 = vld [vmem:[%s358 + $0x90] sm:$0xff]
        %v381 = vld [vmem:[%s358 + $0x98] sm:$0xff]
        %v382 = vld [vmem:[%s358 + $0xa0] sm:$0xff]
        %v383 = vld [vmem:[%s358 + $0xa8] sm:$0xff]
        %v384 = vld [vmem:[%s358 + $0xb0] sm:$0xff]
        %v385 = vld [vmem:[%s358 + $0xb8] sm:$0xff]
        %v386 = vld [vmem:[%s358 + $0xc0] sm:$0xff]
        %v387 = vld [vmem:[%s358 + $0xc8] sm:$0xff]
        %v388 = vld [vmem:[%s358 + $0xd0] sm:$0xff]
        %v389 = vld [vmem:[%s358 + $0xd8] sm:$0xff]
        %v390 = vld [vmem:[%s358 + $0xe0] sm:$0xff]
        %v391 = vld [vmem:[%s358 + $0xe8] sm:$0xff]
        %v392 = vld [vmem:[%s358 + $0xf0] sm:$0xff]
        %v393 = vld [vmem:[%s358 + $0xf8] sm:$0xff]
        %v394 = vld [vmem:[%s358 + $0x100] sm:$0xff]
        %v395 = vld [vmem:[%s358 + $0x108] sm:$0xff]
        %v396 = vld [vmem:[%s358 + $0x110] sm:$0xff]
        %v397 = vld [vmem:[%s358 + $0x118] sm:$0xff]
        %v398 = vld [vmem:[%s358 + $0x120] sm:$0xff]
        %v399 = vld [vmem:[%s358 + $0x128] sm:$0xff]
        %v400 = vld [vmem:[%s358 + $0x130] sm:$0xff]
        %v401 = vld [vmem:[%s358 + $0x138] sm:$0xff]
        %v402 = vld [vmem:[%s358 + $0x140] sm:$0xff]
        %v403 = vld [vmem:[%s358 + $0x148] sm:$0xff]
        %v404 = vld [vmem:[%s358 + $0x150] sm:$0xff]
        %v405 = vld [vmem:[%s358 + $0x158] sm:$0xff]
        %v406 = vld [vmem:[%s358 + $0x160] sm:$0xff]
        %v407 = vld [vmem:[%s358 + $0x168] sm:$0xff]
        %v408 = vld [vmem:[%s358 + $0x170] sm:$0xff]
        %v409 = vld [vmem:[%s358 + $0x178] sm:$0xff]
        %v410 = vld [vmem:[%s358 + $0x180] sm:$0xff]
        %v411 = vld [vmem:[%s358 + $0x188] sm:$0xff]
        %v412 = vld [vmem:[%s358 + $0x190] sm:$0xff]
        %v413 = vld [vmem:[%s358 + $0x198] sm:$0xff]
        %v414 = vld [vmem:[%s358 + $0x1a0] sm:$0xff]
        %v415 = vld [vmem:[%s358 + $0x1a8] sm:$0xff]
        %v416 = vld [vmem:[%s358 + $0x1b0] sm:$0xff]
        %v417 = vld [vmem:[%s358 + $0x1b8] sm:$0xff]
        %v418 = vld [vmem:[%s358 + $0x1c0] sm:$0xff]
        %v419 = vld [vmem:[%s358 + $0x1c8] sm:$0xff]
        %v420 = vld [vmem:[%s358 + $0x1d0] sm:$0xff]
        %v421 = vld [vmem:[%s358 + $0x1d8] sm:$0xff]
        %v422 = vld [vmem:[%s358 + $0x1e0] sm:$0xff]
        %v423 = vld [vmem:[%s358 + $0x1e8] sm:$0xff]
        %v424 = vld [vmem:[%s358 + $0x1f0] sm:$0xff]
        %v425 = vld [vmem:[%s358 + $0x1f8] sm:$0xff]
        %v426 = vld [vmem:[%s358 + $0x200] sm:$0xff]
        %v427 = vld [vmem:[%s358 + $0x208] sm:$0xff]
        %v428 = vld [vmem:[%s358 + $0x210] sm:$0xff]
        %v429 = vld [vmem:[%s358 + $0x218] sm:$0xff]
        %v430 = vld [vmem:[%s358 + $0x220] sm:$0xff]
        %v431 = vld [vmem:[%s358 + $0x228] sm:$0xff]
        %v432 = vld [vmem:[%s358 + $0x230] sm:$0xff]
        %v433 = vld [vmem:[%s358 + $0x238] sm:$0xff]
        %v434 = vld [vmem:[%s358 + $0x240] sm:$0xff]
        %v435 = vld [vmem:[%s358 + $0x248] sm:$0xff]
        %v436 = vld [vmem:[%s358 + $0x250] sm:$0xff]
        %v437 = vld [vmem:[%s358 + $0x258] sm:$0xff]
        %v438 = vld [vmem:[%s358 + $0x260] sm:$0xff]
        %v439 = vld [vmem:[%s358 + $0x268] sm:$0xff]
        %v440 = vld [vmem:[%s358 + $0x270] sm:$0xff]
        %v441 = vld [vmem:[%s358 + $0x278] sm:$0xff]
        %v442 = vld [vmem:[%s358 + $0x280] sm:$0xff]
        %v443 = vld [vmem:[%s358 + $0x288] sm:$0xff]
        %v444 = vld [vmem:[%s358 + $0x290] sm:$0xff]
        %v445 = vld [vmem:[%s358 + $0x298] sm:$0xff]
        %v446 = vld [vmem:[%s358 + $0x2a0] sm:$0xff]
        %v447 = vld [vmem:[%s358 + $0x2a8] sm:$0xff]
        %v448 = vld [vmem:[%s358 + $0x2b0] sm:$0xff]
        %v449 = vld [vmem:[%s358 + $0x2b8] sm:$0xff]
        %v450 = vld [vmem:[%s358 + $0x2c0] sm:$0xff]
        %v451 = vld [vmem:[%s358 + $0x2c8] sm:$0xff]
        %v452 = vld [vmem:[%s358 + $0x2d0] sm:$0xff]
        %v453 = vld [vmem:[%s358 + $0x2d8] sm:$0xff]
        %v454 = vld [vmem:[%s358 + $0x2e0] sm:$0xff]
        %v455 = vld [vmem:[%s358 + $0x2e8] sm:$0xff]
        %v456 = vld [vmem:[%s358 + $0x2f0] sm:$0xff]
        %v457 = vld [vmem:[%s358 + $0x2f8] sm:$0xff]
        %v458 = vld [vmem:[%s358 + $0x300] sm:$0xff]
        %v459 = vld [vmem:[%s358 + $0x308] sm:$0xff]
        %v460 = vld [vmem:[%s358 + $0x310] sm:$0xff]
        %v461 = vld [vmem:[%s358 + $0x318] sm:$0xff]
        %v462 = vld [vmem:[%s358 + $0x320] sm:$0xff]
        %v463 = vld [vmem:[%s358 + $0x328] sm:$0xff]
        %v464 = vld [vmem:[%s358 + $0x330] sm:$0xff]
        %v465 = vld [vmem:[%s358 + $0x338] sm:$0xff]
        %v466 = vld [vmem:[%s358 + $0x340] sm:$0xff]
        %v467 = vld [vmem:[%s358 + $0x348] sm:$0xff]
        %v468 = vld [vmem:[%s358 + $0x350] sm:$0xff]
        %v469 = vld [vmem:[%s358 + $0x358] sm:$0xff]
        %v470 = vld [vmem:[%s358 + $0x360] sm:$0xff]
        %v471 = vld [vmem:[%s358 + $0x368] sm:$0xff]
        %v472 = vld [vmem:[%s358 + $0x370] sm:$0xff]
        %v473 = vld [vmem:[%s358 + $0x378] sm:$0xff]
        %v474 = vld [vmem:[%s358 + $0x380] sm:$0xff]
        %v475 = vld [vmem:[%s358 + $0x388] sm:$0xff]
        %v476 = vld [vmem:[%s358 + $0x390] sm:$0xff]
        %v477 = vld [vmem:[%s358 + $0x398] sm:$0xff]
        %v478 = vld [vmem:[%s358 + $0x3a0] sm:$0xff]
        %v479 = vld [vmem:[%s358 + $0x3a8] sm:$0xff]
        %v480 = vld [vmem:[%s358 + $0x3b0] sm:$0xff]
        %v481 = vld [vmem:[%s358 + $0x3b8] sm:$0xff]
        %v482 = vld [vmem:[%s358 + $0x3c0] sm:$0xff]
        %v483 = vld [vmem:[%s358 + $0x3c8] sm:$0xff]
        %v484 = vld [vmem:[%s358 + $0x3d0] sm:$0xff]
        %v485 = vld [vmem:[%s358 + $0x3d8] sm:$0xff]
        %v486 = vld [vmem:[%s358 + $0x3e0] sm:$0xff]
        %v487 = vld [vmem:[%s358 + $0x3e8] sm:$0xff]
        %v488 = vld [vmem:[%s358 + $0x3f0] sm:$0xff]
        %v489 = vld [vmem:[%s358 + $0x3f8] sm:$0xff]
        %v490 = vld [vmem:[%s358 + $0x400] sm:$0xff]
        %v491 = vld [vmem:[%s358 + $0x408] sm:$0xff]
        %v492 = vld [vmem:[%s358 + $0x410] sm:$0xff]
        %v493 = vld [vmem:[%s358 + $0x418] sm:$0xff]
        %v494 = vld [vmem:[%s358 + $0x420] sm:$0xff]
        %v495 = vld [vmem:[%s358 + $0x428] sm:$0xff]
        %v496 = vld [vmem:[%s358 + $0x430] sm:$0xff]
        %v497 = vld [vmem:[%s358 + $0x438] sm:$0xff]
        %v498 = vld [vmem:[%s358 + $0x440] sm:$0xff]
        %v499 = vld [vmem:[%s358 + $0x448] sm:$0xff]
        %v500 = vld [vmem:[%s358 + $0x450] sm:$0xff]
        %v501 = vld [vmem:[%s358 + $0x458] sm:$0xff]
        %v502 = vld [vmem:[%s358 + $0x460] sm:$0xff]
        %v503 = vld [vmem:[%s358 + $0x468] sm:$0xff]
        %v504 = vld [vmem:[%s358 + $0x470] sm:$0xff]
        %v505 = vld [vmem:[%s358 + $0x478] sm:$0xff]
        %v506 = vld [vmem:[%s358 + $0x480] sm:$0xff]
        %v507 = vld [vmem:[%s358 + $0x488] sm:$0xff]
        %v508 = vld [vmem:[%s358 + $0x490] sm:$0xff]
        %v509 = vld [vmem:[%s358 + $0x498] sm:$0xff]
        %v510 = vld [vmem:[%s358 + $0x4a0] sm:$0xff]
        %v511 = vld [vmem:[%s358 + $0x4a8] sm:$0xff]
        %v512 = vld [vmem:[%s358 + $0x4b0] sm:$0xff]
        %v513 = vld [vmem:[%s358 + $0x4b8] sm:$0xff]
        %v514 = vld [vmem:[%s358 + $0x4c0] sm:$0xff]
        %v515 = vld [vmem:[%s358 + $0x4c8] sm:$0xff]
        %v516 = vld [vmem:[%s358 + $0x4d0] sm:$0xff]
        %v517 = vld [vmem:[%s358 + $0x4d8] sm:$0xff]
        %v518 = vld [vmem:[%s358 + $0x4e0] sm:$0xff]
        %v519 = vld [vmem:[%s358 + $0x4e8] sm:$0xff]
        %v520 = vld [vmem:[%s358 + $0x4f0] sm:$0xff]
        %v521 = vld [vmem:[%s358 + $0x4f8] sm:$0xff]
        %v522 = vld [vmem:[%s358 + $0x500] sm:$0xff]
        %v523 = vld [vmem:[%s358 + $0x508] sm:$0xff]
        %v524 = vld [vmem:[%s358 + $0x510] sm:$0xff]
        %v525 = vld [vmem:[%s358 + $0x518] sm:$0xff]
        %v526 = vld [vmem:[%s358 + $0x520] sm:$0xff]
        %v527 = vld [vmem:[%s358 + $0x528] sm:$0xff]
        %v528 = vld [vmem:[%s358 + $0x530] sm:$0xff]
        %v529 = vld [vmem:[%s358 + $0x538] sm:$0xff]
        %v530 = vld [vmem:[%s358 + $0x540] sm:$0xff]
        %v531 = vld [vmem:[%s358 + $0x548] sm:$0x3f]
        %v532 = vpack.c.bf16 %v363, %v362
        %v533 = vpack.c.bf16 %v365, %v364
        %v534 = vpack.c.bf16 %v367, %v366
        %v535 = vpack.c.bf16 %v369, %v368
        %v536 = vpack.c.bf16 %v371, %v370
        %v537 = vpack.c.bf16 %v373, %v372
        %v538 = vpack.c.bf16 %v375, %v374
        %v539 = vpack.c.bf16 %v377, %v376
        %v540 = vpack.c.bf16 %v379, %v378
        %v541 = vpack.c.bf16 %v381, %v380
        %v542 = vpack.c.bf16 %v383, %v382
        %v543 = vpack.c.bf16 %v385, %v384
        %v544 = vpack.c.bf16 %v387, %v386
        %v545 = vpack.c.bf16 %v389, %v388
        %v546 = vpack.c.bf16 %v391, %v390
        %v547 = vpack.c.bf16 %v393, %v392
        %v548 = vpack.c.bf16 %v395, %v394
        %v549 = vpack.c.bf16 %v397, %v396
        %v550 = vpack.c.bf16 %v399, %v398
        %v551 = vpack.c.bf16 %v401, %v400
        %v552 = vpack.c.bf16 %v403, %v402
        %v553 = vpack.c.bf16 %v405, %v404
        %v554 = vpack.c.bf16 %v407, %v406
        %v555 = vpack.c.bf16 %v409, %v408
        %v556 = vpack.c.bf16 %v411, %v410
        %v557 = vpack.c.bf16 %v413, %v412
        %v558 = vpack.c.bf16 %v415, %v414
        %v559 = vpack.c.bf16 %v417, %v416
        %v560 = vpack.c.bf16 %v419, %v418
        %v561 = vpack.c.bf16 %v421, %v420
        %v562 = vpack.c.bf16 %v423, %v422
        %v563 = vpack.c.bf16 %v425, %v424
        %v564 = vpack.c.bf16 %v427, %v426
        %v565 = vpack.c.bf16 %v429, %v428
        %v566 = vpack.c.bf16 %v431, %v430
        %v567 = vpack.c.bf16 %v433, %v432
        %v568 = vpack.c.bf16 %v435, %v434
        %v569 = vpack.c.bf16 %v437, %v436
        %v570 = vpack.c.bf16 %v439, %v438
        %v571 = vpack.c.bf16 %v441, %v440
        %v572 = vpack.c.bf16 %v443, %v442
        %v573 = vpack.c.bf16 %v445, %v444
        %v574 = vpack.c.bf16 %v447, %v446
        %v575 = vpack.c.bf16 %v449, %v448
        %v576 = vpack.c.bf16 %v451, %v450
        %v577 = vpack.c.bf16 %v453, %v452
        %v578 = vpack.c.bf16 %v455, %v454
        %v579 = vpack.c.bf16 %v457, %v456
        %v580 = vpack.c.bf16 %v459, %v458
        %v581 = vpack.c.bf16 %v461, %v460
        %v582 = vpack.c.bf16 %v463, %v462
        %v583 = vpack.c.bf16 %v465, %v464
        %v584 = vpack.c.bf16 %v467, %v466
        %v585 = vpack.c.bf16 %v469, %v468
        %v586 = vpack.c.bf16 %v471, %v470
        %v587 = vpack.c.bf16 %v473, %v472
        %v588 = vpack.c.bf16 %v475, %v474
        %v589 = vpack.c.bf16 %v477, %v476
        %v590 = vpack.c.bf16 %v479, %v478
        %v591 = vpack.c.bf16 %v481, %v480
        %v592 = vpack.c.bf16 %v483, %v482
        %v593 = vpack.c.bf16 %v485, %v484
        %v594 = vpack.c.bf16 %v487, %v486
        %v595 = vpack.c.bf16 %v489, %v488
        %v596 = vpack.c.bf16 %v491, %v490
        %v597 = vpack.c.bf16 %v493, %v492
        %v598 = vpack.c.bf16 %v495, %v494
        %v599 = vpack.c.bf16 %v497, %v496
        %v600 = vpack.c.bf16 %v499, %v498
        %v601 = vpack.c.bf16 %v501, %v500
        %v602 = vpack.c.bf16 %v503, %v502
        %v603 = vpack.c.bf16 %v505, %v504
        %v604 = vpack.c.bf16 %v507, %v506
        %v605 = vpack.c.bf16 %v509, %v508
        %v606 = vpack.c.bf16 %v511, %v510
        %v607 = vpack.c.bf16 %v513, %v512
        %v608 = vpack.c.bf16 %v515, %v514
        %v609 = vpack.c.bf16 %v517, %v516
        %v610 = vpack.c.bf16 %v519, %v518
        %v611 = vpack.c.bf16 %v521, %v520
        %v612 = vpack.c.bf16 %v523, %v522
        %v613 = vpack.c.bf16 %v525, %v524
        %v614 = vpack.c.bf16 %v527, %v526
        %v615 = vpack.c.bf16 %v529, %v528
        %v616 = vpack.c.bf16 %v531, %v530
        %v617 = vld [vmem:[%s1] sm:$0xf]
        %v618 = vld [vmem:[%s358 + $0x1] sm:$0xff]
        %v619 = vld [vmem:[%s358 + $0x9] sm:$0xff]
        %v620 = vld [vmem:[%s358 + $0x11] sm:$0xff]
        %v621 = vld [vmem:[%s358 + $0x19] sm:$0xff]
        %v622 = vld [vmem:[%s358 + $0x21] sm:$0xff]
        %v623 = vld [vmem:[%s358 + $0x29] sm:$0xff]
        %v624 = vld [vmem:[%s358 + $0x31] sm:$0xff]
        %v625 = vld [vmem:[%s358 + $0x39] sm:$0xff]
        %v626 = vld [vmem:[%s358 + $0x41] sm:$0xff]
        %v627 = vld [vmem:[%s358 + $0x49] sm:$0xff]
        %v628 = vld [vmem:[%s358 + $0x51] sm:$0xff]
        %v629 = vld [vmem:[%s358 + $0x59] sm:$0xff]
        %v630 = vld [vmem:[%s358 + $0x61] sm:$0xff]
        %v631 = vld [vmem:[%s358 + $0x69] sm:$0xff]
        %v632 = vld [vmem:[%s358 + $0x71] sm:$0xff]
        %v633 = vld [vmem:[%s358 + $0x79] sm:$0xff]
        %v634 = vld [vmem:[%s358 + $0x81] sm:$0xff]
        %v635 = vld [vmem:[%s358 + $0x89] sm:$0xff]
        %v636 = vld [vmem:[%s358 + $0x91] sm:$0xff]
        %v637 = vld [vmem:[%s358 + $0x99] sm:$0xff]
        %v638 = vld [vmem:[%s358 + $0xa1] sm:$0xff]
        %v639 = vld [vmem:[%s358 + $0xa9] sm:$0xff]
        %v640 = vld [vmem:[%s358 + $0xb1] sm:$0xff]
        %v641 = vld [vmem:[%s358 + $0xb9] sm:$0xff]
        %v642 = vld [vmem:[%s358 + $0xc1] sm:$0xff]
        %v643 = vld [vmem:[%s358 + $0xc9] sm:$0xff]
        %v644 = vld [vmem:[%s358 + $0xd1] sm:$0xff]
        %v645 = vld [vmem:[%s358 + $0xd9] sm:$0xff]
        %v646 = vld [vmem:[%s358 + $0xe1] sm:$0xff]
        %v647 = vld [vmem:[%s358 + $0xe9] sm:$0xff]
        %v648 = vld [vmem:[%s358 + $0xf1] sm:$0xff]
        %v649 = vld [vmem:[%s358 + $0xf9] sm:$0xff]
        %v650 = vld [vmem:[%s358 + $0x101] sm:$0xff]
        %v651 = vld [vmem:[%s358 + $0x109] sm:$0xff]
        %v652 = vld [vmem:[%s358 + $0x111] sm:$0xff]
        %v653 = vld [vmem:[%s358 + $0x119] sm:$0xff]
        %v654 = vld [vmem:[%s358 + $0x121] sm:$0xff]
        %v655 = vld [vmem:[%s358 + $0x129] sm:$0xff]
        %v656 = vld [vmem:[%s358 + $0x131] sm:$0xff]
        %v657 = vld [vmem:[%s358 + $0x139] sm:$0xff]
        %v658 = vld [vmem:[%s358 + $0x141] sm:$0xff]
        %v659 = vld [vmem:[%s358 + $0x149] sm:$0xff]
        %v660 = vld [vmem:[%s358 + $0x151] sm:$0xff]
        %v661 = vld [vmem:[%s358 + $0x159] sm:$0xff]
        %v662 = vld [vmem:[%s358 + $0x161] sm:$0xff]
        %v663 = vld [vmem:[%s358 + $0x169] sm:$0xff]
        %v664 = vld [vmem:[%s358 + $0x171] sm:$0xff]
        %v665 = vld [vmem:[%s358 + $0x179] sm:$0xff]
        %v666 = vld [vmem:[%s358 + $0x181] sm:$0xff]
        %v667 = vld [vmem:[%s358 + $0x189] sm:$0xff]
        %v668 = vld [vmem:[%s358 + $0x191] sm:$0xff]
        %v669 = vld [vmem:[%s358 + $0x199] sm:$0xff]
        %v670 = vld [vmem:[%s358 + $0x1a1] sm:$0xff]
        %v671 = vld [vmem:[%s358 + $0x1a9] sm:$0xff]
        %v672 = vld [vmem:[%s358 + $0x1b1] sm:$0xff]
        %v673 = vld [vmem:[%s358 + $0x1b9] sm:$0xff]
        %v674 = vld [vmem:[%s358 + $0x1c1] sm:$0xff]
        %v675 = vld [vmem:[%s358 + $0x1c9] sm:$0xff]
        %v676 = vld [vmem:[%s358 + $0x1d1] sm:$0xff]
        %v677 = vld [vmem:[%s358 + $0x1d9] sm:$0xff]
        %v678 = vld [vmem:[%s358 + $0x1e1] sm:$0xff]
        %v679 = vld [vmem:[%s358 + $0x1e9] sm:$0xff]
        %v680 = vld [vmem:[%s358 + $0x1f1] sm:$0xff]
        %v681 = vld [vmem:[%s358 + $0x1f9] sm:$0xff]
        %v682 = vld [vmem:[%s358 + $0x201] sm:$0xff]
        %v683 = vld [vmem:[%s358 + $0x209] sm:$0xff]
        %v684 = vld [vmem:[%s358 + $0x211] sm:$0xff]
        %v685 = vld [vmem:[%s358 + $0x219] sm:$0xff]
        %v686 = vld [vmem:[%s358 + $0x221] sm:$0xff]
        %v687 = vld [vmem:[%s358 + $0x229] sm:$0xff]
        %v688 = vld [vmem:[%s358 + $0x231] sm:$0xff]
        %v689 = vld [vmem:[%s358 + $0x239] sm:$0xff]
        %v690 = vld [vmem:[%s358 + $0x241] sm:$0xff]
        %v691 = vld [vmem:[%s358 + $0x249] sm:$0xff]
        %v692 = vld [vmem:[%s358 + $0x251] sm:$0xff]
        %v693 = vld [vmem:[%s358 + $0x259] sm:$0xff]
        %v694 = vld [vmem:[%s358 + $0x261] sm:$0xff]
        %v695 = vld [vmem:[%s358 + $0x269] sm:$0xff]
        %v696 = vld [vmem:[%s358 + $0x271] sm:$0xff]
        %v697 = vld [vmem:[%s358 + $0x279] sm:$0xff]
        %v698 = vld [vmem:[%s358 + $0x281] sm:$0xff]
        %v699 = vld [vmem:[%s358 + $0x289] sm:$0xff]
        %v700 = vld [vmem:[%s358 + $0x291] sm:$0xff]
        %v701 = vld [vmem:[%s358 + $0x299] sm:$0xff]
        %v702 = vld [vmem:[%s358 + $0x2a1] sm:$0xff]
        %v703 = vld [vmem:[%s358 + $0x2a9] sm:$0xff]
        %v704 = vld [vmem:[%s358 + $0x2b1] sm:$0xff]
        %v705 = vld [vmem:[%s358 + $0x2b9] sm:$0xff]
        %v706 = vld [vmem:[%s358 + $0x2c1] sm:$0xff]
        %v707 = vld [vmem:[%s358 + $0x2c9] sm:$0xff]
        %v708 = vld [vmem:[%s358 + $0x2d1] sm:$0xff]
        %v709 = vld [vmem:[%s358 + $0x2d9] sm:$0xff]
        %v710 = vld [vmem:[%s358 + $0x2e1] sm:$0xff]
        %v711 = vld [vmem:[%s358 + $0x2e9] sm:$0xff]
        %v712 = vld [vmem:[%s358 + $0x2f1] sm:$0xff]
        %v713 = vld [vmem:[%s358 + $0x2f9] sm:$0xff]
        %v714 = vld [vmem:[%s358 + $0x301] sm:$0xff]
        %v715 = vld [vmem:[%s358 + $0x309] sm:$0xff]
        %v716 = vld [vmem:[%s358 + $0x311] sm:$0xff]
        %v717 = vld [vmem:[%s358 + $0x319] sm:$0xff]
        %v718 = vld [vmem:[%s358 + $0x321] sm:$0xff]
        %v719 = vld [vmem:[%s358 + $0x329] sm:$0xff]
        %v720 = vld [vmem:[%s358 + $0x331] sm:$0xff]
        %v721 = vld [vmem:[%s358 + $0x339] sm:$0xff]
        %v722 = vld [vmem:[%s358 + $0x341] sm:$0xff]
        %v723 = vld [vmem:[%s358 + $0x349] sm:$0xff]
        %v724 = vld [vmem:[%s358 + $0x351] sm:$0xff]
        %v725 = vld [vmem:[%s358 + $0x359] sm:$0xff]
        %v726 = vld [vmem:[%s358 + $0x361] sm:$0xff]
        %v727 = vld [vmem:[%s358 + $0x369] sm:$0xff]
        %v728 = vld [vmem:[%s358 + $0x371] sm:$0xff]
        %v729 = vld [vmem:[%s358 + $0x379] sm:$0xff]
        %v730 = vld [vmem:[%s358 + $0x381] sm:$0xff]
        %v731 = vld [vmem:[%s358 + $0x389] sm:$0xff]
        %v732 = vld [vmem:[%s358 + $0x391] sm:$0xff]
        %v733 = vld [vmem:[%s358 + $0x399] sm:$0xff]
        %v734 = vld [vmem:[%s358 + $0x3a1] sm:$0xff]
        %v735 = vld [vmem:[%s358 + $0x3a9] sm:$0xff]
        %v736 = vld [vmem:[%s358 + $0x3b1] sm:$0xff]
        %v737 = vld [vmem:[%s358 + $0x3b9] sm:$0xff]
        %v738 = vld [vmem:[%s358 + $0x3c1] sm:$0xff]
        %v739 = vld [vmem:[%s358 + $0x3c9] sm:$0xff]
        %v740 = vld [vmem:[%s358 + $0x3d1] sm:$0xff]
        %v741 = vld [vmem:[%s358 + $0x3d9] sm:$0xff]
        %v742 = vld [vmem:[%s358 + $0x3e1] sm:$0xff]
        %v743 = vld [vmem:[%s358 + $0x3e9] sm:$0xff]
        %v744 = vld [vmem:[%s358 + $0x3f1] sm:$0xff]
        %v745 = vld [vmem:[%s358 + $0x3f9] sm:$0xff]
        %v746 = vld [vmem:[%s358 + $0x401] sm:$0xff]
        %v747 = vld [vmem:[%s358 + $0x409] sm:$0xff]
        %v748 = vld [vmem:[%s358 + $0x411] sm:$0xff]
        %v749 = vld [vmem:[%s358 + $0x419] sm:$0xff]
        %v750 = vld [vmem:[%s358 + $0x421] sm:$0xff]
        %v751 = vld [vmem:[%s358 + $0x429] sm:$0xff]
        %v752 = vld [vmem:[%s358 + $0x431] sm:$0xff]
        %v753 = vld [vmem:[%s358 + $0x439] sm:$0xff]
        %v754 = vld [vmem:[%s358 + $0x441] sm:$0xff]
        %v755 = vld [vmem:[%s358 + $0x449] sm:$0xff]
        %v756 = vld [vmem:[%s358 + $0x451] sm:$0xff]
        %v757 = vld [vmem:[%s358 + $0x459] sm:$0xff]
        %v758 = vld [vmem:[%s358 + $0x461] sm:$0xff]
        %v759 = vld [vmem:[%s358 + $0x469] sm:$0xff]
        %v760 = vld [vmem:[%s358 + $0x471] sm:$0xff]
        %v761 = vld [vmem:[%s358 + $0x479] sm:$0xff]
        %v762 = vld [vmem:[%s358 + $0x481] sm:$0xff]
        %v763 = vld [vmem:[%s358 + $0x489] sm:$0xff]
        %v764 = vld [vmem:[%s358 + $0x491] sm:$0xff]
        %v765 = vld [vmem:[%s358 + $0x499] sm:$0xff]
        %v766 = vld [vmem:[%s358 + $0x4a1] sm:$0xff]
        %v767 = vld [vmem:[%s358 + $0x4a9] sm:$0xff]
        %v768 = vld [vmem:[%s358 + $0x4b1] sm:$0xff]
        %v769 = vld [vmem:[%s358 + $0x4b9] sm:$0xff]
        %v770 = vld [vmem:[%s358 + $0x4c1] sm:$0xff]
        %v771 = vld [vmem:[%s358 + $0x4c9] sm:$0xff]
        %v772 = vld [vmem:[%s358 + $0x4d1] sm:$0xff]
        %v773 = vld [vmem:[%s358 + $0x4d9] sm:$0xff]
        %v774 = vld [vmem:[%s358 + $0x4e1] sm:$0xff]
        %v775 = vld [vmem:[%s358 + $0x4e9] sm:$0xff]
        %v776 = vld [vmem:[%s358 + $0x4f1] sm:$0xff]
        %v777 = vld [vmem:[%s358 + $0x4f9] sm:$0xff]
        %v778 = vld [vmem:[%s358 + $0x501] sm:$0xff]
        %v779 = vld [vmem:[%s358 + $0x509] sm:$0xff]
        %v780 = vld [vmem:[%s358 + $0x511] sm:$0xff]
        %v781 = vld [vmem:[%s358 + $0x519] sm:$0xff]
        %v782 = vld [vmem:[%s358 + $0x521] sm:$0xff]
        %v783 = vld [vmem:[%s358 + $0x529] sm:$0xff]
        %v784 = vld [vmem:[%s358 + $0x531] sm:$0xff]
        %v785 = vld [vmem:[%s358 + $0x539] sm:$0xff]
        %v786 = vld [vmem:[%s358 + $0x541] sm:$0xff]
        %v787 = vld [vmem:[%s358 + $0x549] sm:$0x3f]
        %v788 = vpack.c.bf16 %v619, %v618
        %v789 = vpack.c.bf16 %v621, %v620
        %v790 = vpack.c.bf16 %v623, %v622
        %v791 = vpack.c.bf16 %v625, %v624
        %v792 = vpack.c.bf16 %v627, %v626
        %v793 = vpack.c.bf16 %v629, %v628
        %v794 = vpack.c.bf16 %v631, %v630
        %v795 = vpack.c.bf16 %v633, %v632
        %v796 = vpack.c.bf16 %v635, %v634
        %v797 = vpack.c.bf16 %v637, %v636
        %v798 = vpack.c.bf16 %v639, %v638
        %v799 = vpack.c.bf16 %v641, %v640
        %v800 = vpack.c.bf16 %v643, %v642
        %v801 = vpack.c.bf16 %v645, %v644
        %v802 = vpack.c.bf16 %v647, %v646
        %v803 = vpack.c.bf16 %v649, %v648
        %v804 = vpack.c.bf16 %v651, %v650
        %v805 = vpack.c.bf16 %v653, %v652
        %v806 = vpack.c.bf16 %v655, %v654
        %v807 = vpack.c.bf16 %v657, %v656
        %v808 = vpack.c.bf16 %v659, %v658
        %v809 = vpack.c.bf16 %v661, %v660
        %v810 = vpack.c.bf16 %v663, %v662
        %v811 = vpack.c.bf16 %v665, %v664
        %v812 = vpack.c.bf16 %v667, %v666
        %v813 = vpack.c.bf16 %v669, %v668
        %v814 = vpack.c.bf16 %v671, %v670
        %v815 = vpack.c.bf16 %v673, %v672
        %v816 = vpack.c.bf16 %v675, %v674
        %v817 = vpack.c.bf16 %v677, %v676
        %v818 = vpack.c.bf16 %v679, %v678
        %v819 = vpack.c.bf16 %v681, %v680
        %v820 = vpack.c.bf16 %v683, %v682
        %v821 = vpack.c.bf16 %v685, %v684
        %v822 = vpack.c.bf16 %v687, %v686
        %v823 = vpack.c.bf16 %v689, %v688
        %v824 = vpack.c.bf16 %v691, %v690
        %v825 = vpack.c.bf16 %v693, %v692
        %v826 = vpack.c.bf16 %v695, %v694
        %v827 = vpack.c.bf16 %v697, %v696
        %v828 = vpack.c.bf16 %v699, %v698
        %v829 = vpack.c.bf16 %v701, %v700
        %v830 = vpack.c.bf16 %v703, %v702
        %v831 = vpack.c.bf16 %v705, %v704
        %v832 = vpack.c.bf16 %v707, %v706
        %v833 = vpack.c.bf16 %v709, %v708
        %v834 = vpack.c.bf16 %v711, %v710
        %v835 = vpack.c.bf16 %v713, %v712
        %v836 = vpack.c.bf16 %v715, %v714
        %v837 = vpack.c.bf16 %v717, %v716
        %v838 = vpack.c.bf16 %v719, %v718
        %v839 = vpack.c.bf16 %v721, %v720
        %v840 = vpack.c.bf16 %v723, %v722
        %v841 = vpack.c.bf16 %v725, %v724
        %v842 = vpack.c.bf16 %v727, %v726
        %v843 = vpack.c.bf16 %v729, %v728
        %v844 = vpack.c.bf16 %v731, %v730
        %v845 = vpack.c.bf16 %v733, %v732
        %v846 = vpack.c.bf16 %v735, %v734
        %v847 = vpack.c.bf16 %v737, %v736
        %v848 = vpack.c.bf16 %v739, %v738
        %v849 = vpack.c.bf16 %v741, %v740
        %v850 = vpack.c.bf16 %v743, %v742
        %v851 = vpack.c.bf16 %v745, %v744
        %v852 = vpack.c.bf16 %v747, %v746
        %v853 = vpack.c.bf16 %v749, %v748
        %v854 = vpack.c.bf16 %v751, %v750
        %v855 = vpack.c.bf16 %v753, %v752
        %v856 = vpack.c.bf16 %v755, %v754
        %v857 = vpack.c.bf16 %v757, %v756
        %v858 = vpack.c.bf16 %v759, %v758
        %v859 = vpack.c.bf16 %v761, %v760
        %v860 = vpack.c.bf16 %v763, %v762
        %v861 = vpack.c.bf16 %v765, %v764
        %v862 = vpack.c.bf16 %v767, %v766
        %v863 = vpack.c.bf16 %v769, %v768
        %v864 = vpack.c.bf16 %v771, %v770
        %v865 = vpack.c.bf16 %v773, %v772
        %v866 = vpack.c.bf16 %v775, %v774
        %v867 = vpack.c.bf16 %v777, %v776
        %v868 = vpack.c.bf16 %v779, %v778
        %v869 = vpack.c.bf16 %v781, %v780
        %v870 = vpack.c.bf16 %v783, %v782
        %v871 = vpack.c.bf16 %v785, %v784
        %v872 = vpack.c.bf16 %v787, %v786
        %s873 = scalar_lea.vmem %s1, 4
        %v874 = vld [vmem:[%s873] sm:$0xf]
        %vm875 = vcmask 64512
        %v877 = vsel %vm875, %v788, 0
        %v880 = vsel %vm875, %v789, 0
        %v883 = vsel %vm875, %v790, 0
        %v886 = vsel %vm875, %v791, 0
        %v889 = vsel %vm875, %v792, 0
        %v892 = vsel %vm875, %v793, 0
        %v895 = vsel %vm875, %v794, 0
        %v898 = vsel %vm875, %v795, 0
        %v901 = vsel %vm875, %v796, 0
        %v904 = vsel %vm875, %v797, 0
        %v907 = vsel %vm875, %v798, 0
        %v910 = vsel %vm875, %v799, 0
        %v913 = vsel %vm875, %v800, 0
        %v916 = vsel %vm875, %v801, 0
        %v919 = vsel %vm875, %v802, 0
        %v922 = vsel %vm875, %v803, 0
        %v925 = vsel %vm875, %v804, 0
        %v928 = vsel %vm875, %v805, 0
        %v931 = vsel %vm875, %v806, 0
        %v934 = vsel %vm875, %v807, 0
        %v937 = vsel %vm875, %v808, 0
        %v940 = vsel %vm875, %v809, 0
        %v943 = vsel %vm875, %v810, 0
        %v946 = vsel %vm875, %v811, 0
        %v949 = vsel %vm875, %v812, 0
        %v952 = vsel %vm875, %v813, 0
        %v955 = vsel %vm875, %v814, 0
        %v958 = vsel %vm875, %v815, 0
        %v961 = vsel %vm875, %v816, 0
        %v964 = vsel %vm875, %v817, 0
        %v967 = vsel %vm875, %v818, 0
        %v970 = vsel %vm875, %v819, 0
        %v973 = vsel %vm875, %v820, 0
        %v976 = vsel %vm875, %v821, 0
        %v979 = vsel %vm875, %v822, 0
        %v982 = vsel %vm875, %v823, 0
        %v985 = vsel %vm875, %v824, 0
        %v988 = vsel %vm875, %v825, 0
        %v991 = vsel %vm875, %v826, 0
        %v994 = vsel %vm875, %v827, 0
        %v997 = vsel %vm875, %v828, 0
        %v1000 = vsel %vm875, %v829, 0
        %v1003 = vsel %vm875, %v830, 0
        %v1006 = vsel %vm875, %v831, 0
        %v1009 = vsel %vm875, %v832, 0
        %v1012 = vsel %vm875, %v833, 0
        %v1015 = vsel %vm875, %v834, 0
        %v1018 = vsel %vm875, %v835, 0
        %v1021 = vsel %vm875, %v836, 0
        %v1024 = vsel %vm875, %v837, 0
        %v1027 = vsel %vm875, %v838, 0
        %v1030 = vsel %vm875, %v839, 0
        %v1033 = vsel %vm875, %v840, 0
        %v1036 = vsel %vm875, %v841, 0
        %v1039 = vsel %vm875, %v842, 0
        %v1042 = vsel %vm875, %v843, 0
        %v1045 = vsel %vm875, %v844, 0
        %v1048 = vsel %vm875, %v845, 0
        %v1051 = vsel %vm875, %v846, 0
        %v1054 = vsel %vm875, %v847, 0
        %v1057 = vsel %vm875, %v848, 0
        %v1060 = vsel %vm875, %v849, 0
        %v1063 = vsel %vm875, %v850, 0
        %v1066 = vsel %vm875, %v851, 0
        %v1069 = vsel %vm875, %v852, 0
        %v1072 = vsel %vm875, %v853, 0
        %v1075 = vsel %vm875, %v854, 0
        %v1078 = vsel %vm875, %v855, 0
        %v1081 = vsel %vm875, %v856, 0
        %v1084 = vsel %vm875, %v857, 0
        %v1087 = vsel %vm875, %v858, 0
        %v1090 = vsel %vm875, %v859, 0
        %v1093 = vsel %vm875, %v860, 0
        %v1096 = vsel %vm875, %v861, 0
        %v1099 = vsel %vm875, %v862, 0
        %v1102 = vsel %vm875, %v863, 0
        %v1105 = vsel %vm875, %v864, 0
        %v1108 = vsel %vm875, %v865, 0
        %v1111 = vsel %vm875, %v866, 0
        %v1114 = vsel %vm875, %v867, 0
        %v1117 = vsel %vm875, %v868, 0
        %v1120 = vsel %vm875, %v869, 0
        %v1123 = vsel %vm875, %v870, 0
        %v1126 = vsel %vm875, %v871, 0
        %v1129 = vsel %vm875, %v872, 0
        %vm1131 = vcmask 1043456
        %v1133 = vsel %vm1131, %v874, 0
        %1135 = vmatprep.subr.bf16.mxu0 0
        %1136 = vmatpush1.bf16.msra.mxu0 %v1133
        %1137 = vmatprep.subr.bf16.mxu0 0
        %1138 = vmatpush1.bf16.msra.mxu0 0
        %1139 = vmatprep.subr.bf16.mxu0 0
        %1140 = vmatpush1.bf16.msra.mxu0 0
        %1141 = vmatprep.subr.bf16.mxu0 0
        %1142 = vmatpush1.bf16.msra.mxu0 0
        %1143 = vmatprep.subr.bf16.mxu0 0
        %1144 = vmatpush1.bf16.msra.mxu0 0
        %1145 = vmatprep.subr.bf16.mxu0 0
        %1146 = vmatpush1.bf16.msra.mxu0 0
        %1147 = vmatprep.subr.bf16.mxu0 0
        %1148 = vmatpush1.bf16.msra.mxu0 0
        %1149 = vmatprep.subr.bf16.mxu0 0
        %1150 = vmatpush1.bf16.msra.mxu0 0
        %1151 = vmatprep.subr.bf16.mxu0 0
        %1152 = vmatpush1.bf16.msra.mxu0 0
        %1153 = vmatprep.subr.bf16.mxu0 0
        %1154 = vmatpush1.bf16.msra.mxu0 0
        %1155 = vmatprep.subr.bf16.mxu0 0
        %1156 = vmatpush1.bf16.msra.mxu0 0
        %1157 = vmatprep.subr.bf16.mxu0 0
        %1158 = vmatpush1.bf16.msra.mxu0 0
        %1159 = vmatprep.subr.bf16.mxu0 0
        %1160 = vmatpush1.bf16.msra.mxu0 0
        %1161 = vmatprep.subr.bf16.mxu0 0
        %1162 = vmatpush1.bf16.msra.mxu0 0
        %1163 = vmatprep.subr.bf16.mxu0 0
        %1164 = vmatpush1.bf16.msra.mxu0 0
        %1165 = vmatprep.subr.bf16.mxu0 0
        %1166 = vmatpush1.bf16.msra.mxu0 0
        %1167 = vmatprep.mubr.bf16.mxu0 0
        %1168 = vmatmul.mubr.bf16.gmra.mrb[0].mxu0 %v877
        %v1169 = vpop.f32.mrb[0].mxu0
        %v1170 = vadd.f32 0.0, %v1169
        %v1171 = vpop.f32.mrb[0].mxu0
        %v1172 = vpop.f32.mrb[0].mxu0
        %v1173 = vadd.f32 0.0, %v1172
        %v1174 = vpop.f32.mrb[0].mxu0
        %1175 = vmatprep.mubr.bf16.mxu0 0
        %1176 = vmatmul.mubr.bf16.gmra.mrb[0].mxu0 %v880
        %v1177 = vpop.f32.mrb[0].mxu0
        %v1178 = vadd.f32 0.0, %v1177
        %v1179 = vpop.f32.mrb[0].mxu0
        %v1180 = vpop.f32.mrb[0].mxu0
        %v1181 = vadd.f32 0.0, %v1180
        %v1182 = vpop.f32.mrb[0].mxu0
        %1183 = vmatprep.mubr.bf16.mxu0 0
        %1184 = vmatmul.mubr.bf16.gmra.mrb[0].mxu0 %v883
        %v1185 = vpop.f32.mrb[0].mxu0
        %v1186 = vadd.f32 0.0, %v1185
        %v1187 = vpop.f32.mrb[0].mxu0
        %v1188 = vpop.f32.mrb[0].mxu0
        %v1189 = vadd.f32 0.0, %v1188
        %v1190 = vpop.f32.mrb[0].mxu0
        %1191 = vmatprep.mubr.bf16.mxu0 0
        %1192 = vmatmul.mubr.bf16.gmra.mrb[0].mxu0 %v886
        %v1193 = vpop.f32.mrb[0].mxu0
        %v1194 = vadd.f32 0.0, %v1193
        %v1195 = vpop.f32.mrb[0].mxu0
        %v1196 = vpop.f32.mrb[0].mxu0
        %v1197 = vadd.f32 0.0, %v1196
        %v1198 = vpop.f32.mrb[0].mxu0
        %1199 = vmatprep.mubr.bf16.mxu0 0
        %1200 = vmatmul.mubr.bf16.gmra.mrb[0].mxu0 %v889
        %v1201 = vpop.f32.mrb[0].mxu0
        %v1202 = vadd.f32 0.0, %v1201
        %v1203 = vpop.f32.mrb[0].mxu0
        %v1204 = vpop.f32.mrb[0].mxu0
        %v1205 = vadd.f32 0.0, %v1204
        %v1206 = vpop.f32.mrb[0].mxu0
        %1207 = vmatprep.mubr.bf16.mxu0 0
        %1208 = vmatmul.mubr.bf16.gmra.mrb[0].mxu0 %v892
        %v1209 = vpop.f32.mrb[0].mxu0
        %v1210 = vadd.f32 0.0, %v1209
        %v1211 = vpop.f32.mrb[0].mxu0
        %v1212 = vpop.f32.mrb[0].mxu0
        %v1213 = vadd.f32 0.0, %v1212
        %v1214 = vpop.f32.mrb[0].mxu0
        %1215 = vmatprep.mubr.bf16.mxu0 0
        %1216 = vmatmul.mubr.bf16.gmra.mrb[0].mxu0 %v895
        %v1217 = vpop.f32.mrb[0].mxu0
        %v1218 = vadd.f32 0.0, %v1217
        %v1219 = vpop.f32.mrb[0].mxu0
        %v1220 = vpop.f32.mrb[0].mxu0
        %v1221 = vadd.f32 0.0, %v1220
        %v1222 = vpop.f32.mrb[0].mxu0
        %1223 = vmatprep.mubr.bf16.mxu0 0
        %1224 = vmatmul.mubr.bf16.gmra.mrb[0].mxu0 %v898
        %v1225 = vpop.f32.mrb[0].mxu0
        %v1226 = vadd.f32 0.0, %v1225
        %v1227 = vpop.f32.mrb[0].mxu0
        %v1228 = vpop.f32.mrb[0].mxu0
        %v1229 = vadd.f32 0.0, %v1228
        %v1230 = vpop.f32.mrb[0].mxu0
        %1231 = vmatprep.mubr.bf16.mxu0 0
        %1232 = vmatmul.mubr.bf16.gmra.mrb[0].mxu0 %v901
        %v1233 = vpop.f32.mrb[0].mxu0
        %v1234 = vadd.f32 0.0, %v1233
        %v1235 = vpop.f32.mrb[0].mxu0
        %v1236 = vpop.f32.mrb[0].mxu0
        %v1237 = vadd.f32 0.0, %v1236
        %v1238 = vpop.f32.mrb[0].mxu0
        %1239 = vmatprep.mubr.bf16.mxu0 0
        %1240 = vmatmul.mubr.bf16.gmra.mrb[0].mxu0 %v904
        %v1241 = vpop.f32.mrb[0].mxu0
        %v1242 = vadd.f32 0.0, %v1241
        %v1243 = vpop.f32.mrb[0].mxu0
        %v1244 = vpop.f32.mrb[0].mxu0
        %v1245 = vadd.f32 0.0, %v1244
        %v1246 = vpop.f32.mrb[0].mxu0
        %1247 = vmatprep.mubr.bf16.mxu0 0
        %1248 = vmatmul.mubr.bf16.gmra.mrb[0].mxu0 %v907
        %v1249 = vpop.f32.mrb[0].mxu0
        %v1250 = vadd.f32 0.0, %v1249
        %v1251 = vpop.f32.mrb[0].mxu0
        %v1252 = vpop.f32.mrb[0].mxu0
        %v1253 = vadd.f32 0.0, %v1252
        %v1254 = vpop.f32.mrb[0].mxu0
        %1255 = vmatprep.mubr.bf16.mxu0 0
        %1256 = vmatmul.mubr.bf16.gmra.mrb[0].mxu0 %v910
        %v1257 = vpop.f32.mrb[0].mxu0
        %v1258 = vadd.f32 0.0, %v1257
        %v1259 = vpop.f32.mrb[0].mxu0
        %v1260 = vpop.f32.mrb[0].mxu0
        %v1261 = vadd.f32 0.0, %v1260
        %v1262 = vpop.f32.mrb[0].mxu0
        %1263 = vmatprep.mubr.bf16.mxu0 0
        %1264 = vmatmul.mubr.bf16.gmra.mrb[0].mxu0 %v913
        %v1265 = vpop.f32.mrb[0].mxu0
        %v1266 = vadd.f32 0.0, %v1265
        %v1267 = vpop.f32.mrb[0].mxu0
        %v1268 = vpop.f32.mrb[0].mxu0
        %v1269 = vadd.f32 0.0, %v1268
        %v1270 = vpop.f32.mrb[0].mxu0
        %1271 = vmatprep.mubr.bf16.mxu0 0
        %1272 = vmatmul.mubr.bf16.gmra.mrb[0].mxu0 %v916
        %v1273 = vpop.f32.mrb[0].mxu0
        %v1274 = vadd.f32 0.0, %v1273
        %v1275 = vpop.f32.mrb[0].mxu0
        %v1276 = vpop.f32.mrb[0].mxu0
        %v1277 = vadd.f32 0.0, %v1276
        %v1278 = vpop.f32.mrb[0].mxu0
        %1279 = vmatprep.mubr.bf16.mxu0 0
        %1280 = vmatmul.mubr.bf16.gmra.mrb[0].mxu0 %v919
        %v1281 = vpop.f32.mrb[0].mxu0
        %v1282 = vadd.f32 0.0, %v1281
        %v1283 = vpop.f32.mrb[0].mxu0
        %v1284 = vpop.f32.mrb[0].mxu0
        %v1285 = vadd.f32 0.0, %v1284
        %v1286 = vpop.f32.mrb[0].mxu0
        %1287 = vmatprep.mubr.bf16.mxu0 0
        %1288 = vmatmul.mubr.bf16.gmra.mrb[0].mxu0 %v922
        %v1289 = vpop.f32.mrb[0].mxu0
        %v1290 = vadd.f32 0.0, %v1289
        %v1291 = vpop.f32.mrb[0].mxu0
        %v1292 = vpop.f32.mrb[0].mxu0
        %v1293 = vadd.f32 0.0, %v1292
        %v1294 = vpop.f32.mrb[0].mxu0
        %1295 = vmatprep.mubr.bf16.mxu0 0
        %1296 = vmatmul.mubr.bf16.gmra.mrb[0].mxu0 %v925
        %v1297 = vpop.f32.mrb[0].mxu0
        %v1298 = vadd.f32 0.0, %v1297
        %v1299 = vpop.f32.mrb[0].mxu0
        %v1300 = vpop.f32.mrb[0].mxu0
        %v1301 = vadd.f32 0.0, %v1300
        %v1302 = vpop.f32.mrb[0].mxu0
        %1303 = vmatprep.mubr.bf16.mxu0 0
        %1304 = vmatmul.mubr.bf16.gmra.mrb[0].mxu0 %v928
        %v1305 = vpop.f32.mrb[0].mxu0
        %v1306 = vadd.f32 0.0, %v1305
        %v1307 = vpop.f32.mrb[0].mxu0
        %v1308 = vpop.f32.mrb[0].mxu0
        %v1309 = vadd.f32 0.0, %v1308
        %v1310 = vpop.f32.mrb[0].mxu0
        %1311 = vmatprep.mubr.bf16.mxu0 0
        %1312 = vmatmul.mubr.bf16.gmra.mrb[0].mxu0 %v931
        %v1313 = vpop.f32.mrb[0].mxu0
        %v1314 = vadd.f32 0.0, %v1313
        %v1315 = vpop.f32.mrb[0].mxu0
        %v1316 = vpop.f32.mrb[0].mxu0
        %v1317 = vadd.f32 0.0, %v1316
        %v1318 = vpop.f32.mrb[0].mxu0
        %1319 = vmatprep.mubr.bf16.mxu0 0
        %1320 = vmatmul.mubr.bf16.gmra.mrb[0].mxu0 %v934
        %v1321 = vpop.f32.mrb[0].mxu0
        %v1322 = vadd.f32 0.0, %v1321
        %v1323 = vpop.f32.mrb[0].mxu0
        %v1324 = vpop.f32.mrb[0].mxu0
        %v1325 = vadd.f32 0.0, %v1324
        %v1326 = vpop.f32.mrb[0].mxu0
        %1327 = vmatprep.mubr.bf16.mxu0 0
        %1328 = vmatmul.mubr.bf16.gmra.mrb[0].mxu0 %v937
        %v1329 = vpop.f32.mrb[0].mxu0
        %v1330 = vadd.f32 0.0, %v1329
        %v1331 = vpop.f32.mrb[0].mxu0
        %v1332 = vpop.f32.mrb[0].mxu0
        %v1333 = vadd.f32 0.0, %v1332
        %v1334 = vpop.f32.mrb[0].mxu0
        %1335 = vmatprep.mubr.bf16.mxu0 0
        %1336 = vmatmul.mubr.bf16.gmra.mrb[0].mxu0 %v940
        %v1337 = vpop.f32.mrb[0].mxu0
        %v1338 = vadd.f32 0.0, %v1337
        %v1339 = vpop.f32.mrb[0].mxu0
        %v1340 = vpop.f32.mrb[0].mxu0
        %v1341 = vadd.f32 0.0, %v1340
        %v1342 = vpop.f32.mrb[0].mxu0
        %1343 = vmatprep.mubr.bf16.mxu0 0
        %1344 = vmatmul.mubr.bf16.gmra.mrb[0].mxu0 %v943
        %v1345 = vpop.f32.mrb[0].mxu0
        %v1346 = vadd.f32 0.0, %v1345
        %v1347 = vpop.f32.mrb[0].mxu0
        %v1348 = vpop.f32.mrb[0].mxu0
        %v1349 = vadd.f32 0.0, %v1348
        %v1350 = vpop.f32.mrb[0].mxu0
        %1351 = vmatprep.mubr.bf16.mxu0 0
        %1352 = vmatmul.mubr.bf16.gmra.mrb[0].mxu0 %v946
        %v1353 = vpop.f32.mrb[0].mxu0
        %v1354 = vadd.f32 0.0, %v1353
        %v1355 = vpop.f32.mrb[0].mxu0
        %v1356 = vpop.f32.mrb[0].mxu0
        %v1357 = vadd.f32 0.0, %v1356
        %v1358 = vpop.f32.mrb[0].mxu0
        %1359 = vmatprep.mubr.bf16.mxu0 0
        %1360 = vmatmul.mubr.bf16.gmra.mrb[0].mxu0 %v949
        %v1361 = vpop.f32.mrb[0].mxu0
        %v1362 = vadd.f32 0.0, %v1361
        %v1363 = vpop.f32.mrb[0].mxu0
        %v1364 = vpop.f32.mrb[0].mxu0
        %v1365 = vadd.f32 0.0, %v1364
        %v1366 = vpop.f32.mrb[0].mxu0
        %1367 = vmatprep.mubr.bf16.mxu0 0
        %1368 = vmatmul.mubr.bf16.gmra.mrb[0].mxu0 %v952
        %v1369 = vpop.f32.mrb[0].mxu0
        %v1370 = vadd.f32 0.0, %v1369
        %v1371 = vpop.f32.mrb[0].mxu0
        %v1372 = vpop.f32.mrb[0].mxu0
        %v1373 = vadd.f32 0.0, %v1372
        %v1374 = vpop.f32.mrb[0].mxu0
        %1375 = vmatprep.mubr.bf16.mxu0 0
        %1376 = vmatmul.mubr.bf16.gmra.mrb[0].mxu0 %v955
        %v1377 = vpop.f32.mrb[0].mxu0
        %v1378 = vadd.f32 0.0, %v1377
        %v1379 = vpop.f32.mrb[0].mxu0
        %v1380 = vpop.f32.mrb[0].mxu0
        %v1381 = vadd.f32 0.0, %v1380
        %v1382 = vpop.f32.mrb[0].mxu0
        %1383 = vmatprep.mubr.bf16.mxu0 0
        %1384 = vmatmul.mubr.bf16.gmra.mrb[0].mxu0 %v958
        %v1385 = vpop.f32.mrb[0].mxu0
        %v1386 = vadd.f32 0.0, %v1385
        %v1387 = vpop.f32.mrb[0].mxu0
        %v1388 = vpop.f32.mrb[0].mxu0
        %v1389 = vadd.f32 0.0, %v1388
        %v1390 = vpop.f32.mrb[0].mxu0
        %1391 = vmatprep.mubr.bf16.mxu0 0
        %1392 = vmatmul.mubr.bf16.gmra.mrb[0].mxu0 %v961
        %v1393 = vpop.f32.mrb[0].mxu0
        %v1394 = vadd.f32 0.0, %v1393
        %v1395 = vpop.f32.mrb[0].mxu0
        %v1396 = vpop.f32.mrb[0].mxu0
        %v1397 = vadd.f32 0.0, %v1396
        %v1398 = vpop.f32.mrb[0].mxu0
        %1399 = vmatprep.mubr.bf16.mxu0 0
        %1400 = vmatmul.mubr.bf16.gmra.mrb[0].mxu0 %v964
        %v1401 = vpop.f32.mrb[0].mxu0
        %v1402 = vadd.f32 0.0, %v1401
        %v1403 = vpop.f32.mrb[0].mxu0
        %v1404 = vpop.f32.mrb[0].mxu0
        %v1405 = vadd.f32 0.0, %v1404
        %v1406 = vpop.f32.mrb[0].mxu0
        %1407 = vmatprep.mubr.bf16.mxu0 0
        %1408 = vmatmul.mubr.bf16.gmra.mrb[0].mxu0 %v967
        %v1409 = vpop.f32.mrb[0].mxu0
        %v1410 = vadd.f32 0.0, %v1409
        %v1411 = vpop.f32.mrb[0].mxu0
        %v1412 = vpop.f32.mrb[0].mxu0
        %v1413 = vadd.f32 0.0, %v1412
        %v1414 = vpop.f32.mrb[0].mxu0
        %1415 = vmatprep.mubr.bf16.mxu0 0
        %1416 = vmatmul.mubr.bf16.gmra.mrb[0].mxu0 %v970
        %v1417 = vpop.f32.mrb[0].mxu0
        %v1418 = vadd.f32 0.0, %v1417
        %v1419 = vpop.f32.mrb[0].mxu0
        %v1420 = vpop.f32.mrb[0].mxu0
        %v1421 = vadd.f32 0.0, %v1420
        %v1422 = vpop.f32.mrb[0].mxu0
        %1423 = vmatprep.mubr.bf16.mxu0 0
        %1424 = vmatmul.mubr.bf16.gmra.mrb[0].mxu0 %v973
        %v1425 = vpop.f32.mrb[0].mxu0
        %v1426 = vadd.f32 0.0, %v1425
        %v1427 = vpop.f32.mrb[0].mxu0
        %v1428 = vpop.f32.mrb[0].mxu0
        %v1429 = vadd.f32 0.0, %v1428
        %v1430 = vpop.f32.mrb[0].mxu0
        %1431 = vmatprep.mubr.bf16.mxu0 0
        %1432 = vmatmul.mubr.bf16.gmra.mrb[0].mxu0 %v976
        %v1433 = vpop.f32.mrb[0].mxu0
        %v1434 = vadd.f32 0.0, %v1433
        %v1435 = vpop.f32.mrb[0].mxu0
        %v1436 = vpop.f32.mrb[0].mxu0
        %v1437 = vadd.f32 0.0, %v1436
        %v1438 = vpop.f32.mrb[0].mxu0
        %1439 = vmatprep.mubr.bf16.mxu0 0
        %1440 = vmatmul.mubr.bf16.gmra.mrb[0].mxu0 %v979
        %v1441 = vpop.f32.mrb[0].mxu0
        %v1442 = vadd.f32 0.0, %v1441
        %v1443 = vpop.f32.mrb[0].mxu0
        %v1444 = vpop.f32.mrb[0].mxu0
        %v1445 = vadd.f32 0.0, %v1444
        %v1446 = vpop.f32.mrb[0].mxu0
        %1447 = vmatprep.mubr.bf16.mxu0 0
        %1448 = vmatmul.mubr.bf16.gmra.mrb[0].mxu0 %v982
        %v1449 = vpop.f32.mrb[0].mxu0
        %v1450 = vadd.f32 0.0, %v1449
        %v1451 = vpop.f32.mrb[0].mxu0
        %v1452 = vpop.f32.mrb[0].mxu0
        %v1453 = vadd.f32 0.0, %v1452
        %v1454 = vpop.f32.mrb[0].mxu0
        %1455 = vmatprep.mubr.bf16.mxu0 0
        %1456 = vmatmul.mubr.bf16.gmra.mrb[0].mxu0 %v985
        %v1457 = vpop.f32.mrb[0].mxu0
        %v1458 = vadd.f32 0.0, %v1457
        %v1459 = vpop.f32.mrb[0].mxu0
        %v1460 = vpop.f32.mrb[0].mxu0
        %v1461 = vadd.f32 0.0, %v1460
        %v1462 = vpop.f32.mrb[0].mxu0
        %1463 = vmatprep.mubr.bf16.mxu0 0
        %1464 = vmatmul.mubr.bf16.gmra.mrb[0].mxu0 %v988
        %v1465 = vpop.f32.mrb[0].mxu0
        %v1466 = vadd.f32 0.0, %v1465
        %v1467 = vpop.f32.mrb[0].mxu0
        %v1468 = vpop.f32.mrb[0].mxu0
        %v1469 = vadd.f32 0.0, %v1468
        %v1470 = vpop.f32.mrb[0].mxu0
        %1471 = vmatprep.mubr.bf16.mxu0 0
        %1472 = vmatmul.mubr.bf16.gmra.mrb[0].mxu0 %v991
        %v1473 = vpop.f32.mrb[0].mxu0
        %v1474 = vadd.f32 0.0, %v1473
        %v1475 = vpop.f32.mrb[0].mxu0
        %v1476 = vpop.f32.mrb[0].mxu0
        %v1477 = vadd.f32 0.0, %v1476
        %v1478 = vpop.f32.mrb[0].mxu0
        %1479 = vmatprep.mubr.bf16.mxu0 0
        %1480 = vmatmul.mubr.bf16.gmra.mrb[0].mxu0 %v994
        %v1481 = vpop.f32.mrb[0].mxu0
        %v1482 = vadd.f32 0.0, %v1481
        %v1483 = vpop.f32.mrb[0].mxu0
        %v1484 = vpop.f32.mrb[0].mxu0
        %v1485 = vadd.f32 0.0, %v1484
        %v1486 = vpop.f32.mrb[0].mxu0
        %1487 = vmatprep.mubr.bf16.mxu0 0
        %1488 = vmatmul.mubr.bf16.gmra.mrb[0].mxu0 %v997
        %v1489 = vpop.f32.mrb[0].mxu0
        %v1490 = vadd.f32 0.0, %v1489
        %v1491 = vpop.f32.mrb[0].mxu0
        %v1492 = vpop.f32.mrb[0].mxu0
        %v1493 = vadd.f32 0.0, %v1492
        %v1494 = vpop.f32.mrb[0].mxu0
        %1495 = vmatprep.mubr.bf16.mxu0 0
        %1496 = vmatmul.mubr.bf16.gmra.mrb[0].mxu0 %v1000
        %v1497 = vpop.f32.mrb[0].mxu0
        %v1498 = vadd.f32 0.0, %v1497
        %v1499 = vpop.f32.mrb[0].mxu0
        %v1500 = vpop.f32.mrb[0].mxu0
        %v1501 = vadd.f32 0.0, %v1500
        %v1502 = vpop.f32.mrb[0].mxu0
        %1503 = vmatprep.mubr.bf16.mxu0 0
        %1504 = vmatmul.mubr.bf16.gmra.mrb[0].mxu0 %v1003
        %v1505 = vpop.f32.mrb[0].mxu0
        %v1506 = vadd.f32 0.0, %v1505
        %v1507 = vpop.f32.mrb[0].mxu0
        %v1508 = vpop.f32.mrb[0].mxu0
        %v1509 = vadd.f32 0.0, %v1508
        %v1510 = vpop.f32.mrb[0].mxu0
        %1511 = vmatprep.mubr.bf16.mxu0 0
        %1512 = vmatmul.mubr.bf16.gmra.mrb[0].mxu0 %v1006
        %v1513 = vpop.f32.mrb[0].mxu0
        %v1514 = vadd.f32 0.0, %v1513
        %v1515 = vpop.f32.mrb[0].mxu0
        %v1516 = vpop.f32.mrb[0].mxu0
        %v1517 = vadd.f32 0.0, %v1516
        %v1518 = vpop.f32.mrb[0].mxu0
        %1519 = vmatprep.mubr.bf16.mxu0 0
        %1520 = vmatmul.mubr.bf16.gmra.mrb[0].mxu0 %v1009
        %v1521 = vpop.f32.mrb[0].mxu0
        %v1522 = vadd.f32 0.0, %v1521
        %v1523 = vpop.f32.mrb[0].mxu0
        %v1524 = vpop.f32.mrb[0].mxu0
        %v1525 = vadd.f32 0.0, %v1524
        %v1526 = vpop.f32.mrb[0].mxu0
        %1527 = vmatprep.mubr.bf16.mxu0 0
        %1528 = vmatmul.mubr.bf16.gmra.mrb[0].mxu0 %v1012
        %v1529 = vpop.f32.mrb[0].mxu0
        %v1530 = vadd.f32 0.0, %v1529
        %v1531 = vpop.f32.mrb[0].mxu0
        %v1532 = vpop.f32.mrb[0].mxu0
        %v1533 = vadd.f32 0.0, %v1532
        %v1534 = vpop.f32.mrb[0].mxu0
        %1535 = vmatprep.mubr.bf16.mxu0 0
        %1536 = vmatmul.mubr.bf16.gmra.mrb[0].mxu0 %v1015
        %v1537 = vpop.f32.mrb[0].mxu0
        %v1538 = vadd.f32 0.0, %v1537
        %v1539 = vpop.f32.mrb[0].mxu0
        %v1540 = vpop.f32.mrb[0].mxu0
        %v1541 = vadd.f32 0.0, %v1540
        %v1542 = vpop.f32.mrb[0].mxu0
        %1543 = vmatprep.mubr.bf16.mxu0 0
        %1544 = vmatmul.mubr.bf16.gmra.mrb[0].mxu0 %v1018
        %v1545 = vpop.f32.mrb[0].mxu0
        %v1546 = vadd.f32 0.0, %v1545
        %v1547 = vpop.f32.mrb[0].mxu0
        %v1548 = vpop.f32.mrb[0].mxu0
        %v1549 = vadd.f32 0.0, %v1548
        %v1550 = vpop.f32.mrb[0].mxu0
        %1551 = vmatprep.mubr.bf16.mxu0 0
        %1552 = vmatmul.mubr.bf16.gmra.mrb[0].mxu0 %v1021
        %v1553 = vpop.f32.mrb[0].mxu0
        %v1554 = vadd.f32 0.0, %v1553
        %v1555 = vpop.f32.mrb[0].mxu0
        %v1556 = vpop.f32.mrb[0].mxu0
        %v1557 = vadd.f32 0.0, %v1556
        %v1558 = vpop.f32.mrb[0].mxu0
        %1559 = vmatprep.mubr.bf16.mxu0 0
        %1560 = vmatmul.mubr.bf16.gmra.mrb[0].mxu0 %v1024
        %v1561 = vpop.f32.mrb[0].mxu0
        %v1562 = vadd.f32 0.0, %v1561
        %v1563 = vpop.f32.mrb[0].mxu0
        %v1564 = vpop.f32.mrb[0].mxu0
        %v1565 = vadd.f32 0.0, %v1564
        %v1566 = vpop.f32.mrb[0].mxu0
        %1567 = vmatprep.mubr.bf16.mxu0 0
        %1568 = vmatmul.mubr.bf16.gmra.mrb[0].mxu0 %v1027
        %v1569 = vpop.f32.mrb[0].mxu0
        %v1570 = vadd.f32 0.0, %v1569
        %v1571 = vpop.f32.mrb[0].mxu0
        %v1572 = vpop.f32.mrb[0].mxu0
        %v1573 = vadd.f32 0.0, %v1572
        %v1574 = vpop.f32.mrb[0].mxu0
        %1575 = vmatprep.mubr.bf16.mxu0 0
        %1576 = vmatmul.mubr.bf16.gmra.mrb[0].mxu0 %v1030
        %v1577 = vpop.f32.mrb[0].mxu0
        %v1578 = vadd.f32 0.0, %v1577
        %v1579 = vpop.f32.mrb[0].mxu0
        %v1580 = vpop.f32.mrb[0].mxu0
        %v1581 = vadd.f32 0.0, %v1580
        %v1582 = vpop.f32.mrb[0].mxu0
        %1583 = vmatprep.mubr.bf16.mxu0 0
        %1584 = vmatmul.mubr.bf16.gmra.mrb[0].mxu0 %v1033
        %v1585 = vpop.f32.mrb[0].mxu0
        %v1586 = vadd.f32 0.0, %v1585
        %v1587 = vpop.f32.mrb[0].mxu0
        %v1588 = vpop.f32.mrb[0].mxu0
        %v1589 = vadd.f32 0.0, %v1588
        %v1590 = vpop.f32.mrb[0].mxu0
        %1591 = vmatprep.mubr.bf16.mxu0 0
        %1592 = vmatmul.mubr.bf16.gmra.mrb[0].mxu0 %v1036
        %v1593 = vpop.f32.mrb[0].mxu0
        %v1594 = vadd.f32 0.0, %v1593
        %v1595 = vpop.f32.mrb[0].mxu0
        %v1596 = vpop.f32.mrb[0].mxu0
        %v1597 = vadd.f32 0.0, %v1596
        %v1598 = vpop.f32.mrb[0].mxu0
        %1599 = vmatprep.mubr.bf16.mxu0 0
        %1600 = vmatmul.mubr.bf16.gmra.mrb[0].mxu0 %v1039
        %v1601 = vpop.f32.mrb[0].mxu0
        %v1602 = vadd.f32 0.0, %v1601
        %v1603 = vpop.f32.mrb[0].mxu0
        %v1604 = vpop.f32.mrb[0].mxu0
        %v1605 = vadd.f32 0.0, %v1604
        %v1606 = vpop.f32.mrb[0].mxu0
        %1607 = vmatprep.mubr.bf16.mxu0 0
        %1608 = vmatmul.mubr.bf16.gmra.mrb[0].mxu0 %v1042
        %v1609 = vpop.f32.mrb[0].mxu0
        %v1610 = vadd.f32 0.0, %v1609
        %v1611 = vpop.f32.mrb[0].mxu0
        %v1612 = vpop.f32.mrb[0].mxu0
        %v1613 = vadd.f32 0.0, %v1612
        %v1614 = vpop.f32.mrb[0].mxu0
        %1615 = vmatprep.mubr.bf16.mxu0 0
        %1616 = vmatmul.mubr.bf16.gmra.mrb[0].mxu0 %v1045
        %v1617 = vpop.f32.mrb[0].mxu0
        %v1618 = vadd.f32 0.0, %v1617
        %v1619 = vpop.f32.mrb[0].mxu0
        %v1620 = vpop.f32.mrb[0].mxu0
        %v1621 = vadd.f32 0.0, %v1620
        %v1622 = vpop.f32.mrb[0].mxu0
        %1623 = vmatprep.mubr.bf16.mxu0 0
        %1624 = vmatmul.mubr.bf16.gmra.mrb[0].mxu0 %v1048
        %v1625 = vpop.f32.mrb[0].mxu0
        %v1626 = vadd.f32 0.0, %v1625
        %v1627 = vpop.f32.mrb[0].mxu0
        %v1628 = vpop.f32.mrb[0].mxu0
        %v1629 = vadd.f32 0.0, %v1628
        %v1630 = vpop.f32.mrb[0].mxu0
        %1631 = vmatprep.mubr.bf16.mxu0 0
        %1632 = vmatmul.mubr.bf16.gmra.mrb[0].mxu0 %v1051
        %v1633 = vpop.f32.mrb[0].mxu0
        %v1634 = vadd.f32 0.0, %v1633
        %v1635 = vpop.f32.mrb[0].mxu0
        %v1636 = vpop.f32.mrb[0].mxu0
        %v1637 = vadd.f32 0.0, %v1636
        %v1638 = vpop.f32.mrb[0].mxu0
        %1639 = vmatprep.mubr.bf16.mxu0 0
        %1640 = vmatmul.mubr.bf16.gmra.mrb[0].mxu0 %v1054
        %v1641 = vpop.f32.mrb[0].mxu0
        %v1642 = vadd.f32 0.0, %v1641
        %v1643 = vpop.f32.mrb[0].mxu0
        %v1644 = vpop.f32.mrb[0].mxu0
        %v1645 = vadd.f32 0.0, %v1644
        %v1646 = vpop.f32.mrb[0].mxu0
        %1647 = vmatprep.mubr.bf16.mxu0 0
        %1648 = vmatmul.mubr.bf16.gmra.mrb[0].mxu0 %v1057
        %v1649 = vpop.f32.mrb[0].mxu0
        %v1650 = vadd.f32 0.0, %v1649
        %v1651 = vpop.f32.mrb[0].mxu0
        %v1652 = vpop.f32.mrb[0].mxu0
        %v1653 = vadd.f32 0.0, %v1652
        %v1654 = vpop.f32.mrb[0].mxu0
        %1655 = vmatprep.mubr.bf16.mxu0 0
        %1656 = vmatmul.mubr.bf16.gmra.mrb[0].mxu0 %v1060
        %v1657 = vpop.f32.mrb[0].mxu0
        %v1658 = vadd.f32 0.0, %v1657
        %v1659 = vpop.f32.mrb[0].mxu0
        %v1660 = vpop.f32.mrb[0].mxu0
        %v1661 = vadd.f32 0.0, %v1660
        %v1662 = vpop.f32.mrb[0].mxu0
        %1663 = vmatprep.mubr.bf16.mxu0 0
        %1664 = vmatmul.mubr.bf16.gmra.mrb[0].mxu0 %v1063
        %v1665 = vpop.f32.mrb[0].mxu0
        %v1666 = vadd.f32 0.0, %v1665
        %v1667 = vpop.f32.mrb[0].mxu0
        %v1668 = vpop.f32.mrb[0].mxu0
        %v1669 = vadd.f32 0.0, %v1668
        %v1670 = vpop.f32.mrb[0].mxu0
        %1671 = vmatprep.mubr.bf16.mxu0 0
        %1672 = vmatmul.mubr.bf16.gmra.mrb[0].mxu0 %v1066
        %v1673 = vpop.f32.mrb[0].mxu0
        %v1674 = vadd.f32 0.0, %v1673
        %v1675 = vpop.f32.mrb[0].mxu0
        %v1676 = vpop.f32.mrb[0].mxu0
        %v1677 = vadd.f32 0.0, %v1676
        %v1678 = vpop.f32.mrb[0].mxu0
        %1679 = vmatprep.mubr.bf16.mxu0 0
        %1680 = vmatmul.mubr.bf16.gmra.mrb[0].mxu0 %v1069
        %v1681 = vpop.f32.mrb[0].mxu0
        %v1682 = vadd.f32 0.0, %v1681
        %v1683 = vpop.f32.mrb[0].mxu0
        %v1684 = vpop.f32.mrb[0].mxu0
        %v1685 = vadd.f32 0.0, %v1684
        %v1686 = vpop.f32.mrb[0].mxu0
        %1687 = vmatprep.mubr.bf16.mxu0 0
        %1688 = vmatmul.mubr.bf16.gmra.mrb[0].mxu0 %v1072
        %v1689 = vpop.f32.mrb[0].mxu0
        %v1690 = vadd.f32 0.0, %v1689
        %v1691 = vpop.f32.mrb[0].mxu0
        %v1692 = vpop.f32.mrb[0].mxu0
        %v1693 = vadd.f32 0.0, %v1692
        %v1694 = vpop.f32.mrb[0].mxu0
        %1695 = vmatprep.mubr.bf16.mxu0 0
        %1696 = vmatmul.mubr.bf16.gmra.mrb[0].mxu0 %v1075
        %v1697 = vpop.f32.mrb[0].mxu0
        %v1698 = vadd.f32 0.0, %v1697
        %v1699 = vpop.f32.mrb[0].mxu0
        %v1700 = vpop.f32.mrb[0].mxu0
        %v1701 = vadd.f32 0.0, %v1700
        %v1702 = vpop.f32.mrb[0].mxu0
        %1703 = vmatprep.mubr.bf16.mxu0 0
        %1704 = vmatmul.mubr.bf16.gmra.mrb[0].mxu0 %v1078
        %v1705 = vpop.f32.mrb[0].mxu0
        %v1706 = vadd.f32 0.0, %v1705
        %v1707 = vpop.f32.mrb[0].mxu0
        %v1708 = vpop.f32.mrb[0].mxu0
        %v1709 = vadd.f32 0.0, %v1708
        %v1710 = vpop.f32.mrb[0].mxu0
        %1711 = vmatprep.mubr.bf16.mxu0 0
        %1712 = vmatmul.mubr.bf16.gmra.mrb[0].mxu0 %v1081
        %v1713 = vpop.f32.mrb[0].mxu0
        %v1714 = vadd.f32 0.0, %v1713
        %v1715 = vpop.f32.mrb[0].mxu0
        %v1716 = vpop.f32.mrb[0].mxu0
        %v1717 = vadd.f32 0.0, %v1716
        %v1718 = vpop.f32.mrb[0].mxu0
        %1719 = vmatprep.mubr.bf16.mxu0 0
        %1720 = vmatmul.mubr.bf16.gmra.mrb[0].mxu0 %v1084
        %v1721 = vpop.f32.mrb[0].mxu0
        %v1722 = vadd.f32 0.0, %v1721
        %v1723 = vpop.f32.mrb[0].mxu0
        %v1724 = vpop.f32.mrb[0].mxu0
        %v1725 = vadd.f32 0.0, %v1724
        %v1726 = vpop.f32.mrb[0].mxu0
        %1727 = vmatprep.mubr.bf16.mxu0 0
        %1728 = vmatmul.mubr.bf16.gmra.mrb[0].mxu0 %v1087
        %v1729 = vpop.f32.mrb[0].mxu0
        %v1730 = vadd.f32 0.0, %v1729
        %v1731 = vpop.f32.mrb[0].mxu0
        %v1732 = vpop.f32.mrb[0].mxu0
        %v1733 = vadd.f32 0.0, %v1732
        %v1734 = vpop.f32.mrb[0].mxu0
        %1735 = vmatprep.mubr.bf16.mxu0 0
        %1736 = vmatmul.mubr.bf16.gmra.mrb[0].mxu0 %v1090
        %v1737 = vpop.f32.mrb[0].mxu0
        %v1738 = vadd.f32 0.0, %v1737
        %v1739 = vpop.f32.mrb[0].mxu0
        %v1740 = vpop.f32.mrb[0].mxu0
        %v1741 = vadd.f32 0.0, %v1740
        %v1742 = vpop.f32.mrb[0].mxu0
        %1743 = vmatprep.mubr.bf16.mxu0 0
        %1744 = vmatmul.mubr.bf16.gmra.mrb[0].mxu0 %v1093
        %v1745 = vpop.f32.mrb[0].mxu0
        %v1746 = vadd.f32 0.0, %v1745
        %v1747 = vpop.f32.mrb[0].mxu0
        %v1748 = vpop.f32.mrb[0].mxu0
        %v1749 = vadd.f32 0.0, %v1748
        %v1750 = vpop.f32.mrb[0].mxu0
        %1751 = vmatprep.mubr.bf16.mxu0 0
        %1752 = vmatmul.mubr.bf16.gmra.mrb[0].mxu0 %v1096
        %v1753 = vpop.f32.mrb[0].mxu0
        %v1754 = vadd.f32 0.0, %v1753
        %v1755 = vpop.f32.mrb[0].mxu0
        %v1756 = vpop.f32.mrb[0].mxu0
        %v1757 = vadd.f32 0.0, %v1756
        %v1758 = vpop.f32.mrb[0].mxu0
        %1759 = vmatprep.mubr.bf16.mxu0 0
        %1760 = vmatmul.mubr.bf16.gmra.mrb[0].mxu0 %v1099
        %v1761 = vpop.f32.mrb[0].mxu0
        %v1762 = vadd.f32 0.0, %v1761
        %v1763 = vpop.f32.mrb[0].mxu0
        %v1764 = vpop.f32.mrb[0].mxu0
        %v1765 = vadd.f32 0.0, %v1764
        %v1766 = vpop.f32.mrb[0].mxu0
        %1767 = vmatprep.mubr.bf16.mxu0 0
        %1768 = vmatmul.mubr.bf16.gmra.mrb[0].mxu0 %v1102
        %v1769 = vpop.f32.mrb[0].mxu0
        %v1770 = vadd.f32 0.0, %v1769
        %v1771 = vpop.f32.mrb[0].mxu0
        %v1772 = vpop.f32.mrb[0].mxu0
        %v1773 = vadd.f32 0.0, %v1772
        %v1774 = vpop.f32.mrb[0].mxu0
        %1775 = vmatprep.mubr.bf16.mxu0 0
        %1776 = vmatmul.mubr.bf16.gmra.mrb[0].mxu0 %v1105
        %v1777 = vpop.f32.mrb[0].mxu0
        %v1778 = vadd.f32 0.0, %v1777
        %v1779 = vpop.f32.mrb[0].mxu0
        %v1780 = vpop.f32.mrb[0].mxu0
        %v1781 = vadd.f32 0.0, %v1780
        %v1782 = vpop.f32.mrb[0].mxu0
        %1783 = vmatprep.mubr.bf16.mxu0 0
        %1784 = vmatmul.mubr.bf16.gmra.mrb[0].mxu0 %v1108
        %v1785 = vpop.f32.mrb[0].mxu0
        %v1786 = vadd.f32 0.0, %v1785
        %v1787 = vpop.f32.mrb[0].mxu0
        %v1788 = vpop.f32.mrb[0].mxu0
        %v1789 = vadd.f32 0.0, %v1788
        %v1790 = vpop.f32.mrb[0].mxu0
        %1791 = vmatprep.mubr.bf16.mxu0 0
        %1792 = vmatmul.mubr.bf16.gmra.mrb[0].mxu0 %v1111
        %v1793 = vpop.f32.mrb[0].mxu0
        %v1794 = vadd.f32 0.0, %v1793
        %v1795 = vpop.f32.mrb[0].mxu0
        %v1796 = vpop.f32.mrb[0].mxu0
        %v1797 = vadd.f32 0.0, %v1796
        %v1798 = vpop.f32.mrb[0].mxu0
        %1799 = vmatprep.mubr.bf16.mxu0 0
        %1800 = vmatmul.mubr.bf16.gmra.mrb[0].mxu0 %v1114
        %v1801 = vpop.f32.mrb[0].mxu0
        %v1802 = vadd.f32 0.0, %v1801
        %v1803 = vpop.f32.mrb[0].mxu0
        %v1804 = vpop.f32.mrb[0].mxu0
        %v1805 = vadd.f32 0.0, %v1804
        %v1806 = vpop.f32.mrb[0].mxu0
        %1807 = vmatprep.mubr.bf16.mxu0 0
        %1808 = vmatmul.mubr.bf16.gmra.mrb[0].mxu0 %v1117
        %v1809 = vpop.f32.mrb[0].mxu0
        %v1810 = vadd.f32 0.0, %v1809
        %v1811 = vpop.f32.mrb[0].mxu0
        %v1812 = vpop.f32.mrb[0].mxu0
        %v1813 = vadd.f32 0.0, %v1812
        %v1814 = vpop.f32.mrb[0].mxu0
        %1815 = vmatprep.mubr.bf16.mxu0 0
        %1816 = vmatmul.mubr.bf16.gmra.mrb[0].mxu0 %v1120
        %v1817 = vpop.f32.mrb[0].mxu0
        %v1818 = vadd.f32 0.0, %v1817
        %v1819 = vpop.f32.mrb[0].mxu0
        %v1820 = vpop.f32.mrb[0].mxu0
        %v1821 = vadd.f32 0.0, %v1820
        %v1822 = vpop.f32.mrb[0].mxu0
        %1823 = vmatprep.mubr.bf16.mxu0 0
        %1824 = vmatmul.mubr.bf16.gmra.mrb[0].mxu0 %v1123
        %v1825 = vpop.f32.mrb[0].mxu0
        %v1826 = vadd.f32 0.0, %v1825
        %v1827 = vpop.f32.mrb[0].mxu0
        %v1828 = vpop.f32.mrb[0].mxu0
        %v1829 = vadd.f32 0.0, %v1828
        %v1830 = vpop.f32.mrb[0].mxu0
        %1831 = vmatprep.mubr.bf16.mxu0 0
        %1832 = vmatmul.mubr.bf16.gmra.mrb[0].mxu0 %v1126
        %v1833 = vpop.f32.mrb[0].mxu0
        %v1834 = vadd.f32 0.0, %v1833
        %v1835 = vpop.f32.mrb[0].mxu0
        %v1836 = vpop.f32.mrb[0].mxu0
        %v1837 = vadd.f32 0.0, %v1836
        %v1838 = vpop.f32.mrb[0].mxu0
        %1839 = vmatprep.mubr.bf16.mxu0 0
        %1840 = vmatmul.mubr.bf16.gmra.mrb[0].mxu0 %v1129
        %v1841 = vpop.f32.mrb[0].mxu0
        %v1842 = vadd.f32 0.0, %v1841
        %v1843 = vpop.f32.mrb[0].mxu0
        %v1844 = vpop.f32.mrb[0].mxu0
        %v1845 = vadd.f32 0.0, %v1844
        %v1846 = vpop.f32.mrb[0].mxu0
        %1847 = vdwg.mxu0
        %v1849 = vsel %vm875, %v532, 0
        %v1852 = vsel %vm875, %v533, 0
        %v1855 = vsel %vm875, %v534, 0
        %v1858 = vsel %vm875, %v535, 0
        %v1861 = vsel %vm875, %v536, 0
        %v1864 = vsel %vm875, %v537, 0
        %v1867 = vsel %vm875, %v538, 0
        %v1870 = vsel %vm875, %v539, 0
        %v1873 = vsel %vm875, %v540, 0
        %v1876 = vsel %vm875, %v541, 0
        %v1879 = vsel %vm875, %v542, 0
        %v1882 = vsel %vm875, %v543, 0
        %v1885 = vsel %vm875, %v544, 0
        %v1888 = vsel %vm875, %v545, 0
        %v1891 = vsel %vm875, %v546, 0
        %v1894 = vsel %vm875, %v547, 0
        %v1897 = vsel %vm875, %v548, 0
        %v1900 = vsel %vm875, %v549, 0
        %v1903 = vsel %vm875, %v550, 0
        %v1906 = vsel %vm875, %v551, 0
        %v1909 = vsel %vm875, %v552, 0
        %v1912 = vsel %vm875, %v553, 0
        %v1915 = vsel %vm875, %v554, 0
        %v1918 = vsel %vm875, %v555, 0
        %v1921 = vsel %vm875, %v556, 0
        %v1924 = vsel %vm875, %v557, 0
        %v1927 = vsel %vm875, %v558, 0
        %v1930 = vsel %vm875, %v559, 0
        %v1933 = vsel %vm875, %v560, 0
        %v1936 = vsel %vm875, %v561, 0
        %v1939 = vsel %vm875, %v562, 0
        %v1942 = vsel %vm875, %v563, 0
        %v1945 = vsel %vm875, %v564, 0
        %v1948 = vsel %vm875, %v565, 0
        %v1951 = vsel %vm875, %v566, 0
        %v1954 = vsel %vm875, %v567, 0
        %v1957 = vsel %vm875, %v568, 0
        %v1960 = vsel %vm875, %v569, 0
        %v1963 = vsel %vm875, %v570, 0
        %v1966 = vsel %vm875, %v571, 0
        %v1969 = vsel %vm875, %v572, 0
        %v1972 = vsel %vm875, %v573, 0
        %v1975 = vsel %vm875, %v574, 0
        %v1978 = vsel %vm875, %v575, 0
        %v1981 = vsel %vm875, %v576, 0
        %v1984 = vsel %vm875, %v577, 0
        %v1987 = vsel %vm875, %v578, 0
        %v1990 = vsel %vm875, %v579, 0
        %v1993 = vsel %vm875, %v580, 0
        %v1996 = vsel %vm875, %v581, 0
        %v1999 = vsel %vm875, %v582, 0
        %v2002 = vsel %vm875, %v583, 0
        %v2005 = vsel %vm875, %v584, 0
        %v2008 = vsel %vm875, %v585, 0
        %v2011 = vsel %vm875, %v586, 0
        %v2014 = vsel %vm875, %v587, 0
        %v2017 = vsel %vm875, %v588, 0
        %v2020 = vsel %vm875, %v589, 0
        %v2023 = vsel %vm875, %v590, 0
        %v2026 = vsel %vm875, %v591, 0
        %v2029 = vsel %vm875, %v592, 0
        %v2032 = vsel %vm875, %v593, 0
        %v2035 = vsel %vm875, %v594, 0
        %v2038 = vsel %vm875, %v595, 0
        %v2041 = vsel %vm875, %v596, 0
        %v2044 = vsel %vm875, %v597, 0
        %v2047 = vsel %vm875, %v598, 0
        %v2050 = vsel %vm875, %v599, 0
        %v2053 = vsel %vm875, %v600, 0
        %v2056 = vsel %vm875, %v601, 0
        %v2059 = vsel %vm875, %v602, 0
        %v2062 = vsel %vm875, %v603, 0
        %v2065 = vsel %vm875, %v604, 0
        %v2068 = vsel %vm875, %v605, 0
        %v2071 = vsel %vm875, %v606, 0
        %v2074 = vsel %vm875, %v607, 0
        %v2077 = vsel %vm875, %v608, 0
        %v2080 = vsel %vm875, %v609, 0
        %v2083 = vsel %vm875, %v610, 0
        %v2086 = vsel %vm875, %v611, 0
        %v2089 = vsel %vm875, %v612, 0
        %v2092 = vsel %vm875, %v613, 0
        %v2095 = vsel %vm875, %v614, 0
        %v2098 = vsel %vm875, %v615, 0
        %v2101 = vsel %vm875, %v616, 0
        %v2104 = vsel %vm1131, %v617, 0
        %2106 = vmatprep.subr.bf16.mxu0 0
        %2107 = vmatpush1.bf16.msra.mxu0 %v2104
        %2108 = vmatprep.subr.bf16.mxu0 0
        %2109 = vmatpush1.bf16.msra.mxu0 0
        %2110 = vmatprep.subr.bf16.mxu0 0
        %2111 = vmatpush1.bf16.msra.mxu0 0
        %2112 = vmatprep.subr.bf16.mxu0 0
        %2113 = vmatpush1.bf16.msra.mxu0 0
        %2114 = vmatprep.subr.bf16.mxu0 0
        %2115 = vmatpush1.bf16.msra.mxu0 0
        %2116 = vmatprep.subr.bf16.mxu0 0
        %2117 = vmatpush1.bf16.msra.mxu0 0
        %2118 = vmatprep.subr.bf16.mxu0 0
        %2119 = vmatpush1.bf16.msra.mxu0 0
        %2120 = vmatprep.subr.bf16.mxu0 0
        %2121 = vmatpush1.bf16.msra.mxu0 0
        %2122 = vmatprep.subr.bf16.mxu0 0
        %2123 = vmatpush1.bf16.msra.mxu0 0
        %2124 = vmatprep.subr.bf16.mxu0 0
        %2125 = vmatpush1.bf16.msra.mxu0 0
        %2126 = vmatprep.subr.bf16.mxu0 0
        %2127 = vmatpush1.bf16.msra.mxu0 0
        %2128 = vmatprep.subr.bf16.mxu0 0
        %2129 = vmatpush1.bf16.msra.mxu0 0
        %2130 = vmatprep.subr.bf16.mxu0 0
        %2131 = vmatpush1.bf16.msra.mxu0 0
        %2132 = vmatprep.subr.bf16.mxu0 0
        %2133 = vmatpush1.bf16.msra.mxu0 0
        %2134 = vmatprep.subr.bf16.mxu0 0
        %2135 = vmatpush1.bf16.msra.mxu0 0
        %2136 = vmatprep.subr.bf16.mxu0 0
        %2137 = vmatpush1.bf16.msra.mxu0 0
        %2138 = vmatprep.mubr.bf16.mxu0 0
        %2139 = vmatmul.mubr.bf16.gmra.mrb[0].mxu0 %v1849
        %v2140 = vpop.f32.mrb[0].mxu0
        %v2141 = vadd.f32 %v1170, %v2140
        %v2142 = vpop.f32.mrb[0].mxu0
        %v2143 = vpop.f32.mrb[0].mxu0
        %v2144 = vadd.f32 %v1173, %v2143
        %v2145 = vpop.f32.mrb[0].mxu0
        %2146 = vmatprep.mubr.bf16.mxu0 0
        %2147 = vmatmul.mubr.bf16.gmra.mrb[0].mxu0 %v1852
        %v2148 = vpop.f32.mrb[0].mxu0
        %v2149 = vadd.f32 %v1178, %v2148
        %v2150 = vpop.f32.mrb[0].mxu0
        %v2151 = vpop.f32.mrb[0].mxu0
        %v2152 = vadd.f32 %v1181, %v2151
        %v2153 = vpop.f32.mrb[0].mxu0
        %2154 = vmatprep.mubr.bf16.mxu0 0
        %2155 = vmatmul.mubr.bf16.gmra.mrb[0].mxu0 %v1855
        %v2156 = vpop.f32.mrb[0].mxu0
        %v2157 = vadd.f32 %v1186, %v2156
        %v2158 = vpop.f32.mrb[0].mxu0
        %v2159 = vpop.f32.mrb[0].mxu0
        %v2160 = vadd.f32 %v1189, %v2159
        %v2161 = vpop.f32.mrb[0].mxu0
        %2162 = vmatprep.mubr.bf16.mxu0 0
        %2163 = vmatmul.mubr.bf16.gmra.mrb[0].mxu0 %v1858
        %v2164 = vpop.f32.mrb[0].mxu0
        %v2165 = vadd.f32 %v1194, %v2164
        %v2166 = vpop.f32.mrb[0].mxu0
        %v2167 = vpop.f32.mrb[0].mxu0
        %v2168 = vadd.f32 %v1197, %v2167
        %v2169 = vpop.f32.mrb[0].mxu0
        %2170 = vmatprep.mubr.bf16.mxu0 0
        %2171 = vmatmul.mubr.bf16.gmra.mrb[0].mxu0 %v1861
        %v2172 = vpop.f32.mrb[0].mxu0
        %v2173 = vadd.f32 %v1202, %v2172
        %v2174 = vpop.f32.mrb[0].mxu0
        %v2175 = vpop.f32.mrb[0].mxu0
        %v2176 = vadd.f32 %v1205, %v2175
        %v2177 = vpop.f32.mrb[0].mxu0
        %2178 = vmatprep.mubr.bf16.mxu0 0
        %2179 = vmatmul.mubr.bf16.gmra.mrb[0].mxu0 %v1864
        %v2180 = vpop.f32.mrb[0].mxu0
        %v2181 = vadd.f32 %v1210, %v2180
        %v2182 = vpop.f32.mrb[0].mxu0
        %v2183 = vpop.f32.mrb[0].mxu0
        %v2184 = vadd.f32 %v1213, %v2183
        %v2185 = vpop.f32.mrb[0].mxu0
        %2186 = vmatprep.mubr.bf16.mxu0 0
        %2187 = vmatmul.mubr.bf16.gmra.mrb[0].mxu0 %v1867
        %v2188 = vpop.f32.mrb[0].mxu0
        %v2189 = vadd.f32 %v1218, %v2188
        %v2190 = vpop.f32.mrb[0].mxu0
        %v2191 = vpop.f32.mrb[0].mxu0
        %v2192 = vadd.f32 %v1221, %v2191
        %v2193 = vpop.f32.mrb[0].mxu0
        %2194 = vmatprep.mubr.bf16.mxu0 0
        %2195 = vmatmul.mubr.bf16.gmra.mrb[0].mxu0 %v1870
        %v2196 = vpop.f32.mrb[0].mxu0
        %v2197 = vadd.f32 %v1226, %v2196
        %v2198 = vpop.f32.mrb[0].mxu0
        %v2199 = vpop.f32.mrb[0].mxu0
        %v2200 = vadd.f32 %v1229, %v2199
        %v2201 = vpop.f32.mrb[0].mxu0
        %2202 = vmatprep.mubr.bf16.mxu0 0
        %2203 = vmatmul.mubr.bf16.gmra.mrb[0].mxu0 %v1873
        %v2204 = vpop.f32.mrb[0].mxu0
        %v2205 = vadd.f32 %v1234, %v2204
        %v2206 = vpop.f32.mrb[0].mxu0
        %v2207 = vpop.f32.mrb[0].mxu0
        %v2208 = vadd.f32 %v1237, %v2207
        %v2209 = vpop.f32.mrb[0].mxu0
        %2210 = vmatprep.mubr.bf16.mxu0 0
        %2211 = vmatmul.mubr.bf16.gmra.mrb[0].mxu0 %v1876
        %v2212 = vpop.f32.mrb[0].mxu0
        %v2213 = vadd.f32 %v1242, %v2212
        %v2214 = vpop.f32.mrb[0].mxu0
        %v2215 = vpop.f32.mrb[0].mxu0
        %v2216 = vadd.f32 %v1245, %v2215
        %v2217 = vpop.f32.mrb[0].mxu0
        %2218 = vmatprep.mubr.bf16.mxu0 0
        %2219 = vmatmul.mubr.bf16.gmra.mrb[0].mxu0 %v1879
        %v2220 = vpop.f32.mrb[0].mxu0
        %v2221 = vadd.f32 %v1250, %v2220
        %v2222 = vpop.f32.mrb[0].mxu0
        %v2223 = vpop.f32.mrb[0].mxu0
        %v2224 = vadd.f32 %v1253, %v2223
        %v2225 = vpop.f32.mrb[0].mxu0
        %2226 = vmatprep.mubr.bf16.mxu0 0
        %2227 = vmatmul.mubr.bf16.gmra.mrb[0].mxu0 %v1882
        %v2228 = vpop.f32.mrb[0].mxu0
        %v2229 = vadd.f32 %v1258, %v2228
        %v2230 = vpop.f32.mrb[0].mxu0
        %v2231 = vpop.f32.mrb[0].mxu0
        %v2232 = vadd.f32 %v1261, %v2231
        %v2233 = vpop.f32.mrb[0].mxu0
        %2234 = vmatprep.mubr.bf16.mxu0 0
        %2235 = vmatmul.mubr.bf16.gmra.mrb[0].mxu0 %v1885
        %v2236 = vpop.f32.mrb[0].mxu0
        %v2237 = vadd.f32 %v1266, %v2236
        %v2238 = vpop.f32.mrb[0].mxu0
        %v2239 = vpop.f32.mrb[0].mxu0
        %v2240 = vadd.f32 %v1269, %v2239
        %v2241 = vpop.f32.mrb[0].mxu0
        %2242 = vmatprep.mubr.bf16.mxu0 0
        %2243 = vmatmul.mubr.bf16.gmra.mrb[0].mxu0 %v1888
        %v2244 = vpop.f32.mrb[0].mxu0
        %v2245 = vadd.f32 %v1274, %v2244
        %v2246 = vpop.f32.mrb[0].mxu0
        %v2247 = vpop.f32.mrb[0].mxu0
        %v2248 = vadd.f32 %v1277, %v2247
        %v2249 = vpop.f32.mrb[0].mxu0
        %2250 = vmatprep.mubr.bf16.mxu0 0
        %2251 = vmatmul.mubr.bf16.gmra.mrb[0].mxu0 %v1891
        %v2252 = vpop.f32.mrb[0].mxu0
        %v2253 = vadd.f32 %v1282, %v2252
        %v2254 = vpop.f32.mrb[0].mxu0
        %v2255 = vpop.f32.mrb[0].mxu0
        %v2256 = vadd.f32 %v1285, %v2255
        %v2257 = vpop.f32.mrb[0].mxu0
        %2258 = vmatprep.mubr.bf16.mxu0 0
        %2259 = vmatmul.mubr.bf16.gmra.mrb[0].mxu0 %v1894
        %v2260 = vpop.f32.mrb[0].mxu0
        %v2261 = vadd.f32 %v1290, %v2260
        %v2262 = vpop.f32.mrb[0].mxu0
        %v2263 = vpop.f32.mrb[0].mxu0
        %v2264 = vadd.f32 %v1293, %v2263
        %v2265 = vpop.f32.mrb[0].mxu0
        %2266 = vmatprep.mubr.bf16.mxu0 0
        %2267 = vmatmul.mubr.bf16.gmra.mrb[0].mxu0 %v1897
        %v2268 = vpop.f32.mrb[0].mxu0
        %v2269 = vadd.f32 %v1298, %v2268
        %v2270 = vpop.f32.mrb[0].mxu0
        %v2271 = vpop.f32.mrb[0].mxu0
        %v2272 = vadd.f32 %v1301, %v2271
        %v2273 = vpop.f32.mrb[0].mxu0
        %2274 = vmatprep.mubr.bf16.mxu0 0
        %2275 = vmatmul.mubr.bf16.gmra.mrb[0].mxu0 %v1900
        %v2276 = vpop.f32.mrb[0].mxu0
        %v2277 = vadd.f32 %v1306, %v2276
        %v2278 = vpop.f32.mrb[0].mxu0
        %v2279 = vpop.f32.mrb[0].mxu0
        %v2280 = vadd.f32 %v1309, %v2279
        %v2281 = vpop.f32.mrb[0].mxu0
        %2282 = vmatprep.mubr.bf16.mxu0 0
        %2283 = vmatmul.mubr.bf16.gmra.mrb[0].mxu0 %v1903
        %v2284 = vpop.f32.mrb[0].mxu0
        %v2285 = vadd.f32 %v1314, %v2284
        %v2286 = vpop.f32.mrb[0].mxu0
        %v2287 = vpop.f32.mrb[0].mxu0
        %v2288 = vadd.f32 %v1317, %v2287
        %v2289 = vpop.f32.mrb[0].mxu0
        %2290 = vmatprep.mubr.bf16.mxu0 0
        %2291 = vmatmul.mubr.bf16.gmra.mrb[0].mxu0 %v1906
        %v2292 = vpop.f32.mrb[0].mxu0
        %v2293 = vadd.f32 %v1322, %v2292
        %v2294 = vpop.f32.mrb[0].mxu0
        %v2295 = vpop.f32.mrb[0].mxu0
        %v2296 = vadd.f32 %v1325, %v2295
        %v2297 = vpop.f32.mrb[0].mxu0
        %2298 = vmatprep.mubr.bf16.mxu0 0
        %2299 = vmatmul.mubr.bf16.gmra.mrb[0].mxu0 %v1909
        %v2300 = vpop.f32.mrb[0].mxu0
        %v2301 = vadd.f32 %v1330, %v2300
        %v2302 = vpop.f32.mrb[0].mxu0
        %v2303 = vpop.f32.mrb[0].mxu0
        %v2304 = vadd.f32 %v1333, %v2303
        %v2305 = vpop.f32.mrb[0].mxu0
        %2306 = vmatprep.mubr.bf16.mxu0 0
        %2307 = vmatmul.mubr.bf16.gmra.mrb[0].mxu0 %v1912
        %v2308 = vpop.f32.mrb[0].mxu0
        %v2309 = vadd.f32 %v1338, %v2308
        %v2310 = vpop.f32.mrb[0].mxu0
        %v2311 = vpop.f32.mrb[0].mxu0
        %v2312 = vadd.f32 %v1341, %v2311
        %v2313 = vpop.f32.mrb[0].mxu0
        %2314 = vmatprep.mubr.bf16.mxu0 0
        %2315 = vmatmul.mubr.bf16.gmra.mrb[0].mxu0 %v1915
        %v2316 = vpop.f32.mrb[0].mxu0
        %v2317 = vadd.f32 %v1346, %v2316
        %v2318 = vpop.f32.mrb[0].mxu0
        %v2319 = vpop.f32.mrb[0].mxu0
        %v2320 = vadd.f32 %v1349, %v2319
        %v2321 = vpop.f32.mrb[0].mxu0
        %2322 = vmatprep.mubr.bf16.mxu0 0
        %2323 = vmatmul.mubr.bf16.gmra.mrb[0].mxu0 %v1918
        %v2324 = vpop.f32.mrb[0].mxu0
        %v2325 = vadd.f32 %v1354, %v2324
        %v2326 = vpop.f32.mrb[0].mxu0
        %v2327 = vpop.f32.mrb[0].mxu0
        %v2328 = vadd.f32 %v1357, %v2327
        %v2329 = vpop.f32.mrb[0].mxu0
        %2330 = vmatprep.mubr.bf16.mxu0 0
        %2331 = vmatmul.mubr.bf16.gmra.mrb[0].mxu0 %v1921
        %v2332 = vpop.f32.mrb[0].mxu0
        %v2333 = vadd.f32 %v1362, %v2332
        %v2334 = vpop.f32.mrb[0].mxu0
        %v2335 = vpop.f32.mrb[0].mxu0
        %v2336 = vadd.f32 %v1365, %v2335
        %v2337 = vpop.f32.mrb[0].mxu0
        %2338 = vmatprep.mubr.bf16.mxu0 0
        %2339 = vmatmul.mubr.bf16.gmra.mrb[0].mxu0 %v1924
        %v2340 = vpop.f32.mrb[0].mxu0
        %v2341 = vadd.f32 %v1370, %v2340
        %v2342 = vpop.f32.mrb[0].mxu0
        %v2343 = vpop.f32.mrb[0].mxu0
        %v2344 = vadd.f32 %v1373, %v2343
        %v2345 = vpop.f32.mrb[0].mxu0
        %2346 = vmatprep.mubr.bf16.mxu0 0
        %2347 = vmatmul.mubr.bf16.gmra.mrb[0].mxu0 %v1927
        %v2348 = vpop.f32.mrb[0].mxu0
        %v2349 = vadd.f32 %v1378, %v2348
        %v2350 = vpop.f32.mrb[0].mxu0
        %v2351 = vpop.f32.mrb[0].mxu0
        %v2352 = vadd.f32 %v1381, %v2351
        %v2353 = vpop.f32.mrb[0].mxu0
        %2354 = vmatprep.mubr.bf16.mxu0 0
        %2355 = vmatmul.mubr.bf16.gmra.mrb[0].mxu0 %v1930
        %v2356 = vpop.f32.mrb[0].mxu0
        %v2357 = vadd.f32 %v1386, %v2356
        %v2358 = vpop.f32.mrb[0].mxu0
        %v2359 = vpop.f32.mrb[0].mxu0
        %v2360 = vadd.f32 %v1389, %v2359
        %v2361 = vpop.f32.mrb[0].mxu0
        %2362 = vmatprep.mubr.bf16.mxu0 0
        %2363 = vmatmul.mubr.bf16.gmra.mrb[0].mxu0 %v1933
        %v2364 = vpop.f32.mrb[0].mxu0
        %v2365 = vadd.f32 %v1394, %v2364
        %v2366 = vpop.f32.mrb[0].mxu0
        %v2367 = vpop.f32.mrb[0].mxu0
        %v2368 = vadd.f32 %v1397, %v2367
        %v2369 = vpop.f32.mrb[0].mxu0
        %2370 = vmatprep.mubr.bf16.mxu0 0
        %2371 = vmatmul.mubr.bf16.gmra.mrb[0].mxu0 %v1936
        %v2372 = vpop.f32.mrb[0].mxu0
        %v2373 = vadd.f32 %v1402, %v2372
        %v2374 = vpop.f32.mrb[0].mxu0
        %v2375 = vpop.f32.mrb[0].mxu0
        %v2376 = vadd.f32 %v1405, %v2375
        %v2377 = vpop.f32.mrb[0].mxu0
        %2378 = vmatprep.mubr.bf16.mxu0 0
        %2379 = vmatmul.mubr.bf16.gmra.mrb[0].mxu0 %v1939
        %v2380 = vpop.f32.mrb[0].mxu0
        %v2381 = vadd.f32 %v1410, %v2380
        %v2382 = vpop.f32.mrb[0].mxu0
        %v2383 = vpop.f32.mrb[0].mxu0
        %v2384 = vadd.f32 %v1413, %v2383
        %v2385 = vpop.f32.mrb[0].mxu0
        %2386 = vmatprep.mubr.bf16.mxu0 0
        %2387 = vmatmul.mubr.bf16.gmra.mrb[0].mxu0 %v1942
        %v2388 = vpop.f32.mrb[0].mxu0
        %v2389 = vadd.f32 %v1418, %v2388
        %v2390 = vpop.f32.mrb[0].mxu0
        %v2391 = vpop.f32.mrb[0].mxu0
        %v2392 = vadd.f32 %v1421, %v2391
        %v2393 = vpop.f32.mrb[0].mxu0
        %2394 = vmatprep.mubr.bf16.mxu0 0
        %2395 = vmatmul.mubr.bf16.gmra.mrb[0].mxu0 %v1945
        %v2396 = vpop.f32.mrb[0].mxu0
        %v2397 = vadd.f32 %v1426, %v2396
        %v2398 = vpop.f32.mrb[0].mxu0
        %v2399 = vpop.f32.mrb[0].mxu0
        %v2400 = vadd.f32 %v1429, %v2399
        %v2401 = vpop.f32.mrb[0].mxu0
        %2402 = vmatprep.mubr.bf16.mxu0 0
        %2403 = vmatmul.mubr.bf16.gmra.mrb[0].mxu0 %v1948
        %v2404 = vpop.f32.mrb[0].mxu0
        %v2405 = vadd.f32 %v1434, %v2404
        %v2406 = vpop.f32.mrb[0].mxu0
        %v2407 = vpop.f32.mrb[0].mxu0
        %v2408 = vadd.f32 %v1437, %v2407
        %v2409 = vpop.f32.mrb[0].mxu0
        %2410 = vmatprep.mubr.bf16.mxu0 0
        %2411 = vmatmul.mubr.bf16.gmra.mrb[0].mxu0 %v1951
        %v2412 = vpop.f32.mrb[0].mxu0
        %v2413 = vadd.f32 %v1442, %v2412
        %v2414 = vpop.f32.mrb[0].mxu0
        %v2415 = vpop.f32.mrb[0].mxu0
        %v2416 = vadd.f32 %v1445, %v2415
        %v2417 = vpop.f32.mrb[0].mxu0
        %2418 = vmatprep.mubr.bf16.mxu0 0
        %2419 = vmatmul.mubr.bf16.gmra.mrb[0].mxu0 %v1954
        %v2420 = vpop.f32.mrb[0].mxu0
        %v2421 = vadd.f32 %v1450, %v2420
        %v2422 = vpop.f32.mrb[0].mxu0
        %v2423 = vpop.f32.mrb[0].mxu0
        %v2424 = vadd.f32 %v1453, %v2423
        %v2425 = vpop.f32.mrb[0].mxu0
        %2426 = vmatprep.mubr.bf16.mxu0 0
        %2427 = vmatmul.mubr.bf16.gmra.mrb[0].mxu0 %v1957
        %v2428 = vpop.f32.mrb[0].mxu0
        %v2429 = vadd.f32 %v1458, %v2428
        %v2430 = vpop.f32.mrb[0].mxu0
        %v2431 = vpop.f32.mrb[0].mxu0
        %v2432 = vadd.f32 %v1461, %v2431
        %v2433 = vpop.f32.mrb[0].mxu0
        %2434 = vmatprep.mubr.bf16.mxu0 0
        %2435 = vmatmul.mubr.bf16.gmra.mrb[0].mxu0 %v1960
        %v2436 = vpop.f32.mrb[0].mxu0
        %v2437 = vadd.f32 %v1466, %v2436
        %v2438 = vpop.f32.mrb[0].mxu0
        %v2439 = vpop.f32.mrb[0].mxu0
        %v2440 = vadd.f32 %v1469, %v2439
        %v2441 = vpop.f32.mrb[0].mxu0
        %2442 = vmatprep.mubr.bf16.mxu0 0
        %2443 = vmatmul.mubr.bf16.gmra.mrb[0].mxu0 %v1963
        %v2444 = vpop.f32.mrb[0].mxu0
        %v2445 = vadd.f32 %v1474, %v2444
        %v2446 = vpop.f32.mrb[0].mxu0
        %v2447 = vpop.f32.mrb[0].mxu0
        %v2448 = vadd.f32 %v1477, %v2447
        %v2449 = vpop.f32.mrb[0].mxu0
        %2450 = vmatprep.mubr.bf16.mxu0 0
        %2451 = vmatmul.mubr.bf16.gmra.mrb[0].mxu0 %v1966
        %v2452 = vpop.f32.mrb[0].mxu0
        %v2453 = vadd.f32 %v1482, %v2452
        %v2454 = vpop.f32.mrb[0].mxu0
        %v2455 = vpop.f32.mrb[0].mxu0
        %v2456 = vadd.f32 %v1485, %v2455
        %v2457 = vpop.f32.mrb[0].mxu0
        %2458 = vmatprep.mubr.bf16.mxu0 0
        %2459 = vmatmul.mubr.bf16.gmra.mrb[0].mxu0 %v1969
        %v2460 = vpop.f32.mrb[0].mxu0
        %v2461 = vadd.f32 %v1490, %v2460
        %v2462 = vpop.f32.mrb[0].mxu0
        %v2463 = vpop.f32.mrb[0].mxu0
        %v2464 = vadd.f32 %v1493, %v2463
        %v2465 = vpop.f32.mrb[0].mxu0
        %2466 = vmatprep.mubr.bf16.mxu0 0
        %2467 = vmatmul.mubr.bf16.gmra.mrb[0].mxu0 %v1972
        %v2468 = vpop.f32.mrb[0].mxu0
        %v2469 = vadd.f32 %v1498, %v2468
        %v2470 = vpop.f32.mrb[0].mxu0
        %v2471 = vpop.f32.mrb[0].mxu0
        %v2472 = vadd.f32 %v1501, %v2471
        %v2473 = vpop.f32.mrb[0].mxu0
        %2474 = vmatprep.mubr.bf16.mxu0 0
        %2475 = vmatmul.mubr.bf16.gmra.mrb[0].mxu0 %v1975
        %v2476 = vpop.f32.mrb[0].mxu0
        %v2477 = vadd.f32 %v1506, %v2476
        %v2478 = vpop.f32.mrb[0].mxu0
        %v2479 = vpop.f32.mrb[0].mxu0
        %v2480 = vadd.f32 %v1509, %v2479
        %v2481 = vpop.f32.mrb[0].mxu0
        %2482 = vmatprep.mubr.bf16.mxu0 0
        %2483 = vmatmul.mubr.bf16.gmra.mrb[0].mxu0 %v1978
        %v2484 = vpop.f32.mrb[0].mxu0
        %v2485 = vadd.f32 %v1514, %v2484
        %v2486 = vpop.f32.mrb[0].mxu0
        %v2487 = vpop.f32.mrb[0].mxu0
        %v2488 = vadd.f32 %v1517, %v2487
        %v2489 = vpop.f32.mrb[0].mxu0
        %2490 = vmatprep.mubr.bf16.mxu0 0
        %2491 = vmatmul.mubr.bf16.gmra.mrb[0].mxu0 %v1981
        %v2492 = vpop.f32.mrb[0].mxu0
        %v2493 = vadd.f32 %v1522, %v2492
        %v2494 = vpop.f32.mrb[0].mxu0
        %v2495 = vpop.f32.mrb[0].mxu0
        %v2496 = vadd.f32 %v1525, %v2495
        %v2497 = vpop.f32.mrb[0].mxu0
        %2498 = vmatprep.mubr.bf16.mxu0 0
        %2499 = vmatmul.mubr.bf16.gmra.mrb[0].mxu0 %v1984
        %v2500 = vpop.f32.mrb[0].mxu0
        %v2501 = vadd.f32 %v1530, %v2500
        %v2502 = vpop.f32.mrb[0].mxu0
        %v2503 = vpop.f32.mrb[0].mxu0
        %v2504 = vadd.f32 %v1533, %v2503
        %v2505 = vpop.f32.mrb[0].mxu0
        %2506 = vmatprep.mubr.bf16.mxu0 0
        %2507 = vmatmul.mubr.bf16.gmra.mrb[0].mxu0 %v1987
        %v2508 = vpop.f32.mrb[0].mxu0
        %v2509 = vadd.f32 %v1538, %v2508
        %v2510 = vpop.f32.mrb[0].mxu0
        %v2511 = vpop.f32.mrb[0].mxu0
        %v2512 = vadd.f32 %v1541, %v2511
        %v2513 = vpop.f32.mrb[0].mxu0
        %2514 = vmatprep.mubr.bf16.mxu0 0
        %2515 = vmatmul.mubr.bf16.gmra.mrb[0].mxu0 %v1990
        %v2516 = vpop.f32.mrb[0].mxu0
        %v2517 = vadd.f32 %v1546, %v2516
        %v2518 = vpop.f32.mrb[0].mxu0
        %v2519 = vpop.f32.mrb[0].mxu0
        %v2520 = vadd.f32 %v1549, %v2519
        %v2521 = vpop.f32.mrb[0].mxu0
        %2522 = vmatprep.mubr.bf16.mxu0 0
        %2523 = vmatmul.mubr.bf16.gmra.mrb[0].mxu0 %v1993
        %v2524 = vpop.f32.mrb[0].mxu0
        %v2525 = vadd.f32 %v1554, %v2524
        %v2526 = vpop.f32.mrb[0].mxu0
        %v2527 = vpop.f32.mrb[0].mxu0
        %v2528 = vadd.f32 %v1557, %v2527
        %v2529 = vpop.f32.mrb[0].mxu0
        %2530 = vmatprep.mubr.bf16.mxu0 0
        %2531 = vmatmul.mubr.bf16.gmra.mrb[0].mxu0 %v1996
        %v2532 = vpop.f32.mrb[0].mxu0
        %v2533 = vadd.f32 %v1562, %v2532
        %v2534 = vpop.f32.mrb[0].mxu0
        %v2535 = vpop.f32.mrb[0].mxu0
        %v2536 = vadd.f32 %v1565, %v2535
        %v2537 = vpop.f32.mrb[0].mxu0
        %2538 = vmatprep.mubr.bf16.mxu0 0
        %2539 = vmatmul.mubr.bf16.gmra.mrb[0].mxu0 %v1999
        %v2540 = vpop.f32.mrb[0].mxu0
        %v2541 = vadd.f32 %v1570, %v2540
        %v2542 = vpop.f32.mrb[0].mxu0
        %v2543 = vpop.f32.mrb[0].mxu0
        %v2544 = vadd.f32 %v1573, %v2543
        %v2545 = vpop.f32.mrb[0].mxu0
        %2546 = vmatprep.mubr.bf16.mxu0 0
        %2547 = vmatmul.mubr.bf16.gmra.mrb[0].mxu0 %v2002
        %v2548 = vpop.f32.mrb[0].mxu0
        %v2549 = vadd.f32 %v1578, %v2548
        %v2550 = vpop.f32.mrb[0].mxu0
        %v2551 = vpop.f32.mrb[0].mxu0
        %v2552 = vadd.f32 %v1581, %v2551
        %v2553 = vpop.f32.mrb[0].mxu0
        %2554 = vmatprep.mubr.bf16.mxu0 0
        %2555 = vmatmul.mubr.bf16.gmra.mrb[0].mxu0 %v2005
        %v2556 = vpop.f32.mrb[0].mxu0
        %v2557 = vadd.f32 %v1586, %v2556
        %v2558 = vpop.f32.mrb[0].mxu0
        %v2559 = vpop.f32.mrb[0].mxu0
        %v2560 = vadd.f32 %v1589, %v2559
        %v2561 = vpop.f32.mrb[0].mxu0
        %2562 = vmatprep.mubr.bf16.mxu0 0
        %2563 = vmatmul.mubr.bf16.gmra.mrb[0].mxu0 %v2008
        %v2564 = vpop.f32.mrb[0].mxu0
        %v2565 = vadd.f32 %v1594, %v2564
        %v2566 = vpop.f32.mrb[0].mxu0
        %v2567 = vpop.f32.mrb[0].mxu0
        %v2568 = vadd.f32 %v1597, %v2567
        %v2569 = vpop.f32.mrb[0].mxu0
        %2570 = vmatprep.mubr.bf16.mxu0 0
        %2571 = vmatmul.mubr.bf16.gmra.mrb[0].mxu0 %v2011
        %v2572 = vpop.f32.mrb[0].mxu0
        %v2573 = vadd.f32 %v1602, %v2572
        %v2574 = vpop.f32.mrb[0].mxu0
        %v2575 = vpop.f32.mrb[0].mxu0
        %v2576 = vadd.f32 %v1605, %v2575
        %v2577 = vpop.f32.mrb[0].mxu0
        %2578 = vmatprep.mubr.bf16.mxu0 0
        %2579 = vmatmul.mubr.bf16.gmra.mrb[0].mxu0 %v2014
        %v2580 = vpop.f32.mrb[0].mxu0
        %v2581 = vadd.f32 %v1610, %v2580
        %v2582 = vpop.f32.mrb[0].mxu0
        %v2583 = vpop.f32.mrb[0].mxu0
        %v2584 = vadd.f32 %v1613, %v2583
        %v2585 = vpop.f32.mrb[0].mxu0
        %2586 = vmatprep.mubr.bf16.mxu0 0
        %2587 = vmatmul.mubr.bf16.gmra.mrb[0].mxu0 %v2017
        %v2588 = vpop.f32.mrb[0].mxu0
        %v2589 = vadd.f32 %v1618, %v2588
        %v2590 = vpop.f32.mrb[0].mxu0
        %v2591 = vpop.f32.mrb[0].mxu0
        %v2592 = vadd.f32 %v1621, %v2591
        %v2593 = vpop.f32.mrb[0].mxu0
        %2594 = vmatprep.mubr.bf16.mxu0 0
        %2595 = vmatmul.mubr.bf16.gmra.mrb[0].mxu0 %v2020
        %v2596 = vpop.f32.mrb[0].mxu0
        %v2597 = vadd.f32 %v1626, %v2596
        %v2598 = vpop.f32.mrb[0].mxu0
        %v2599 = vpop.f32.mrb[0].mxu0
        %v2600 = vadd.f32 %v1629, %v2599
        %v2601 = vpop.f32.mrb[0].mxu0
        %2602 = vmatprep.mubr.bf16.mxu0 0
        %2603 = vmatmul.mubr.bf16.gmra.mrb[0].mxu0 %v2023
        %v2604 = vpop.f32.mrb[0].mxu0
        %v2605 = vadd.f32 %v1634, %v2604
        %v2606 = vpop.f32.mrb[0].mxu0
        %v2607 = vpop.f32.mrb[0].mxu0
        %v2608 = vadd.f32 %v1637, %v2607
        %v2609 = vpop.f32.mrb[0].mxu0
        %2610 = vmatprep.mubr.bf16.mxu0 0
        %2611 = vmatmul.mubr.bf16.gmra.mrb[0].mxu0 %v2026
        %v2612 = vpop.f32.mrb[0].mxu0
        %v2613 = vadd.f32 %v1642, %v2612
        %v2614 = vpop.f32.mrb[0].mxu0
        %v2615 = vpop.f32.mrb[0].mxu0
        %v2616 = vadd.f32 %v1645, %v2615
        %v2617 = vpop.f32.mrb[0].mxu0
        %2618 = vmatprep.mubr.bf16.mxu0 0
        %2619 = vmatmul.mubr.bf16.gmra.mrb[0].mxu0 %v2029
        %v2620 = vpop.f32.mrb[0].mxu0
        %v2621 = vadd.f32 %v1650, %v2620
        %v2622 = vpop.f32.mrb[0].mxu0
        %v2623 = vpop.f32.mrb[0].mxu0
        %v2624 = vadd.f32 %v1653, %v2623
        %v2625 = vpop.f32.mrb[0].mxu0
        %2626 = vmatprep.mubr.bf16.mxu0 0
        %2627 = vmatmul.mubr.bf16.gmra.mrb[0].mxu0 %v2032
        %v2628 = vpop.f32.mrb[0].mxu0
        %v2629 = vadd.f32 %v1658, %v2628
        %v2630 = vpop.f32.mrb[0].mxu0
        %v2631 = vpop.f32.mrb[0].mxu0
        %v2632 = vadd.f32 %v1661, %v2631
        %v2633 = vpop.f32.mrb[0].mxu0
        %2634 = vmatprep.mubr.bf16.mxu0 0
        %2635 = vmatmul.mubr.bf16.gmra.mrb[0].mxu0 %v2035
        %v2636 = vpop.f32.mrb[0].mxu0
        %v2637 = vadd.f32 %v1666, %v2636
        %v2638 = vpop.f32.mrb[0].mxu0
        %v2639 = vpop.f32.mrb[0].mxu0
        %v2640 = vadd.f32 %v1669, %v2639
        %v2641 = vpop.f32.mrb[0].mxu0
        %2642 = vmatprep.mubr.bf16.mxu0 0
        %2643 = vmatmul.mubr.bf16.gmra.mrb[0].mxu0 %v2038
        %v2644 = vpop.f32.mrb[0].mxu0
        %v2645 = vadd.f32 %v1674, %v2644
        %v2646 = vpop.f32.mrb[0].mxu0
        %v2647 = vpop.f32.mrb[0].mxu0
        %v2648 = vadd.f32 %v1677, %v2647
        %v2649 = vpop.f32.mrb[0].mxu0
        %2650 = vmatprep.mubr.bf16.mxu0 0
        %2651 = vmatmul.mubr.bf16.gmra.mrb[0].mxu0 %v2041
        %v2652 = vpop.f32.mrb[0].mxu0
        %v2653 = vadd.f32 %v1682, %v2652
        %v2654 = vpop.f32.mrb[0].mxu0
        %v2655 = vpop.f32.mrb[0].mxu0
        %v2656 = vadd.f32 %v1685, %v2655
        %v2657 = vpop.f32.mrb[0].mxu0
        %2658 = vmatprep.mubr.bf16.mxu0 0
        %2659 = vmatmul.mubr.bf16.gmra.mrb[0].mxu0 %v2044
        %v2660 = vpop.f32.mrb[0].mxu0
        %v2661 = vadd.f32 %v1690, %v2660
        %v2662 = vpop.f32.mrb[0].mxu0
        %v2663 = vpop.f32.mrb[0].mxu0
        %v2664 = vadd.f32 %v1693, %v2663
        %v2665 = vpop.f32.mrb[0].mxu0
        %2666 = vmatprep.mubr.bf16.mxu0 0
        %2667 = vmatmul.mubr.bf16.gmra.mrb[0].mxu0 %v2047
        %v2668 = vpop.f32.mrb[0].mxu0
        %v2669 = vadd.f32 %v1698, %v2668
        %v2670 = vpop.f32.mrb[0].mxu0
        %v2671 = vpop.f32.mrb[0].mxu0
        %v2672 = vadd.f32 %v1701, %v2671
        %v2673 = vpop.f32.mrb[0].mxu0
        %2674 = vmatprep.mubr.bf16.mxu0 0
        %2675 = vmatmul.mubr.bf16.gmra.mrb[0].mxu0 %v2050
        %v2676 = vpop.f32.mrb[0].mxu0
        %v2677 = vadd.f32 %v1706, %v2676
        %v2678 = vpop.f32.mrb[0].mxu0
        %v2679 = vpop.f32.mrb[0].mxu0
        %v2680 = vadd.f32 %v1709, %v2679
        %v2681 = vpop.f32.mrb[0].mxu0
        %2682 = vmatprep.mubr.bf16.mxu0 0
        %2683 = vmatmul.mubr.bf16.gmra.mrb[0].mxu0 %v2053
        %v2684 = vpop.f32.mrb[0].mxu0
        %v2685 = vadd.f32 %v1714, %v2684
        %v2686 = vpop.f32.mrb[0].mxu0
        %v2687 = vpop.f32.mrb[0].mxu0
        %v2688 = vadd.f32 %v1717, %v2687
        %v2689 = vpop.f32.mrb[0].mxu0
        %2690 = vmatprep.mubr.bf16.mxu0 0
        %2691 = vmatmul.mubr.bf16.gmra.mrb[0].mxu0 %v2056
        %v2692 = vpop.f32.mrb[0].mxu0
        %v2693 = vadd.f32 %v1722, %v2692
        %v2694 = vpop.f32.mrb[0].mxu0
        %v2695 = vpop.f32.mrb[0].mxu0
        %v2696 = vadd.f32 %v1725, %v2695
        %v2697 = vpop.f32.mrb[0].mxu0
        %2698 = vmatprep.mubr.bf16.mxu0 0
        %2699 = vmatmul.mubr.bf16.gmra.mrb[0].mxu0 %v2059
        %v2700 = vpop.f32.mrb[0].mxu0
        %v2701 = vadd.f32 %v1730, %v2700
        %v2702 = vpop.f32.mrb[0].mxu0
        %v2703 = vpop.f32.mrb[0].mxu0
        %v2704 = vadd.f32 %v1733, %v2703
        %v2705 = vpop.f32.mrb[0].mxu0
        %2706 = vmatprep.mubr.bf16.mxu0 0
        %2707 = vmatmul.mubr.bf16.gmra.mrb[0].mxu0 %v2062
        %v2708 = vpop.f32.mrb[0].mxu0
        %v2709 = vadd.f32 %v1738, %v2708
        %v2710 = vpop.f32.mrb[0].mxu0
        %v2711 = vpop.f32.mrb[0].mxu0
        %v2712 = vadd.f32 %v1741, %v2711
        %v2713 = vpop.f32.mrb[0].mxu0
        %2714 = vmatprep.mubr.bf16.mxu0 0
        %2715 = vmatmul.mubr.bf16.gmra.mrb[0].mxu0 %v2065
        %v2716 = vpop.f32.mrb[0].mxu0
        %v2717 = vadd.f32 %v1746, %v2716
        %v2718 = vpop.f32.mrb[0].mxu0
        %v2719 = vpop.f32.mrb[0].mxu0
        %v2720 = vadd.f32 %v1749, %v2719
        %v2721 = vpop.f32.mrb[0].mxu0
        %2722 = vmatprep.mubr.bf16.mxu0 0
        %2723 = vmatmul.mubr.bf16.gmra.mrb[0].mxu0 %v2068
        %v2724 = vpop.f32.mrb[0].mxu0
        %v2725 = vadd.f32 %v1754, %v2724
        %v2726 = vpop.f32.mrb[0].mxu0
        %v2727 = vpop.f32.mrb[0].mxu0
        %v2728 = vadd.f32 %v1757, %v2727
        %v2729 = vpop.f32.mrb[0].mxu0
        %2730 = vmatprep.mubr.bf16.mxu0 0
        %2731 = vmatmul.mubr.bf16.gmra.mrb[0].mxu0 %v2071
        %v2732 = vpop.f32.mrb[0].mxu0
        %v2733 = vadd.f32 %v1762, %v2732
        %v2734 = vpop.f32.mrb[0].mxu0
        %v2735 = vpop.f32.mrb[0].mxu0
        %v2736 = vadd.f32 %v1765, %v2735
        %v2737 = vpop.f32.mrb[0].mxu0
        %2738 = vmatprep.mubr.bf16.mxu0 0
        %2739 = vmatmul.mubr.bf16.gmra.mrb[0].mxu0 %v2074
        %v2740 = vpop.f32.mrb[0].mxu0
        %v2741 = vadd.f32 %v1770, %v2740
        %v2742 = vpop.f32.mrb[0].mxu0
        %v2743 = vpop.f32.mrb[0].mxu0
        %v2744 = vadd.f32 %v1773, %v2743
        %v2745 = vpop.f32.mrb[0].mxu0
        %2746 = vmatprep.mubr.bf16.mxu0 0
        %2747 = vmatmul.mubr.bf16.gmra.mrb[0].mxu0 %v2077
        %v2748 = vpop.f32.mrb[0].mxu0
        %v2749 = vadd.f32 %v1778, %v2748
        %v2750 = vpop.f32.mrb[0].mxu0
        %v2751 = vpop.f32.mrb[0].mxu0
        %v2752 = vadd.f32 %v1781, %v2751
        %v2753 = vpop.f32.mrb[0].mxu0
        %2754 = vmatprep.mubr.bf16.mxu0 0
        %2755 = vmatmul.mubr.bf16.gmra.mrb[0].mxu0 %v2080
        %v2756 = vpop.f32.mrb[0].mxu0
        %v2757 = vadd.f32 %v1786, %v2756
        %v2758 = vpop.f32.mrb[0].mxu0
        %v2759 = vpop.f32.mrb[0].mxu0
        %v2760 = vadd.f32 %v1789, %v2759
        %v2761 = vpop.f32.mrb[0].mxu0
        %2762 = vmatprep.mubr.bf16.mxu0 0
        %2763 = vmatmul.mubr.bf16.gmra.mrb[0].mxu0 %v2083
        %v2764 = vpop.f32.mrb[0].mxu0
        %v2765 = vadd.f32 %v1794, %v2764
        %v2766 = vpop.f32.mrb[0].mxu0
        %v2767 = vpop.f32.mrb[0].mxu0
        %v2768 = vadd.f32 %v1797, %v2767
        %v2769 = vpop.f32.mrb[0].mxu0
        %2770 = vmatprep.mubr.bf16.mxu0 0
        %2771 = vmatmul.mubr.bf16.gmra.mrb[0].mxu0 %v2086
        %v2772 = vpop.f32.mrb[0].mxu0
        %v2773 = vadd.f32 %v1802, %v2772
        %v2774 = vpop.f32.mrb[0].mxu0
        %v2775 = vpop.f32.mrb[0].mxu0
        %v2776 = vadd.f32 %v1805, %v2775
        %v2777 = vpop.f32.mrb[0].mxu0
        %2778 = vmatprep.mubr.bf16.mxu0 0
        %2779 = vmatmul.mubr.bf16.gmra.mrb[0].mxu0 %v2089
        %v2780 = vpop.f32.mrb[0].mxu0
        %v2781 = vadd.f32 %v1810, %v2780
        %v2782 = vpop.f32.mrb[0].mxu0
        %v2783 = vpop.f32.mrb[0].mxu0
        %v2784 = vadd.f32 %v1813, %v2783
        %v2785 = vpop.f32.mrb[0].mxu0
        %2786 = vmatprep.mubr.bf16.mxu0 0
        %2787 = vmatmul.mubr.bf16.gmra.mrb[0].mxu0 %v2092
        %v2788 = vpop.f32.mrb[0].mxu0
        %v2789 = vadd.f32 %v1818, %v2788
        %v2790 = vpop.f32.mrb[0].mxu0
        %v2791 = vpop.f32.mrb[0].mxu0
        %v2792 = vadd.f32 %v1821, %v2791
        %v2793 = vpop.f32.mrb[0].mxu0
        %2794 = vmatprep.mubr.bf16.mxu0 0
        %2795 = vmatmul.mubr.bf16.gmra.mrb[0].mxu0 %v2095
        %v2796 = vpop.f32.mrb[0].mxu0
        %v2797 = vadd.f32 %v1826, %v2796
        %v2798 = vpop.f32.mrb[0].mxu0
        %v2799 = vpop.f32.mrb[0].mxu0
        %v2800 = vadd.f32 %v1829, %v2799
        %v2801 = vpop.f32.mrb[0].mxu0
        %2802 = vmatprep.mubr.bf16.mxu0 0
        %2803 = vmatmul.mubr.bf16.gmra.mrb[0].mxu0 %v2098
        %v2804 = vpop.f32.mrb[0].mxu0
        %v2805 = vadd.f32 %v1834, %v2804
        %v2806 = vpop.f32.mrb[0].mxu0
        %v2807 = vpop.f32.mrb[0].mxu0
        %v2808 = vadd.f32 %v1837, %v2807
        %v2809 = vpop.f32.mrb[0].mxu0
        %2810 = vmatprep.mubr.bf16.mxu0 0
        %2811 = vmatmul.mubr.bf16.gmra.mrb[0].mxu0 %v2101
        %v2812 = vpop.f32.mrb[0].mxu0
        %v2813 = vadd.f32 %v1842, %v2812
        %v2814 = vpop.f32.mrb[0].mxu0
        %v2815 = vpop.f32.mrb[0].mxu0
        %v2816 = vadd.f32 %v1845, %v2815
        %v2817 = vpop.f32.mrb[0].mxu0
        %2818 = vdwg.mxu0
        %v2819 = vld [vmem:[%s358 + $0x2] sm:$0xff]
        %v2820 = vld [vmem:[%s358 + $0xa] sm:$0xff]
        %v2821 = vld [vmem:[%s358 + $0x12] sm:$0xff]
        %v2822 = vld [vmem:[%s358 + $0x1a] sm:$0xff]
        %v2823 = vld [vmem:[%s358 + $0x22] sm:$0xff]
        %v2824 = vld [vmem:[%s358 + $0x2a] sm:$0xff]
        %v2825 = vld [vmem:[%s358 + $0x32] sm:$0xff]
        %v2826 = vld [vmem:[%s358 + $0x3a] sm:$0xff]
        %v2827 = vld [vmem:[%s358 + $0x42] sm:$0xff]
        %v2828 = vld [vmem:[%s358 + $0x4a] sm:$0xff]
        %v2829 = vld [vmem:[%s358 + $0x52] sm:$0xff]
        %v2830 = vld [vmem:[%s358 + $0x5a] sm:$0xff]
        %v2831 = vld [vmem:[%s358 + $0x62] sm:$0xff]
        %v2832 = vld [vmem:[%s358 + $0x6a] sm:$0xff]
        %v2833 = vld [vmem:[%s358 + $0x72] sm:$0xff]
        %v2834 = vld [vmem:[%s358 + $0x7a] sm:$0xff]
        %v2835 = vld [vmem:[%s358 + $0x82] sm:$0xff]
        %v2836 = vld [vmem:[%s358 + $0x8a] sm:$0xff]
        %v2837 = vld [vmem:[%s358 + $0x92] sm:$0xff]
        %v2838 = vld [vmem:[%s358 + $0x9a] sm:$0xff]
        %v2839 = vld [vmem:[%s358 + $0xa2] sm:$0xff]
        %v2840 = vld [vmem:[%s358 + $0xaa] sm:$0xff]
        %v2841 = vld [vmem:[%s358 + $0xb2] sm:$0xff]
        %v2842 = vld [vmem:[%s358 + $0xba] sm:$0xff]
        %v2843 = vld [vmem:[%s358 + $0xc2] sm:$0xff]
        %v2844 = vld [vmem:[%s358 + $0xca] sm:$0xff]
        %v2845 = vld [vmem:[%s358 + $0xd2] sm:$0xff]
        %v2846 = vld [vmem:[%s358 + $0xda] sm:$0xff]
        %v2847 = vld [vmem:[%s358 + $0xe2] sm:$0xff]
        %v2848 = vld [vmem:[%s358 + $0xea] sm:$0xff]
        %v2849 = vld [vmem:[%s358 + $0xf2] sm:$0xff]
        %v2850 = vld [vmem:[%s358 + $0xfa] sm:$0xff]
        %v2851 = vld [vmem:[%s358 + $0x102] sm:$0xff]
        %v2852 = vld [vmem:[%s358 + $0x10a] sm:$0xff]
        %v2853 = vld [vmem:[%s358 + $0x112] sm:$0xff]
        %v2854 = vld [vmem:[%s358 + $0x11a] sm:$0xff]
        %v2855 = vld [vmem:[%s358 + $0x122] sm:$0xff]
        %v2856 = vld [vmem:[%s358 + $0x12a] sm:$0xff]
        %v2857 = vld [vmem:[%s358 + $0x132] sm:$0xff]
        %v2858 = vld [vmem:[%s358 + $0x13a] sm:$0xff]
        %v2859 = vld [vmem:[%s358 + $0x142] sm:$0xff]
        %v2860 = vld [vmem:[%s358 + $0x14a] sm:$0xff]
        %v2861 = vld [vmem:[%s358 + $0x152] sm:$0xff]
        %v2862 = vld [vmem:[%s358 + $0x15a] sm:$0xff]
        %v2863 = vld [vmem:[%s358 + $0x162] sm:$0xff]
        %v2864 = vld [vmem:[%s358 + $0x16a] sm:$0xff]
        %v2865 = vld [vmem:[%s358 + $0x172] sm:$0xff]
        %v2866 = vld [vmem:[%s358 + $0x17a] sm:$0xff]
        %v2867 = vld [vmem:[%s358 + $0x182] sm:$0xff]
        %v2868 = vld [vmem:[%s358 + $0x18a] sm:$0xff]
        %v2869 = vld [vmem:[%s358 + $0x192] sm:$0xff]
        %v2870 = vld [vmem:[%s358 + $0x19a] sm:$0xff]
        %v2871 = vld [vmem:[%s358 + $0x1a2] sm:$0xff]
        %v2872 = vld [vmem:[%s358 + $0x1aa] sm:$0xff]
        %v2873 = vld [vmem:[%s358 + $0x1b2] sm:$0xff]
        %v2874 = vld [vmem:[%s358 + $0x1ba] sm:$0xff]
        %v2875 = vld [vmem:[%s358 + $0x1c2] sm:$0xff]
        %v2876 = vld [vmem:[%s358 + $0x1ca] sm:$0xff]
        %v2877 = vld [vmem:[%s358 + $0x1d2] sm:$0xff]
        %v2878 = vld [vmem:[%s358 + $0x1da] sm:$0xff]
        %v2879 = vld [vmem:[%s358 + $0x1e2] sm:$0xff]
        %v2880 = vld [vmem:[%s358 + $0x1ea] sm:$0xff]
        %v2881 = vld [vmem:[%s358 + $0x1f2] sm:$0xff]
        %v2882 = vld [vmem:[%s358 + $0x1fa] sm:$0xff]
        %v2883 = vld [vmem:[%s358 + $0x202] sm:$0xff]
        %v2884 = vld [vmem:[%s358 + $0x20a] sm:$0xff]
        %v2885 = vld [vmem:[%s358 + $0x212] sm:$0xff]
        %v2886 = vld [vmem:[%s358 + $0x21a] sm:$0xff]
        %v2887 = vld [vmem:[%s358 + $0x222] sm:$0xff]
        %v2888 = vld [vmem:[%s358 + $0x22a] sm:$0xff]
        %v2889 = vld [vmem:[%s358 + $0x232] sm:$0xff]
        %v2890 = vld [vmem:[%s358 + $0x23a] sm:$0xff]
        %v2891 = vld [vmem:[%s358 + $0x242] sm:$0xff]
        %v2892 = vld [vmem:[%s358 + $0x24a] sm:$0xff]
        %v2893 = vld [vmem:[%s358 + $0x252] sm:$0xff]
        %v2894 = vld [vmem:[%s358 + $0x25a] sm:$0xff]
        %v2895 = vld [vmem:[%s358 + $0x262] sm:$0xff]
        %v2896 = vld [vmem:[%s358 + $0x26a] sm:$0xff]
        %v2897 = vld [vmem:[%s358 + $0x272] sm:$0xff]
        %v2898 = vld [vmem:[%s358 + $0x27a] sm:$0xff]
        %v2899 = vld [vmem:[%s358 + $0x282] sm:$0xff]
        %v2900 = vld [vmem:[%s358 + $0x28a] sm:$0xff]
        %v2901 = vld [vmem:[%s358 + $0x292] sm:$0xff]
        %v2902 = vld [vmem:[%s358 + $0x29a] sm:$0xff]
        %v2903 = vld [vmem:[%s358 + $0x2a2] sm:$0xff]
        %v2904 = vld [vmem:[%s358 + $0x2aa] sm:$0xff]
        %v2905 = vld [vmem:[%s358 + $0x2b2] sm:$0xff]
        %v2906 = vld [vmem:[%s358 + $0x2ba] sm:$0xff]
        %v2907 = vld [vmem:[%s358 + $0x2c2] sm:$0xff]
        %v2908 = vld [vmem:[%s358 + $0x2ca] sm:$0xff]
        %v2909 = vld [vmem:[%s358 + $0x2d2] sm:$0xff]
        %v2910 = vld [vmem:[%s358 + $0x2da] sm:$0xff]
        %v2911 = vld [vmem:[%s358 + $0x2e2] sm:$0xff]
        %v2912 = vld [vmem:[%s358 + $0x2ea] sm:$0xff]
        %v2913 = vld [vmem:[%s358 + $0x2f2] sm:$0xff]
        %v2914 = vld [vmem:[%s358 + $0x2fa] sm:$0xff]
        %v2915 = vld [vmem:[%s358 + $0x302] sm:$0xff]
        %v2916 = vld [vmem:[%s358 + $0x30a] sm:$0xff]
        %v2917 = vld [vmem:[%s358 + $0x312] sm:$0xff]
        %v2918 = vld [vmem:[%s358 + $0x31a] sm:$0xff]
        %v2919 = vld [vmem:[%s358 + $0x322] sm:$0xff]
        %v2920 = vld [vmem:[%s358 + $0x32a] sm:$0xff]
        %v2921 = vld [vmem:[%s358 + $0x332] sm:$0xff]
        %v2922 = vld [vmem:[%s358 + $0x33a] sm:$0xff]
        %v2923 = vld [vmem:[%s358 + $0x342] sm:$0xff]
        %v2924 = vld [vmem:[%s358 + $0x34a] sm:$0xff]
        %v2925 = vld [vmem:[%s358 + $0x352] sm:$0xff]
        %v2926 = vld [vmem:[%s358 + $0x35a] sm:$0xff]
        %v2927 = vld [vmem:[%s358 + $0x362] sm:$0xff]
        %v2928 = vld [vmem:[%s358 + $0x36a] sm:$0xff]
        %v2929 = vld [vmem:[%s358 + $0x372] sm:$0xff]
        %v2930 = vld [vmem:[%s358 + $0x37a] sm:$0xff]
        %v2931 = vld [vmem:[%s358 + $0x382] sm:$0xff]
        %v2932 = vld [vmem:[%s358 + $0x38a] sm:$0xff]
        %v2933 = vld [vmem:[%s358 + $0x392] sm:$0xff]
        %v2934 = vld [vmem:[%s358 + $0x39a] sm:$0xff]
        %v2935 = vld [vmem:[%s358 + $0x3a2] sm:$0xff]
        %v2936 = vld [vmem:[%s358 + $0x3aa] sm:$0xff]
        %v2937 = vld [vmem:[%s358 + $0x3b2] sm:$0xff]
        %v2938 = vld [vmem:[%s358 + $0x3ba] sm:$0xff]
        %v2939 = vld [vmem:[%s358 + $0x3c2] sm:$0xff]
        %v2940 = vld [vmem:[%s358 + $0x3ca] sm:$0xff]
        %v2941 = vld [vmem:[%s358 + $0x3d2] sm:$0xff]
        %v2942 = vld [vmem:[%s358 + $0x3da] sm:$0xff]
        %v2943 = vld [vmem:[%s358 + $0x3e2] sm:$0xff]
        %v2944 = vld [vmem:[%s358 + $0x3ea] sm:$0xff]
        %v2945 = vld [vmem:[%s358 + $0x3f2] sm:$0xff]
        %v2946 = vld [vmem:[%s358 + $0x3fa] sm:$0xff]
        %v2947 = vld [vmem:[%s358 + $0x402] sm:$0xff]
        %v2948 = vld [vmem:[%s358 + $0x40a] sm:$0xff]
        %v2949 = vld [vmem:[%s358 + $0x412] sm:$0xff]
        %v2950 = vld [vmem:[%s358 + $0x41a] sm:$0xff]
        %v2951 = vld [vmem:[%s358 + $0x422] sm:$0xff]
        %v2952 = vld [vmem:[%s358 + $0x42a] sm:$0xff]
        %v2953 = vld [vmem:[%s358 + $0x432] sm:$0xff]
        %v2954 = vld [vmem:[%s358 + $0x43a] sm:$0xff]
        %v2955 = vld [vmem:[%s358 + $0x442] sm:$0xff]
        %v2956 = vld [vmem:[%s358 + $0x44a] sm:$0xff]
        %v2957 = vld [vmem:[%s358 + $0x452] sm:$0xff]
        %v2958 = vld [vmem:[%s358 + $0x45a] sm:$0xff]
        %v2959 = vld [vmem:[%s358 + $0x462] sm:$0xff]
        %v2960 = vld [vmem:[%s358 + $0x46a] sm:$0xff]
        %v2961 = vld [vmem:[%s358 + $0x472] sm:$0xff]
        %v2962 = vld [vmem:[%s358 + $0x47a] sm:$0xff]
        %v2963 = vld [vmem:[%s358 + $0x482] sm:$0xff]
        %v2964 = vld [vmem:[%s358 + $0x48a] sm:$0xff]
        %v2965 = vld [vmem:[%s358 + $0x492] sm:$0xff]
        %v2966 = vld [vmem:[%s358 + $0x49a] sm:$0xff]
        %v2967 = vld [vmem:[%s358 + $0x4a2] sm:$0xff]
        %v2968 = vld [vmem:[%s358 + $0x4aa] sm:$0xff]
        %v2969 = vld [vmem:[%s358 + $0x4b2] sm:$0xff]
        %v2970 = vld [vmem:[%s358 + $0x4ba] sm:$0xff]
        %v2971 = vld [vmem:[%s358 + $0x4c2] sm:$0xff]
        %v2972 = vld [vmem:[%s358 + $0x4ca] sm:$0xff]
        %v2973 = vld [vmem:[%s358 + $0x4d2] sm:$0xff]
        %v2974 = vld [vmem:[%s358 + $0x4da] sm:$0xff]
        %v2975 = vld [vmem:[%s358 + $0x4e2] sm:$0xff]
        %v2976 = vld [vmem:[%s358 + $0x4ea] sm:$0xff]
        %v2977 = vld [vmem:[%s358 + $0x4f2] sm:$0xff]
        %v2978 = vld [vmem:[%s358 + $0x4fa] sm:$0xff]
        %v2979 = vld [vmem:[%s358 + $0x502] sm:$0xff]
        %v2980 = vld [vmem:[%s358 + $0x50a] sm:$0xff]
        %v2981 = vld [vmem:[%s358 + $0x512] sm:$0xff]
        %v2982 = vld [vmem:[%s358 + $0x51a] sm:$0xff]
        %v2983 = vld [vmem:[%s358 + $0x522] sm:$0xff]
        %v2984 = vld [vmem:[%s358 + $0x52a] sm:$0xff]
        %v2985 = vld [vmem:[%s358 + $0x532] sm:$0xff]
        %v2986 = vld [vmem:[%s358 + $0x53a] sm:$0xff]
        %v2987 = vld [vmem:[%s358 + $0x542] sm:$0xff]
        %v2988 = vld [vmem:[%s358 + $0x54a] sm:$0x3f]
        %v2989 = vpack.c.bf16 %v2820, %v2819
        %v2990 = vpack.c.bf16 %v2822, %v2821
        %v2991 = vpack.c.bf16 %v2824, %v2823
        %v2992 = vpack.c.bf16 %v2826, %v2825
        %v2993 = vpack.c.bf16 %v2828, %v2827
        %v2994 = vpack.c.bf16 %v2830, %v2829
        %v2995 = vpack.c.bf16 %v2832, %v2831
        %v2996 = vpack.c.bf16 %v2834, %v2833
        %v2997 = vpack.c.bf16 %v2836, %v2835
        %v2998 = vpack.c.bf16 %v2838, %v2837
        %v2999 = vpack.c.bf16 %v2840, %v2839
        %v3000 = vpack.c.bf16 %v2842, %v2841
        %v3001 = vpack.c.bf16 %v2844, %v2843
        %v3002 = vpack.c.bf16 %v2846, %v2845
        %v3003 = vpack.c.bf16 %v2848, %v2847
        %v3004 = vpack.c.bf16 %v2850, %v2849
        %v3005 = vpack.c.bf16 %v2852, %v2851
        %v3006 = vpack.c.bf16 %v2854, %v2853
        %v3007 = vpack.c.bf16 %v2856, %v2855
        %v3008 = vpack.c.bf16 %v2858, %v2857
        %v3009 = vpack.c.bf16 %v2860, %v2859
        %v3010 = vpack.c.bf16 %v2862, %v2861
        %v3011 = vpack.c.bf16 %v2864, %v2863
        %v3012 = vpack.c.bf16 %v2866, %v2865
        %v3013 = vpack.c.bf16 %v2868, %v2867
        %v3014 = vpack.c.bf16 %v2870, %v2869
        %v3015 = vpack.c.bf16 %v2872, %v2871
        %v3016 = vpack.c.bf16 %v2874, %v2873
        %v3017 = vpack.c.bf16 %v2876, %v2875
        %v3018 = vpack.c.bf16 %v2878, %v2877
        %v3019 = vpack.c.bf16 %v2880, %v2879
        %v3020 = vpack.c.bf16 %v2882, %v2881
        %v3021 = vpack.c.bf16 %v2884, %v2883
        %v3022 = vpack.c.bf16 %v2886, %v2885
        %v3023 = vpack.c.bf16 %v2888, %v2887
        %v3024 = vpack.c.bf16 %v2890, %v2889
        %v3025 = vpack.c.bf16 %v2892, %v2891
        %v3026 = vpack.c.bf16 %v2894, %v2893
        %v3027 = vpack.c.bf16 %v2896, %v2895
        %v3028 = vpack.c.bf16 %v2898, %v2897
        %v3029 = vpack.c.bf16 %v2900, %v2899
        %v3030 = vpack.c.bf16 %v2902, %v2901
        %v3031 = vpack.c.bf16 %v2904, %v2903
        %v3032 = vpack.c.bf16 %v2906, %v2905
        %v3033 = vpack.c.bf16 %v2908, %v2907
        %v3034 = vpack.c.bf16 %v2910, %v2909
        %v3035 = vpack.c.bf16 %v2912, %v2911
        %v3036 = vpack.c.bf16 %v2914, %v2913
        %v3037 = vpack.c.bf16 %v2916, %v2915
        %v3038 = vpack.c.bf16 %v2918, %v2917
        %v3039 = vpack.c.bf16 %v2920, %v2919
        %v3040 = vpack.c.bf16 %v2922, %v2921
        %v3041 = vpack.c.bf16 %v2924, %v2923
        %v3042 = vpack.c.bf16 %v2926, %v2925
        %v3043 = vpack.c.bf16 %v2928, %v2927
        %v3044 = vpack.c.bf16 %v2930, %v2929
        %v3045 = vpack.c.bf16 %v2932, %v2931
        %v3046 = vpack.c.bf16 %v2934, %v2933
        %v3047 = vpack.c.bf16 %v2936, %v2935
        %v3048 = vpack.c.bf16 %v2938, %v2937
        %v3049 = vpack.c.bf16 %v2940, %v2939
        %v3050 = vpack.c.bf16 %v2942, %v2941
        %v3051 = vpack.c.bf16 %v2944, %v2943
        %v3052 = vpack.c.bf16 %v2946, %v2945
        %v3053 = vpack.c.bf16 %v2948, %v2947
        %v3054 = vpack.c.bf16 %v2950, %v2949
        %v3055 = vpack.c.bf16 %v2952, %v2951
        %v3056 = vpack.c.bf16 %v2954, %v2953
        %v3057 = vpack.c.bf16 %v2956, %v2955
        %v3058 = vpack.c.bf16 %v2958, %v2957
        %v3059 = vpack.c.bf16 %v2960, %v2959
        %v3060 = vpack.c.bf16 %v2962, %v2961
        %v3061 = vpack.c.bf16 %v2964, %v2963
        %v3062 = vpack.c.bf16 %v2966, %v2965
        %v3063 = vpack.c.bf16 %v2968, %v2967
        %v3064 = vpack.c.bf16 %v2970, %v2969
        %v3065 = vpack.c.bf16 %v2972, %v2971
        %v3066 = vpack.c.bf16 %v2974, %v2973
        %v3067 = vpack.c.bf16 %v2976, %v2975
        %v3068 = vpack.c.bf16 %v2978, %v2977
        %v3069 = vpack.c.bf16 %v2980, %v2979
        %v3070 = vpack.c.bf16 %v2982, %v2981
        %v3071 = vpack.c.bf16 %v2984, %v2983
        %v3072 = vpack.c.bf16 %v2986, %v2985
        %v3073 = vpack.c.bf16 %v2988, %v2987
        %s3074 = scalar_lea.vmem %s1, 8
        %v3075 = vld [vmem:[%s3074] sm:$0xf]
        %v3077 = vsel %vm875, %v2989, 0
        %v3080 = vsel %vm875, %v2990, 0
        %v3083 = vsel %vm875, %v2991, 0
        %v3086 = vsel %vm875, %v2992, 0
        %v3089 = vsel %vm875, %v2993, 0
        %v3092 = vsel %vm875, %v2994, 0
        %v3095 = vsel %vm875, %v2995, 0
        %v3098 = vsel %vm875, %v2996, 0
        %v3101 = vsel %vm875, %v2997, 0
        %v3104 = vsel %vm875, %v2998, 0
        %v3107 = vsel %vm875, %v2999, 0
        %v3110 = vsel %vm875, %v3000, 0
        %v3113 = vsel %vm875, %v3001, 0
        %v3116 = vsel %vm875, %v3002, 0
        %v3119 = vsel %vm875, %v3003, 0
        %v3122 = vsel %vm875, %v3004, 0
        %v3125 = vsel %vm875, %v3005, 0
        %v3128 = vsel %vm875, %v3006, 0
        %v3131 = vsel %vm875, %v3007, 0
        %v3134 = vsel %vm875, %v3008, 0
        %v3137 = vsel %vm875, %v3009, 0
        %v3140 = vsel %vm875, %v3010, 0
        %v3143 = vsel %vm875, %v3011, 0
        %v3146 = vsel %vm875, %v3012, 0
        %v3149 = vsel %vm875, %v3013, 0
        %v3152 = vsel %vm875, %v3014, 0
        %v3155 = vsel %vm875, %v3015, 0
        %v3158 = vsel %vm875, %v3016, 0
        %v3161 = vsel %vm875, %v3017, 0
        %v3164 = vsel %vm875, %v3018, 0
        %v3167 = vsel %vm875, %v3019, 0
        %v3170 = vsel %vm875, %v3020, 0
        %v3173 = vsel %vm875, %v3021, 0
        %v3176 = vsel %vm875, %v3022, 0
        %v3179 = vsel %vm875, %v3023, 0
        %v3182 = vsel %vm875, %v3024, 0
        %v3185 = vsel %vm875, %v3025, 0
        %v3188 = vsel %vm875, %v3026, 0
        %v3191 = vsel %vm875, %v3027, 0
        %v3194 = vsel %vm875, %v3028, 0
        %v3197 = vsel %vm875, %v3029, 0
        %v3200 = vsel %vm875, %v3030, 0
        %v3203 = vsel %vm875, %v3031, 0
        %v3206 = vsel %vm875, %v3032, 0
        %v3209 = vsel %vm875, %v3033, 0
        %v3212 = vsel %vm875, %v3034, 0
        %v3215 = vsel %vm875, %v3035, 0
        %v3218 = vsel %vm875, %v3036, 0
        %v3221 = vsel %vm875, %v3037, 0
        %v3224 = vsel %vm875, %v3038, 0
        %v3227 = vsel %vm875, %v3039, 0
        %v3230 = vsel %vm875, %v3040, 0
        %v3233 = vsel %vm875, %v3041, 0
        %v3236 = vsel %vm875, %v3042, 0
        %v3239 = vsel %vm875, %v3043, 0
        %v3242 = vsel %vm875, %v3044, 0
        %v3245 = vsel %vm875, %v3045, 0
        %v3248 = vsel %vm875, %v3046, 0
        %v3251 = vsel %vm875, %v3047, 0
        %v3254 = vsel %vm875, %v3048, 0
        %v3257 = vsel %vm875, %v3049, 0
        %v3260 = vsel %vm875, %v3050, 0
        %v3263 = vsel %vm875, %v3051, 0
        %v3266 = vsel %vm875, %v3052, 0
        %v3269 = vsel %vm875, %v3053, 0
        %v3272 = vsel %vm875, %v3054, 0
        %v3275 = vsel %vm875, %v3055, 0
        %v3278 = vsel %vm875, %v3056, 0
        %v3281 = vsel %vm875, %v3057, 0
        %v3284 = vsel %vm875, %v3058, 0
        %v3287 = vsel %vm875, %v3059, 0
        %v3290 = vsel %vm875, %v3060, 0
        %v3293 = vsel %vm875, %v3061, 0
        %v3296 = vsel %vm875, %v3062, 0
        %v3299 = vsel %vm875, %v3063, 0
        %v3302 = vsel %vm875, %v3064, 0
        %v3305 = vsel %vm875, %v3065, 0
        %v3308 = vsel %vm875, %v3066, 0
        %v3311 = vsel %vm875, %v3067, 0
        %v3314 = vsel %vm875, %v3068, 0
        %v3317 = vsel %vm875, %v3069, 0
        %v3320 = vsel %vm875, %v3070, 0
        %v3323 = vsel %vm875, %v3071, 0
        %v3326 = vsel %vm875, %v3072, 0
        %v3329 = vsel %vm875, %v3073, 0
        %v3332 = vsel %vm1131, %v3075, 0
        %3334 = vmatprep.subr.bf16.mxu0 0
        %3335 = vmatpush1.bf16.msra.mxu0 %v3332
        %3336 = vmatprep.subr.bf16.mxu0 0
        %3337 = vmatpush1.bf16.msra.mxu0 0
        %3338 = vmatprep.subr.bf16.mxu0 0
        %3339 = vmatpush1.bf16.msra.mxu0 0
        %3340 = vmatprep.subr.bf16.mxu0 0
        %3341 = vmatpush1.bf16.msra.mxu0 0
        %3342 = vmatprep.subr.bf16.mxu0 0
        %3343 = vmatpush1.bf16.msra.mxu0 0
        %3344 = vmatprep.subr.bf16.mxu0 0
        %3345 = vmatpush1.bf16.msra.mxu0 0
        %3346 = vmatprep.subr.bf16.mxu0 0
        %3347 = vmatpush1.bf16.msra.mxu0 0
        %3348 = vmatprep.subr.bf16.mxu0 0
        %3349 = vmatpush1.bf16.msra.mxu0 0
        %3350 = vmatprep.subr.bf16.mxu0 0
        %3351 = vmatpush1.bf16.msra.mxu0 0
        %3352 = vmatprep.subr.bf16.mxu0 0
        %3353 = vmatpush1.bf16.msra.mxu0 0
        %3354 = vmatprep.subr.bf16.mxu0 0
        %3355 = vmatpush1.bf16.msra.mxu0 0
        %3356 = vmatprep.subr.bf16.mxu0 0
        %3357 = vmatpush1.bf16.msra.mxu0 0
        %3358 = vmatprep.subr.bf16.mxu0 0
        %3359 = vmatpush1.bf16.msra.mxu0 0
        %3360 = vmatprep.subr.bf16.mxu0 0
        %3361 = vmatpush1.bf16.msra.mxu0 0
        %3362 = vmatprep.subr.bf16.mxu0 0
        %3363 = vmatpush1.bf16.msra.mxu0 0
        %3364 = vmatprep.subr.bf16.mxu0 0
        %3365 = vmatpush1.bf16.msra.mxu0 0
        %3366 = vmatprep.mubr.bf16.mxu0 0
        %3367 = vmatmul.mubr.bf16.gmra.mrb[0].mxu0 %v3077
        %v3368 = vpop.f32.mrb[0].mxu0
        %v3369 = vadd.f32 0.0, %v3368
        %v3370 = vpop.f32.mrb[0].mxu0
        %v3371 = vpop.f32.mrb[0].mxu0
        %v3372 = vadd.f32 0.0, %v3371
        %v3373 = vpop.f32.mrb[0].mxu0
        %3374 = vmatprep.mubr.bf16.mxu0 0
        %3375 = vmatmul.mubr.bf16.gmra.mrb[0].mxu0 %v3080
        %v3376 = vpop.f32.mrb[0].mxu0
        %v3377 = vadd.f32 0.0, %v3376
        %v3378 = vpop.f32.mrb[0].mxu0
        %v3379 = vpop.f32.mrb[0].mxu0
        %v3380 = vadd.f32 0.0, %v3379
        %v3381 = vpop.f32.mrb[0].mxu0
        %3382 = vmatprep.mubr.bf16.mxu0 0
        %3383 = vmatmul.mubr.bf16.gmra.mrb[0].mxu0 %v3083
        %v3384 = vpop.f32.mrb[0].mxu0
        %v3385 = vadd.f32 0.0, %v3384
        %v3386 = vpop.f32.mrb[0].mxu0
        %v3387 = vpop.f32.mrb[0].mxu0
        %v3388 = vadd.f32 0.0, %v3387
        %v3389 = vpop.f32.mrb[0].mxu0
        %3390 = vmatprep.mubr.bf16.mxu0 0
        %3391 = vmatmul.mubr.bf16.gmra.mrb[0].mxu0 %v3086
        %v3392 = vpop.f32.mrb[0].mxu0
        %v3393 = vadd.f32 0.0, %v3392
        %v3394 = vpop.f32.mrb[0].mxu0
        %v3395 = vpop.f32.mrb[0].mxu0
        %v3396 = vadd.f32 0.0, %v3395
        %v3397 = vpop.f32.mrb[0].mxu0
        %3398 = vmatprep.mubr.bf16.mxu0 0
        %3399 = vmatmul.mubr.bf16.gmra.mrb[0].mxu0 %v3089
        %v3400 = vpop.f32.mrb[0].mxu0
        %v3401 = vadd.f32 0.0, %v3400
        %v3402 = vpop.f32.mrb[0].mxu0
        %v3403 = vpop.f32.mrb[0].mxu0
        %v3404 = vadd.f32 0.0, %v3403
        %v3405 = vpop.f32.mrb[0].mxu0
        %3406 = vmatprep.mubr.bf16.mxu0 0
        %3407 = vmatmul.mubr.bf16.gmra.mrb[0].mxu0 %v3092
        %v3408 = vpop.f32.mrb[0].mxu0
        %v3409 = vadd.f32 0.0, %v3408
        %v3410 = vpop.f32.mrb[0].mxu0
        %v3411 = vpop.f32.mrb[0].mxu0
        %v3412 = vadd.f32 0.0, %v3411
        %v3413 = vpop.f32.mrb[0].mxu0
        %3414 = vmatprep.mubr.bf16.mxu0 0
        %3415 = vmatmul.mubr.bf16.gmra.mrb[0].mxu0 %v3095
        %v3416 = vpop.f32.mrb[0].mxu0
        %v3417 = vadd.f32 0.0, %v3416
        %v3418 = vpop.f32.mrb[0].mxu0
        %v3419 = vpop.f32.mrb[0].mxu0
        %v3420 = vadd.f32 0.0, %v3419
        %v3421 = vpop.f32.mrb[0].mxu0
        %3422 = vmatprep.mubr.bf16.mxu0 0
        %3423 = vmatmul.mubr.bf16.gmra.mrb[0].mxu0 %v3098
        %v3424 = vpop.f32.mrb[0].mxu0
        %v3425 = vadd.f32 0.0, %v3424
        %v3426 = vpop.f32.mrb[0].mxu0
        %v3427 = vpop.f32.mrb[0].mxu0
        %v3428 = vadd.f32 0.0, %v3427
        %v3429 = vpop.f32.mrb[0].mxu0
        %3430 = vmatprep.mubr.bf16.mxu0 0
        %3431 = vmatmul.mubr.bf16.gmra.mrb[0].mxu0 %v3101
        %v3432 = vpop.f32.mrb[0].mxu0
        %v3433 = vadd.f32 0.0, %v3432
        %v3434 = vpop.f32.mrb[0].mxu0
        %v3435 = vpop.f32.mrb[0].mxu0
        %v3436 = vadd.f32 0.0, %v3435
        %v3437 = vpop.f32.mrb[0].mxu0
        %3438 = vmatprep.mubr.bf16.mxu0 0
        %3439 = vmatmul.mubr.bf16.gmra.mrb[0].mxu0 %v3104
        %v3440 = vpop.f32.mrb[0].mxu0
        %v3441 = vadd.f32 0.0, %v3440
        %v3442 = vpop.f32.mrb[0].mxu0
        %v3443 = vpop.f32.mrb[0].mxu0
        %v3444 = vadd.f32 0.0, %v3443
        %v3445 = vpop.f32.mrb[0].mxu0
        %3446 = vmatprep.mubr.bf16.mxu0 0
        %3447 = vmatmul.mubr.bf16.gmra.mrb[0].mxu0 %v3107
        %v3448 = vpop.f32.mrb[0].mxu0
        %v3449 = vadd.f32 0.0, %v3448
        %v3450 = vpop.f32.mrb[0].mxu0
        %v3451 = vpop.f32.mrb[0].mxu0
        %v3452 = vadd.f32 0.0, %v3451
        %v3453 = vpop.f32.mrb[0].mxu0
        %3454 = vmatprep.mubr.bf16.mxu0 0
        %3455 = vmatmul.mubr.bf16.gmra.mrb[0].mxu0 %v3110
        %v3456 = vpop.f32.mrb[0].mxu0
        %v3457 = vadd.f32 0.0, %v3456
        %v3458 = vpop.f32.mrb[0].mxu0
        %v3459 = vpop.f32.mrb[0].mxu0
        %v3460 = vadd.f32 0.0, %v3459
        %v3461 = vpop.f32.mrb[0].mxu0
        %3462 = vmatprep.mubr.bf16.mxu0 0
        %3463 = vmatmul.mubr.bf16.gmra.mrb[0].mxu0 %v3113
        %v3464 = vpop.f32.mrb[0].mxu0
        %v3465 = vadd.f32 0.0, %v3464
        %v3466 = vpop.f32.mrb[0].mxu0
        %v3467 = vpop.f32.mrb[0].mxu0
        %v3468 = vadd.f32 0.0, %v3467
        %v3469 = vpop.f32.mrb[0].mxu0
        %3470 = vmatprep.mubr.bf16.mxu0 0
        %3471 = vmatmul.mubr.bf16.gmra.mrb[0].mxu0 %v3116
        %v3472 = vpop.f32.mrb[0].mxu0
        %v3473 = vadd.f32 0.0, %v3472
        %v3474 = vpop.f32.mrb[0].mxu0
        %v3475 = vpop.f32.mrb[0].mxu0
        %v3476 = vadd.f32 0.0, %v3475
        %v3477 = vpop.f32.mrb[0].mxu0
        %3478 = vmatprep.mubr.bf16.mxu0 0
        %3479 = vmatmul.mubr.bf16.gmra.mrb[0].mxu0 %v3119
        %v3480 = vpop.f32.mrb[0].mxu0
        %v3481 = vadd.f32 0.0, %v3480
        %v3482 = vpop.f32.mrb[0].mxu0
        %v3483 = vpop.f32.mrb[0].mxu0
        %v3484 = vadd.f32 0.0, %v3483
        %v3485 = vpop.f32.mrb[0].mxu0
        %3486 = vmatprep.mubr.bf16.mxu0 0
        %3487 = vmatmul.mubr.bf16.gmra.mrb[0].mxu0 %v3122
        %v3488 = vpop.f32.mrb[0].mxu0
        %v3489 = vadd.f32 0.0, %v3488
        %v3490 = vpop.f32.mrb[0].mxu0
        %v3491 = vpop.f32.mrb[0].mxu0
        %v3492 = vadd.f32 0.0, %v3491
        %v3493 = vpop.f32.mrb[0].mxu0
        %3494 = vmatprep.mubr.bf16.mxu0 0
        %3495 = vmatmul.mubr.bf16.gmra.mrb[0].mxu0 %v3125
        %v3496 = vpop.f32.mrb[0].mxu0
        %v3497 = vadd.f32 0.0, %v3496
        %v3498 = vpop.f32.mrb[0].mxu0
        %v3499 = vpop.f32.mrb[0].mxu0
        %v3500 = vadd.f32 0.0, %v3499
        %v3501 = vpop.f32.mrb[0].mxu0
        %3502 = vmatprep.mubr.bf16.mxu0 0
        %3503 = vmatmul.mubr.bf16.gmra.mrb[0].mxu0 %v3128
        %v3504 = vpop.f32.mrb[0].mxu0
        %v3505 = vadd.f32 0.0, %v3504
        %v3506 = vpop.f32.mrb[0].mxu0
        %v3507 = vpop.f32.mrb[0].mxu0
        %v3508 = vadd.f32 0.0, %v3507
        %v3509 = vpop.f32.mrb[0].mxu0
        %3510 = vmatprep.mubr.bf16.mxu0 0
        %3511 = vmatmul.mubr.bf16.gmra.mrb[0].mxu0 %v3131
        %v3512 = vpop.f32.mrb[0].mxu0
        %v3513 = vadd.f32 0.0, %v3512
        %v3514 = vpop.f32.mrb[0].mxu0
        %v3515 = vpop.f32.mrb[0].mxu0
        %v3516 = vadd.f32 0.0, %v3515
        %v3517 = vpop.f32.mrb[0].mxu0
        %3518 = vmatprep.mubr.bf16.mxu0 0
        %3519 = vmatmul.mubr.bf16.gmra.mrb[0].mxu0 %v3134
        %v3520 = vpop.f32.mrb[0].mxu0
        %v3521 = vadd.f32 0.0, %v3520
        %v3522 = vpop.f32.mrb[0].mxu0
        %v3523 = vpop.f32.mrb[0].mxu0
        %v3524 = vadd.f32 0.0, %v3523
        %v3525 = vpop.f32.mrb[0].mxu0
        %3526 = vmatprep.mubr.bf16.mxu0 0
        %3527 = vmatmul.mubr.bf16.gmra.mrb[0].mxu0 %v3137
        %v3528 = vpop.f32.mrb[0].mxu0
        %v3529 = vadd.f32 0.0, %v3528
        %v3530 = vpop.f32.mrb[0].mxu0
        %v3531 = vpop.f32.mrb[0].mxu0
        %v3532 = vadd.f32 0.0, %v3531
        %v3533 = vpop.f32.mrb[0].mxu0
        %3534 = vmatprep.mubr.bf16.mxu0 0
        %3535 = vmatmul.mubr.bf16.gmra.mrb[0].mxu0 %v3140
        %v3536 = vpop.f32.mrb[0].mxu0
        %v3537 = vadd.f32 0.0, %v3536
        %v3538 = vpop.f32.mrb[0].mxu0
        %v3539 = vpop.f32.mrb[0].mxu0
        %v3540 = vadd.f32 0.0, %v3539
        %v3541 = vpop.f32.mrb[0].mxu0
        %3542 = vmatprep.mubr.bf16.mxu0 0
        %3543 = vmatmul.mubr.bf16.gmra.mrb[0].mxu0 %v3143
        %v3544 = vpop.f32.mrb[0].mxu0
        %v3545 = vadd.f32 0.0, %v3544
        %v3546 = vpop.f32.mrb[0].mxu0
        %v3547 = vpop.f32.mrb[0].mxu0
        %v3548 = vadd.f32 0.0, %v3547
        %v3549 = vpop.f32.mrb[0].mxu0
        %3550 = vmatprep.mubr.bf16.mxu0 0
        %3551 = vmatmul.mubr.bf16.gmra.mrb[0].mxu0 %v3146
        %v3552 = vpop.f32.mrb[0].mxu0
        %v3553 = vadd.f32 0.0, %v3552
        %v3554 = vpop.f32.mrb[0].mxu0
        %v3555 = vpop.f32.mrb[0].mxu0
        %v3556 = vadd.f32 0.0, %v3555
        %v3557 = vpop.f32.mrb[0].mxu0
        %3558 = vmatprep.mubr.bf16.mxu0 0
        %3559 = vmatmul.mubr.bf16.gmra.mrb[0].mxu0 %v3149
        %v3560 = vpop.f32.mrb[0].mxu0
        %v3561 = vadd.f32 0.0, %v3560
        %v3562 = vpop.f32.mrb[0].mxu0
        %v3563 = vpop.f32.mrb[0].mxu0
        %v3564 = vadd.f32 0.0, %v3563
        %v3565 = vpop.f32.mrb[0].mxu0
        %3566 = vmatprep.mubr.bf16.mxu0 0
        %3567 = vmatmul.mubr.bf16.gmra.mrb[0].mxu0 %v3152
        %v3568 = vpop.f32.mrb[0].mxu0
        %v3569 = vadd.f32 0.0, %v3568
        %v3570 = vpop.f32.mrb[0].mxu0
        %v3571 = vpop.f32.mrb[0].mxu0
        %v3572 = vadd.f32 0.0, %v3571
        %v3573 = vpop.f32.mrb[0].mxu0
        %3574 = vmatprep.mubr.bf16.mxu0 0
        %3575 = vmatmul.mubr.bf16.gmra.mrb[0].mxu0 %v3155
        %v3576 = vpop.f32.mrb[0].mxu0
        %v3577 = vadd.f32 0.0, %v3576
        %v3578 = vpop.f32.mrb[0].mxu0
        %v3579 = vpop.f32.mrb[0].mxu0
        %v3580 = vadd.f32 0.0, %v3579
        %v3581 = vpop.f32.mrb[0].mxu0
        %3582 = vmatprep.mubr.bf16.mxu0 0
        %3583 = vmatmul.mubr.bf16.gmra.mrb[0].mxu0 %v3158
        %v3584 = vpop.f32.mrb[0].mxu0
        %v3585 = vadd.f32 0.0, %v3584
        %v3586 = vpop.f32.mrb[0].mxu0
        %v3587 = vpop.f32.mrb[0].mxu0
        %v3588 = vadd.f32 0.0, %v3587
        %v3589 = vpop.f32.mrb[0].mxu0
        %3590 = vmatprep.mubr.bf16.mxu0 0
        %3591 = vmatmul.mubr.bf16.gmra.mrb[0].mxu0 %v3161
        %v3592 = vpop.f32.mrb[0].mxu0
        %v3593 = vadd.f32 0.0, %v3592
        %v3594 = vpop.f32.mrb[0].mxu0
        %v3595 = vpop.f32.mrb[0].mxu0
        %v3596 = vadd.f32 0.0, %v3595
        %v3597 = vpop.f32.mrb[0].mxu0
        %3598 = vmatprep.mubr.bf16.mxu0 0
        %3599 = vmatmul.mubr.bf16.gmra.mrb[0].mxu0 %v3164
        %v3600 = vpop.f32.mrb[0].mxu0
        %v3601 = vadd.f32 0.0, %v3600
        %v3602 = vpop.f32.mrb[0].mxu0
        %v3603 = vpop.f32.mrb[0].mxu0
        %v3604 = vadd.f32 0.0, %v3603
        %v3605 = vpop.f32.mrb[0].mxu0
        %3606 = vmatprep.mubr.bf16.mxu0 0
        %3607 = vmatmul.mubr.bf16.gmra.mrb[0].mxu0 %v3167
        %v3608 = vpop.f32.mrb[0].mxu0
        %v3609 = vadd.f32 0.0, %v3608
        %v3610 = vpop.f32.mrb[0].mxu0
        %v3611 = vpop.f32.mrb[0].mxu0
        %v3612 = vadd.f32 0.0, %v3611
        %v3613 = vpop.f32.mrb[0].mxu0
        %3614 = vmatprep.mubr.bf16.mxu0 0
        %3615 = vmatmul.mubr.bf16.gmra.mrb[0].mxu0 %v3170
        %v3616 = vpop.f32.mrb[0].mxu0
        %v3617 = vadd.f32 0.0, %v3616
        %v3618 = vpop.f32.mrb[0].mxu0
        %v3619 = vpop.f32.mrb[0].mxu0
        %v3620 = vadd.f32 0.0, %v3619
        %v3621 = vpop.f32.mrb[0].mxu0
        %3622 = vmatprep.mubr.bf16.mxu0 0
        %3623 = vmatmul.mubr.bf16.gmra.mrb[0].mxu0 %v3173
        %v3624 = vpop.f32.mrb[0].mxu0
        %v3625 = vadd.f32 0.0, %v3624
        %v3626 = vpop.f32.mrb[0].mxu0
        %v3627 = vpop.f32.mrb[0].mxu0
        %v3628 = vadd.f32 0.0, %v3627
        %v3629 = vpop.f32.mrb[0].mxu0
        %3630 = vmatprep.mubr.bf16.mxu0 0
        %3631 = vmatmul.mubr.bf16.gmra.mrb[0].mxu0 %v3176
        %v3632 = vpop.f32.mrb[0].mxu0
        %v3633 = vadd.f32 0.0, %v3632
        %v3634 = vpop.f32.mrb[0].mxu0
        %v3635 = vpop.f32.mrb[0].mxu0
        %v3636 = vadd.f32 0.0, %v3635
        %v3637 = vpop.f32.mrb[0].mxu0
        %3638 = vmatprep.mubr.bf16.mxu0 0
        %3639 = vmatmul.mubr.bf16.gmra.mrb[0].mxu0 %v3179
        %v3640 = vpop.f32.mrb[0].mxu0
        %v3641 = vadd.f32 0.0, %v3640
        %v3642 = vpop.f32.mrb[0].mxu0
        %v3643 = vpop.f32.mrb[0].mxu0
        %v3644 = vadd.f32 0.0, %v3643
        %v3645 = vpop.f32.mrb[0].mxu0
        %3646 = vmatprep.mubr.bf16.mxu0 0
        %3647 = vmatmul.mubr.bf16.gmra.mrb[0].mxu0 %v3182
        %v3648 = vpop.f32.mrb[0].mxu0
        %v3649 = vadd.f32 0.0, %v3648
        %v3650 = vpop.f32.mrb[0].mxu0
        %v3651 = vpop.f32.mrb[0].mxu0
        %v3652 = vadd.f32 0.0, %v3651
        %v3653 = vpop.f32.mrb[0].mxu0
        %3654 = vmatprep.mubr.bf16.mxu0 0
        %3655 = vmatmul.mubr.bf16.gmra.mrb[0].mxu0 %v3185
        %v3656 = vpop.f32.mrb[0].mxu0
        %v3657 = vadd.f32 0.0, %v3656
        %v3658 = vpop.f32.mrb[0].mxu0
        %v3659 = vpop.f32.mrb[0].mxu0
        %v3660 = vadd.f32 0.0, %v3659
        %v3661 = vpop.f32.mrb[0].mxu0
        %3662 = vmatprep.mubr.bf16.mxu0 0
        %3663 = vmatmul.mubr.bf16.gmra.mrb[0].mxu0 %v3188
        %v3664 = vpop.f32.mrb[0].mxu0
        %v3665 = vadd.f32 0.0, %v3664
        %v3666 = vpop.f32.mrb[0].mxu0
        %v3667 = vpop.f32.mrb[0].mxu0
        %v3668 = vadd.f32 0.0, %v3667
        %v3669 = vpop.f32.mrb[0].mxu0
        %3670 = vmatprep.mubr.bf16.mxu0 0
        %3671 = vmatmul.mubr.bf16.gmra.mrb[0].mxu0 %v3191
        %v3672 = vpop.f32.mrb[0].mxu0
        %v3673 = vadd.f32 0.0, %v3672
        %v3674 = vpop.f32.mrb[0].mxu0
        %v3675 = vpop.f32.mrb[0].mxu0
        %v3676 = vadd.f32 0.0, %v3675
        %v3677 = vpop.f32.mrb[0].mxu0
        %3678 = vmatprep.mubr.bf16.mxu0 0
        %3679 = vmatmul.mubr.bf16.gmra.mrb[0].mxu0 %v3194
        %v3680 = vpop.f32.mrb[0].mxu0
        %v3681 = vadd.f32 0.0, %v3680
        %v3682 = vpop.f32.mrb[0].mxu0
        %v3683 = vpop.f32.mrb[0].mxu0
        %v3684 = vadd.f32 0.0, %v3683
        %v3685 = vpop.f32.mrb[0].mxu0
        %3686 = vmatprep.mubr.bf16.mxu0 0
        %3687 = vmatmul.mubr.bf16.gmra.mrb[0].mxu0 %v3197
        %v3688 = vpop.f32.mrb[0].mxu0
        %v3689 = vadd.f32 0.0, %v3688
        %v3690 = vpop.f32.mrb[0].mxu0
        %v3691 = vpop.f32.mrb[0].mxu0
        %v3692 = vadd.f32 0.0, %v3691
        %v3693 = vpop.f32.mrb[0].mxu0
        %3694 = vmatprep.mubr.bf16.mxu0 0
        %3695 = vmatmul.mubr.bf16.gmra.mrb[0].mxu0 %v3200
        %v3696 = vpop.f32.mrb[0].mxu0
        %v3697 = vadd.f32 0.0, %v3696
        %v3698 = vpop.f32.mrb[0].mxu0
        %v3699 = vpop.f32.mrb[0].mxu0
        %v3700 = vadd.f32 0.0, %v3699
        %v3701 = vpop.f32.mrb[0].mxu0
        %3702 = vmatprep.mubr.bf16.mxu0 0
        %3703 = vmatmul.mubr.bf16.gmra.mrb[0].mxu0 %v3203
        %v3704 = vpop.f32.mrb[0].mxu0
        %v3705 = vadd.f32 0.0, %v3704
        %v3706 = vpop.f32.mrb[0].mxu0
        %v3707 = vpop.f32.mrb[0].mxu0
        %v3708 = vadd.f32 0.0, %v3707
        %v3709 = vpop.f32.mrb[0].mxu0
        %3710 = vmatprep.mubr.bf16.mxu0 0
        %3711 = vmatmul.mubr.bf16.gmra.mrb[0].mxu0 %v3206
        %v3712 = vpop.f32.mrb[0].mxu0
        %v3713 = vadd.f32 0.0, %v3712
        %v3714 = vpop.f32.mrb[0].mxu0
        %v3715 = vpop.f32.mrb[0].mxu0
        %v3716 = vadd.f32 0.0, %v3715
        %v3717 = vpop.f32.mrb[0].mxu0
        %3718 = vmatprep.mubr.bf16.mxu0 0
        %3719 = vmatmul.mubr.bf16.gmra.mrb[0].mxu0 %v3209
        %v3720 = vpop.f32.mrb[0].mxu0
        %v3721 = vadd.f32 0.0, %v3720
        %v3722 = vpop.f32.mrb[0].mxu0
        %v3723 = vpop.f32.mrb[0].mxu0
        %v3724 = vadd.f32 0.0, %v3723
        %v3725 = vpop.f32.mrb[0].mxu0
        %3726 = vmatprep.mubr.bf16.mxu0 0
        %3727 = vmatmul.mubr.bf16.gmra.mrb[0].mxu0 %v3212
        %v3728 = vpop.f32.mrb[0].mxu0
        %v3729 = vadd.f32 0.0, %v3728
        %v3730 = vpop.f32.mrb[0].mxu0
        %v3731 = vpop.f32.mrb[0].mxu0
        %v3732 = vadd.f32 0.0, %v3731
        %v3733 = vpop.f32.mrb[0].mxu0
        %3734 = vmatprep.mubr.bf16.mxu0 0
        %3735 = vmatmul.mubr.bf16.gmra.mrb[0].mxu0 %v3215
        %v3736 = vpop.f32.mrb[0].mxu0
        %v3737 = vadd.f32 0.0, %v3736
        %v3738 = vpop.f32.mrb[0].mxu0
        %v3739 = vpop.f32.mrb[0].mxu0
        %v3740 = vadd.f32 0.0, %v3739
        %v3741 = vpop.f32.mrb[0].mxu0
        %3742 = vmatprep.mubr.bf16.mxu0 0
        %3743 = vmatmul.mubr.bf16.gmra.mrb[0].mxu0 %v3218
        %v3744 = vpop.f32.mrb[0].mxu0
        %v3745 = vadd.f32 0.0, %v3744
        %v3746 = vpop.f32.mrb[0].mxu0
        %v3747 = vpop.f32.mrb[0].mxu0
        %v3748 = vadd.f32 0.0, %v3747
        %v3749 = vpop.f32.mrb[0].mxu0
        %3750 = vmatprep.mubr.bf16.mxu0 0
        %3751 = vmatmul.mubr.bf16.gmra.mrb[0].mxu0 %v3221
        %v3752 = vpop.f32.mrb[0].mxu0
        %v3753 = vadd.f32 0.0, %v3752
        %v3754 = vpop.f32.mrb[0].mxu0
        %v3755 = vpop.f32.mrb[0].mxu0
        %v3756 = vadd.f32 0.0, %v3755
        %v3757 = vpop.f32.mrb[0].mxu0
        %3758 = vmatprep.mubr.bf16.mxu0 0
        %3759 = vmatmul.mubr.bf16.gmra.mrb[0].mxu0 %v3224
        %v3760 = vpop.f32.mrb[0].mxu0
        %v3761 = vadd.f32 0.0, %v3760
        %v3762 = vpop.f32.mrb[0].mxu0
        %v3763 = vpop.f32.mrb[0].mxu0
        %v3764 = vadd.f32 0.0, %v3763
        %v3765 = vpop.f32.mrb[0].mxu0
        %3766 = vmatprep.mubr.bf16.mxu0 0
        %3767 = vmatmul.mubr.bf16.gmra.mrb[0].mxu0 %v3227
        %v3768 = vpop.f32.mrb[0].mxu0
        %v3769 = vadd.f32 0.0, %v3768
        %v3770 = vpop.f32.mrb[0].mxu0
        %v3771 = vpop.f32.mrb[0].mxu0
        %v3772 = vadd.f32 0.0, %v3771
        %v3773 = vpop.f32.mrb[0].mxu0
        %3774 = vmatprep.mubr.bf16.mxu0 0
        %3775 = vmatmul.mubr.bf16.gmra.mrb[0].mxu0 %v3230
        %v3776 = vpop.f32.mrb[0].mxu0
        %v3777 = vadd.f32 0.0, %v3776
        %v3778 = vpop.f32.mrb[0].mxu0
        %v3779 = vpop.f32.mrb[0].mxu0
        %v3780 = vadd.f32 0.0, %v3779
        %v3781 = vpop.f32.mrb[0].mxu0
        %3782 = vmatprep.mubr.bf16.mxu0 0
        %3783 = vmatmul.mubr.bf16.gmra.mrb[0].mxu0 %v3233
        %v3784 = vpop.f32.mrb[0].mxu0
        %v3785 = vadd.f32 0.0, %v3784
        %v3786 = vpop.f32.mrb[0].mxu0
        %v3787 = vpop.f32.mrb[0].mxu0
        %v3788 = vadd.f32 0.0, %v3787
        %v3789 = vpop.f32.mrb[0].mxu0
        %3790 = vmatprep.mubr.bf16.mxu0 0
        %3791 = vmatmul.mubr.bf16.gmra.mrb[0].mxu0 %v3236
        %v3792 = vpop.f32.mrb[0].mxu0
        %v3793 = vadd.f32 0.0, %v3792
        %v3794 = vpop.f32.mrb[0].mxu0
        %v3795 = vpop.f32.mrb[0].mxu0
        %v3796 = vadd.f32 0.0, %v3795
        %v3797 = vpop.f32.mrb[0].mxu0
        %3798 = vmatprep.mubr.bf16.mxu0 0
        %3799 = vmatmul.mubr.bf16.gmra.mrb[0].mxu0 %v3239
        %v3800 = vpop.f32.mrb[0].mxu0
        %v3801 = vadd.f32 0.0, %v3800
        %v3802 = vpop.f32.mrb[0].mxu0
        %v3803 = vpop.f32.mrb[0].mxu0
        %v3804 = vadd.f32 0.0, %v3803
        %v3805 = vpop.f32.mrb[0].mxu0
        %3806 = vmatprep.mubr.bf16.mxu0 0
        %3807 = vmatmul.mubr.bf16.gmra.mrb[0].mxu0 %v3242
        %v3808 = vpop.f32.mrb[0].mxu0
        %v3809 = vadd.f32 0.0, %v3808
        %v3810 = vpop.f32.mrb[0].mxu0
        %v3811 = vpop.f32.mrb[0].mxu0
        %v3812 = vadd.f32 0.0, %v3811
        %v3813 = vpop.f32.mrb[0].mxu0
        %3814 = vmatprep.mubr.bf16.mxu0 0
        %3815 = vmatmul.mubr.bf16.gmra.mrb[0].mxu0 %v3245
        %v3816 = vpop.f32.mrb[0].mxu0
        %v3817 = vadd.f32 0.0, %v3816
        %v3818 = vpop.f32.mrb[0].mxu0
        %v3819 = vpop.f32.mrb[0].mxu0
        %v3820 = vadd.f32 0.0, %v3819
        %v3821 = vpop.f32.mrb[0].mxu0
        %3822 = vmatprep.mubr.bf16.mxu0 0
        %3823 = vmatmul.mubr.bf16.gmra.mrb[0].mxu0 %v3248
        %v3824 = vpop.f32.mrb[0].mxu0
        %v3825 = vadd.f32 0.0, %v3824
        %v3826 = vpop.f32.mrb[0].mxu0
        %v3827 = vpop.f32.mrb[0].mxu0
        %v3828 = vadd.f32 0.0, %v3827
        %v3829 = vpop.f32.mrb[0].mxu0
        %3830 = vmatprep.mubr.bf16.mxu0 0
        %3831 = vmatmul.mubr.bf16.gmra.mrb[0].mxu0 %v3251
        %v3832 = vpop.f32.mrb[0].mxu0
        %v3833 = vadd.f32 0.0, %v3832
        %v3834 = vpop.f32.mrb[0].mxu0
        %v3835 = vpop.f32.mrb[0].mxu0
        %v3836 = vadd.f32 0.0, %v3835
        %v3837 = vpop.f32.mrb[0].mxu0
        %3838 = vmatprep.mubr.bf16.mxu0 0
        %3839 = vmatmul.mubr.bf16.gmra.mrb[0].mxu0 %v3254
        %v3840 = vpop.f32.mrb[0].mxu0
        %v3841 = vadd.f32 0.0, %v3840
        %v3842 = vpop.f32.mrb[0].mxu0
        %v3843 = vpop.f32.mrb[0].mxu0
        %v3844 = vadd.f32 0.0, %v3843
        %v3845 = vpop.f32.mrb[0].mxu0
        %3846 = vmatprep.mubr.bf16.mxu0 0
        %3847 = vmatmul.mubr.bf16.gmra.mrb[0].mxu0 %v3257
        %v3848 = vpop.f32.mrb[0].mxu0
        %v3849 = vadd.f32 0.0, %v3848
        %v3850 = vpop.f32.mrb[0].mxu0
        %v3851 = vpop.f32.mrb[0].mxu0
        %v3852 = vadd.f32 0.0, %v3851
        %v3853 = vpop.f32.mrb[0].mxu0
        %3854 = vmatprep.mubr.bf16.mxu0 0
        %3855 = vmatmul.mubr.bf16.gmra.mrb[0].mxu0 %v3260
        %v3856 = vpop.f32.mrb[0].mxu0
        %v3857 = vadd.f32 0.0, %v3856
        %v3858 = vpop.f32.mrb[0].mxu0
        %v3859 = vpop.f32.mrb[0].mxu0
        %v3860 = vadd.f32 0.0, %v3859
        %v3861 = vpop.f32.mrb[0].mxu0
        %3862 = vmatprep.mubr.bf16.mxu0 0
        %3863 = vmatmul.mubr.bf16.gmra.mrb[0].mxu0 %v3263
        %v3864 = vpop.f32.mrb[0].mxu0
        %v3865 = vadd.f32 0.0, %v3864
        %v3866 = vpop.f32.mrb[0].mxu0
        %v3867 = vpop.f32.mrb[0].mxu0
        %v3868 = vadd.f32 0.0, %v3867
        %v3869 = vpop.f32.mrb[0].mxu0
        %3870 = vmatprep.mubr.bf16.mxu0 0
        %3871 = vmatmul.mubr.bf16.gmra.mrb[0].mxu0 %v3266
        %v3872 = vpop.f32.mrb[0].mxu0
        %v3873 = vadd.f32 0.0, %v3872
        %v3874 = vpop.f32.mrb[0].mxu0
        %v3875 = vpop.f32.mrb[0].mxu0
        %v3876 = vadd.f32 0.0, %v3875
        %v3877 = vpop.f32.mrb[0].mxu0
        %3878 = vmatprep.mubr.bf16.mxu0 0
        %3879 = vmatmul.mubr.bf16.gmra.mrb[0].mxu0 %v3269
        %v3880 = vpop.f32.mrb[0].mxu0
        %v3881 = vadd.f32 0.0, %v3880
        %v3882 = vpop.f32.mrb[0].mxu0
        %v3883 = vpop.f32.mrb[0].mxu0
        %v3884 = vadd.f32 0.0, %v3883
        %v3885 = vpop.f32.mrb[0].mxu0
        %3886 = vmatprep.mubr.bf16.mxu0 0
        %3887 = vmatmul.mubr.bf16.gmra.mrb[0].mxu0 %v3272
        %v3888 = vpop.f32.mrb[0].mxu0
        %v3889 = vadd.f32 0.0, %v3888
        %v3890 = vpop.f32.mrb[0].mxu0
        %v3891 = vpop.f32.mrb[0].mxu0
        %v3892 = vadd.f32 0.0, %v3891
        %v3893 = vpop.f32.mrb[0].mxu0
        %3894 = vmatprep.mubr.bf16.mxu0 0
        %3895 = vmatmul.mubr.bf16.gmra.mrb[0].mxu0 %v3275
        %v3896 = vpop.f32.mrb[0].mxu0
        %v3897 = vadd.f32 0.0, %v3896
        %v3898 = vpop.f32.mrb[0].mxu0
        %v3899 = vpop.f32.mrb[0].mxu0
        %v3900 = vadd.f32 0.0, %v3899
        %v3901 = vpop.f32.mrb[0].mxu0
        %3902 = vmatprep.mubr.bf16.mxu0 0
        %3903 = vmatmul.mubr.bf16.gmra.mrb[0].mxu0 %v3278
        %v3904 = vpop.f32.mrb[0].mxu0
        %v3905 = vadd.f32 0.0, %v3904
        %v3906 = vpop.f32.mrb[0].mxu0
        %v3907 = vpop.f32.mrb[0].mxu0
        %v3908 = vadd.f32 0.0, %v3907
        %v3909 = vpop.f32.mrb[0].mxu0
        %3910 = vmatprep.mubr.bf16.mxu0 0
        %3911 = vmatmul.mubr.bf16.gmra.mrb[0].mxu0 %v3281
        %v3912 = vpop.f32.mrb[0].mxu0
        %v3913 = vadd.f32 0.0, %v3912
        %v3914 = vpop.f32.mrb[0].mxu0
        %v3915 = vpop.f32.mrb[0].mxu0
        %v3916 = vadd.f32 0.0, %v3915
        %v3917 = vpop.f32.mrb[0].mxu0
        %3918 = vmatprep.mubr.bf16.mxu0 0
        %3919 = vmatmul.mubr.bf16.gmra.mrb[0].mxu0 %v3284
        %v3920 = vpop.f32.mrb[0].mxu0
        %v3921 = vadd.f32 0.0, %v3920
        %v3922 = vpop.f32.mrb[0].mxu0
        %v3923 = vpop.f32.mrb[0].mxu0
        %v3924 = vadd.f32 0.0, %v3923
        %v3925 = vpop.f32.mrb[0].mxu0
        %3926 = vmatprep.mubr.bf16.mxu0 0
        %3927 = vmatmul.mubr.bf16.gmra.mrb[0].mxu0 %v3287
        %v3928 = vpop.f32.mrb[0].mxu0
        %v3929 = vadd.f32 0.0, %v3928
        %v3930 = vpop.f32.mrb[0].mxu0
        %v3931 = vpop.f32.mrb[0].mxu0
        %v3932 = vadd.f32 0.0, %v3931
        %v3933 = vpop.f32.mrb[0].mxu0
        %3934 = vmatprep.mubr.bf16.mxu0 0
        %3935 = vmatmul.mubr.bf16.gmra.mrb[0].mxu0 %v3290
        %v3936 = vpop.f32.mrb[0].mxu0
        %v3937 = vadd.f32 0.0, %v3936
        %v3938 = vpop.f32.mrb[0].mxu0
        %v3939 = vpop.f32.mrb[0].mxu0
        %v3940 = vadd.f32 0.0, %v3939
        %v3941 = vpop.f32.mrb[0].mxu0
        %3942 = vmatprep.mubr.bf16.mxu0 0
        %3943 = vmatmul.mubr.bf16.gmra.mrb[0].mxu0 %v3293
        %v3944 = vpop.f32.mrb[0].mxu0
        %v3945 = vadd.f32 0.0, %v3944
        %v3946 = vpop.f32.mrb[0].mxu0
        %v3947 = vpop.f32.mrb[0].mxu0
        %v3948 = vadd.f32 0.0, %v3947
        %v3949 = vpop.f32.mrb[0].mxu0
        %3950 = vmatprep.mubr.bf16.mxu0 0
        %3951 = vmatmul.mubr.bf16.gmra.mrb[0].mxu0 %v3296
        %v3952 = vpop.f32.mrb[0].mxu0
        %v3953 = vadd.f32 0.0, %v3952
        %v3954 = vpop.f32.mrb[0].mxu0
        %v3955 = vpop.f32.mrb[0].mxu0
        %v3956 = vadd.f32 0.0, %v3955
        %v3957 = vpop.f32.mrb[0].mxu0
        %3958 = vmatprep.mubr.bf16.mxu0 0
        %3959 = vmatmul.mubr.bf16.gmra.mrb[0].mxu0 %v3299
        %v3960 = vpop.f32.mrb[0].mxu0
        %v3961 = vadd.f32 0.0, %v3960
        %v3962 = vpop.f32.mrb[0].mxu0
        %v3963 = vpop.f32.mrb[0].mxu0
        %v3964 = vadd.f32 0.0, %v3963
        %v3965 = vpop.f32.mrb[0].mxu0
        %3966 = vmatprep.mubr.bf16.mxu0 0
        %3967 = vmatmul.mubr.bf16.gmra.mrb[0].mxu0 %v3302
        %v3968 = vpop.f32.mrb[0].mxu0
        %v3969 = vadd.f32 0.0, %v3968
        %v3970 = vpop.f32.mrb[0].mxu0
        %v3971 = vpop.f32.mrb[0].mxu0
        %v3972 = vadd.f32 0.0, %v3971
        %v3973 = vpop.f32.mrb[0].mxu0
        %3974 = vmatprep.mubr.bf16.mxu0 0
        %3975 = vmatmul.mubr.bf16.gmra.mrb[0].mxu0 %v3305
        %v3976 = vpop.f32.mrb[0].mxu0
        %v3977 = vadd.f32 0.0, %v3976
        %v3978 = vpop.f32.mrb[0].mxu0
        %v3979 = vpop.f32.mrb[0].mxu0
        %v3980 = vadd.f32 0.0, %v3979
        %v3981 = vpop.f32.mrb[0].mxu0
        %3982 = vmatprep.mubr.bf16.mxu0 0
        %3983 = vmatmul.mubr.bf16.gmra.mrb[0].mxu0 %v3308
        %v3984 = vpop.f32.mrb[0].mxu0
        %v3985 = vadd.f32 0.0, %v3984
        %v3986 = vpop.f32.mrb[0].mxu0
        %v3987 = vpop.f32.mrb[0].mxu0
        %v3988 = vadd.f32 0.0, %v3987
        %v3989 = vpop.f32.mrb[0].mxu0
        %3990 = vmatprep.mubr.bf16.mxu0 0
        %3991 = vmatmul.mubr.bf16.gmra.mrb[0].mxu0 %v3311
        %v3992 = vpop.f32.mrb[0].mxu0
        %v3993 = vadd.f32 0.0, %v3992
        %v3994 = vpop.f32.mrb[0].mxu0
        %v3995 = vpop.f32.mrb[0].mxu0
        %v3996 = vadd.f32 0.0, %v3995
        %v3997 = vpop.f32.mrb[0].mxu0
        %3998 = vmatprep.mubr.bf16.mxu0 0
        %3999 = vmatmul.mubr.bf16.gmra.mrb[0].mxu0 %v3314
        %v4000 = vpop.f32.mrb[0].mxu0
        %v4001 = vadd.f32 0.0, %v4000
        %v4002 = vpop.f32.mrb[0].mxu0
        %v4003 = vpop.f32.mrb[0].mxu0
        %v4004 = vadd.f32 0.0, %v4003
        %v4005 = vpop.f32.mrb[0].mxu0
        %4006 = vmatprep.mubr.bf16.mxu0 0
        %4007 = vmatmul.mubr.bf16.gmra.mrb[0].mxu0 %v3317
        %v4008 = vpop.f32.mrb[0].mxu0
        %v4009 = vadd.f32 0.0, %v4008
        %v4010 = vpop.f32.mrb[0].mxu0
        %v4011 = vpop.f32.mrb[0].mxu0
        %v4012 = vadd.f32 0.0, %v4011
        %v4013 = vpop.f32.mrb[0].mxu0
        %4014 = vmatprep.mubr.bf16.mxu0 0
        %4015 = vmatmul.mubr.bf16.gmra.mrb[0].mxu0 %v3320
        %v4016 = vpop.f32.mrb[0].mxu0
        %v4017 = vadd.f32 0.0, %v4016
        %v4018 = vpop.f32.mrb[0].mxu0
        %v4019 = vpop.f32.mrb[0].mxu0
        %v4020 = vadd.f32 0.0, %v4019
        %v4021 = vpop.f32.mrb[0].mxu0
        %4022 = vmatprep.mubr.bf16.mxu0 0
        %4023 = vmatmul.mubr.bf16.gmra.mrb[0].mxu0 %v3323
        %v4024 = vpop.f32.mrb[0].mxu0
        %v4025 = vadd.f32 0.0, %v4024
        %v4026 = vpop.f32.mrb[0].mxu0
        %v4027 = vpop.f32.mrb[0].mxu0
        %v4028 = vadd.f32 0.0, %v4027
        %v4029 = vpop.f32.mrb[0].mxu0
        %4030 = vmatprep.mubr.bf16.mxu0 0
        %4031 = vmatmul.mubr.bf16.gmra.mrb[0].mxu0 %v3326
        %v4032 = vpop.f32.mrb[0].mxu0
        %v4033 = vadd.f32 0.0, %v4032
        %v4034 = vpop.f32.mrb[0].mxu0
        %v4035 = vpop.f32.mrb[0].mxu0
        %v4036 = vadd.f32 0.0, %v4035
        %v4037 = vpop.f32.mrb[0].mxu0
        %4038 = vmatprep.mubr.bf16.mxu0 0
        %4039 = vmatmul.mubr.bf16.gmra.mrb[0].mxu0 %v3329
        %v4040 = vpop.f32.mrb[0].mxu0
        %v4041 = vadd.f32 0.0, %v4040
        %v4042 = vpop.f32.mrb[0].mxu0
        %v4043 = vpop.f32.mrb[0].mxu0
        %v4044 = vadd.f32 0.0, %v4043
        %v4045 = vpop.f32.mrb[0].mxu0
        %4046 = vdwg.mxu0
        %v4047 = vadd.f32 %v2141, %v3369
        %v4048 = vadd.f32 %v2144, %v3372
        %v4049 = vadd.f32 %v2149, %v3377
        %v4050 = vadd.f32 %v2152, %v3380
        %v4051 = vadd.f32 %v2157, %v3385
        %v4052 = vadd.f32 %v2160, %v3388
        %v4053 = vadd.f32 %v2165, %v3393
        %v4054 = vadd.f32 %v2168, %v3396
        %v4055 = vadd.f32 %v2173, %v3401
        %v4056 = vadd.f32 %v2176, %v3404
        %v4057 = vadd.f32 %v2181, %v3409
        %v4058 = vadd.f32 %v2184, %v3412
        %v4059 = vadd.f32 %v2189, %v3417
        %v4060 = vadd.f32 %v2192, %v3420
        %v4061 = vadd.f32 %v2197, %v3425
        %v4062 = vadd.f32 %v2200, %v3428
        %v4063 = vadd.f32 %v2205, %v3433
        %v4064 = vadd.f32 %v2208, %v3436
        %v4065 = vadd.f32 %v2213, %v3441
        %v4066 = vadd.f32 %v2216, %v3444
        %v4067 = vadd.f32 %v2221, %v3449
        %v4068 = vadd.f32 %v2224, %v3452
        %v4069 = vadd.f32 %v2229, %v3457
        %v4070 = vadd.f32 %v2232, %v3460
        %v4071 = vadd.f32 %v2237, %v3465
        %v4072 = vadd.f32 %v2240, %v3468
        %v4073 = vadd.f32 %v2245, %v3473
        %v4074 = vadd.f32 %v2248, %v3476
        %v4075 = vadd.f32 %v2253, %v3481
        %v4076 = vadd.f32 %v2256, %v3484
        %v4077 = vadd.f32 %v2261, %v3489
        %v4078 = vadd.f32 %v2264, %v3492
        %v4079 = vadd.f32 %v2269, %v3497
        %v4080 = vadd.f32 %v2272, %v3500
        %v4081 = vadd.f32 %v2277, %v3505
        %v4082 = vadd.f32 %v2280, %v3508
        %v4083 = vadd.f32 %v2285, %v3513
        %v4084 = vadd.f32 %v2288, %v3516
        %v4085 = vadd.f32 %v2293, %v3521
        %v4086 = vadd.f32 %v2296, %v3524
        %v4087 = vadd.f32 %v2301, %v3529
        %v4088 = vadd.f32 %v2304, %v3532
        %v4089 = vadd.f32 %v2309, %v3537
        %v4090 = vadd.f32 %v2312, %v3540
        %v4091 = vadd.f32 %v2317, %v3545
        %v4092 = vadd.f32 %v2320, %v3548
        %v4093 = vadd.f32 %v2325, %v3553
        %v4094 = vadd.f32 %v2328, %v3556
        %v4095 = vadd.f32 %v2333, %v3561
        %v4096 = vadd.f32 %v2336, %v3564
        %v4097 = vadd.f32 %v2341, %v3569
        %v4098 = vadd.f32 %v2344, %v3572
        %v4099 = vadd.f32 %v2349, %v3577
        %v4100 = vadd.f32 %v2352, %v3580
        %v4101 = vadd.f32 %v2357, %v3585
        %v4102 = vadd.f32 %v2360, %v3588
        %v4103 = vadd.f32 %v2365, %v3593
        %v4104 = vadd.f32 %v2368, %v3596
        %v4105 = vadd.f32 %v2373, %v3601
        %v4106 = vadd.f32 %v2376, %v3604
        %v4107 = vadd.f32 %v2381, %v3609
        %v4108 = vadd.f32 %v2384, %v3612
        %v4109 = vadd.f32 %v2389, %v3617
        %v4110 = vadd.f32 %v2392, %v3620
        %v4111 = vadd.f32 %v2397, %v3625
        %v4112 = vadd.f32 %v2400, %v3628
        %v4113 = vadd.f32 %v2405, %v3633
        %v4114 = vadd.f32 %v2408, %v3636
        %v4115 = vadd.f32 %v2413, %v3641
        %v4116 = vadd.f32 %v2416, %v3644
        %v4117 = vadd.f32 %v2421, %v3649
        %v4118 = vadd.f32 %v2424, %v3652
        %v4119 = vadd.f32 %v2429, %v3657
        %v4120 = vadd.f32 %v2432, %v3660
        %v4121 = vadd.f32 %v2437, %v3665
        %v4122 = vadd.f32 %v2440, %v3668
        %v4123 = vadd.f32 %v2445, %v3673
        %v4124 = vadd.f32 %v2448, %v3676
        %v4125 = vadd.f32 %v2453, %v3681
        %v4126 = vadd.f32 %v2456, %v3684
        %v4127 = vadd.f32 %v2461, %v3689
        %v4128 = vadd.f32 %v2464, %v3692
        %v4129 = vadd.f32 %v2469, %v3697
        %v4130 = vadd.f32 %v2472, %v3700
        %v4131 = vadd.f32 %v2477, %v3705
        %v4132 = vadd.f32 %v2480, %v3708
        %v4133 = vadd.f32 %v2485, %v3713
        %v4134 = vadd.f32 %v2488, %v3716
        %v4135 = vadd.f32 %v2493, %v3721
        %v4136 = vadd.f32 %v2496, %v3724
        %v4137 = vadd.f32 %v2501, %v3729
        %v4138 = vadd.f32 %v2504, %v3732
        %v4139 = vadd.f32 %v2509, %v3737
        %v4140 = vadd.f32 %v2512, %v3740
        %v4141 = vadd.f32 %v2517, %v3745
        %v4142 = vadd.f32 %v2520, %v3748
        %v4143 = vadd.f32 %v2525, %v3753
        %v4144 = vadd.f32 %v2528, %v3756
        %v4145 = vadd.f32 %v2533, %v3761
        %v4146 = vadd.f32 %v2536, %v3764
        %v4147 = vadd.f32 %v2541, %v3769
        %v4148 = vadd.f32 %v2544, %v3772
        %v4149 = vadd.f32 %v2549, %v3777
        %v4150 = vadd.f32 %v2552, %v3780
        %v4151 = vadd.f32 %v2557, %v3785
        %v4152 = vadd.f32 %v2560, %v3788
        %v4153 = vadd.f32 %v2565, %v3793
        %v4154 = vadd.f32 %v2568, %v3796
        %v4155 = vadd.f32 %v2573, %v3801
        %v4156 = vadd.f32 %v2576, %v3804
        %v4157 = vadd.f32 %v2581, %v3809
        %v4158 = vadd.f32 %v2584, %v3812
        %v4159 = vadd.f32 %v2589, %v3817
        %v4160 = vadd.f32 %v2592, %v3820
        %v4161 = vadd.f32 %v2597, %v3825
        %v4162 = vadd.f32 %v2600, %v3828
        %v4163 = vadd.f32 %v2605, %v3833
        %v4164 = vadd.f32 %v2608, %v3836
        %v4165 = vadd.f32 %v2613, %v3841
        %v4166 = vadd.f32 %v2616, %v3844
        %v4167 = vadd.f32 %v2621, %v3849
        %v4168 = vadd.f32 %v2624, %v3852
        %v4169 = vadd.f32 %v2629, %v3857
        %v4170 = vadd.f32 %v2632, %v3860
        %v4171 = vadd.f32 %v2637, %v3865
        %v4172 = vadd.f32 %v2640, %v3868
        %v4173 = vadd.f32 %v2645, %v3873
        %v4174 = vadd.f32 %v2648, %v3876
        %v4175 = vadd.f32 %v2653, %v3881
        %v4176 = vadd.f32 %v2656, %v3884
        %v4177 = vadd.f32 %v2661, %v3889
        %v4178 = vadd.f32 %v2664, %v3892
        %v4179 = vadd.f32 %v2669, %v3897
        %v4180 = vadd.f32 %v2672, %v3900
        %v4181 = vadd.f32 %v2677, %v3905
        %v4182 = vadd.f32 %v2680, %v3908
        %v4183 = vadd.f32 %v2685, %v3913
        %v4184 = vadd.f32 %v2688, %v3916
        %v4185 = vadd.f32 %v2693, %v3921
        %v4186 = vadd.f32 %v2696, %v3924
        %v4187 = vadd.f32 %v2701, %v3929
        %v4188 = vadd.f32 %v2704, %v3932
        %v4189 = vadd.f32 %v2709, %v3937
        %v4190 = vadd.f32 %v2712, %v3940
        %v4191 = vadd.f32 %v2717, %v3945
        %v4192 = vadd.f32 %v2720, %v3948
        %v4193 = vadd.f32 %v2725, %v3953
        %v4194 = vadd.f32 %v2728, %v3956
        %v4195 = vadd.f32 %v2733, %v3961
        %v4196 = vadd.f32 %v2736, %v3964
        %v4197 = vadd.f32 %v2741, %v3969
        %v4198 = vadd.f32 %v2744, %v3972
        %v4199 = vadd.f32 %v2749, %v3977
        %v4200 = vadd.f32 %v2752, %v3980
        %v4201 = vadd.f32 %v2757, %v3985
        %v4202 = vadd.f32 %v2760, %v3988
        %v4203 = vadd.f32 %v2765, %v3993
        %v4204 = vadd.f32 %v2768, %v3996
        %v4205 = vadd.f32 %v2773, %v4001
        %v4206 = vadd.f32 %v2776, %v4004
        %v4207 = vadd.f32 %v2781, %v4009
        %v4208 = vadd.f32 %v2784, %v4012
        %v4209 = vadd.f32 %v2789, %v4017
        %v4210 = vadd.f32 %v2792, %v4020
        %v4211 = vadd.f32 %v2797, %v4025
        %v4212 = vadd.f32 %v2800, %v4028
        %v4213 = vadd.f32 %v2805, %v4033
        %v4214 = vadd.f32 %v2808, %v4036
        %v4215 = vadd.f32 %v2813, %v4041
        %v4216 = vadd.f32 %v2816, %v4044
        %v4217 = vlaneseq
        %v4218 = vshrl.u32 %v4217, 7
        %v4219 = vsub.s32 0, %v4218
        %v4220 = vrot.slane %v361, %v4219
        %v4221 = vadd.f32 %v4047, %v4220
        %v4222 = vadd.f32 %v4048, %v4220
        %v4223 = vadd.f32 %v4049, %v4220
        %v4224 = vadd.f32 %v4050, %v4220
        %v4225 = vadd.f32 %v4051, %v4220
        %v4226 = vadd.f32 %v4052, %v4220
        %v4227 = vadd.f32 %v4053, %v4220
        %v4228 = vadd.f32 %v4054, %v4220
        %v4229 = vadd.f32 %v4055, %v4220
        %v4230 = vadd.f32 %v4056, %v4220
        %v4231 = vadd.f32 %v4057, %v4220
        %v4232 = vadd.f32 %v4058, %v4220
        %v4233 = vadd.f32 %v4059, %v4220
        %v4234 = vadd.f32 %v4060, %v4220
        %v4235 = vadd.f32 %v4061, %v4220
        %v4236 = vadd.f32 %v4062, %v4220
        %v4237 = vadd.f32 %v4063, %v4220
        %v4238 = vadd.f32 %v4064, %v4220
        %v4239 = vadd.f32 %v4065, %v4220
        %v4240 = vadd.f32 %v4066, %v4220
        %v4241 = vadd.f32 %v4067, %v4220
        %v4242 = vadd.f32 %v4068, %v4220
        %v4243 = vadd.f32 %v4069, %v4220
        %v4244 = vadd.f32 %v4070, %v4220
        %v4245 = vadd.f32 %v4071, %v4220
        %v4246 = vadd.f32 %v4072, %v4220
        %v4247 = vadd.f32 %v4073, %v4220
        %v4248 = vadd.f32 %v4074, %v4220
        %v4249 = vadd.f32 %v4075, %v4220
        %v4250 = vadd.f32 %v4076, %v4220
        %v4251 = vadd.f32 %v4077, %v4220
        %v4252 = vadd.f32 %v4078, %v4220
        %v4253 = vadd.f32 %v4079, %v4220
        %v4254 = vadd.f32 %v4080, %v4220
        %v4255 = vadd.f32 %v4081, %v4220
        %v4256 = vadd.f32 %v4082, %v4220
        %v4257 = vadd.f32 %v4083, %v4220
        %v4258 = vadd.f32 %v4084, %v4220
        %v4259 = vadd.f32 %v4085, %v4220
        %v4260 = vadd.f32 %v4086, %v4220
        %v4261 = vadd.f32 %v4087, %v4220
        %v4262 = vadd.f32 %v4088, %v4220
        %v4263 = vadd.f32 %v4089, %v4220
        %v4264 = vadd.f32 %v4090, %v4220
        %v4265 = vadd.f32 %v4091, %v4220
        %v4266 = vadd.f32 %v4092, %v4220
        %v4267 = vadd.f32 %v4093, %v4220
        %v4268 = vadd.f32 %v4094, %v4220
        %v4269 = vadd.f32 %v4095, %v4220
        %v4270 = vadd.f32 %v4096, %v4220
        %v4271 = vadd.f32 %v4097, %v4220
        %v4272 = vadd.f32 %v4098, %v4220
        %v4273 = vadd.f32 %v4099, %v4220
        %v4274 = vadd.f32 %v4100, %v4220
        %v4275 = vadd.f32 %v4101, %v4220
        %v4276 = vadd.f32 %v4102, %v4220
        %v4277 = vadd.f32 %v4103, %v4220
        %v4278 = vadd.f32 %v4104, %v4220
        %v4279 = vadd.f32 %v4105, %v4220
        %v4280 = vadd.f32 %v4106, %v4220
        %v4281 = vadd.f32 %v4107, %v4220
        %v4282 = vadd.f32 %v4108, %v4220
        %v4283 = vadd.f32 %v4109, %v4220
        %v4284 = vadd.f32 %v4110, %v4220
        %v4285 = vadd.f32 %v4111, %v4220
        %v4286 = vadd.f32 %v4112, %v4220
        %v4287 = vadd.f32 %v4113, %v4220
        %v4288 = vadd.f32 %v4114, %v4220
        %v4289 = vadd.f32 %v4115, %v4220
        %v4290 = vadd.f32 %v4116, %v4220
        %v4291 = vadd.f32 %v4117, %v4220
        %v4292 = vadd.f32 %v4118, %v4220
        %v4293 = vadd.f32 %v4119, %v4220
        %v4294 = vadd.f32 %v4120, %v4220
        %v4295 = vadd.f32 %v4121, %v4220
        %v4296 = vadd.f32 %v4122, %v4220
        %v4297 = vadd.f32 %v4123, %v4220
        %v4298 = vadd.f32 %v4124, %v4220
        %v4299 = vadd.f32 %v4125, %v4220
        %v4300 = vadd.f32 %v4126, %v4220
        %v4301 = vadd.f32 %v4127, %v4220
        %v4302 = vadd.f32 %v4128, %v4220
        %v4303 = vadd.f32 %v4129, %v4220
        %v4304 = vadd.f32 %v4130, %v4220
        %v4305 = vadd.f32 %v4131, %v4220
        %v4306 = vadd.f32 %v4132, %v4220
        %v4307 = vadd.f32 %v4133, %v4220
        %v4308 = vadd.f32 %v4134, %v4220
        %v4309 = vadd.f32 %v4135, %v4220
        %v4310 = vadd.f32 %v4136, %v4220
        %v4311 = vadd.f32 %v4137, %v4220
        %v4312 = vadd.f32 %v4138, %v4220
        %v4313 = vadd.f32 %v4139, %v4220
        %v4314 = vadd.f32 %v4140, %v4220
        %v4315 = vadd.f32 %v4141, %v4220
        %v4316 = vadd.f32 %v4142, %v4220
        %v4317 = vadd.f32 %v4143, %v4220
        %v4318 = vadd.f32 %v4144, %v4220
        %v4319 = vadd.f32 %v4145, %v4220
        %v4320 = vadd.f32 %v4146, %v4220
        %v4321 = vadd.f32 %v4147, %v4220
        %v4322 = vadd.f32 %v4148, %v4220
        %v4323 = vadd.f32 %v4149, %v4220
        %v4324 = vadd.f32 %v4150, %v4220
        %v4325 = vadd.f32 %v4151, %v4220
        %v4326 = vadd.f32 %v4152, %v4220
        %v4327 = vadd.f32 %v4153, %v4220
        %v4328 = vadd.f32 %v4154, %v4220
        %v4329 = vadd.f32 %v4155, %v4220
        %v4330 = vadd.f32 %v4156, %v4220
        %v4331 = vadd.f32 %v4157, %v4220
        %v4332 = vadd.f32 %v4158, %v4220
        %v4333 = vadd.f32 %v4159, %v4220
        %v4334 = vadd.f32 %v4160, %v4220
        %v4335 = vadd.f32 %v4161, %v4220
        %v4336 = vadd.f32 %v4162, %v4220
        %v4337 = vadd.f32 %v4163, %v4220
        %v4338 = vadd.f32 %v4164, %v4220
        %v4339 = vadd.f32 %v4165, %v4220
        %v4340 = vadd.f32 %v4166, %v4220
        %v4341 = vadd.f32 %v4167, %v4220
        %v4342 = vadd.f32 %v4168, %v4220
        %v4343 = vadd.f32 %v4169, %v4220
        %v4344 = vadd.f32 %v4170, %v4220
        %v4345 = vadd.f32 %v4171, %v4220
        %v4346 = vadd.f32 %v4172, %v4220
        %v4347 = vadd.f32 %v4173, %v4220
        %v4348 = vadd.f32 %v4174, %v4220
        %v4349 = vadd.f32 %v4175, %v4220
        %v4350 = vadd.f32 %v4176, %v4220
        %v4351 = vadd.f32 %v4177, %v4220
        %v4352 = vadd.f32 %v4178, %v4220
        %v4353 = vadd.f32 %v4179, %v4220
        %v4354 = vadd.f32 %v4180, %v4220
        %v4355 = vadd.f32 %v4181, %v4220
        %v4356 = vadd.f32 %v4182, %v4220
        %v4357 = vadd.f32 %v4183, %v4220
        %v4358 = vadd.f32 %v4184, %v4220
        %v4359 = vadd.f32 %v4185, %v4220
        %v4360 = vadd.f32 %v4186, %v4220
        %v4361 = vadd.f32 %v4187, %v4220
        %v4362 = vadd.f32 %v4188, %v4220
        %v4363 = vadd.f32 %v4189, %v4220
        %v4364 = vadd.f32 %v4190, %v4220
        %v4365 = vadd.f32 %v4191, %v4220
        %v4366 = vadd.f32 %v4192, %v4220
        %v4367 = vadd.f32 %v4193, %v4220
        %v4368 = vadd.f32 %v4194, %v4220
        %v4369 = vadd.f32 %v4195, %v4220
        %v4370 = vadd.f32 %v4196, %v4220
        %v4371 = vadd.f32 %v4197, %v4220
        %v4372 = vadd.f32 %v4198, %v4220
        %v4373 = vadd.f32 %v4199, %v4220
        %v4374 = vadd.f32 %v4200, %v4220
        %v4375 = vadd.f32 %v4201, %v4220
        %v4376 = vadd.f32 %v4202, %v4220
        %v4377 = vadd.f32 %v4203, %v4220
        %v4378 = vadd.f32 %v4204, %v4220
        %v4379 = vadd.f32 %v4205, %v4220
        %v4380 = vadd.f32 %v4206, %v4220
        %v4381 = vadd.f32 %v4207, %v4220
        %v4382 = vadd.f32 %v4208, %v4220
        %v4383 = vadd.f32 %v4209, %v4220
        %v4384 = vadd.f32 %v4210, %v4220
        %v4385 = vadd.f32 %v4211, %v4220
        %v4386 = vadd.f32 %v4212, %v4220
        %v4387 = vadd.f32 %v4213, %v4220
        %v4388 = vadd.f32 %v4214, %v4220
        %v4389 = vadd.f32 %v4215, %v4220
        %v4390 = vadd.f32 %v4216, %v4220
        %v4391 = vmax.f32 %v4221, 0.0
        %v4392 = vmax.f32 %v4222, 0.0
        %v4393 = vmax.f32 %v4223, 0.0
        %v4394 = vmax.f32 %v4224, 0.0
        %v4395 = vmax.f32 %v4225, 0.0
        %v4396 = vmax.f32 %v4226, 0.0
        %v4397 = vmax.f32 %v4227, 0.0
        %v4398 = vmax.f32 %v4228, 0.0
        %v4399 = vmax.f32 %v4229, 0.0
        %v4400 = vmax.f32 %v4230, 0.0
        %v4401 = vmax.f32 %v4231, 0.0
        %v4402 = vmax.f32 %v4232, 0.0
        %v4403 = vmax.f32 %v4233, 0.0
        %v4404 = vmax.f32 %v4234, 0.0
        %v4405 = vmax.f32 %v4235, 0.0
        %v4406 = vmax.f32 %v4236, 0.0
        %v4407 = vmax.f32 %v4237, 0.0
        %v4408 = vmax.f32 %v4238, 0.0
        %v4409 = vmax.f32 %v4239, 0.0
        %v4410 = vmax.f32 %v4240, 0.0
        %v4411 = vmax.f32 %v4241, 0.0
        %v4412 = vmax.f32 %v4242, 0.0
        %v4413 = vmax.f32 %v4243, 0.0
        %v4414 = vmax.f32 %v4244, 0.0
        %v4415 = vmax.f32 %v4245, 0.0
        %v4416 = vmax.f32 %v4246, 0.0
        %v4417 = vmax.f32 %v4247, 0.0
        %v4418 = vmax.f32 %v4248, 0.0
        %v4419 = vmax.f32 %v4249, 0.0
        %v4420 = vmax.f32 %v4250, 0.0
        %v4421 = vmax.f32 %v4251, 0.0
        %v4422 = vmax.f32 %v4252, 0.0
        %v4423 = vmax.f32 %v4253, 0.0
        %v4424 = vmax.f32 %v4254, 0.0
        %v4425 = vmax.f32 %v4255, 0.0
        %v4426 = vmax.f32 %v4256, 0.0
        %v4427 = vmax.f32 %v4257, 0.0
        %v4428 = vmax.f32 %v4258, 0.0
        %v4429 = vmax.f32 %v4259, 0.0
        %v4430 = vmax.f32 %v4260, 0.0
        %v4431 = vmax.f32 %v4261, 0.0
        %v4432 = vmax.f32 %v4262, 0.0
        %v4433 = vmax.f32 %v4263, 0.0
        %v4434 = vmax.f32 %v4264, 0.0
        %v4435 = vmax.f32 %v4265, 0.0
        %v4436 = vmax.f32 %v4266, 0.0
        %v4437 = vmax.f32 %v4267, 0.0
        %v4438 = vmax.f32 %v4268, 0.0
        %v4439 = vmax.f32 %v4269, 0.0
        %v4440 = vmax.f32 %v4270, 0.0
        %v4441 = vmax.f32 %v4271, 0.0
        %v4442 = vmax.f32 %v4272, 0.0
        %v4443 = vmax.f32 %v4273, 0.0
        %v4444 = vmax.f32 %v4274, 0.0
        %v4445 = vmax.f32 %v4275, 0.0
        %v4446 = vmax.f32 %v4276, 0.0
        %v4447 = vmax.f32 %v4277, 0.0
        %v4448 = vmax.f32 %v4278, 0.0
        %v4449 = vmax.f32 %v4279, 0.0
        %v4450 = vmax.f32 %v4280, 0.0
        %v4451 = vmax.f32 %v4281, 0.0
        %v4452 = vmax.f32 %v4282, 0.0
        %v4453 = vmax.f32 %v4283, 0.0
        %v4454 = vmax.f32 %v4284, 0.0
        %v4455 = vmax.f32 %v4285, 0.0
        %v4456 = vmax.f32 %v4286, 0.0
        %v4457 = vmax.f32 %v4287, 0.0
        %v4458 = vmax.f32 %v4288, 0.0
        %v4459 = vmax.f32 %v4289, 0.0
        %v4460 = vmax.f32 %v4290, 0.0
        %v4461 = vmax.f32 %v4291, 0.0
        %v4462 = vmax.f32 %v4292, 0.0
        %v4463 = vmax.f32 %v4293, 0.0
        %v4464 = vmax.f32 %v4294, 0.0
        %v4465 = vmax.f32 %v4295, 0.0
        %v4466 = vmax.f32 %v4296, 0.0
        %v4467 = vmax.f32 %v4297, 0.0
        %v4468 = vmax.f32 %v4298, 0.0
        %v4469 = vmax.f32 %v4299, 0.0
        %v4470 = vmax.f32 %v4300, 0.0
        %v4471 = vmax.f32 %v4301, 0.0
        %v4472 = vmax.f32 %v4302, 0.0
        %v4473 = vmax.f32 %v4303, 0.0
        %v4474 = vmax.f32 %v4304, 0.0
        %v4475 = vmax.f32 %v4305, 0.0
        %v4476 = vmax.f32 %v4306, 0.0
        %v4477 = vmax.f32 %v4307, 0.0
        %v4478 = vmax.f32 %v4308, 0.0
        %v4479 = vmax.f32 %v4309, 0.0
        %v4480 = vmax.f32 %v4310, 0.0
        %v4481 = vmax.f32 %v4311, 0.0
        %v4482 = vmax.f32 %v4312, 0.0
        %v4483 = vmax.f32 %v4313, 0.0
        %v4484 = vmax.f32 %v4314, 0.0
        %v4485 = vmax.f32 %v4315, 0.0
        %v4486 = vmax.f32 %v4316, 0.0
        %v4487 = vmax.f32 %v4317, 0.0
        %v4488 = vmax.f32 %v4318, 0.0
        %v4489 = vmax.f32 %v4319, 0.0
        %v4490 = vmax.f32 %v4320, 0.0
        %v4491 = vmax.f32 %v4321, 0.0
        %v4492 = vmax.f32 %v4322, 0.0
        %v4493 = vmax.f32 %v4323, 0.0
        %v4494 = vmax.f32 %v4324, 0.0
        %v4495 = vmax.f32 %v4325, 0.0
        %v4496 = vmax.f32 %v4326, 0.0
        %v4497 = vmax.f32 %v4327, 0.0
        %v4498 = vmax.f32 %v4328, 0.0
        %v4499 = vmax.f32 %v4329, 0.0
        %v4500 = vmax.f32 %v4330, 0.0
        %v4501 = vmax.f32 %v4331, 0.0
        %v4502 = vmax.f32 %v4332, 0.0
        %v4503 = vmax.f32 %v4333, 0.0
        %v4504 = vmax.f32 %v4334, 0.0
        %v4505 = vmax.f32 %v4335, 0.0
        %v4506 = vmax.f32 %v4336, 0.0
        %v4507 = vmax.f32 %v4337, 0.0
        %v4508 = vmax.f32 %v4338, 0.0
        %v4509 = vmax.f32 %v4339, 0.0
        %v4510 = vmax.f32 %v4340, 0.0
        %v4511 = vmax.f32 %v4341, 0.0
        %v4512 = vmax.f32 %v4342, 0.0
        %v4513 = vmax.f32 %v4343, 0.0
        %v4514 = vmax.f32 %v4344, 0.0
        %v4515 = vmax.f32 %v4345, 0.0
        %v4516 = vmax.f32 %v4346, 0.0
        %v4517 = vmax.f32 %v4347, 0.0
        %v4518 = vmax.f32 %v4348, 0.0
        %v4519 = vmax.f32 %v4349, 0.0
        %v4520 = vmax.f32 %v4350, 0.0
        %v4521 = vmax.f32 %v4351, 0.0
        %v4522 = vmax.f32 %v4352, 0.0
        %v4523 = vmax.f32 %v4353, 0.0
        %v4524 = vmax.f32 %v4354, 0.0
        %v4525 = vmax.f32 %v4355, 0.0
        %v4526 = vmax.f32 %v4356, 0.0
        %v4527 = vmax.f32 %v4357, 0.0
        %v4528 = vmax.f32 %v4358, 0.0
        %v4529 = vmax.f32 %v4359, 0.0
        %v4530 = vmax.f32 %v4360, 0.0
        %v4531 = vmax.f32 %v4361, 0.0
        %v4532 = vmax.f32 %v4362, 0.0
        %v4533 = vmax.f32 %v4363, 0.0
        %v4534 = vmax.f32 %v4364, 0.0
        %v4535 = vmax.f32 %v4365, 0.0
        %v4536 = vmax.f32 %v4366, 0.0
        %v4537 = vmax.f32 %v4367, 0.0
        %v4538 = vmax.f32 %v4368, 0.0
        %v4539 = vmax.f32 %v4369, 0.0
        %v4540 = vmax.f32 %v4370, 0.0
        %v4541 = vmax.f32 %v4371, 0.0
        %v4542 = vmax.f32 %v4372, 0.0
        %v4543 = vmax.f32 %v4373, 0.0
        %v4544 = vmax.f32 %v4374, 0.0
        %v4545 = vmax.f32 %v4375, 0.0
        %v4546 = vmax.f32 %v4376, 0.0
        %v4547 = vmax.f32 %v4377, 0.0
        %v4548 = vmax.f32 %v4378, 0.0
        %v4549 = vmax.f32 %v4379, 0.0
        %v4550 = vmax.f32 %v4380, 0.0
        %v4551 = vmax.f32 %v4381, 0.0
        %v4552 = vmax.f32 %v4382, 0.0
        %v4553 = vmax.f32 %v4383, 0.0
        %v4554 = vmax.f32 %v4384, 0.0
        %v4555 = vmax.f32 %v4385, 0.0
        %v4556 = vmax.f32 %v4386, 0.0
        %v4557 = vmax.f32 %v4387, 0.0
        %v4558 = vmax.f32 %v4388, 0.0
        %v4559 = vmax.f32 %v4389, 0.0
        %v4560 = vmax.f32 %v4390, 0.0
        %vm4561 = vcmask 523264
        %4562 = vst.msk [vmem:[#allocation2] sm:$0xff] %vm4561, %v4391
        %4563 = vst.msk [vmem:[#allocation2 + $0x8] sm:$0xff] %vm4561, %v4392
        %4564 = vst.msk [vmem:[#allocation2 + $0x10] sm:$0xff] %vm4561, %v4393
        %4565 = vst.msk [vmem:[#allocation2 + $0x18] sm:$0xff] %vm4561, %v4394
        %4566 = vst.msk [vmem:[#allocation2 + $0x20] sm:$0xff] %vm4561, %v4395
        %4567 = vst.msk [vmem:[#allocation2 + $0x28] sm:$0xff] %vm4561, %v4396
        %4568 = vst.msk [vmem:[#allocation2 + $0x30] sm:$0xff] %vm4561, %v4397
        %4569 = vst.msk [vmem:[#allocation2 + $0x38] sm:$0xff] %vm4561, %v4398
        %4570 = vst.msk [vmem:[#allocation2 + $0x40] sm:$0xff] %vm4561, %v4399
        %4571 = vst.msk [vmem:[#allocation2 + $0x48] sm:$0xff] %vm4561, %v4400
        %4572 = vst.msk [vmem:[#allocation2 + $0x50] sm:$0xff] %vm4561, %v4401
        %4573 = vst.msk [vmem:[#allocation2 + $0x58] sm:$0xff] %vm4561, %v4402
        %4574 = vst.msk [vmem:[#allocation2 + $0x60] sm:$0xff] %vm4561, %v4403
        %4575 = vst.msk [vmem:[#allocation2 + $0x68] sm:$0xff] %vm4561, %v4404
        %4576 = vst.msk [vmem:[#allocation2 + $0x70] sm:$0xff] %vm4561, %v4405
        %4577 = vst.msk [vmem:[#allocation2 + $0x78] sm:$0xff] %vm4561, %v4406
        %4578 = vst.msk [vmem:[#allocation2 + $0x80] sm:$0xff] %vm4561, %v4407
        %4579 = vst.msk [vmem:[#allocation2 + $0x88] sm:$0xff] %vm4561, %v4408
        %4580 = vst.msk [vmem:[#allocation2 + $0x90] sm:$0xff] %vm4561, %v4409
        %4581 = vst.msk [vmem:[#allocation2 + $0x98] sm:$0xff] %vm4561, %v4410
        %4582 = vst.msk [vmem:[#allocation2 + $0xa0] sm:$0xff] %vm4561, %v4411
        %4583 = vst.msk [vmem:[#allocation2 + $0xa8] sm:$0xff] %vm4561, %v4412
        %4584 = vst.msk [vmem:[#allocation2 + $0xb0] sm:$0xff] %vm4561, %v4413
        %4585 = vst.msk [vmem:[#allocation2 + $0xb8] sm:$0xff] %vm4561, %v4414
        %4586 = vst.msk [vmem:[#allocation2 + $0xc0] sm:$0xff] %vm4561, %v4415
        %4587 = vst.msk [vmem:[#allocation2 + $0xc8] sm:$0xff] %vm4561, %v4416
        %4588 = vst.msk [vmem:[#allocation2 + $0xd0] sm:$0xff] %vm4561, %v4417
        %4589 = vst.msk [vmem:[#allocation2 + $0xd8] sm:$0xff] %vm4561, %v4418
        %4590 = vst.msk [vmem:[#allocation2 + $0xe0] sm:$0xff] %vm4561, %v4419
        %4591 = vst.msk [vmem:[#allocation2 + $0xe8] sm:$0xff] %vm4561, %v4420
        %4592 = vst.msk [vmem:[#allocation2 + $0xf0] sm:$0xff] %vm4561, %v4421
        %4593 = vst.msk [vmem:[#allocation2 + $0xf8] sm:$0xff] %vm4561, %v4422
        %4594 = vst.msk [vmem:[#allocation2 + $0x100] sm:$0xff] %vm4561, %v4423
        %4595 = vst.msk [vmem:[#allocation2 + $0x108] sm:$0xff] %vm4561, %v4424
        %4596 = vst.msk [vmem:[#allocation2 + $0x110] sm:$0xff] %vm4561, %v4425
        %4597 = vst.msk [vmem:[#allocation2 + $0x118] sm:$0xff] %vm4561, %v4426
        %4598 = vst.msk [vmem:[#allocation2 + $0x120] sm:$0xff] %vm4561, %v4427
        %4599 = vst.msk [vmem:[#allocation2 + $0x128] sm:$0xff] %vm4561, %v4428
        %4600 = vst.msk [vmem:[#allocation2 + $0x130] sm:$0xff] %vm4561, %v4429
        %4601 = vst.msk [vmem:[#allocation2 + $0x138] sm:$0xff] %vm4561, %v4430
        %4602 = vst.msk [vmem:[#allocation2 + $0x140] sm:$0xff] %vm4561, %v4431
        %4603 = vst.msk [vmem:[#allocation2 + $0x148] sm:$0xff] %vm4561, %v4432
        %4604 = vst.msk [vmem:[#allocation2 + $0x150] sm:$0xff] %vm4561, %v4433
        %4605 = vst.msk [vmem:[#allocation2 + $0x158] sm:$0xff] %vm4561, %v4434
        %4606 = vst.msk [vmem:[#allocation2 + $0x160] sm:$0xff] %vm4561, %v4435
        %4607 = vst.msk [vmem:[#allocation2 + $0x168] sm:$0xff] %vm4561, %v4436
        %4608 = vst.msk [vmem:[#allocation2 + $0x170] sm:$0xff] %vm4561, %v4437
        %4609 = vst.msk [vmem:[#allocation2 + $0x178] sm:$0xff] %vm4561, %v4438
        %4610 = vst.msk [vmem:[#allocation2 + $0x180] sm:$0xff] %vm4561, %v4439
        %4611 = vst.msk [vmem:[#allocation2 + $0x188] sm:$0xff] %vm4561, %v4440
        %4612 = vst.msk [vmem:[#allocation2 + $0x190] sm:$0xff] %vm4561, %v4441
        %4613 = vst.msk [vmem:[#allocation2 + $0x198] sm:$0xff] %vm4561, %v4442
        %4614 = vst.msk [vmem:[#allocation2 + $0x1a0] sm:$0xff] %vm4561, %v4443
        %4615 = vst.msk [vmem:[#allocation2 + $0x1a8] sm:$0xff] %vm4561, %v4444
        %4616 = vst.msk [vmem:[#allocation2 + $0x1b0] sm:$0xff] %vm4561, %v4445
        %4617 = vst.msk [vmem:[#allocation2 + $0x1b8] sm:$0xff] %vm4561, %v4446
        %4618 = vst.msk [vmem:[#allocation2 + $0x1c0] sm:$0xff] %vm4561, %v4447
        %4619 = vst.msk [vmem:[#allocation2 + $0x1c8] sm:$0xff] %vm4561, %v4448
        %4620 = vst.msk [vmem:[#allocation2 + $0x1d0] sm:$0xff] %vm4561, %v4449
        %4621 = vst.msk [vmem:[#allocation2 + $0x1d8] sm:$0xff] %vm4561, %v4450
        %4622 = vst.msk [vmem:[#allocation2 + $0x1e0] sm:$0xff] %vm4561, %v4451
        %4623 = vst.msk [vmem:[#allocation2 + $0x1e8] sm:$0xff] %vm4561, %v4452
        %4624 = vst.msk [vmem:[#allocation2 + $0x1f0] sm:$0xff] %vm4561, %v4453
        %4625 = vst.msk [vmem:[#allocation2 + $0x1f8] sm:$0xff] %vm4561, %v4454
        %4626 = vst.msk [vmem:[#allocation2 + $0x200] sm:$0xff] %vm4561, %v4455
        %4627 = vst.msk [vmem:[#allocation2 + $0x208] sm:$0xff] %vm4561, %v4456
        %4628 = vst.msk [vmem:[#allocation2 + $0x210] sm:$0xff] %vm4561, %v4457
        %4629 = vst.msk [vmem:[#allocation2 + $0x218] sm:$0xff] %vm4561, %v4458
        %4630 = vst.msk [vmem:[#allocation2 + $0x220] sm:$0xff] %vm4561, %v4459
        %4631 = vst.msk [vmem:[#allocation2 + $0x228] sm:$0xff] %vm4561, %v4460
        %4632 = vst.msk [vmem:[#allocation2 + $0x230] sm:$0xff] %vm4561, %v4461
        %4633 = vst.msk [vmem:[#allocation2 + $0x238] sm:$0xff] %vm4561, %v4462
        %4634 = vst.msk [vmem:[#allocation2 + $0x240] sm:$0xff] %vm4561, %v4463
        %4635 = vst.msk [vmem:[#allocation2 + $0x248] sm:$0xff] %vm4561, %v4464
        %4636 = vst.msk [vmem:[#allocation2 + $0x250] sm:$0xff] %vm4561, %v4465
        %4637 = vst.msk [vmem:[#allocation2 + $0x258] sm:$0xff] %vm4561, %v4466
        %4638 = vst.msk [vmem:[#allocation2 + $0x260] sm:$0xff] %vm4561, %v4467
        %4639 = vst.msk [vmem:[#allocation2 + $0x268] sm:$0xff] %vm4561, %v4468
        %4640 = vst.msk [vmem:[#allocation2 + $0x270] sm:$0xff] %vm4561, %v4469
        %4641 = vst.msk [vmem:[#allocation2 + $0x278] sm:$0xff] %vm4561, %v4470
        %4642 = vst.msk [vmem:[#allocation2 + $0x280] sm:$0xff] %vm4561, %v4471
        %4643 = vst.msk [vmem:[#allocation2 + $0x288] sm:$0xff] %vm4561, %v4472
        %4644 = vst.msk [vmem:[#allocation2 + $0x290] sm:$0xff] %vm4561, %v4473
        %4645 = vst.msk [vmem:[#allocation2 + $0x298] sm:$0xff] %vm4561, %v4474
        %4646 = vst.msk [vmem:[#allocation2 + $0x2a0] sm:$0xff] %vm4561, %v4475
        %4647 = vst.msk [vmem:[#allocation2 + $0x2a8] sm:$0xff] %vm4561, %v4476
        %4648 = vst.msk [vmem:[#allocation2 + $0x2b0] sm:$0xff] %vm4561, %v4477
        %4649 = vst.msk [vmem:[#allocation2 + $0x2b8] sm:$0xff] %vm4561, %v4478
        %4650 = vst.msk [vmem:[#allocation2 + $0x2c0] sm:$0xff] %vm4561, %v4479
        %4651 = vst.msk [vmem:[#allocation2 + $0x2c8] sm:$0xff] %vm4561, %v4480
        %4652 = vst.msk [vmem:[#allocation2 + $0x2d0] sm:$0xff] %vm4561, %v4481
        %4653 = vst.msk [vmem:[#allocation2 + $0x2d8] sm:$0xff] %vm4561, %v4482
        %4654 = vst.msk [vmem:[#allocation2 + $0x2e0] sm:$0xff] %vm4561, %v4483
        %4655 = vst.msk [vmem:[#allocation2 + $0x2e8] sm:$0xff] %vm4561, %v4484
        %4656 = vst.msk [vmem:[#allocation2 + $0x2f0] sm:$0xff] %vm4561, %v4485
        %4657 = vst.msk [vmem:[#allocation2 + $0x2f8] sm:$0xff] %vm4561, %v4486
        %4658 = vst.msk [vmem:[#allocation2 + $0x300] sm:$0xff] %vm4561, %v4487
        %4659 = vst.msk [vmem:[#allocation2 + $0x308] sm:$0xff] %vm4561, %v4488
        %4660 = vst.msk [vmem:[#allocation2 + $0x310] sm:$0xff] %vm4561, %v4489
        %4661 = vst.msk [vmem:[#allocation2 + $0x318] sm:$0xff] %vm4561, %v4490
        %4662 = vst.msk [vmem:[#allocation2 + $0x320] sm:$0xff] %vm4561, %v4491
        %4663 = vst.msk [vmem:[#allocation2 + $0x328] sm:$0xff] %vm4561, %v4492
        %4664 = vst.msk [vmem:[#allocation2 + $0x330] sm:$0xff] %vm4561, %v4493
        %4665 = vst.msk [vmem:[#allocation2 + $0x338] sm:$0xff] %vm4561, %v4494
        %4666 = vst.msk [vmem:[#allocation2 + $0x340] sm:$0xff] %vm4561, %v4495
        %4667 = vst.msk [vmem:[#allocation2 + $0x348] sm:$0xff] %vm4561, %v4496
        %4668 = vst.msk [vmem:[#allocation2 + $0x350] sm:$0xff] %vm4561, %v4497
        %4669 = vst.msk [vmem:[#allocation2 + $0x358] sm:$0xff] %vm4561, %v4498
        %4670 = vst.msk [vmem:[#allocation2 + $0x360] sm:$0xff] %vm4561, %v4499
        %4671 = vst.msk [vmem:[#allocation2 + $0x368] sm:$0xff] %vm4561, %v4500
        %4672 = vst.msk [vmem:[#allocation2 + $0x370] sm:$0xff] %vm4561, %v4501
        %4673 = vst.msk [vmem:[#allocation2 + $0x378] sm:$0xff] %vm4561, %v4502
        %4674 = vst.msk [vmem:[#allocation2 + $0x380] sm:$0xff] %vm4561, %v4503
        %4675 = vst.msk [vmem:[#allocation2 + $0x388] sm:$0xff] %vm4561, %v4504
        %4676 = vst.msk [vmem:[#allocation2 + $0x390] sm:$0xff] %vm4561, %v4505
        %4677 = vst.msk [vmem:[#allocation2 + $0x398] sm:$0xff] %vm4561, %v4506
        %4678 = vst.msk [vmem:[#allocation2 + $0x3a0] sm:$0xff] %vm4561, %v4507
        %4679 = vst.msk [vmem:[#allocation2 + $0x3a8] sm:$0xff] %vm4561, %v4508
        %4680 = vst.msk [vmem:[#allocation2 + $0x3b0] sm:$0xff] %vm4561, %v4509
        %4681 = vst.msk [vmem:[#allocation2 + $0x3b8] sm:$0xff] %vm4561, %v4510
        %4682 = vst.msk [vmem:[#allocation2 + $0x3c0] sm:$0xff] %vm4561, %v4511
        %4683 = vst.msk [vmem:[#allocation2 + $0x3c8] sm:$0xff] %vm4561, %v4512
        %4684 = vst.msk [vmem:[#allocation2 + $0x3d0] sm:$0xff] %vm4561, %v4513
        %4685 = vst.msk [vmem:[#allocation2 + $0x3d8] sm:$0xff] %vm4561, %v4514
        %4686 = vst.msk [vmem:[#allocation2 + $0x3e0] sm:$0xff] %vm4561, %v4515
        %4687 = vst.msk [vmem:[#allocation2 + $0x3e8] sm:$0xff] %vm4561, %v4516
        %4688 = vst.msk [vmem:[#allocation2 + $0x3f0] sm:$0xff] %vm4561, %v4517
        %4689 = vst.msk [vmem:[#allocation2 + $0x3f8] sm:$0xff] %vm4561, %v4518
        %4690 = vst.msk [vmem:[#allocation2 + $0x400] sm:$0xff] %vm4561, %v4519
        %4691 = vst.msk [vmem:[#allocation2 + $0x408] sm:$0xff] %vm4561, %v4520
        %4692 = vst.msk [vmem:[#allocation2 + $0x410] sm:$0xff] %vm4561, %v4521
        %4693 = vst.msk [vmem:[#allocation2 + $0x418] sm:$0xff] %vm4561, %v4522
        %4694 = vst.msk [vmem:[#allocation2 + $0x420] sm:$0xff] %vm4561, %v4523
        %4695 = vst.msk [vmem:[#allocation2 + $0x428] sm:$0xff] %vm4561, %v4524
        %4696 = vst.msk [vmem:[#allocation2 + $0x430] sm:$0xff] %vm4561, %v4525
        %4697 = vst.msk [vmem:[#allocation2 + $0x438] sm:$0xff] %vm4561, %v4526
        %4698 = vst.msk [vmem:[#allocation2 + $0x440] sm:$0xff] %vm4561, %v4527
        %4699 = vst.msk [vmem:[#allocation2 + $0x448] sm:$0xff] %vm4561, %v4528
        %4700 = vst.msk [vmem:[#allocation2 + $0x450] sm:$0xff] %vm4561, %v4529
        %4701 = vst.msk [vmem:[#allocation2 + $0x458] sm:$0xff] %vm4561, %v4530
        %4702 = vst.msk [vmem:[#allocation2 + $0x460] sm:$0xff] %vm4561, %v4531
        %4703 = vst.msk [vmem:[#allocation2 + $0x468] sm:$0xff] %vm4561, %v4532
        %4704 = vst.msk [vmem:[#allocation2 + $0x470] sm:$0xff] %vm4561, %v4533
        %4705 = vst.msk [vmem:[#allocation2 + $0x478] sm:$0xff] %vm4561, %v4534
        %4706 = vst.msk [vmem:[#allocation2 + $0x480] sm:$0xff] %vm4561, %v4535
        %4707 = vst.msk [vmem:[#allocation2 + $0x488] sm:$0xff] %vm4561, %v4536
        %4708 = vst.msk [vmem:[#allocation2 + $0x490] sm:$0xff] %vm4561, %v4537
        %4709 = vst.msk [vmem:[#allocation2 + $0x498] sm:$0xff] %vm4561, %v4538
        %4710 = vst.msk [vmem:[#allocation2 + $0x4a0] sm:$0xff] %vm4561, %v4539
        %4711 = vst.msk [vmem:[#allocation2 + $0x4a8] sm:$0xff] %vm4561, %v4540
        %4712 = vst.msk [vmem:[#allocation2 + $0x4b0] sm:$0xff] %vm4561, %v4541
        %4713 = vst.msk [vmem:[#allocation2 + $0x4b8] sm:$0xff] %vm4561, %v4542
        %4714 = vst.msk [vmem:[#allocation2 + $0x4c0] sm:$0xff] %vm4561, %v4543
        %4715 = vst.msk [vmem:[#allocation2 + $0x4c8] sm:$0xff] %vm4561, %v4544
        %4716 = vst.msk [vmem:[#allocation2 + $0x4d0] sm:$0xff] %vm4561, %v4545
        %4717 = vst.msk [vmem:[#allocation2 + $0x4d8] sm:$0xff] %vm4561, %v4546
        %4718 = vst.msk [vmem:[#allocation2 + $0x4e0] sm:$0xff] %vm4561, %v4547
        %4719 = vst.msk [vmem:[#allocation2 + $0x4e8] sm:$0xff] %vm4561, %v4548
        %4720 = vst.msk [vmem:[#allocation2 + $0x4f0] sm:$0xff] %vm4561, %v4549
        %4721 = vst.msk [vmem:[#allocation2 + $0x4f8] sm:$0xff] %vm4561, %v4550
        %4722 = vst.msk [vmem:[#allocation2 + $0x500] sm:$0xff] %vm4561, %v4551
        %4723 = vst.msk [vmem:[#allocation2 + $0x508] sm:$0xff] %vm4561, %v4552
        %4724 = vst.msk [vmem:[#allocation2 + $0x510] sm:$0xff] %vm4561, %v4553
        %4725 = vst.msk [vmem:[#allocation2 + $0x518] sm:$0xff] %vm4561, %v4554
        %4726 = vst.msk [vmem:[#allocation2 + $0x520] sm:$0xff] %vm4561, %v4555
        %4727 = vst.msk [vmem:[#allocation2 + $0x528] sm:$0xff] %vm4561, %v4556
        %4728 = vst.msk [vmem:[#allocation2 + $0x530] sm:$0xff] %vm4561, %v4557
        %4729 = vst.msk [vmem:[#allocation2 + $0x538] sm:$0xff] %vm4561, %v4558
        %4730 = vst.msk [vmem:[#allocation2 + $0x540] sm:$0xff] %vm4561, %v4559
        %vm4731 = vcmask 521216
        %4732 = vst.msk [vmem:[#allocation2 + $0x548] sm:$0x3f] %vm4731, %v4560
        loop: start=0, step=1, limit=8
        $region61: #{_lambda_.1} parent=59 // loop_pre_header
          _
        $region62: #{_lambda_.1} parent=59 // loop_header
          %s4734 = sphi 0, %s4738
          %p4735 = scmp.ge.s32.totalorder %s4734, 8
        $region63: #{_lambda_.1} parent=59 // loop_header_branch
          %4737 = sbr.rel (%p4735) target = $region67
        $region64: #{_lambda_.1} parent=59 // loop_body
          %s4739 = smul.u32 %s4734, 170
          %s4740 = smul.u32 %s4734, 86
          %s4741 = scalar_lea.vmem [#allocation2], %s4739
          %v4742 = vld [vmem:[%s4741] ss:$2 sm:$0xff]
          %s4743 = scalar_lea.vmem %s4741, 16 [#allocation2]
          %v4744 = vld [vmem:[%s4743] ss:$2 sm:$0xff]
          %s4745 = scalar_lea.vmem %s4741, 32 [#allocation2]
          %v4746 = vld [vmem:[%s4745] ss:$2 sm:$0xff]
          %s4747 = scalar_lea.vmem %s4741, 48 [#allocation2]
          %v4748 = vld [vmem:[%s4747] ss:$2 sm:$0xff]
          %s4749 = scalar_lea.vmem %s4741, 64 [#allocation2]
          %v4750 = vld [vmem:[%s4749] ss:$2 sm:$0xff]
          %s4751 = scalar_lea.vmem %s4741, 80 [#allocation2]
          %v4752 = vld [vmem:[%s4751] ss:$2 sm:$0xff]
          %s4753 = scalar_lea.vmem %s4741, 96 [#allocation2]
          %v4754 = vld [vmem:[%s4753] ss:$2 sm:$0xff]
          %s4755 = scalar_lea.vmem %s4741, 112 [#allocation2]
          %v4756 = vld [vmem:[%s4755] ss:$2 sm:$0xff]
          %s4757 = scalar_lea.vmem %s4741, 128 [#allocation2]
          %v4758 = vld [vmem:[%s4757] ss:$2 sm:$0xff]
          %s4759 = scalar_lea.vmem %s4741, 144 [#allocation2]
          %v4760 = vld [vmem:[%s4759] ss:$2 sm:$0xff]
          %s4761 = scalar_lea.vmem %s4741, 160 [#allocation2]
          %v4762 = vld [vmem:[%s4761] ss:$2 sm:$0xf]
          %s4763 = sadd.s32 %s4739, 1
          %s4764 = scalar_lea.vmem [#allocation2], %s4763
          %v4765 = vld [vmem:[%s4764] ss:$2 sm:$0xff]
          %s4766 = scalar_lea.vmem %s4764, 16 [#allocation2]
          %v4767 = vld [vmem:[%s4766] ss:$2 sm:$0xff]
          %s4768 = scalar_lea.vmem %s4764, 32 [#allocation2]
          %v4769 = vld [vmem:[%s4768] ss:$2 sm:$0xff]
          %s4770 = scalar_lea.vmem %s4764, 48 [#allocation2]
          %v4771 = vld [vmem:[%s4770] ss:$2 sm:$0xff]
          %s4772 = scalar_lea.vmem %s4764, 64 [#allocation2]
          %v4773 = vld [vmem:[%s4772] ss:$2 sm:$0xff]
          %s4774 = scalar_lea.vmem %s4764, 80 [#allocation2]
          %v4775 = vld [vmem:[%s4774] ss:$2 sm:$0xff]
          %s4776 = scalar_lea.vmem %s4764, 96 [#allocation2]
          %v4777 = vld [vmem:[%s4776] ss:$2 sm:$0xff]
          %s4778 = scalar_lea.vmem %s4764, 112 [#allocation2]
          %v4779 = vld [vmem:[%s4778] ss:$2 sm:$0xff]
          %s4780 = scalar_lea.vmem %s4764, 128 [#allocation2]
          %v4781 = vld [vmem:[%s4780] ss:$2 sm:$0xff]
          %s4782 = scalar_lea.vmem %s4764, 144 [#allocation2]
          %v4783 = vld [vmem:[%s4782] ss:$2 sm:$0xff]
          %s4784 = scalar_lea.vmem %s4764, 160 [#allocation2]
          %v4785 = vld [vmem:[%s4784] ss:$2 sm:$0xf]
          %s4786 = scalar_lea.vmem [#allocation3], %s4740
          %vm4787 = vcmask 516096
          %4788 = vst.msk [vmem:[%s4786] sm:$0x1] %vm4787, 0.0
          %v4789 = vmax.f32 %v4742, %v4765
          %v4790 = vmax.f32 %v4744, %v4767
          %v4791 = vmax.f32 %v4746, %v4769
          %v4792 = vmax.f32 %v4748, %v4771
          %v4793 = vmax.f32 %v4750, %v4773
          %v4794 = vmax.f32 %v4752, %v4775
          %v4795 = vmax.f32 %v4754, %v4777
          %v4796 = vmax.f32 %v4756, %v4779
          %v4797 = vmax.f32 %v4758, %v4781
          %v4798 = vmax.f32 %v4760, %v4783
          %v4799 = vmax.f32 %v4762, %v4785
          %s4800 = sadd.s32 %s4740, 1
          %s4801 = scalar_lea.vmem [#allocation3], %s4800
          %4802 = vst.msk [vmem:[%s4801] sm:$0xff] %vm4561, %v4789
          %4803 = vst.msk [vmem:[%s4801 + $0x8] sm:$0xff] %vm4561, %v4790
          %4804 = vst.msk [vmem:[%s4801 + $0x10] sm:$0xff] %vm4561, %v4791
          %4805 = vst.msk [vmem:[%s4801 + $0x18] sm:$0xff] %vm4561, %v4792
          %4806 = vst.msk [vmem:[%s4801 + $0x20] sm:$0xff] %vm4561, %v4793
          %4807 = vst.msk [vmem:[%s4801 + $0x28] sm:$0xff] %vm4561, %v4794
          %4808 = vst.msk [vmem:[%s4801 + $0x30] sm:$0xff] %vm4561, %v4795
          %4809 = vst.msk [vmem:[%s4801 + $0x38] sm:$0xff] %vm4561, %v4796
          %4810 = vst.msk [vmem:[%s4801 + $0x40] sm:$0xff] %vm4561, %v4797
          %4811 = vst.msk [vmem:[%s4801 + $0x48] sm:$0xff] %vm4561, %v4798
          %vm4812 = vcmask 519168
          %4813 = vst.msk [vmem:[%s4801 + $0x50] sm:$0xf] %vm4812, %v4799
          %s4814 = sadd.s32 %s4740, 85
          %s4815 = scalar_lea.vmem [#allocation3], %s4814
          %4816 = vst.msk [vmem:[%s4815] sm:$0x1] %vm4787, 0.0
        $region65: #{_lambda_.1} parent=59 // loop_footer
          %s4738 = sadd.s32 1, %s4734
        $region66: #{_lambda_.1} parent=59 // loop_footer_branch
          %4733 = sbr.rel target = $region62
        $region67: #{_lambda_.1} parent=59 // loop_exit
          _
        %v4817 = vld [vmem:[%s4 + $0x1] sm:$0x1]
        %v4818 = vld [vmem:[#allocation3] sm:$0xff]
        %v4819 = vld [vmem:[#allocation3 + $0x8] sm:$0xff]
        %v4820 = vld [vmem:[#allocation3 + $0x10] sm:$0xff]
        %v4821 = vld [vmem:[#allocation3 + $0x18] sm:$0xff]
        %v4822 = vld [vmem:[#allocation3 + $0x20] sm:$0xff]
        %v4823 = vld [vmem:[#allocation3 + $0x28] sm:$0xff]
        %v4824 = vld [vmem:[#allocation3 + $0x30] sm:$0xff]
        %v4825 = vld [vmem:[#allocation3 + $0x38] sm:$0xff]
        %v4826 = vld [vmem:[#allocation3 + $0x40] sm:$0xff]
        %v4827 = vld [vmem:[#allocation3 + $0x48] sm:$0xff]
        %v4828 = vld [vmem:[#allocation3 + $0x50] sm:$0xff]
        %v4829 = vld [vmem:[#allocation3 + $0x58] sm:$0xff]
        %v4830 = vld [vmem:[#allocation3 + $0x60] sm:$0xff]
        %v4831 = vld [vmem:[#allocation3 + $0x68] sm:$0xff]
        %v4832 = vld [vmem:[#allocation3 + $0x70] sm:$0xff]
        %v4833 = vld [vmem:[#allocation3 + $0x78] sm:$0xff]
        %v4834 = vld [vmem:[#allocation3 + $0x80] sm:$0xff]
        %v4835 = vld [vmem:[#allocation3 + $0x88] sm:$0xff]
        %v4836 = vld [vmem:[#allocation3 + $0x90] sm:$0xff]
        %v4837 = vld [vmem:[#allocation3 + $0x98] sm:$0xff]
        %v4838 = vld [vmem:[#allocation3 + $0xa0] sm:$0xff]
        %v4839 = vld [vmem:[#allocation3 + $0xa8] sm:$0xff]
        %v4840 = vld [vmem:[#allocation3 + $0xb0] sm:$0xff]
        %v4841 = vld [vmem:[#allocation3 + $0xb8] sm:$0xff]
        %v4842 = vld [vmem:[#allocation3 + $0xc0] sm:$0xff]
        %v4843 = vld [vmem:[#allocation3 + $0xc8] sm:$0xff]
        %v4844 = vld [vmem:[#allocation3 + $0xd0] sm:$0xff]
        %v4845 = vld [vmem:[#allocation3 + $0xd8] sm:$0xff]
        %v4846 = vld [vmem:[#allocation3 + $0xe0] sm:$0xff]
        %v4847 = vld [vmem:[#allocation3 + $0xe8] sm:$0xff]
        %v4848 = vld [vmem:[#allocation3 + $0xf0] sm:$0xff]
        %v4849 = vld [vmem:[#allocation3 + $0xf8] sm:$0xff]
        %v4850 = vld [vmem:[#allocation3 + $0x100] sm:$0xff]
        %v4851 = vld [vmem:[#allocation3 + $0x108] sm:$0xff]
        %v4852 = vld [vmem:[#allocation3 + $0x110] sm:$0xff]
        %v4853 = vld [vmem:[#allocation3 + $0x118] sm:$0xff]
        %v4854 = vld [vmem:[#allocation3 + $0x120] sm:$0xff]
        %v4855 = vld [vmem:[#allocation3 + $0x128] sm:$0xff]
        %v4856 = vld [vmem:[#allocation3 + $0x130] sm:$0xff]
        %v4857 = vld [vmem:[#allocation3 + $0x138] sm:$0xff]
        %v4858 = vld [vmem:[#allocation3 + $0x140] sm:$0xff]
        %v4859 = vld [vmem:[#allocation3 + $0x148] sm:$0xff]
        %v4860 = vld [vmem:[#allocation3 + $0x150] sm:$0xff]
        %v4861 = vld [vmem:[#allocation3 + $0x158] sm:$0xff]
        %v4862 = vld [vmem:[#allocation3 + $0x160] sm:$0xff]
        %v4863 = vld [vmem:[#allocation3 + $0x168] sm:$0xff]
        %v4864 = vld [vmem:[#allocation3 + $0x170] sm:$0xff]
        %v4865 = vld [vmem:[#allocation3 + $0x178] sm:$0xff]
        %v4866 = vld [vmem:[#allocation3 + $0x180] sm:$0xff]
        %v4867 = vld [vmem:[#allocation3 + $0x188] sm:$0xff]
        %v4868 = vld [vmem:[#allocation3 + $0x190] sm:$0xff]
        %v4869 = vld [vmem:[#allocation3 + $0x198] sm:$0xff]
        %v4870 = vld [vmem:[#allocation3 + $0x1a0] sm:$0xff]
        %v4871 = vld [vmem:[#allocation3 + $0x1a8] sm:$0xff]
        %v4872 = vld [vmem:[#allocation3 + $0x1b0] sm:$0xff]
        %v4873 = vld [vmem:[#allocation3 + $0x1b8] sm:$0xff]
        %v4874 = vld [vmem:[#allocation3 + $0x1c0] sm:$0xff]
        %v4875 = vld [vmem:[#allocation3 + $0x1c8] sm:$0xff]
        %v4876 = vld [vmem:[#allocation3 + $0x1d0] sm:$0xff]
        %v4877 = vld [vmem:[#allocation3 + $0x1d8] sm:$0xff]
        %v4878 = vld [vmem:[#allocation3 + $0x1e0] sm:$0xff]
        %v4879 = vld [vmem:[#allocation3 + $0x1e8] sm:$0xff]
        %v4880 = vld [vmem:[#allocation3 + $0x1f0] sm:$0xff]
        %v4881 = vld [vmem:[#allocation3 + $0x1f8] sm:$0xff]
        %v4882 = vld [vmem:[#allocation3 + $0x200] sm:$0xff]
        %v4883 = vld [vmem:[#allocation3 + $0x208] sm:$0xff]
        %v4884 = vld [vmem:[#allocation3 + $0x210] sm:$0xff]
        %v4885 = vld [vmem:[#allocation3 + $0x218] sm:$0xff]
        %v4886 = vld [vmem:[#allocation3 + $0x220] sm:$0xff]
        %v4887 = vld [vmem:[#allocation3 + $0x228] sm:$0xff]
        %v4888 = vld [vmem:[#allocation3 + $0x230] sm:$0xff]
        %v4889 = vld [vmem:[#allocation3 + $0x238] sm:$0xff]
        %v4890 = vld [vmem:[#allocation3 + $0x240] sm:$0xff]
        %v4891 = vld [vmem:[#allocation3 + $0x248] sm:$0xff]
        %v4892 = vld [vmem:[#allocation3 + $0x250] sm:$0xff]
        %v4893 = vld [vmem:[#allocation3 + $0x258] sm:$0xff]
        %v4894 = vld [vmem:[#allocation3 + $0x260] sm:$0xff]
        %v4895 = vld [vmem:[#allocation3 + $0x268] sm:$0xff]
        %v4896 = vld [vmem:[#allocation3 + $0x270] sm:$0xff]
        %v4897 = vld [vmem:[#allocation3 + $0x278] sm:$0xff]
        %v4898 = vld [vmem:[#allocation3 + $0x280] sm:$0xff]
        %v4899 = vld [vmem:[#allocation3 + $0x288] sm:$0xff]
        %v4900 = vld [vmem:[#allocation3 + $0x290] sm:$0xff]
        %v4901 = vld [vmem:[#allocation3 + $0x298] sm:$0xff]
        %v4902 = vld [vmem:[#allocation3 + $0x2a0] sm:$0xff]
        %v4903 = vld [vmem:[#allocation3 + $0x2a8] sm:$0x3f]
        %v4904 = vpack.c.bf16 %v4819, %v4818
        %v4905 = vpack.c.bf16 %v4821, %v4820
        %v4906 = vpack.c.bf16 %v4823, %v4822
        %v4907 = vpack.c.bf16 %v4825, %v4824
        %v4908 = vpack.c.bf16 %v4827, %v4826
        %v4909 = vpack.c.bf16 %v4829, %v4828
        %v4910 = vpack.c.bf16 %v4831, %v4830
        %v4911 = vpack.c.bf16 %v4833, %v4832
        %v4912 = vpack.c.bf16 %v4835, %v4834
        %v4913 = vpack.c.bf16 %v4837, %v4836
        %v4914 = vpack.c.bf16 %v4839, %v4838
        %v4915 = vpack.c.bf16 %v4841, %v4840
        %v4916 = vpack.c.bf16 %v4843, %v4842
        %v4917 = vpack.c.bf16 %v4845, %v4844
        %v4918 = vpack.c.bf16 %v4847, %v4846
        %v4919 = vpack.c.bf16 %v4849, %v4848
        %v4920 = vpack.c.bf16 %v4851, %v4850
        %v4921 = vpack.c.bf16 %v4853, %v4852
        %v4922 = vpack.c.bf16 %v4855, %v4854
        %v4923 = vpack.c.bf16 %v4857, %v4856
        %v4924 = vpack.c.bf16 %v4859, %v4858
        %v4925 = vpack.c.bf16 %v4861, %v4860
        %v4926 = vpack.c.bf16 %v4863, %v4862
        %v4927 = vpack.c.bf16 %v4865, %v4864
        %v4928 = vpack.c.bf16 %v4867, %v4866
        %v4929 = vpack.c.bf16 %v4869, %v4868
        %v4930 = vpack.c.bf16 %v4871, %v4870
        %v4931 = vpack.c.bf16 %v4873, %v4872
        %v4932 = vpack.c.bf16 %v4875, %v4874
        %v4933 = vpack.c.bf16 %v4877, %v4876
        %v4934 = vpack.c.bf16 %v4879, %v4878
        %v4935 = vpack.c.bf16 %v4881, %v4880
        %v4936 = vpack.c.bf16 %v4883, %v4882
        %v4937 = vpack.c.bf16 %v4885, %v4884
        %v4938 = vpack.c.bf16 %v4887, %v4886
        %v4939 = vpack.c.bf16 %v4889, %v4888
        %v4940 = vpack.c.bf16 %v4891, %v4890
        %v4941 = vpack.c.bf16 %v4893, %v4892
        %v4942 = vpack.c.bf16 %v4895, %v4894
        %v4943 = vpack.c.bf16 %v4897, %v4896
        %v4944 = vpack.c.bf16 %v4899, %v4898
        %v4945 = vpack.c.bf16 %v4901, %v4900
        %v4946 = vpack.c.bf16 %v4903, %v4902
        %v4947 = vld [vmem:[%s2] sm:$0xf]
        %v4948 = vld [vmem:[%s2 + $0x4] sm:$0xf]
        %v4949 = vld [vmem:[%s2 + $0x8] sm:$0xf]
        %v4950 = vld [vmem:[%s2 + $0xc] sm:$0xf]
        %v4951 = vld [vmem:[%s2 + $0x10] sm:$0xf]
        %v4952 = vld [vmem:[%s2 + $0x14] sm:$0xf]
        %v4953 = vld [vmem:[%s2 + $0x18] sm:$0xf]
        %v4954 = vld [vmem:[%s2 + $0x1c] sm:$0xf]
        %v4955 = vld [vmem:[#allocation3 + $0x1] sm:$0xff]
        %v4956 = vld [vmem:[#allocation3 + $0x9] sm:$0xff]
        %v4957 = vld [vmem:[#allocation3 + $0x11] sm:$0xff]
        %v4958 = vld [vmem:[#allocation3 + $0x19] sm:$0xff]
        %v4959 = vld [vmem:[#allocation3 + $0x21] sm:$0xff]
        %v4960 = vld [vmem:[#allocation3 + $0x29] sm:$0xff]
        %v4961 = vld [vmem:[#allocation3 + $0x31] sm:$0xff]
        %v4962 = vld [vmem:[#allocation3 + $0x39] sm:$0xff]
        %v4963 = vld [vmem:[#allocation3 + $0x41] sm:$0xff]
        %v4964 = vld [vmem:[#allocation3 + $0x49] sm:$0xff]
        %v4965 = vld [vmem:[#allocation3 + $0x51] sm:$0xff]
        %v4966 = vld [vmem:[#allocation3 + $0x59] sm:$0xff]
        %v4967 = vld [vmem:[#allocation3 + $0x61] sm:$0xff]
        %v4968 = vld [vmem:[#allocation3 + $0x69] sm:$0xff]
        %v4969 = vld [vmem:[#allocation3 + $0x71] sm:$0xff]
        %v4970 = vld [vmem:[#allocation3 + $0x79] sm:$0xff]
        %v4971 = vld [vmem:[#allocation3 + $0x81] sm:$0xff]
        %v4972 = vld [vmem:[#allocation3 + $0x89] sm:$0xff]
        %v4973 = vld [vmem:[#allocation3 + $0x91] sm:$0xff]
        %v4974 = vld [vmem:[#allocation3 + $0x99] sm:$0xff]
        %v4975 = vld [vmem:[#allocation3 + $0xa1] sm:$0xff]
        %v4976 = vld [vmem:[#allocation3 + $0xa9] sm:$0xff]
        %v4977 = vld [vmem:[#allocation3 + $0xb1] sm:$0xff]
        %v4978 = vld [vmem:[#allocation3 + $0xb9] sm:$0xff]
        %v4979 = vld [vmem:[#allocation3 + $0xc1] sm:$0xff]
        %v4980 = vld [vmem:[#allocation3 + $0xc9] sm:$0xff]
        %v4981 = vld [vmem:[#allocation3 + $0xd1] sm:$0xff]
        %v4982 = vld [vmem:[#allocation3 + $0xd9] sm:$0xff]
        %v4983 = vld [vmem:[#allocation3 + $0xe1] sm:$0xff]
        %v4984 = vld [vmem:[#allocation3 + $0xe9] sm:$0xff]
        %v4985 = vld [vmem:[#allocation3 + $0xf1] sm:$0xff]
        %v4986 = vld [vmem:[#allocation3 + $0xf9] sm:$0xff]
        %v4987 = vld [vmem:[#allocation3 + $0x101] sm:$0xff]
        %v4988 = vld [vmem:[#allocation3 + $0x109] sm:$0xff]
        %v4989 = vld [vmem:[#allocation3 + $0x111] sm:$0xff]
        %v4990 = vld [vmem:[#allocation3 + $0x119] sm:$0xff]
        %v4991 = vld [vmem:[#allocation3 + $0x121] sm:$0xff]
        %v4992 = vld [vmem:[#allocation3 + $0x129] sm:$0xff]
        %v4993 = vld [vmem:[#allocation3 + $0x131] sm:$0xff]
        %v4994 = vld [vmem:[#allocation3 + $0x139] sm:$0xff]
        %v4995 = vld [vmem:[#allocation3 + $0x141] sm:$0xff]
        %v4996 = vld [vmem:[#allocation3 + $0x149] sm:$0xff]
        %v4997 = vld [vmem:[#allocation3 + $0x151] sm:$0xff]
        %v4998 = vld [vmem:[#allocation3 + $0x159] sm:$0xff]
        %v4999 = vld [vmem:[#allocation3 + $0x161] sm:$0xff]
        %v5000 = vld [vmem:[#allocation3 + $0x169] sm:$0xff]
        %v5001 = vld [vmem:[#allocation3 + $0x171] sm:$0xff]
        %v5002 = vld [vmem:[#allocation3 + $0x179] sm:$0xff]
        %v5003 = vld [vmem:[#allocation3 + $0x181] sm:$0xff]
        %v5004 = vld [vmem:[#allocation3 + $0x189] sm:$0xff]
        %v5005 = vld [vmem:[#allocation3 + $0x191] sm:$0xff]
        %v5006 = vld [vmem:[#allocation3 + $0x199] sm:$0xff]
        %v5007 = vld [vmem:[#allocation3 + $0x1a1] sm:$0xff]
        %v5008 = vld [vmem:[#allocation3 + $0x1a9] sm:$0xff]
        %v5009 = vld [vmem:[#allocation3 + $0x1b1] sm:$0xff]
        %v5010 = vld [vmem:[#allocation3 + $0x1b9] sm:$0xff]
        %v5011 = vld [vmem:[#allocation3 + $0x1c1] sm:$0xff]
        %v5012 = vld [vmem:[#allocation3 + $0x1c9] sm:$0xff]
        %v5013 = vld [vmem:[#allocation3 + $0x1d1] sm:$0xff]
        %v5014 = vld [vmem:[#allocation3 + $0x1d9] sm:$0xff]
        %v5015 = vld [vmem:[#allocation3 + $0x1e1] sm:$0xff]
        %v5016 = vld [vmem:[#allocation3 + $0x1e9] sm:$0xff]
        %v5017 = vld [vmem:[#allocation3 + $0x1f1] sm:$0xff]
        %v5018 = vld [vmem:[#allocation3 + $0x1f9] sm:$0xff]
        %v5019 = vld [vmem:[#allocation3 + $0x201] sm:$0xff]
        %v5020 = vld [vmem:[#allocation3 + $0x209] sm:$0xff]
        %v5021 = vld [vmem:[#allocation3 + $0x211] sm:$0xff]
        %v5022 = vld [vmem:[#allocation3 + $0x219] sm:$0xff]
        %v5023 = vld [vmem:[#allocation3 + $0x221] sm:$0xff]
        %v5024 = vld [vmem:[#allocation3 + $0x229] sm:$0xff]
        %v5025 = vld [vmem:[#allocation3 + $0x231] sm:$0xff]
        %v5026 = vld [vmem:[#allocation3 + $0x239] sm:$0xff]
        %v5027 = vld [vmem:[#allocation3 + $0x241] sm:$0xff]
        %v5028 = vld [vmem:[#allocation3 + $0x249] sm:$0xff]
        %v5029 = vld [vmem:[#allocation3 + $0x251] sm:$0xff]
        %v5030 = vld [vmem:[#allocation3 + $0x259] sm:$0xff]
        %v5031 = vld [vmem:[#allocation3 + $0x261] sm:$0xff]
        %v5032 = vld [vmem:[#allocation3 + $0x269] sm:$0xff]
        %v5033 = vld [vmem:[#allocation3 + $0x271] sm:$0xff]
        %v5034 = vld [vmem:[#allocation3 + $0x279] sm:$0xff]
        %v5035 = vld [vmem:[#allocation3 + $0x281] sm:$0xff]
        %v5036 = vld [vmem:[#allocation3 + $0x289] sm:$0xff]
        %v5037 = vld [vmem:[#allocation3 + $0x291] sm:$0xff]
        %v5038 = vld [vmem:[#allocation3 + $0x299] sm:$0xff]
        %v5039 = vld [vmem:[#allocation3 + $0x2a1] sm:$0xff]
        %v5040 = vld [vmem:[#allocation3 + $0x2a9] sm:$0x3f]
        %v5041 = vpack.c.bf16 %v4956, %v4955
        %v5042 = vpack.c.bf16 %v4958, %v4957
        %v5043 = vpack.c.bf16 %v4960, %v4959
        %v5044 = vpack.c.bf16 %v4962, %v4961
        %v5045 = vpack.c.bf16 %v4964, %v4963
        %v5046 = vpack.c.bf16 %v4966, %v4965
        %v5047 = vpack.c.bf16 %v4968, %v4967
        %v5048 = vpack.c.bf16 %v4970, %v4969
        %v5049 = vpack.c.bf16 %v4972, %v4971
        %v5050 = vpack.c.bf16 %v4974, %v4973
        %v5051 = vpack.c.bf16 %v4976, %v4975
        %v5052 = vpack.c.bf16 %v4978, %v4977
        %v5053 = vpack.c.bf16 %v4980, %v4979
        %v5054 = vpack.c.bf16 %v4982, %v4981
        %v5055 = vpack.c.bf16 %v4984, %v4983
        %v5056 = vpack.c.bf16 %v4986, %v4985
        %v5057 = vpack.c.bf16 %v4988, %v4987
        %v5058 = vpack.c.bf16 %v4990, %v4989
        %v5059 = vpack.c.bf16 %v4992, %v4991
        %v5060 = vpack.c.bf16 %v4994, %v4993
        %v5061 = vpack.c.bf16 %v4996, %v4995
        %v5062 = vpack.c.bf16 %v4998, %v4997
        %v5063 = vpack.c.bf16 %v5000, %v4999
        %v5064 = vpack.c.bf16 %v5002, %v5001
        %v5065 = vpack.c.bf16 %v5004, %v5003
        %v5066 = vpack.c.bf16 %v5006, %v5005
        %v5067 = vpack.c.bf16 %v5008, %v5007
        %v5068 = vpack.c.bf16 %v5010, %v5009
        %v5069 = vpack.c.bf16 %v5012, %v5011
        %v5070 = vpack.c.bf16 %v5014, %v5013
        %v5071 = vpack.c.bf16 %v5016, %v5015
        %v5072 = vpack.c.bf16 %v5018, %v5017
        %v5073 = vpack.c.bf16 %v5020, %v5019
        %v5074 = vpack.c.bf16 %v5022, %v5021
        %v5075 = vpack.c.bf16 %v5024, %v5023
        %v5076 = vpack.c.bf16 %v5026, %v5025
        %v5077 = vpack.c.bf16 %v5028, %v5027
        %v5078 = vpack.c.bf16 %v5030, %v5029
        %v5079 = vpack.c.bf16 %v5032, %v5031
        %v5080 = vpack.c.bf16 %v5034, %v5033
        %v5081 = vpack.c.bf16 %v5036, %v5035
        %v5082 = vpack.c.bf16 %v5038, %v5037
        %v5083 = vpack.c.bf16 %v5040, %v5039
        %s5084 = scalar_lea.vmem %s2, 32
        %v5085 = vld [vmem:[%s5084] sm:$0xf]
        %v5086 = vld [vmem:[%s5084 + $0x4] sm:$0xf]
        %v5087 = vld [vmem:[%s5084 + $0x8] sm:$0xf]
        %v5088 = vld [vmem:[%s5084 + $0xc] sm:$0xf]
        %v5089 = vld [vmem:[%s5084 + $0x10] sm:$0xf]
        %v5090 = vld [vmem:[%s5084 + $0x14] sm:$0xf]
        %v5091 = vld [vmem:[%s5084 + $0x18] sm:$0xf]
        %v5092 = vld [vmem:[%s5084 + $0x1c] sm:$0xf]
        %v5101 = vunpack.c.l.b16 %v5085
        %v5102 = vunpack.c.l.b16 %v5086
        %v5103 = vunpack.c.l.b16 %v5087
        %v5104 = vunpack.c.l.b16 %v5088
        %v5105 = vunpack.c.l.b16 %v5089
        %v5106 = vunpack.c.l.b16 %v5090
        %v5107 = vunpack.c.l.b16 %v5091
        %v5108 = vunpack.c.l.b16 %v5092
        %v5109 = vpack.c.b16 %v5102, %v5101
        %v5110 = vpack.c.b16 %v5104, %v5103
        %v5111 = vpack.c.b16 %v5106, %v5105
        %v5112 = vpack.c.b16 %v5108, %v5107
        %v5118 = vsel %vm4561, %v5041, 0
        %v5121 = vsel %vm4561, %v5042, 0
        %v5124 = vsel %vm4561, %v5043, 0
        %v5127 = vsel %vm4561, %v5044, 0
        %v5130 = vsel %vm4561, %v5045, 0
        %v5133 = vsel %vm4561, %v5046, 0
        %v5136 = vsel %vm4561, %v5047, 0
        %v5139 = vsel %vm4561, %v5048, 0
        %v5142 = vsel %vm4561, %v5049, 0
        %v5145 = vsel %vm4561, %v5050, 0
        %v5148 = vsel %vm4561, %v5051, 0
        %v5151 = vsel %vm4561, %v5052, 0
        %v5154 = vsel %vm4561, %v5053, 0
        %v5157 = vsel %vm4561, %v5054, 0
        %v5160 = vsel %vm4561, %v5055, 0
        %v5163 = vsel %vm4561, %v5056, 0
        %v5166 = vsel %vm4561, %v5057, 0
        %v5169 = vsel %vm4561, %v5058, 0
        %v5172 = vsel %vm4561, %v5059, 0
        %v5175 = vsel %vm4561, %v5060, 0
        %v5178 = vsel %vm4561, %v5061, 0
        %v5181 = vsel %vm4561, %v5062, 0
        %v5184 = vsel %vm4561, %v5063, 0
        %v5187 = vsel %vm4561, %v5064, 0
        %v5190 = vsel %vm4561, %v5065, 0
        %v5193 = vsel %vm4561, %v5066, 0
        %v5196 = vsel %vm4561, %v5067, 0
        %v5199 = vsel %vm4561, %v5068, 0
        %v5202 = vsel %vm4561, %v5069, 0
        %v5205 = vsel %vm4561, %v5070, 0
        %v5208 = vsel %vm4561, %v5071, 0
        %v5211 = vsel %vm4561, %v5072, 0
        %v5214 = vsel %vm4561, %v5073, 0
        %v5217 = vsel %vm4561, %v5074, 0
        %v5220 = vsel %vm4561, %v5075, 0
        %v5223 = vsel %vm4561, %v5076, 0
        %v5226 = vsel %vm4561, %v5077, 0
        %v5229 = vsel %vm4561, %v5078, 0
        %v5232 = vsel %vm4561, %v5079, 0
        %v5235 = vsel %vm4561, %v5080, 0
        %v5238 = vsel %vm4561, %v5081, 0
        %v5241 = vsel %vm4561, %v5082, 0
        %v5244 = vsel %vm4561, %v5083, 0
        %5246 = vmatprep.subr.bf16.mxu0 0
        %5247 = vmatpush1.bf16.msra.mxu0 %v5109
        %5248 = vmatprep.subr.bf16.mxu0 0
        %5249 = vmatpush1.bf16.msra.mxu0 %v5110
        %5250 = vmatprep.subr.bf16.mxu0 0
        %5251 = vmatpush1.bf16.msra.mxu0 %v5111
        %5252 = vmatprep.subr.bf16.mxu0 0
        %5253 = vmatpush1.bf16.msra.mxu0 %v5112
        %5254 = vmatprep.subr.bf16.mxu0 0
        %5255 = vmatpush1.bf16.msra.mxu0 0
        %5256 = vmatprep.subr.bf16.mxu0 0
        %5257 = vmatpush1.bf16.msra.mxu0 0
        %5258 = vmatprep.subr.bf16.mxu0 0
        %5259 = vmatpush1.bf16.msra.mxu0 0
        %5260 = vmatprep.subr.bf16.mxu0 0
        %5261 = vmatpush1.bf16.msra.mxu0 0
        %5262 = vmatprep.subr.bf16.mxu0 0
        %5263 = vmatpush1.bf16.msra.mxu0 0
        %5264 = vmatprep.subr.bf16.mxu0 0
        %5265 = vmatpush1.bf16.msra.mxu0 0
        %5266 = vmatprep.subr.bf16.mxu0 0
        %5267 = vmatpush1.bf16.msra.mxu0 0
        %5268 = vmatprep.subr.bf16.mxu0 0
        %5269 = vmatpush1.bf16.msra.mxu0 0
        %5270 = vmatprep.subr.bf16.mxu0 0
        %5271 = vmatpush1.bf16.msra.mxu0 0
        %5272 = vmatprep.subr.bf16.mxu0 0
        %5273 = vmatpush1.bf16.msra.mxu0 0
        %5274 = vmatprep.subr.bf16.mxu0 0
        %5275 = vmatpush1.bf16.msra.mxu0 0
        %5276 = vmatprep.subr.bf16.mxu0 0
        %5277 = vmatpush1.bf16.msra.mxu0 0
        %5278 = vmatprep.mubr.bf16.mxu0 0
        %5279 = vmatmul.mubr.bf16.gmra.mrb[0].mxu0 %v5118
        %v5280 = vpop.f32.mrb[0].mxu0
        %v5281 = vadd.f32 0.0, %v5280
        %v5282 = vpop.f32.mrb[0].mxu0
        %v5283 = vpop.f32.mrb[0].mxu0
        %v5284 = vadd.f32 0.0, %v5283
        %v5285 = vpop.f32.mrb[0].mxu0
        %5286 = vmatprep.mubr.bf16.mxu0 0
        %5287 = vmatmul.mubr.bf16.gmra.mrb[0].mxu0 %v5121
        %v5288 = vpop.f32.mrb[0].mxu0
        %v5289 = vadd.f32 0.0, %v5288
        %v5290 = vpop.f32.mrb[0].mxu0
        %v5291 = vpop.f32.mrb[0].mxu0
        %v5292 = vadd.f32 0.0, %v5291
        %v5293 = vpop.f32.mrb[0].mxu0
        %5294 = vmatprep.mubr.bf16.mxu0 0
        %5295 = vmatmul.mubr.bf16.gmra.mrb[0].mxu0 %v5124
        %v5296 = vpop.f32.mrb[0].mxu0
        %v5297 = vadd.f32 0.0, %v5296
        %v5298 = vpop.f32.mrb[0].mxu0
        %v5299 = vpop.f32.mrb[0].mxu0
        %v5300 = vadd.f32 0.0, %v5299
        %v5301 = vpop.f32.mrb[0].mxu0
        %5302 = vmatprep.mubr.bf16.mxu0 0
        %5303 = vmatmul.mubr.bf16.gmra.mrb[0].mxu0 %v5127
        %v5304 = vpop.f32.mrb[0].mxu0
        %v5305 = vadd.f32 0.0, %v5304
        %v5306 = vpop.f32.mrb[0].mxu0
        %v5307 = vpop.f32.mrb[0].mxu0
        %v5308 = vadd.f32 0.0, %v5307
        %v5309 = vpop.f32.mrb[0].mxu0
        %5310 = vmatprep.mubr.bf16.mxu0 0
        %5311 = vmatmul.mubr.bf16.gmra.mrb[0].mxu0 %v5130
        %v5312 = vpop.f32.mrb[0].mxu0
        %v5313 = vadd.f32 0.0, %v5312
        %v5314 = vpop.f32.mrb[0].mxu0
        %v5315 = vpop.f32.mrb[0].mxu0
        %v5316 = vadd.f32 0.0, %v5315
        %v5317 = vpop.f32.mrb[0].mxu0
        %5318 = vmatprep.mubr.bf16.mxu0 0
        %5319 = vmatmul.mubr.bf16.gmra.mrb[0].mxu0 %v5133
        %v5320 = vpop.f32.mrb[0].mxu0
        %v5321 = vadd.f32 0.0, %v5320
        %v5322 = vpop.f32.mrb[0].mxu0
        %v5323 = vpop.f32.mrb[0].mxu0
        %v5324 = vadd.f32 0.0, %v5323
        %v5325 = vpop.f32.mrb[0].mxu0
        %5326 = vmatprep.mubr.bf16.mxu0 0
        %5327 = vmatmul.mubr.bf16.gmra.mrb[0].mxu0 %v5136
        %v5328 = vpop.f32.mrb[0].mxu0
        %v5329 = vadd.f32 0.0, %v5328
        %v5330 = vpop.f32.mrb[0].mxu0
        %v5331 = vpop.f32.mrb[0].mxu0
        %v5332 = vadd.f32 0.0, %v5331
        %v5333 = vpop.f32.mrb[0].mxu0
        %5334 = vmatprep.mubr.bf16.mxu0 0
        %5335 = vmatmul.mubr.bf16.gmra.mrb[0].mxu0 %v5139
        %v5336 = vpop.f32.mrb[0].mxu0
        %v5337 = vadd.f32 0.0, %v5336
        %v5338 = vpop.f32.mrb[0].mxu0
        %v5339 = vpop.f32.mrb[0].mxu0
        %v5340 = vadd.f32 0.0, %v5339
        %v5341 = vpop.f32.mrb[0].mxu0
        %5342 = vmatprep.mubr.bf16.mxu0 0
        %5343 = vmatmul.mubr.bf16.gmra.mrb[0].mxu0 %v5142
        %v5344 = vpop.f32.mrb[0].mxu0
        %v5345 = vadd.f32 0.0, %v5344
        %v5346 = vpop.f32.mrb[0].mxu0
        %v5347 = vpop.f32.mrb[0].mxu0
        %v5348 = vadd.f32 0.0, %v5347
        %v5349 = vpop.f32.mrb[0].mxu0
        %5350 = vmatprep.mubr.bf16.mxu0 0
        %5351 = vmatmul.mubr.bf16.gmra.mrb[0].mxu0 %v5145
        %v5352 = vpop.f32.mrb[0].mxu0
        %v5353 = vadd.f32 0.0, %v5352
        %v5354 = vpop.f32.mrb[0].mxu0
        %v5355 = vpop.f32.mrb[0].mxu0
        %v5356 = vadd.f32 0.0, %v5355
        %v5357 = vpop.f32.mrb[0].mxu0
        %5358 = vmatprep.mubr.bf16.mxu0 0
        %5359 = vmatmul.mubr.bf16.gmra.mrb[0].mxu0 %v5148
        %v5360 = vpop.f32.mrb[0].mxu0
        %v5361 = vadd.f32 0.0, %v5360
        %v5362 = vpop.f32.mrb[0].mxu0
        %v5363 = vpop.f32.mrb[0].mxu0
        %v5364 = vadd.f32 0.0, %v5363
        %v5365 = vpop.f32.mrb[0].mxu0
        %5366 = vmatprep.mubr.bf16.mxu0 0
        %5367 = vmatmul.mubr.bf16.gmra.mrb[0].mxu0 %v5151
        %v5368 = vpop.f32.mrb[0].mxu0
        %v5369 = vadd.f32 0.0, %v5368
        %v5370 = vpop.f32.mrb[0].mxu0
        %v5371 = vpop.f32.mrb[0].mxu0
        %v5372 = vadd.f32 0.0, %v5371
        %v5373 = vpop.f32.mrb[0].mxu0
        %5374 = vmatprep.mubr.bf16.mxu0 0
        %5375 = vmatmul.mubr.bf16.gmra.mrb[0].mxu0 %v5154
        %v5376 = vpop.f32.mrb[0].mxu0
        %v5377 = vadd.f32 0.0, %v5376
        %v5378 = vpop.f32.mrb[0].mxu0
        %v5379 = vpop.f32.mrb[0].mxu0
        %v5380 = vadd.f32 0.0, %v5379
        %v5381 = vpop.f32.mrb[0].mxu0
        %5382 = vmatprep.mubr.bf16.mxu0 0
        %5383 = vmatmul.mubr.bf16.gmra.mrb[0].mxu0 %v5157
        %v5384 = vpop.f32.mrb[0].mxu0
        %v5385 = vadd.f32 0.0, %v5384
        %v5386 = vpop.f32.mrb[0].mxu0
        %v5387 = vpop.f32.mrb[0].mxu0
        %v5388 = vadd.f32 0.0, %v5387
        %v5389 = vpop.f32.mrb[0].mxu0
        %5390 = vmatprep.mubr.bf16.mxu0 0
        %5391 = vmatmul.mubr.bf16.gmra.mrb[0].mxu0 %v5160
        %v5392 = vpop.f32.mrb[0].mxu0
        %v5393 = vadd.f32 0.0, %v5392
        %v5394 = vpop.f32.mrb[0].mxu0
        %v5395 = vpop.f32.mrb[0].mxu0
        %v5396 = vadd.f32 0.0, %v5395
        %v5397 = vpop.f32.mrb[0].mxu0
        %5398 = vmatprep.mubr.bf16.mxu0 0
        %5399 = vmatmul.mubr.bf16.gmra.mrb[0].mxu0 %v5163
        %v5400 = vpop.f32.mrb[0].mxu0
        %v5401 = vadd.f32 0.0, %v5400
        %v5402 = vpop.f32.mrb[0].mxu0
        %v5403 = vpop.f32.mrb[0].mxu0
        %v5404 = vadd.f32 0.0, %v5403
        %v5405 = vpop.f32.mrb[0].mxu0
        %5406 = vmatprep.mubr.bf16.mxu0 0
        %5407 = vmatmul.mubr.bf16.gmra.mrb[0].mxu0 %v5166
        %v5408 = vpop.f32.mrb[0].mxu0
        %v5409 = vadd.f32 0.0, %v5408
        %v5410 = vpop.f32.mrb[0].mxu0
        %v5411 = vpop.f32.mrb[0].mxu0
        %v5412 = vadd.f32 0.0, %v5411
        %v5413 = vpop.f32.mrb[0].mxu0
        %5414 = vmatprep.mubr.bf16.mxu0 0
        %5415 = vmatmul.mubr.bf16.gmra.mrb[0].mxu0 %v5169
        %v5416 = vpop.f32.mrb[0].mxu0
        %v5417 = vadd.f32 0.0, %v5416
        %v5418 = vpop.f32.mrb[0].mxu0
        %v5419 = vpop.f32.mrb[0].mxu0
        %v5420 = vadd.f32 0.0, %v5419
        %v5421 = vpop.f32.mrb[0].mxu0
        %5422 = vmatprep.mubr.bf16.mxu0 0
        %5423 = vmatmul.mubr.bf16.gmra.mrb[0].mxu0 %v5172
        %v5424 = vpop.f32.mrb[0].mxu0
        %v5425 = vadd.f32 0.0, %v5424
        %v5426 = vpop.f32.mrb[0].mxu0
        %v5427 = vpop.f32.mrb[0].mxu0
        %v5428 = vadd.f32 0.0, %v5427
        %v5429 = vpop.f32.mrb[0].mxu0
        %5430 = vmatprep.mubr.bf16.mxu0 0
        %5431 = vmatmul.mubr.bf16.gmra.mrb[0].mxu0 %v5175
        %v5432 = vpop.f32.mrb[0].mxu0
        %v5433 = vadd.f32 0.0, %v5432
        %v5434 = vpop.f32.mrb[0].mxu0
        %v5435 = vpop.f32.mrb[0].mxu0
        %v5436 = vadd.f32 0.0, %v5435
        %v5437 = vpop.f32.mrb[0].mxu0
        %5438 = vmatprep.mubr.bf16.mxu0 0
        %5439 = vmatmul.mubr.bf16.gmra.mrb[0].mxu0 %v5178
        %v5440 = vpop.f32.mrb[0].mxu0
        %v5441 = vadd.f32 0.0, %v5440
        %v5442 = vpop.f32.mrb[0].mxu0
        %v5443 = vpop.f32.mrb[0].mxu0
        %v5444 = vadd.f32 0.0, %v5443
        %v5445 = vpop.f32.mrb[0].mxu0
        %5446 = vmatprep.mubr.bf16.mxu0 0
        %5447 = vmatmul.mubr.bf16.gmra.mrb[0].mxu0 %v5181
        %v5448 = vpop.f32.mrb[0].mxu0
        %v5449 = vadd.f32 0.0, %v5448
        %v5450 = vpop.f32.mrb[0].mxu0
        %v5451 = vpop.f32.mrb[0].mxu0
        %v5452 = vadd.f32 0.0, %v5451
        %v5453 = vpop.f32.mrb[0].mxu0
        %5454 = vmatprep.mubr.bf16.mxu0 0
        %5455 = vmatmul.mubr.bf16.gmra.mrb[0].mxu0 %v5184
        %v5456 = vpop.f32.mrb[0].mxu0
        %v5457 = vadd.f32 0.0, %v5456
        %v5458 = vpop.f32.mrb[0].mxu0
        %v5459 = vpop.f32.mrb[0].mxu0
        %v5460 = vadd.f32 0.0, %v5459
        %v5461 = vpop.f32.mrb[0].mxu0
        %5462 = vmatprep.mubr.bf16.mxu0 0
        %5463 = vmatmul.mubr.bf16.gmra.mrb[0].mxu0 %v5187
        %v5464 = vpop.f32.mrb[0].mxu0
        %v5465 = vadd.f32 0.0, %v5464
        %v5466 = vpop.f32.mrb[0].mxu0
        %v5467 = vpop.f32.mrb[0].mxu0
        %v5468 = vadd.f32 0.0, %v5467
        %v5469 = vpop.f32.mrb[0].mxu0
        %5470 = vmatprep.mubr.bf16.mxu0 0
        %5471 = vmatmul.mubr.bf16.gmra.mrb[0].mxu0 %v5190
        %v5472 = vpop.f32.mrb[0].mxu0
        %v5473 = vadd.f32 0.0, %v5472
        %v5474 = vpop.f32.mrb[0].mxu0
        %v5475 = vpop.f32.mrb[0].mxu0
        %v5476 = vadd.f32 0.0, %v5475
        %v5477 = vpop.f32.mrb[0].mxu0
        %5478 = vmatprep.mubr.bf16.mxu0 0
        %5479 = vmatmul.mubr.bf16.gmra.mrb[0].mxu0 %v5193
        %v5480 = vpop.f32.mrb[0].mxu0
        %v5481 = vadd.f32 0.0, %v5480
        %v5482 = vpop.f32.mrb[0].mxu0
        %v5483 = vpop.f32.mrb[0].mxu0
        %v5484 = vadd.f32 0.0, %v5483
        %v5485 = vpop.f32.mrb[0].mxu0
        %5486 = vmatprep.mubr.bf16.mxu0 0
        %5487 = vmatmul.mubr.bf16.gmra.mrb[0].mxu0 %v5196
        %v5488 = vpop.f32.mrb[0].mxu0
        %v5489 = vadd.f32 0.0, %v5488
        %v5490 = vpop.f32.mrb[0].mxu0
        %v5491 = vpop.f32.mrb[0].mxu0
        %v5492 = vadd.f32 0.0, %v5491
        %v5493 = vpop.f32.mrb[0].mxu0
        %5494 = vmatprep.mubr.bf16.mxu0 0
        %5495 = vmatmul.mubr.bf16.gmra.mrb[0].mxu0 %v5199
        %v5496 = vpop.f32.mrb[0].mxu0
        %v5497 = vadd.f32 0.0, %v5496
        %v5498 = vpop.f32.mrb[0].mxu0
        %v5499 = vpop.f32.mrb[0].mxu0
        %v5500 = vadd.f32 0.0, %v5499
        %v5501 = vpop.f32.mrb[0].mxu0
        %5502 = vmatprep.mubr.bf16.mxu0 0
        %5503 = vmatmul.mubr.bf16.gmra.mrb[0].mxu0 %v5202
        %v5504 = vpop.f32.mrb[0].mxu0
        %v5505 = vadd.f32 0.0, %v5504
        %v5506 = vpop.f32.mrb[0].mxu0
        %v5507 = vpop.f32.mrb[0].mxu0
        %v5508 = vadd.f32 0.0, %v5507
        %v5509 = vpop.f32.mrb[0].mxu0
        %5510 = vmatprep.mubr.bf16.mxu0 0
        %5511 = vmatmul.mubr.bf16.gmra.mrb[0].mxu0 %v5205
        %v5512 = vpop.f32.mrb[0].mxu0
        %v5513 = vadd.f32 0.0, %v5512
        %v5514 = vpop.f32.mrb[0].mxu0
        %v5515 = vpop.f32.mrb[0].mxu0
        %v5516 = vadd.f32 0.0, %v5515
        %v5517 = vpop.f32.mrb[0].mxu0
        %5518 = vmatprep.mubr.bf16.mxu0 0
        %5519 = vmatmul.mubr.bf16.gmra.mrb[0].mxu0 %v5208
        %v5520 = vpop.f32.mrb[0].mxu0
        %v5521 = vadd.f32 0.0, %v5520
        %v5522 = vpop.f32.mrb[0].mxu0
        %v5523 = vpop.f32.mrb[0].mxu0
        %v5524 = vadd.f32 0.0, %v5523
        %v5525 = vpop.f32.mrb[0].mxu0
        %5526 = vmatprep.mubr.bf16.mxu0 0
        %5527 = vmatmul.mubr.bf16.gmra.mrb[0].mxu0 %v5211
        %v5528 = vpop.f32.mrb[0].mxu0
        %v5529 = vadd.f32 0.0, %v5528
        %v5530 = vpop.f32.mrb[0].mxu0
        %v5531 = vpop.f32.mrb[0].mxu0
        %v5532 = vadd.f32 0.0, %v5531
        %v5533 = vpop.f32.mrb[0].mxu0
        %5534 = vmatprep.mubr.bf16.mxu0 0
        %5535 = vmatmul.mubr.bf16.gmra.mrb[0].mxu0 %v5214
        %v5536 = vpop.f32.mrb[0].mxu0
        %v5537 = vadd.f32 0.0, %v5536
        %v5538 = vpop.f32.mrb[0].mxu0
        %v5539 = vpop.f32.mrb[0].mxu0
        %v5540 = vadd.f32 0.0, %v5539
        %v5541 = vpop.f32.mrb[0].mxu0
        %5542 = vmatprep.mubr.bf16.mxu0 0
        %5543 = vmatmul.mubr.bf16.gmra.mrb[0].mxu0 %v5217
        %v5544 = vpop.f32.mrb[0].mxu0
        %v5545 = vadd.f32 0.0, %v5544
        %v5546 = vpop.f32.mrb[0].mxu0
        %v5547 = vpop.f32.mrb[0].mxu0
        %v5548 = vadd.f32 0.0, %v5547
        %v5549 = vpop.f32.mrb[0].mxu0
        %5550 = vmatprep.mubr.bf16.mxu0 0
        %5551 = vmatmul.mubr.bf16.gmra.mrb[0].mxu0 %v5220
        %v5552 = vpop.f32.mrb[0].mxu0
        %v5553 = vadd.f32 0.0, %v5552
        %v5554 = vpop.f32.mrb[0].mxu0
        %v5555 = vpop.f32.mrb[0].mxu0
        %v5556 = vadd.f32 0.0, %v5555
        %v5557 = vpop.f32.mrb[0].mxu0
        %5558 = vmatprep.mubr.bf16.mxu0 0
        %5559 = vmatmul.mubr.bf16.gmra.mrb[0].mxu0 %v5223
        %v5560 = vpop.f32.mrb[0].mxu0
        %v5561 = vadd.f32 0.0, %v5560
        %v5562 = vpop.f32.mrb[0].mxu0
        %v5563 = vpop.f32.mrb[0].mxu0
        %v5564 = vadd.f32 0.0, %v5563
        %v5565 = vpop.f32.mrb[0].mxu0
        %5566 = vmatprep.mubr.bf16.mxu0 0
        %5567 = vmatmul.mubr.bf16.gmra.mrb[0].mxu0 %v5226
        %v5568 = vpop.f32.mrb[0].mxu0
        %v5569 = vadd.f32 0.0, %v5568
        %v5570 = vpop.f32.mrb[0].mxu0
        %v5571 = vpop.f32.mrb[0].mxu0
        %v5572 = vadd.f32 0.0, %v5571
        %v5573 = vpop.f32.mrb[0].mxu0
        %5574 = vmatprep.mubr.bf16.mxu0 0
        %5575 = vmatmul.mubr.bf16.gmra.mrb[0].mxu0 %v5229
        %v5576 = vpop.f32.mrb[0].mxu0
        %v5577 = vadd.f32 0.0, %v5576
        %v5578 = vpop.f32.mrb[0].mxu0
        %v5579 = vpop.f32.mrb[0].mxu0
        %v5580 = vadd.f32 0.0, %v5579
        %v5581 = vpop.f32.mrb[0].mxu0
        %5582 = vmatprep.mubr.bf16.mxu0 0
        %5583 = vmatmul.mubr.bf16.gmra.mrb[0].mxu0 %v5232
        %v5584 = vpop.f32.mrb[0].mxu0
        %v5585 = vadd.f32 0.0, %v5584
        %v5586 = vpop.f32.mrb[0].mxu0
        %v5587 = vpop.f32.mrb[0].mxu0
        %v5588 = vadd.f32 0.0, %v5587
        %v5589 = vpop.f32.mrb[0].mxu0
        %5590 = vmatprep.mubr.bf16.mxu0 0
        %5591 = vmatmul.mubr.bf16.gmra.mrb[0].mxu0 %v5235
        %v5592 = vpop.f32.mrb[0].mxu0
        %v5593 = vadd.f32 0.0, %v5592
        %v5594 = vpop.f32.mrb[0].mxu0
        %v5595 = vpop.f32.mrb[0].mxu0
        %v5596 = vadd.f32 0.0, %v5595
        %v5597 = vpop.f32.mrb[0].mxu0
        %5598 = vmatprep.mubr.bf16.mxu0 0
        %5599 = vmatmul.mubr.bf16.gmra.mrb[0].mxu0 %v5238
        %v5600 = vpop.f32.mrb[0].mxu0
        %v5601 = vadd.f32 0.0, %v5600
        %v5602 = vpop.f32.mrb[0].mxu0
        %v5603 = vpop.f32.mrb[0].mxu0
        %v5604 = vadd.f32 0.0, %v5603
        %v5605 = vpop.f32.mrb[0].mxu0
        %5606 = vmatprep.mubr.bf16.mxu0 0
        %5607 = vmatmul.mubr.bf16.gmra.mrb[0].mxu0 %v5241
        %v5608 = vpop.f32.mrb[0].mxu0
        %v5609 = vadd.f32 0.0, %v5608
        %v5610 = vpop.f32.mrb[0].mxu0
        %v5611 = vpop.f32.mrb[0].mxu0
        %v5612 = vadd.f32 0.0, %v5611
        %v5613 = vpop.f32.mrb[0].mxu0
        %5614 = vmatprep.mubr.bf16.mxu0 0
        %5615 = vmatmul.mubr.bf16.gmra.mrb[0].mxu0 %v5244
        %v5616 = vpop.f32.mrb[0].mxu0
        %v5617 = vadd.f32 0.0, %v5616
        %v5618 = vpop.f32.mrb[0].mxu0
        %v5619 = vpop.f32.mrb[0].mxu0
        %v5620 = vadd.f32 0.0, %v5619
        %v5621 = vpop.f32.mrb[0].mxu0
        %5622 = vdwg.mxu0
        %v5631 = vunpack.c.l.b16 %v4947
        %v5632 = vunpack.c.l.b16 %v4948
        %v5633 = vunpack.c.l.b16 %v4949
        %v5634 = vunpack.c.l.b16 %v4950
        %v5635 = vunpack.c.l.b16 %v4951
        %v5636 = vunpack.c.l.b16 %v4952
        %v5637 = vunpack.c.l.b16 %v4953
        %v5638 = vunpack.c.l.b16 %v4954
        %v5639 = vpack.c.b16 %v5632, %v5631
        %v5640 = vpack.c.b16 %v5634, %v5633
        %v5641 = vpack.c.b16 %v5636, %v5635
        %v5642 = vpack.c.b16 %v5638, %v5637
        %v5648 = vsel %vm4561, %v4904, 0
        %v5651 = vsel %vm4561, %v4905, 0
        %v5654 = vsel %vm4561, %v4906, 0
        %v5657 = vsel %vm4561, %v4907, 0
        %v5660 = vsel %vm4561, %v4908, 0
        %v5663 = vsel %vm4561, %v4909, 0
        %v5666 = vsel %vm4561, %v4910, 0
        %v5669 = vsel %vm4561, %v4911, 0
        %v5672 = vsel %vm4561, %v4912, 0
        %v5675 = vsel %vm4561, %v4913, 0
        %v5678 = vsel %vm4561, %v4914, 0
        %v5681 = vsel %vm4561, %v4915, 0
        %v5684 = vsel %vm4561, %v4916, 0
        %v5687 = vsel %vm4561, %v4917, 0
        %v5690 = vsel %vm4561, %v4918, 0
        %v5693 = vsel %vm4561, %v4919, 0
        %v5696 = vsel %vm4561, %v4920, 0
        %v5699 = vsel %vm4561, %v4921, 0
        %v5702 = vsel %vm4561, %v4922, 0
        %v5705 = vsel %vm4561, %v4923, 0
        %v5708 = vsel %vm4561, %v4924, 0
        %v5711 = vsel %vm4561, %v4925, 0
        %v5714 = vsel %vm4561, %v4926, 0
        %v5717 = vsel %vm4561, %v4927, 0
        %v5720 = vsel %vm4561, %v4928, 0
        %v5723 = vsel %vm4561, %v4929, 0
        %v5726 = vsel %vm4561, %v4930, 0
        %v5729 = vsel %vm4561, %v4931, 0
        %v5732 = vsel %vm4561, %v4932, 0
        %v5735 = vsel %vm4561, %v4933, 0
        %v5738 = vsel %vm4561, %v4934, 0
        %v5741 = vsel %vm4561, %v4935, 0
        %v5744 = vsel %vm4561, %v4936, 0
        %v5747 = vsel %vm4561, %v4937, 0
        %v5750 = vsel %vm4561, %v4938, 0
        %v5753 = vsel %vm4561, %v4939, 0
        %v5756 = vsel %vm4561, %v4940, 0
        %v5759 = vsel %vm4561, %v4941, 0
        %v5762 = vsel %vm4561, %v4942, 0
        %v5765 = vsel %vm4561, %v4943, 0
        %v5768 = vsel %vm4561, %v4944, 0
        %v5771 = vsel %vm4561, %v4945, 0
        %v5774 = vsel %vm4561, %v4946, 0
        %5776 = vmatprep.subr.bf16.mxu0 0
        %5777 = vmatpush1.bf16.msra.mxu0 %v5639
        %5778 = vmatprep.subr.bf16.mxu0 0
        %5779 = vmatpush1.bf16.msra.mxu0 %v5640
        %5780 = vmatprep.subr.bf16.mxu0 0
        %5781 = vmatpush1.bf16.msra.mxu0 %v5641
        %5782 = vmatprep.subr.bf16.mxu0 0
        %5783 = vmatpush1.bf16.msra.mxu0 %v5642
        %5784 = vmatprep.subr.bf16.mxu0 0
        %5785 = vmatpush1.bf16.msra.mxu0 0
        %5786 = vmatprep.subr.bf16.mxu0 0
        %5787 = vmatpush1.bf16.msra.mxu0 0
        %5788 = vmatprep.subr.bf16.mxu0 0
        %5789 = vmatpush1.bf16.msra.mxu0 0
        %5790 = vmatprep.subr.bf16.mxu0 0
        %5791 = vmatpush1.bf16.msra.mxu0 0
        %5792 = vmatprep.subr.bf16.mxu0 0
        %5793 = vmatpush1.bf16.msra.mxu0 0
        %5794 = vmatprep.subr.bf16.mxu0 0
        %5795 = vmatpush1.bf16.msra.mxu0 0
        %5796 = vmatprep.subr.bf16.mxu0 0
        %5797 = vmatpush1.bf16.msra.mxu0 0
        %5798 = vmatprep.subr.bf16.mxu0 0
        %5799 = vmatpush1.bf16.msra.mxu0 0
        %5800 = vmatprep.subr.bf16.mxu0 0
        %5801 = vmatpush1.bf16.msra.mxu0 0
        %5802 = vmatprep.subr.bf16.mxu0 0
        %5803 = vmatpush1.bf16.msra.mxu0 0
        %5804 = vmatprep.subr.bf16.mxu0 0
        %5805 = vmatpush1.bf16.msra.mxu0 0
        %5806 = vmatprep.subr.bf16.mxu0 0
        %5807 = vmatpush1.bf16.msra.mxu0 0
        %5808 = vmatprep.mubr.bf16.mxu0 0
        %5809 = vmatmul.mubr.bf16.gmra.mrb[0].mxu0 %v5648
        %v5810 = vpop.f32.mrb[0].mxu0
        %v5811 = vadd.f32 %v5281, %v5810
        %v5812 = vpop.f32.mrb[0].mxu0
        %v5813 = vpop.f32.mrb[0].mxu0
        %v5814 = vadd.f32 %v5284, %v5813
        %v5815 = vpop.f32.mrb[0].mxu0
        %5816 = vmatprep.mubr.bf16.mxu0 0
        %5817 = vmatmul.mubr.bf16.gmra.mrb[0].mxu0 %v5651
        %v5818 = vpop.f32.mrb[0].mxu0
        %v5819 = vadd.f32 %v5289, %v5818
        %v5820 = vpop.f32.mrb[0].mxu0
        %v5821 = vpop.f32.mrb[0].mxu0
        %v5822 = vadd.f32 %v5292, %v5821
        %v5823 = vpop.f32.mrb[0].mxu0
        %5824 = vmatprep.mubr.bf16.mxu0 0
        %5825 = vmatmul.mubr.bf16.gmra.mrb[0].mxu0 %v5654
        %v5826 = vpop.f32.mrb[0].mxu0
        %v5827 = vadd.f32 %v5297, %v5826
        %v5828 = vpop.f32.mrb[0].mxu0
        %v5829 = vpop.f32.mrb[0].mxu0
        %v5830 = vadd.f32 %v5300, %v5829
        %v5831 = vpop.f32.mrb[0].mxu0
        %5832 = vmatprep.mubr.bf16.mxu0 0
        %5833 = vmatmul.mubr.bf16.gmra.mrb[0].mxu0 %v5657
        %v5834 = vpop.f32.mrb[0].mxu0
        %v5835 = vadd.f32 %v5305, %v5834
        %v5836 = vpop.f32.mrb[0].mxu0
        %v5837 = vpop.f32.mrb[0].mxu0
        %v5838 = vadd.f32 %v5308, %v5837
        %v5839 = vpop.f32.mrb[0].mxu0
        %5840 = vmatprep.mubr.bf16.mxu0 0
        %5841 = vmatmul.mubr.bf16.gmra.mrb[0].mxu0 %v5660
        %v5842 = vpop.f32.mrb[0].mxu0
        %v5843 = vadd.f32 %v5313, %v5842
        %v5844 = vpop.f32.mrb[0].mxu0
        %v5845 = vpop.f32.mrb[0].mxu0
        %v5846 = vadd.f32 %v5316, %v5845
        %v5847 = vpop.f32.mrb[0].mxu0
        %5848 = vmatprep.mubr.bf16.mxu0 0
        %5849 = vmatmul.mubr.bf16.gmra.mrb[0].mxu0 %v5663
        %v5850 = vpop.f32.mrb[0].mxu0
        %v5851 = vadd.f32 %v5321, %v5850
        %v5852 = vpop.f32.mrb[0].mxu0
        %v5853 = vpop.f32.mrb[0].mxu0
        %v5854 = vadd.f32 %v5324, %v5853
        %v5855 = vpop.f32.mrb[0].mxu0
        %5856 = vmatprep.mubr.bf16.mxu0 0
        %5857 = vmatmul.mubr.bf16.gmra.mrb[0].mxu0 %v5666
        %v5858 = vpop.f32.mrb[0].mxu0
        %v5859 = vadd.f32 %v5329, %v5858
        %v5860 = vpop.f32.mrb[0].mxu0
        %v5861 = vpop.f32.mrb[0].mxu0
        %v5862 = vadd.f32 %v5332, %v5861
        %v5863 = vpop.f32.mrb[0].mxu0
        %5864 = vmatprep.mubr.bf16.mxu0 0
        %5865 = vmatmul.mubr.bf16.gmra.mrb[0].mxu0 %v5669
        %v5866 = vpop.f32.mrb[0].mxu0
        %v5867 = vadd.f32 %v5337, %v5866
        %v5868 = vpop.f32.mrb[0].mxu0
        %v5869 = vpop.f32.mrb[0].mxu0
        %v5870 = vadd.f32 %v5340, %v5869
        %v5871 = vpop.f32.mrb[0].mxu0
        %5872 = vmatprep.mubr.bf16.mxu0 0
        %5873 = vmatmul.mubr.bf16.gmra.mrb[0].mxu0 %v5672
        %v5874 = vpop.f32.mrb[0].mxu0
        %v5875 = vadd.f32 %v5345, %v5874
        %v5876 = vpop.f32.mrb[0].mxu0
        %v5877 = vpop.f32.mrb[0].mxu0
        %v5878 = vadd.f32 %v5348, %v5877
        %v5879 = vpop.f32.mrb[0].mxu0
        %5880 = vmatprep.mubr.bf16.mxu0 0
        %5881 = vmatmul.mubr.bf16.gmra.mrb[0].mxu0 %v5675
        %v5882 = vpop.f32.mrb[0].mxu0
        %v5883 = vadd.f32 %v5353, %v5882
        %v5884 = vpop.f32.mrb[0].mxu0
        %v5885 = vpop.f32.mrb[0].mxu0
        %v5886 = vadd.f32 %v5356, %v5885
        %v5887 = vpop.f32.mrb[0].mxu0
        %5888 = vmatprep.mubr.bf16.mxu0 0
        %5889 = vmatmul.mubr.bf16.gmra.mrb[0].mxu0 %v5678
        %v5890 = vpop.f32.mrb[0].mxu0
        %v5891 = vadd.f32 %v5361, %v5890
        %v5892 = vpop.f32.mrb[0].mxu0
        %v5893 = vpop.f32.mrb[0].mxu0
        %v5894 = vadd.f32 %v5364, %v5893
        %v5895 = vpop.f32.mrb[0].mxu0
        %5896 = vmatprep.mubr.bf16.mxu0 0
        %5897 = vmatmul.mubr.bf16.gmra.mrb[0].mxu0 %v5681
        %v5898 = vpop.f32.mrb[0].mxu0
        %v5899 = vadd.f32 %v5369, %v5898
        %v5900 = vpop.f32.mrb[0].mxu0
        %v5901 = vpop.f32.mrb[0].mxu0
        %v5902 = vadd.f32 %v5372, %v5901
        %v5903 = vpop.f32.mrb[0].mxu0
        %5904 = vmatprep.mubr.bf16.mxu0 0
        %5905 = vmatmul.mubr.bf16.gmra.mrb[0].mxu0 %v5684
        %v5906 = vpop.f32.mrb[0].mxu0
        %v5907 = vadd.f32 %v5377, %v5906
        %v5908 = vpop.f32.mrb[0].mxu0
        %v5909 = vpop.f32.mrb[0].mxu0
        %v5910 = vadd.f32 %v5380, %v5909
        %v5911 = vpop.f32.mrb[0].mxu0
        %5912 = vmatprep.mubr.bf16.mxu0 0
        %5913 = vmatmul.mubr.bf16.gmra.mrb[0].mxu0 %v5687
        %v5914 = vpop.f32.mrb[0].mxu0
        %v5915 = vadd.f32 %v5385, %v5914
        %v5916 = vpop.f32.mrb[0].mxu0
        %v5917 = vpop.f32.mrb[0].mxu0
        %v5918 = vadd.f32 %v5388, %v5917
        %v5919 = vpop.f32.mrb[0].mxu0
        %5920 = vmatprep.mubr.bf16.mxu0 0
        %5921 = vmatmul.mubr.bf16.gmra.mrb[0].mxu0 %v5690
        %v5922 = vpop.f32.mrb[0].mxu0
        %v5923 = vadd.f32 %v5393, %v5922
        %v5924 = vpop.f32.mrb[0].mxu0
        %v5925 = vpop.f32.mrb[0].mxu0
        %v5926 = vadd.f32 %v5396, %v5925
        %v5927 = vpop.f32.mrb[0].mxu0
        %5928 = vmatprep.mubr.bf16.mxu0 0
        %5929 = vmatmul.mubr.bf16.gmra.mrb[0].mxu0 %v5693
        %v5930 = vpop.f32.mrb[0].mxu0
        %v5931 = vadd.f32 %v5401, %v5930
        %v5932 = vpop.f32.mrb[0].mxu0
        %v5933 = vpop.f32.mrb[0].mxu0
        %v5934 = vadd.f32 %v5404, %v5933
        %v5935 = vpop.f32.mrb[0].mxu0
        %5936 = vmatprep.mubr.bf16.mxu0 0
        %5937 = vmatmul.mubr.bf16.gmra.mrb[0].mxu0 %v5696
        %v5938 = vpop.f32.mrb[0].mxu0
        %v5939 = vadd.f32 %v5409, %v5938
        %v5940 = vpop.f32.mrb[0].mxu0
        %v5941 = vpop.f32.mrb[0].mxu0
        %v5942 = vadd.f32 %v5412, %v5941
        %v5943 = vpop.f32.mrb[0].mxu0
        %5944 = vmatprep.mubr.bf16.mxu0 0
        %5945 = vmatmul.mubr.bf16.gmra.mrb[0].mxu0 %v5699
        %v5946 = vpop.f32.mrb[0].mxu0
        %v5947 = vadd.f32 %v5417, %v5946
        %v5948 = vpop.f32.mrb[0].mxu0
        %v5949 = vpop.f32.mrb[0].mxu0
        %v5950 = vadd.f32 %v5420, %v5949
        %v5951 = vpop.f32.mrb[0].mxu0
        %5952 = vmatprep.mubr.bf16.mxu0 0
        %5953 = vmatmul.mubr.bf16.gmra.mrb[0].mxu0 %v5702
        %v5954 = vpop.f32.mrb[0].mxu0
        %v5955 = vadd.f32 %v5425, %v5954
        %v5956 = vpop.f32.mrb[0].mxu0
        %v5957 = vpop.f32.mrb[0].mxu0
        %v5958 = vadd.f32 %v5428, %v5957
        %v5959 = vpop.f32.mrb[0].mxu0
        %5960 = vmatprep.mubr.bf16.mxu0 0
        %5961 = vmatmul.mubr.bf16.gmra.mrb[0].mxu0 %v5705
        %v5962 = vpop.f32.mrb[0].mxu0
        %v5963 = vadd.f32 %v5433, %v5962
        %v5964 = vpop.f32.mrb[0].mxu0
        %v5965 = vpop.f32.mrb[0].mxu0
        %v5966 = vadd.f32 %v5436, %v5965
        %v5967 = vpop.f32.mrb[0].mxu0
        %5968 = vmatprep.mubr.bf16.mxu0 0
        %5969 = vmatmul.mubr.bf16.gmra.mrb[0].mxu0 %v5708
        %v5970 = vpop.f32.mrb[0].mxu0
        %v5971 = vadd.f32 %v5441, %v5970
        %v5972 = vpop.f32.mrb[0].mxu0
        %v5973 = vpop.f32.mrb[0].mxu0
        %v5974 = vadd.f32 %v5444, %v5973
        %v5975 = vpop.f32.mrb[0].mxu0
        %5976 = vmatprep.mubr.bf16.mxu0 0
        %5977 = vmatmul.mubr.bf16.gmra.mrb[0].mxu0 %v5711
        %v5978 = vpop.f32.mrb[0].mxu0
        %v5979 = vadd.f32 %v5449, %v5978
        %v5980 = vpop.f32.mrb[0].mxu0
        %v5981 = vpop.f32.mrb[0].mxu0
        %v5982 = vadd.f32 %v5452, %v5981
        %v5983 = vpop.f32.mrb[0].mxu0
        %5984 = vmatprep.mubr.bf16.mxu0 0
        %5985 = vmatmul.mubr.bf16.gmra.mrb[0].mxu0 %v5714
        %v5986 = vpop.f32.mrb[0].mxu0
        %v5987 = vadd.f32 %v5457, %v5986
        %v5988 = vpop.f32.mrb[0].mxu0
        %v5989 = vpop.f32.mrb[0].mxu0
        %v5990 = vadd.f32 %v5460, %v5989
        %v5991 = vpop.f32.mrb[0].mxu0
        %5992 = vmatprep.mubr.bf16.mxu0 0
        %5993 = vmatmul.mubr.bf16.gmra.mrb[0].mxu0 %v5717
        %v5994 = vpop.f32.mrb[0].mxu0
        %v5995 = vadd.f32 %v5465, %v5994
        %v5996 = vpop.f32.mrb[0].mxu0
        %v5997 = vpop.f32.mrb[0].mxu0
        %v5998 = vadd.f32 %v5468, %v5997
        %v5999 = vpop.f32.mrb[0].mxu0
        %6000 = vmatprep.mubr.bf16.mxu0 0
        %6001 = vmatmul.mubr.bf16.gmra.mrb[0].mxu0 %v5720
        %v6002 = vpop.f32.mrb[0].mxu0
        %v6003 = vadd.f32 %v5473, %v6002
        %v6004 = vpop.f32.mrb[0].mxu0
        %v6005 = vpop.f32.mrb[0].mxu0
        %v6006 = vadd.f32 %v5476, %v6005
        %v6007 = vpop.f32.mrb[0].mxu0
        %6008 = vmatprep.mubr.bf16.mxu0 0
        %6009 = vmatmul.mubr.bf16.gmra.mrb[0].mxu0 %v5723
        %v6010 = vpop.f32.mrb[0].mxu0
        %v6011 = vadd.f32 %v5481, %v6010
        %v6012 = vpop.f32.mrb[0].mxu0
        %v6013 = vpop.f32.mrb[0].mxu0
        %v6014 = vadd.f32 %v5484, %v6013
        %v6015 = vpop.f32.mrb[0].mxu0
        %6016 = vmatprep.mubr.bf16.mxu0 0
        %6017 = vmatmul.mubr.bf16.gmra.mrb[0].mxu0 %v5726
        %v6018 = vpop.f32.mrb[0].mxu0
        %v6019 = vadd.f32 %v5489, %v6018
        %v6020 = vpop.f32.mrb[0].mxu0
        %v6021 = vpop.f32.mrb[0].mxu0
        %v6022 = vadd.f32 %v5492, %v6021
        %v6023 = vpop.f32.mrb[0].mxu0
        %6024 = vmatprep.mubr.bf16.mxu0 0
        %6025 = vmatmul.mubr.bf16.gmra.mrb[0].mxu0 %v5729
        %v6026 = vpop.f32.mrb[0].mxu0
        %v6027 = vadd.f32 %v5497, %v6026
        %v6028 = vpop.f32.mrb[0].mxu0
        %v6029 = vpop.f32.mrb[0].mxu0
        %v6030 = vadd.f32 %v5500, %v6029
        %v6031 = vpop.f32.mrb[0].mxu0
        %6032 = vmatprep.mubr.bf16.mxu0 0
        %6033 = vmatmul.mubr.bf16.gmra.mrb[0].mxu0 %v5732
        %v6034 = vpop.f32.mrb[0].mxu0
        %v6035 = vadd.f32 %v5505, %v6034
        %v6036 = vpop.f32.mrb[0].mxu0
        %v6037 = vpop.f32.mrb[0].mxu0
        %v6038 = vadd.f32 %v5508, %v6037
        %v6039 = vpop.f32.mrb[0].mxu0
        %6040 = vmatprep.mubr.bf16.mxu0 0
        %6041 = vmatmul.mubr.bf16.gmra.mrb[0].mxu0 %v5735
        %v6042 = vpop.f32.mrb[0].mxu0
        %v6043 = vadd.f32 %v5513, %v6042
        %v6044 = vpop.f32.mrb[0].mxu0
        %v6045 = vpop.f32.mrb[0].mxu0
        %v6046 = vadd.f32 %v5516, %v6045
        %v6047 = vpop.f32.mrb[0].mxu0
        %6048 = vmatprep.mubr.bf16.mxu0 0
        %6049 = vmatmul.mubr.bf16.gmra.mrb[0].mxu0 %v5738
        %v6050 = vpop.f32.mrb[0].mxu0
        %v6051 = vadd.f32 %v5521, %v6050
        %v6052 = vpop.f32.mrb[0].mxu0
        %v6053 = vpop.f32.mrb[0].mxu0
        %v6054 = vadd.f32 %v5524, %v6053
        %v6055 = vpop.f32.mrb[0].mxu0
        %6056 = vmatprep.mubr.bf16.mxu0 0
        %6057 = vmatmul.mubr.bf16.gmra.mrb[0].mxu0 %v5741
        %v6058 = vpop.f32.mrb[0].mxu0
        %v6059 = vadd.f32 %v5529, %v6058
        %v6060 = vpop.f32.mrb[0].mxu0
        %v6061 = vpop.f32.mrb[0].mxu0
        %v6062 = vadd.f32 %v5532, %v6061
        %v6063 = vpop.f32.mrb[0].mxu0
        %6064 = vmatprep.mubr.bf16.mxu0 0
        %6065 = vmatmul.mubr.bf16.gmra.mrb[0].mxu0 %v5744
        %v6066 = vpop.f32.mrb[0].mxu0
        %v6067 = vadd.f32 %v5537, %v6066
        %v6068 = vpop.f32.mrb[0].mxu0
        %v6069 = vpop.f32.mrb[0].mxu0
        %v6070 = vadd.f32 %v5540, %v6069
        %v6071 = vpop.f32.mrb[0].mxu0
        %6072 = vmatprep.mubr.bf16.mxu0 0
        %6073 = vmatmul.mubr.bf16.gmra.mrb[0].mxu0 %v5747
        %v6074 = vpop.f32.mrb[0].mxu0
        %v6075 = vadd.f32 %v5545, %v6074
        %v6076 = vpop.f32.mrb[0].mxu0
        %v6077 = vpop.f32.mrb[0].mxu0
        %v6078 = vadd.f32 %v5548, %v6077
        %v6079 = vpop.f32.mrb[0].mxu0
        %6080 = vmatprep.mubr.bf16.mxu0 0
        %6081 = vmatmul.mubr.bf16.gmra.mrb[0].mxu0 %v5750
        %v6082 = vpop.f32.mrb[0].mxu0
        %v6083 = vadd.f32 %v5553, %v6082
        %v6084 = vpop.f32.mrb[0].mxu0
        %v6085 = vpop.f32.mrb[0].mxu0
        %v6086 = vadd.f32 %v5556, %v6085
        %v6087 = vpop.f32.mrb[0].mxu0
        %6088 = vmatprep.mubr.bf16.mxu0 0
        %6089 = vmatmul.mubr.bf16.gmra.mrb[0].mxu0 %v5753
        %v6090 = vpop.f32.mrb[0].mxu0
        %v6091 = vadd.f32 %v5561, %v6090
        %v6092 = vpop.f32.mrb[0].mxu0
        %v6093 = vpop.f32.mrb[0].mxu0
        %v6094 = vadd.f32 %v5564, %v6093
        %v6095 = vpop.f32.mrb[0].mxu0
        %6096 = vmatprep.mubr.bf16.mxu0 0
        %6097 = vmatmul.mubr.bf16.gmra.mrb[0].mxu0 %v5756
        %v6098 = vpop.f32.mrb[0].mxu0
        %v6099 = vadd.f32 %v5569, %v6098
        %v6100 = vpop.f32.mrb[0].mxu0
        %v6101 = vpop.f32.mrb[0].mxu0
        %v6102 = vadd.f32 %v5572, %v6101
        %v6103 = vpop.f32.mrb[0].mxu0
        %6104 = vmatprep.mubr.bf16.mxu0 0
        %6105 = vmatmul.mubr.bf16.gmra.mrb[0].mxu0 %v5759
        %v6106 = vpop.f32.mrb[0].mxu0
        %v6107 = vadd.f32 %v5577, %v6106
        %v6108 = vpop.f32.mrb[0].mxu0
        %v6109 = vpop.f32.mrb[0].mxu0
        %v6110 = vadd.f32 %v5580, %v6109
        %v6111 = vpop.f32.mrb[0].mxu0
        %6112 = vmatprep.mubr.bf16.mxu0 0
        %6113 = vmatmul.mubr.bf16.gmra.mrb[0].mxu0 %v5762
        %v6114 = vpop.f32.mrb[0].mxu0
        %v6115 = vadd.f32 %v5585, %v6114
        %v6116 = vpop.f32.mrb[0].mxu0
        %v6117 = vpop.f32.mrb[0].mxu0
        %v6118 = vadd.f32 %v5588, %v6117
        %v6119 = vpop.f32.mrb[0].mxu0
        %6120 = vmatprep.mubr.bf16.mxu0 0
        %6121 = vmatmul.mubr.bf16.gmra.mrb[0].mxu0 %v5765
        %v6122 = vpop.f32.mrb[0].mxu0
        %v6123 = vadd.f32 %v5593, %v6122
        %v6124 = vpop.f32.mrb[0].mxu0
        %v6125 = vpop.f32.mrb[0].mxu0
        %v6126 = vadd.f32 %v5596, %v6125
        %v6127 = vpop.f32.mrb[0].mxu0
        %6128 = vmatprep.mubr.bf16.mxu0 0
        %6129 = vmatmul.mubr.bf16.gmra.mrb[0].mxu0 %v5768
        %v6130 = vpop.f32.mrb[0].mxu0
        %v6131 = vadd.f32 %v5601, %v6130
        %v6132 = vpop.f32.mrb[0].mxu0
        %v6133 = vpop.f32.mrb[0].mxu0
        %v6134 = vadd.f32 %v5604, %v6133
        %v6135 = vpop.f32.mrb[0].mxu0
        %6136 = vmatprep.mubr.bf16.mxu0 0
        %6137 = vmatmul.mubr.bf16.gmra.mrb[0].mxu0 %v5771
        %v6138 = vpop.f32.mrb[0].mxu0
        %v6139 = vadd.f32 %v5609, %v6138
        %v6140 = vpop.f32.mrb[0].mxu0
        %v6141 = vpop.f32.mrb[0].mxu0
        %v6142 = vadd.f32 %v5612, %v6141
        %v6143 = vpop.f32.mrb[0].mxu0
        %6144 = vmatprep.mubr.bf16.mxu0 0
        %6145 = vmatmul.mubr.bf16.gmra.mrb[0].mxu0 %v5774
        %v6146 = vpop.f32.mrb[0].mxu0
        %v6147 = vadd.f32 %v5617, %v6146
        %v6148 = vpop.f32.mrb[0].mxu0
        %v6149 = vpop.f32.mrb[0].mxu0
        %v6150 = vadd.f32 %v5620, %v6149
        %v6151 = vpop.f32.mrb[0].mxu0
        %6152 = vdwg.mxu0
        %v6153 = vld [vmem:[#allocation3 + $0x2] sm:$0xff]
        %v6154 = vld [vmem:[#allocation3 + $0xa] sm:$0xff]
        %v6155 = vld [vmem:[#allocation3 + $0x12] sm:$0xff]
        %v6156 = vld [vmem:[#allocation3 + $0x1a] sm:$0xff]
        %v6157 = vld [vmem:[#allocation3 + $0x22] sm:$0xff]
        %v6158 = vld [vmem:[#allocation3 + $0x2a] sm:$0xff]
        %v6159 = vld [vmem:[#allocation3 + $0x32] sm:$0xff]
        %v6160 = vld [vmem:[#allocation3 + $0x3a] sm:$0xff]
        %v6161 = vld [vmem:[#allocation3 + $0x42] sm:$0xff]
        %v6162 = vld [vmem:[#allocation3 + $0x4a] sm:$0xff]
        %v6163 = vld [vmem:[#allocation3 + $0x52] sm:$0xff]
        %v6164 = vld [vmem:[#allocation3 + $0x5a] sm:$0xff]
        %v6165 = vld [vmem:[#allocation3 + $0x62] sm:$0xff]
        %v6166 = vld [vmem:[#allocation3 + $0x6a] sm:$0xff]
        %v6167 = vld [vmem:[#allocation3 + $0x72] sm:$0xff]
        %v6168 = vld [vmem:[#allocation3 + $0x7a] sm:$0xff]
        %v6169 = vld [vmem:[#allocation3 + $0x82] sm:$0xff]
        %v6170 = vld [vmem:[#allocation3 + $0x8a] sm:$0xff]
        %v6171 = vld [vmem:[#allocation3 + $0x92] sm:$0xff]
        %v6172 = vld [vmem:[#allocation3 + $0x9a] sm:$0xff]
        %v6173 = vld [vmem:[#allocation3 + $0xa2] sm:$0xff]
        %v6174 = vld [vmem:[#allocation3 + $0xaa] sm:$0xff]
        %v6175 = vld [vmem:[#allocation3 + $0xb2] sm:$0xff]
        %v6176 = vld [vmem:[#allocation3 + $0xba] sm:$0xff]
        %v6177 = vld [vmem:[#allocation3 + $0xc2] sm:$0xff]
        %v6178 = vld [vmem:[#allocation3 + $0xca] sm:$0xff]
        %v6179 = vld [vmem:[#allocation3 + $0xd2] sm:$0xff]
        %v6180 = vld [vmem:[#allocation3 + $0xda] sm:$0xff]
        %v6181 = vld [vmem:[#allocation3 + $0xe2] sm:$0xff]
        %v6182 = vld [vmem:[#allocation3 + $0xea] sm:$0xff]
        %v6183 = vld [vmem:[#allocation3 + $0xf2] sm:$0xff]
        %v6184 = vld [vmem:[#allocation3 + $0xfa] sm:$0xff]
        %v6185 = vld [vmem:[#allocation3 + $0x102] sm:$0xff]
        %v6186 = vld [vmem:[#allocation3 + $0x10a] sm:$0xff]
        %v6187 = vld [vmem:[#allocation3 + $0x112] sm:$0xff]
        %v6188 = vld [vmem:[#allocation3 + $0x11a] sm:$0xff]
        %v6189 = vld [vmem:[#allocation3 + $0x122] sm:$0xff]
        %v6190 = vld [vmem:[#allocation3 + $0x12a] sm:$0xff]
        %v6191 = vld [vmem:[#allocation3 + $0x132] sm:$0xff]
        %v6192 = vld [vmem:[#allocation3 + $0x13a] sm:$0xff]
        %v6193 = vld [vmem:[#allocation3 + $0x142] sm:$0xff]
        %v6194 = vld [vmem:[#allocation3 + $0x14a] sm:$0xff]
        %v6195 = vld [vmem:[#allocation3 + $0x152] sm:$0xff]
        %v6196 = vld [vmem:[#allocation3 + $0x15a] sm:$0xff]
        %v6197 = vld [vmem:[#allocation3 + $0x162] sm:$0xff]
        %v6198 = vld [vmem:[#allocation3 + $0x16a] sm:$0xff]
        %v6199 = vld [vmem:[#allocation3 + $0x172] sm:$0xff]
        %v6200 = vld [vmem:[#allocation3 + $0x17a] sm:$0xff]
        %v6201 = vld [vmem:[#allocation3 + $0x182] sm:$0xff]
        %v6202 = vld [vmem:[#allocation3 + $0x18a] sm:$0xff]
        %v6203 = vld [vmem:[#allocation3 + $0x192] sm:$0xff]
        %v6204 = vld [vmem:[#allocation3 + $0x19a] sm:$0xff]
        %v6205 = vld [vmem:[#allocation3 + $0x1a2] sm:$0xff]
        %v6206 = vld [vmem:[#allocation3 + $0x1aa] sm:$0xff]
        %v6207 = vld [vmem:[#allocation3 + $0x1b2] sm:$0xff]
        %v6208 = vld [vmem:[#allocation3 + $0x1ba] sm:$0xff]
        %v6209 = vld [vmem:[#allocation3 + $0x1c2] sm:$0xff]
        %v6210 = vld [vmem:[#allocation3 + $0x1ca] sm:$0xff]
        %v6211 = vld [vmem:[#allocation3 + $0x1d2] sm:$0xff]
        %v6212 = vld [vmem:[#allocation3 + $0x1da] sm:$0xff]
        %v6213 = vld [vmem:[#allocation3 + $0x1e2] sm:$0xff]
        %v6214 = vld [vmem:[#allocation3 + $0x1ea] sm:$0xff]
        %v6215 = vld [vmem:[#allocation3 + $0x1f2] sm:$0xff]
        %v6216 = vld [vmem:[#allocation3 + $0x1fa] sm:$0xff]
        %v6217 = vld [vmem:[#allocation3 + $0x202] sm:$0xff]
        %v6218 = vld [vmem:[#allocation3 + $0x20a] sm:$0xff]
        %v6219 = vld [vmem:[#allocation3 + $0x212] sm:$0xff]
        %v6220 = vld [vmem:[#allocation3 + $0x21a] sm:$0xff]
        %v6221 = vld [vmem:[#allocation3 + $0x222] sm:$0xff]
        %v6222 = vld [vmem:[#allocation3 + $0x22a] sm:$0xff]
        %v6223 = vld [vmem:[#allocation3 + $0x232] sm:$0xff]
        %v6224 = vld [vmem:[#allocation3 + $0x23a] sm:$0xff]
        %v6225 = vld [vmem:[#allocation3 + $0x242] sm:$0xff]
        %v6226 = vld [vmem:[#allocation3 + $0x24a] sm:$0xff]
        %v6227 = vld [vmem:[#allocation3 + $0x252] sm:$0xff]
        %v6228 = vld [vmem:[#allocation3 + $0x25a] sm:$0xff]
        %v6229 = vld [vmem:[#allocation3 + $0x262] sm:$0xff]
        %v6230 = vld [vmem:[#allocation3 + $0x26a] sm:$0xff]
        %v6231 = vld [vmem:[#allocation3 + $0x272] sm:$0xff]
        %v6232 = vld [vmem:[#allocation3 + $0x27a] sm:$0xff]
        %v6233 = vld [vmem:[#allocation3 + $0x282] sm:$0xff]
        %v6234 = vld [vmem:[#allocation3 + $0x28a] sm:$0xff]
        %v6235 = vld [vmem:[#allocation3 + $0x292] sm:$0xff]
        %v6236 = vld [vmem:[#allocation3 + $0x29a] sm:$0xff]
        %v6237 = vld [vmem:[#allocation3 + $0x2a2] sm:$0xff]
        %v6238 = vld [vmem:[#allocation3 + $0x2aa] sm:$0x3f]
        %v6239 = vpack.c.bf16 %v6154, %v6153
        %v6240 = vpack.c.bf16 %v6156, %v6155
        %v6241 = vpack.c.bf16 %v6158, %v6157
        %v6242 = vpack.c.bf16 %v6160, %v6159
        %v6243 = vpack.c.bf16 %v6162, %v6161
        %v6244 = vpack.c.bf16 %v6164, %v6163
        %v6245 = vpack.c.bf16 %v6166, %v6165
        %v6246 = vpack.c.bf16 %v6168, %v6167
        %v6247 = vpack.c.bf16 %v6170, %v6169
        %v6248 = vpack.c.bf16 %v6172, %v6171
        %v6249 = vpack.c.bf16 %v6174, %v6173
        %v6250 = vpack.c.bf16 %v6176, %v6175
        %v6251 = vpack.c.bf16 %v6178, %v6177
        %v6252 = vpack.c.bf16 %v6180, %v6179
        %v6253 = vpack.c.bf16 %v6182, %v6181
        %v6254 = vpack.c.bf16 %v6184, %v6183
        %v6255 = vpack.c.bf16 %v6186, %v6185
        %v6256 = vpack.c.bf16 %v6188, %v6187
        %v6257 = vpack.c.bf16 %v6190, %v6189
        %v6258 = vpack.c.bf16 %v6192, %v6191
        %v6259 = vpack.c.bf16 %v6194, %v6193
        %v6260 = vpack.c.bf16 %v6196, %v6195
        %v6261 = vpack.c.bf16 %v6198, %v6197
        %v6262 = vpack.c.bf16 %v6200, %v6199
        %v6263 = vpack.c.bf16 %v6202, %v6201
        %v6264 = vpack.c.bf16 %v6204, %v6203
        %v6265 = vpack.c.bf16 %v6206, %v6205
        %v6266 = vpack.c.bf16 %v6208, %v6207
        %v6267 = vpack.c.bf16 %v6210, %v6209
        %v6268 = vpack.c.bf16 %v6212, %v6211
        %v6269 = vpack.c.bf16 %v6214, %v6213
        %v6270 = vpack.c.bf16 %v6216, %v6215
        %v6271 = vpack.c.bf16 %v6218, %v6217
        %v6272 = vpack.c.bf16 %v6220, %v6219
        %v6273 = vpack.c.bf16 %v6222, %v6221
        %v6274 = vpack.c.bf16 %v6224, %v6223
        %v6275 = vpack.c.bf16 %v6226, %v6225
        %v6276 = vpack.c.bf16 %v6228, %v6227
        %v6277 = vpack.c.bf16 %v6230, %v6229
        %v6278 = vpack.c.bf16 %v6232, %v6231
        %v6279 = vpack.c.bf16 %v6234, %v6233
        %v6280 = vpack.c.bf16 %v6236, %v6235
        %v6281 = vpack.c.bf16 %v6238, %v6237
        %s6282 = scalar_lea.vmem %s2, 64
        %v6283 = vld [vmem:[%s6282] sm:$0xf]
        %v6284 = vld [vmem:[%s6282 + $0x4] sm:$0xf]
        %v6285 = vld [vmem:[%s6282 + $0x8] sm:$0xf]
        %v6286 = vld [vmem:[%s6282 + $0xc] sm:$0xf]
        %v6287 = vld [vmem:[%s6282 + $0x10] sm:$0xf]
        %v6288 = vld [vmem:[%s6282 + $0x14] sm:$0xf]
        %v6289 = vld [vmem:[%s6282 + $0x18] sm:$0xf]
        %v6290 = vld [vmem:[%s6282 + $0x1c] sm:$0xf]
        %v6299 = vunpack.c.l.b16 %v6283
        %v6300 = vunpack.c.l.b16 %v6284
        %v6301 = vunpack.c.l.b16 %v6285
        %v6302 = vunpack.c.l.b16 %v6286
        %v6303 = vunpack.c.l.b16 %v6287
        %v6304 = vunpack.c.l.b16 %v6288
        %v6305 = vunpack.c.l.b16 %v6289
        %v6306 = vunpack.c.l.b16 %v6290
        %v6307 = vpack.c.b16 %v6300, %v6299
        %v6308 = vpack.c.b16 %v6302, %v6301
        %v6309 = vpack.c.b16 %v6304, %v6303
        %v6310 = vpack.c.b16 %v6306, %v6305
        %v6316 = vsel %vm4561, %v6239, 0
        %v6319 = vsel %vm4561, %v6240, 0
        %v6322 = vsel %vm4561, %v6241, 0
        %v6325 = vsel %vm4561, %v6242, 0
        %v6328 = vsel %vm4561, %v6243, 0
        %v6331 = vsel %vm4561, %v6244, 0
        %v6334 = vsel %vm4561, %v6245, 0
        %v6337 = vsel %vm4561, %v6246, 0
        %v6340 = vsel %vm4561, %v6247, 0
        %v6343 = vsel %vm4561, %v6248, 0
        %v6346 = vsel %vm4561, %v6249, 0
        %v6349 = vsel %vm4561, %v6250, 0
        %v6352 = vsel %vm4561, %v6251, 0
        %v6355 = vsel %vm4561, %v6252, 0
        %v6358 = vsel %vm4561, %v6253, 0
        %v6361 = vsel %vm4561, %v6254, 0
        %v6364 = vsel %vm4561, %v6255, 0
        %v6367 = vsel %vm4561, %v6256, 0
        %v6370 = vsel %vm4561, %v6257, 0
        %v6373 = vsel %vm4561, %v6258, 0
        %v6376 = vsel %vm4561, %v6259, 0
        %v6379 = vsel %vm4561, %v6260, 0
        %v6382 = vsel %vm4561, %v6261, 0
        %v6385 = vsel %vm4561, %v6262, 0
        %v6388 = vsel %vm4561, %v6263, 0
        %v6391 = vsel %vm4561, %v6264, 0
        %v6394 = vsel %vm4561, %v6265, 0
        %v6397 = vsel %vm4561, %v6266, 0
        %v6400 = vsel %vm4561, %v6267, 0
        %v6403 = vsel %vm4561, %v6268, 0
        %v6406 = vsel %vm4561, %v6269, 0
        %v6409 = vsel %vm4561, %v6270, 0
        %v6412 = vsel %vm4561, %v6271, 0
        %v6415 = vsel %vm4561, %v6272, 0
        %v6418 = vsel %vm4561, %v6273, 0
        %v6421 = vsel %vm4561, %v6274, 0
        %v6424 = vsel %vm4561, %v6275, 0
        %v6427 = vsel %vm4561, %v6276, 0
        %v6430 = vsel %vm4561, %v6277, 0
        %v6433 = vsel %vm4561, %v6278, 0
        %v6436 = vsel %vm4561, %v6279, 0
        %v6439 = vsel %vm4561, %v6280, 0
        %v6442 = vsel %vm4561, %v6281, 0
        %6444 = vmatprep.subr.bf16.mxu0 0
        %6445 = vmatpush1.bf16.msra.mxu0 %v6307
        %6446 = vmatprep.subr.bf16.mxu0 0
        %6447 = vmatpush1.bf16.msra.mxu0 %v6308
        %6448 = vmatprep.subr.bf16.mxu0 0
        %6449 = vmatpush1.bf16.msra.mxu0 %v6309
        %6450 = vmatprep.subr.bf16.mxu0 0
        %6451 = vmatpush1.bf16.msra.mxu0 %v6310
        %6452 = vmatprep.subr.bf16.mxu0 0
        %6453 = vmatpush1.bf16.msra.mxu0 0
        %6454 = vmatprep.subr.bf16.mxu0 0
        %6455 = vmatpush1.bf16.msra.mxu0 0
        %6456 = vmatprep.subr.bf16.mxu0 0
        %6457 = vmatpush1.bf16.msra.mxu0 0
        %6458 = vmatprep.subr.bf16.mxu0 0
        %6459 = vmatpush1.bf16.msra.mxu0 0
        %6460 = vmatprep.subr.bf16.mxu0 0
        %6461 = vmatpush1.bf16.msra.mxu0 0
        %6462 = vmatprep.subr.bf16.mxu0 0
        %6463 = vmatpush1.bf16.msra.mxu0 0
        %6464 = vmatprep.subr.bf16.mxu0 0
        %6465 = vmatpush1.bf16.msra.mxu0 0
        %6466 = vmatprep.subr.bf16.mxu0 0
        %6467 = vmatpush1.bf16.msra.mxu0 0
        %6468 = vmatprep.subr.bf16.mxu0 0
        %6469 = vmatpush1.bf16.msra.mxu0 0
        %6470 = vmatprep.subr.bf16.mxu0 0
        %6471 = vmatpush1.bf16.msra.mxu0 0
        %6472 = vmatprep.subr.bf16.mxu0 0
        %6473 = vmatpush1.bf16.msra.mxu0 0
        %6474 = vmatprep.subr.bf16.mxu0 0
        %6475 = vmatpush1.bf16.msra.mxu0 0
        %6476 = vmatprep.mubr.bf16.mxu0 0
        %6477 = vmatmul.mubr.bf16.gmra.mrb[0].mxu0 %v6316
        %v6478 = vpop.f32.mrb[0].mxu0
        %v6479 = vadd.f32 0.0, %v6478
        %v6480 = vpop.f32.mrb[0].mxu0
        %v6481 = vpop.f32.mrb[0].mxu0
        %v6482 = vadd.f32 0.0, %v6481
        %v6483 = vpop.f32.mrb[0].mxu0
        %6484 = vmatprep.mubr.bf16.mxu0 0
        %6485 = vmatmul.mubr.bf16.gmra.mrb[0].mxu0 %v6319
        %v6486 = vpop.f32.mrb[0].mxu0
        %v6487 = vadd.f32 0.0, %v6486
        %v6488 = vpop.f32.mrb[0].mxu0
        %v6489 = vpop.f32.mrb[0].mxu0
        %v6490 = vadd.f32 0.0, %v6489
        %v6491 = vpop.f32.mrb[0].mxu0
        %6492 = vmatprep.mubr.bf16.mxu0 0
        %6493 = vmatmul.mubr.bf16.gmra.mrb[0].mxu0 %v6322
        %v6494 = vpop.f32.mrb[0].mxu0
        %v6495 = vadd.f32 0.0, %v6494
        %v6496 = vpop.f32.mrb[0].mxu0
        %v6497 = vpop.f32.mrb[0].mxu0
        %v6498 = vadd.f32 0.0, %v6497
        %v6499 = vpop.f32.mrb[0].mxu0
        %6500 = vmatprep.mubr.bf16.mxu0 0
        %6501 = vmatmul.mubr.bf16.gmra.mrb[0].mxu0 %v6325
        %v6502 = vpop.f32.mrb[0].mxu0
        %v6503 = vadd.f32 0.0, %v6502
        %v6504 = vpop.f32.mrb[0].mxu0
        %v6505 = vpop.f32.mrb[0].mxu0
        %v6506 = vadd.f32 0.0, %v6505
        %v6507 = vpop.f32.mrb[0].mxu0
        %6508 = vmatprep.mubr.bf16.mxu0 0
        %6509 = vmatmul.mubr.bf16.gmra.mrb[0].mxu0 %v6328
        %v6510 = vpop.f32.mrb[0].mxu0
        %v6511 = vadd.f32 0.0, %v6510
        %v6512 = vpop.f32.mrb[0].mxu0
        %v6513 = vpop.f32.mrb[0].mxu0
        %v6514 = vadd.f32 0.0, %v6513
        %v6515 = vpop.f32.mrb[0].mxu0
        %6516 = vmatprep.mubr.bf16.mxu0 0
        %6517 = vmatmul.mubr.bf16.gmra.mrb[0].mxu0 %v6331
        %v6518 = vpop.f32.mrb[0].mxu0
        %v6519 = vadd.f32 0.0, %v6518
        %v6520 = vpop.f32.mrb[0].mxu0
        %v6521 = vpop.f32.mrb[0].mxu0
        %v6522 = vadd.f32 0.0, %v6521
        %v6523 = vpop.f32.mrb[0].mxu0
        %6524 = vmatprep.mubr.bf16.mxu0 0
        %6525 = vmatmul.mubr.bf16.gmra.mrb[0].mxu0 %v6334
        %v6526 = vpop.f32.mrb[0].mxu0
        %v6527 = vadd.f32 0.0, %v6526
        %v6528 = vpop.f32.mrb[0].mxu0
        %v6529 = vpop.f32.mrb[0].mxu0
        %v6530 = vadd.f32 0.0, %v6529
        %v6531 = vpop.f32.mrb[0].mxu0
        %6532 = vmatprep.mubr.bf16.mxu0 0
        %6533 = vmatmul.mubr.bf16.gmra.mrb[0].mxu0 %v6337
        %v6534 = vpop.f32.mrb[0].mxu0
        %v6535 = vadd.f32 0.0, %v6534
        %v6536 = vpop.f32.mrb[0].mxu0
        %v6537 = vpop.f32.mrb[0].mxu0
        %v6538 = vadd.f32 0.0, %v6537
        %v6539 = vpop.f32.mrb[0].mxu0
        %6540 = vmatprep.mubr.bf16.mxu0 0
        %6541 = vmatmul.mubr.bf16.gmra.mrb[0].mxu0 %v6340
        %v6542 = vpop.f32.mrb[0].mxu0
        %v6543 = vadd.f32 0.0, %v6542
        %v6544 = vpop.f32.mrb[0].mxu0
        %v6545 = vpop.f32.mrb[0].mxu0
        %v6546 = vadd.f32 0.0, %v6545
        %v6547 = vpop.f32.mrb[0].mxu0
        %6548 = vmatprep.mubr.bf16.mxu0 0
        %6549 = vmatmul.mubr.bf16.gmra.mrb[0].mxu0 %v6343
        %v6550 = vpop.f32.mrb[0].mxu0
        %v6551 = vadd.f32 0.0, %v6550
        %v6552 = vpop.f32.mrb[0].mxu0
        %v6553 = vpop.f32.mrb[0].mxu0
        %v6554 = vadd.f32 0.0, %v6553
        %v6555 = vpop.f32.mrb[0].mxu0
        %6556 = vmatprep.mubr.bf16.mxu0 0
        %6557 = vmatmul.mubr.bf16.gmra.mrb[0].mxu0 %v6346
        %v6558 = vpop.f32.mrb[0].mxu0
        %v6559 = vadd.f32 0.0, %v6558
        %v6560 = vpop.f32.mrb[0].mxu0
        %v6561 = vpop.f32.mrb[0].mxu0
        %v6562 = vadd.f32 0.0, %v6561
        %v6563 = vpop.f32.mrb[0].mxu0
        %6564 = vmatprep.mubr.bf16.mxu0 0
        %6565 = vmatmul.mubr.bf16.gmra.mrb[0].mxu0 %v6349
        %v6566 = vpop.f32.mrb[0].mxu0
        %v6567 = vadd.f32 0.0, %v6566
        %v6568 = vpop.f32.mrb[0].mxu0
        %v6569 = vpop.f32.mrb[0].mxu0
        %v6570 = vadd.f32 0.0, %v6569
        %v6571 = vpop.f32.mrb[0].mxu0
        %6572 = vmatprep.mubr.bf16.mxu0 0
        %6573 = vmatmul.mubr.bf16.gmra.mrb[0].mxu0 %v6352
        %v6574 = vpop.f32.mrb[0].mxu0
        %v6575 = vadd.f32 0.0, %v6574
        %v6576 = vpop.f32.mrb[0].mxu0
        %v6577 = vpop.f32.mrb[0].mxu0
        %v6578 = vadd.f32 0.0, %v6577
        %v6579 = vpop.f32.mrb[0].mxu0
        %6580 = vmatprep.mubr.bf16.mxu0 0
        %6581 = vmatmul.mubr.bf16.gmra.mrb[0].mxu0 %v6355
        %v6582 = vpop.f32.mrb[0].mxu0
        %v6583 = vadd.f32 0.0, %v6582
        %v6584 = vpop.f32.mrb[0].mxu0
        %v6585 = vpop.f32.mrb[0].mxu0
        %v6586 = vadd.f32 0.0, %v6585
        %v6587 = vpop.f32.mrb[0].mxu0
        %6588 = vmatprep.mubr.bf16.mxu0 0
        %6589 = vmatmul.mubr.bf16.gmra.mrb[0].mxu0 %v6358
        %v6590 = vpop.f32.mrb[0].mxu0
        %v6591 = vadd.f32 0.0, %v6590
        %v6592 = vpop.f32.mrb[0].mxu0
        %v6593 = vpop.f32.mrb[0].mxu0
        %v6594 = vadd.f32 0.0, %v6593
        %v6595 = vpop.f32.mrb[0].mxu0
        %6596 = vmatprep.mubr.bf16.mxu0 0
        %6597 = vmatmul.mubr.bf16.gmra.mrb[0].mxu0 %v6361
        %v6598 = vpop.f32.mrb[0].mxu0
        %v6599 = vadd.f32 0.0, %v6598
        %v6600 = vpop.f32.mrb[0].mxu0
        %v6601 = vpop.f32.mrb[0].mxu0
        %v6602 = vadd.f32 0.0, %v6601
        %v6603 = vpop.f32.mrb[0].mxu0
        %6604 = vmatprep.mubr.bf16.mxu0 0
        %6605 = vmatmul.mubr.bf16.gmra.mrb[0].mxu0 %v6364
        %v6606 = vpop.f32.mrb[0].mxu0
        %v6607 = vadd.f32 0.0, %v6606
        %v6608 = vpop.f32.mrb[0].mxu0
        %v6609 = vpop.f32.mrb[0].mxu0
        %v6610 = vadd.f32 0.0, %v6609
        %v6611 = vpop.f32.mrb[0].mxu0
        %6612 = vmatprep.mubr.bf16.mxu0 0
        %6613 = vmatmul.mubr.bf16.gmra.mrb[0].mxu0 %v6367
        %v6614 = vpop.f32.mrb[0].mxu0
        %v6615 = vadd.f32 0.0, %v6614
        %v6616 = vpop.f32.mrb[0].mxu0
        %v6617 = vpop.f32.mrb[0].mxu0
        %v6618 = vadd.f32 0.0, %v6617
        %v6619 = vpop.f32.mrb[0].mxu0
        %6620 = vmatprep.mubr.bf16.mxu0 0
        %6621 = vmatmul.mubr.bf16.gmra.mrb[0].mxu0 %v6370
        %v6622 = vpop.f32.mrb[0].mxu0
        %v6623 = vadd.f32 0.0, %v6622
        %v6624 = vpop.f32.mrb[0].mxu0
        %v6625 = vpop.f32.mrb[0].mxu0
        %v6626 = vadd.f32 0.0, %v6625
        %v6627 = vpop.f32.mrb[0].mxu0
        %6628 = vmatprep.mubr.bf16.mxu0 0
        %6629 = vmatmul.mubr.bf16.gmra.mrb[0].mxu0 %v6373
        %v6630 = vpop.f32.mrb[0].mxu0
        %v6631 = vadd.f32 0.0, %v6630
        %v6632 = vpop.f32.mrb[0].mxu0
        %v6633 = vpop.f32.mrb[0].mxu0
        %v6634 = vadd.f32 0.0, %v6633
        %v6635 = vpop.f32.mrb[0].mxu0
        %6636 = vmatprep.mubr.bf16.mxu0 0
        %6637 = vmatmul.mubr.bf16.gmra.mrb[0].mxu0 %v6376
        %v6638 = vpop.f32.mrb[0].mxu0
        %v6639 = vadd.f32 0.0, %v6638
        %v6640 = vpop.f32.mrb[0].mxu0
        %v6641 = vpop.f32.mrb[0].mxu0
        %v6642 = vadd.f32 0.0, %v6641
        %v6643 = vpop.f32.mrb[0].mxu0
        %6644 = vmatprep.mubr.bf16.mxu0 0
        %6645 = vmatmul.mubr.bf16.gmra.mrb[0].mxu0 %v6379
        %v6646 = vpop.f32.mrb[0].mxu0
        %v6647 = vadd.f32 0.0, %v6646
        %v6648 = vpop.f32.mrb[0].mxu0
        %v6649 = vpop.f32.mrb[0].mxu0
        %v6650 = vadd.f32 0.0, %v6649
        %v6651 = vpop.f32.mrb[0].mxu0
        %6652 = vmatprep.mubr.bf16.mxu0 0
        %6653 = vmatmul.mubr.bf16.gmra.mrb[0].mxu0 %v6382
        %v6654 = vpop.f32.mrb[0].mxu0
        %v6655 = vadd.f32 0.0, %v6654
        %v6656 = vpop.f32.mrb[0].mxu0
        %v6657 = vpop.f32.mrb[0].mxu0
        %v6658 = vadd.f32 0.0, %v6657
        %v6659 = vpop.f32.mrb[0].mxu0
        %6660 = vmatprep.mubr.bf16.mxu0 0
        %6661 = vmatmul.mubr.bf16.gmra.mrb[0].mxu0 %v6385
        %v6662 = vpop.f32.mrb[0].mxu0
        %v6663 = vadd.f32 0.0, %v6662
        %v6664 = vpop.f32.mrb[0].mxu0
        %v6665 = vpop.f32.mrb[0].mxu0
        %v6666 = vadd.f32 0.0, %v6665
        %v6667 = vpop.f32.mrb[0].mxu0
        %6668 = vmatprep.mubr.bf16.mxu0 0
        %6669 = vmatmul.mubr.bf16.gmra.mrb[0].mxu0 %v6388
        %v6670 = vpop.f32.mrb[0].mxu0
        %v6671 = vadd.f32 0.0, %v6670
        %v6672 = vpop.f32.mrb[0].mxu0
        %v6673 = vpop.f32.mrb[0].mxu0
        %v6674 = vadd.f32 0.0, %v6673
        %v6675 = vpop.f32.mrb[0].mxu0
        %6676 = vmatprep.mubr.bf16.mxu0 0
        %6677 = vmatmul.mubr.bf16.gmra.mrb[0].mxu0 %v6391
        %v6678 = vpop.f32.mrb[0].mxu0
        %v6679 = vadd.f32 0.0, %v6678
        %v6680 = vpop.f32.mrb[0].mxu0
        %v6681 = vpop.f32.mrb[0].mxu0
        %v6682 = vadd.f32 0.0, %v6681
        %v6683 = vpop.f32.mrb[0].mxu0
        %6684 = vmatprep.mubr.bf16.mxu0 0
        %6685 = vmatmul.mubr.bf16.gmra.mrb[0].mxu0 %v6394
        %v6686 = vpop.f32.mrb[0].mxu0
        %v6687 = vadd.f32 0.0, %v6686
        %v6688 = vpop.f32.mrb[0].mxu0
        %v6689 = vpop.f32.mrb[0].mxu0
        %v6690 = vadd.f32 0.0, %v6689
        %v6691 = vpop.f32.mrb[0].mxu0
        %6692 = vmatprep.mubr.bf16.mxu0 0
        %6693 = vmatmul.mubr.bf16.gmra.mrb[0].mxu0 %v6397
        %v6694 = vpop.f32.mrb[0].mxu0
        %v6695 = vadd.f32 0.0, %v6694
        %v6696 = vpop.f32.mrb[0].mxu0
        %v6697 = vpop.f32.mrb[0].mxu0
        %v6698 = vadd.f32 0.0, %v6697
        %v6699 = vpop.f32.mrb[0].mxu0
        %6700 = vmatprep.mubr.bf16.mxu0 0
        %6701 = vmatmul.mubr.bf16.gmra.mrb[0].mxu0 %v6400
        %v6702 = vpop.f32.mrb[0].mxu0
        %v6703 = vadd.f32 0.0, %v6702
        %v6704 = vpop.f32.mrb[0].mxu0
        %v6705 = vpop.f32.mrb[0].mxu0
        %v6706 = vadd.f32 0.0, %v6705
        %v6707 = vpop.f32.mrb[0].mxu0
        %6708 = vmatprep.mubr.bf16.mxu0 0
        %6709 = vmatmul.mubr.bf16.gmra.mrb[0].mxu0 %v6403
        %v6710 = vpop.f32.mrb[0].mxu0
        %v6711 = vadd.f32 0.0, %v6710
        %v6712 = vpop.f32.mrb[0].mxu0
        %v6713 = vpop.f32.mrb[0].mxu0
        %v6714 = vadd.f32 0.0, %v6713
        %v6715 = vpop.f32.mrb[0].mxu0
        %6716 = vmatprep.mubr.bf16.mxu0 0
        %6717 = vmatmul.mubr.bf16.gmra.mrb[0].mxu0 %v6406
        %v6718 = vpop.f32.mrb[0].mxu0
        %v6719 = vadd.f32 0.0, %v6718
        %v6720 = vpop.f32.mrb[0].mxu0
        %v6721 = vpop.f32.mrb[0].mxu0
        %v6722 = vadd.f32 0.0, %v6721
        %v6723 = vpop.f32.mrb[0].mxu0
        %6724 = vmatprep.mubr.bf16.mxu0 0
        %6725 = vmatmul.mubr.bf16.gmra.mrb[0].mxu0 %v6409
        %v6726 = vpop.f32.mrb[0].mxu0
        %v6727 = vadd.f32 0.0, %v6726
        %v6728 = vpop.f32.mrb[0].mxu0
        %v6729 = vpop.f32.mrb[0].mxu0
        %v6730 = vadd.f32 0.0, %v6729
        %v6731 = vpop.f32.mrb[0].mxu0
        %6732 = vmatprep.mubr.bf16.mxu0 0
        %6733 = vmatmul.mubr.bf16.gmra.mrb[0].mxu0 %v6412
        %v6734 = vpop.f32.mrb[0].mxu0
        %v6735 = vadd.f32 0.0, %v6734
        %v6736 = vpop.f32.mrb[0].mxu0
        %v6737 = vpop.f32.mrb[0].mxu0
        %v6738 = vadd.f32 0.0, %v6737
        %v6739 = vpop.f32.mrb[0].mxu0
        %6740 = vmatprep.mubr.bf16.mxu0 0
        %6741 = vmatmul.mubr.bf16.gmra.mrb[0].mxu0 %v6415
        %v6742 = vpop.f32.mrb[0].mxu0
        %v6743 = vadd.f32 0.0, %v6742
        %v6744 = vpop.f32.mrb[0].mxu0
        %v6745 = vpop.f32.mrb[0].mxu0
        %v6746 = vadd.f32 0.0, %v6745
        %v6747 = vpop.f32.mrb[0].mxu0
        %6748 = vmatprep.mubr.bf16.mxu0 0
        %6749 = vmatmul.mubr.bf16.gmra.mrb[0].mxu0 %v6418
        %v6750 = vpop.f32.mrb[0].mxu0
        %v6751 = vadd.f32 0.0, %v6750
        %v6752 = vpop.f32.mrb[0].mxu0
        %v6753 = vpop.f32.mrb[0].mxu0
        %v6754 = vadd.f32 0.0, %v6753
        %v6755 = vpop.f32.mrb[0].mxu0
        %6756 = vmatprep.mubr.bf16.mxu0 0
        %6757 = vmatmul.mubr.bf16.gmra.mrb[0].mxu0 %v6421
        %v6758 = vpop.f32.mrb[0].mxu0
        %v6759 = vadd.f32 0.0, %v6758
        %v6760 = vpop.f32.mrb[0].mxu0
        %v6761 = vpop.f32.mrb[0].mxu0
        %v6762 = vadd.f32 0.0, %v6761
        %v6763 = vpop.f32.mrb[0].mxu0
        %6764 = vmatprep.mubr.bf16.mxu0 0
        %6765 = vmatmul.mubr.bf16.gmra.mrb[0].mxu0 %v6424
        %v6766 = vpop.f32.mrb[0].mxu0
        %v6767 = vadd.f32 0.0, %v6766
        %v6768 = vpop.f32.mrb[0].mxu0
        %v6769 = vpop.f32.mrb[0].mxu0
        %v6770 = vadd.f32 0.0, %v6769
        %v6771 = vpop.f32.mrb[0].mxu0
        %6772 = vmatprep.mubr.bf16.mxu0 0
        %6773 = vmatmul.mubr.bf16.gmra.mrb[0].mxu0 %v6427
        %v6774 = vpop.f32.mrb[0].mxu0
        %v6775 = vadd.f32 0.0, %v6774
        %v6776 = vpop.f32.mrb[0].mxu0
        %v6777 = vpop.f32.mrb[0].mxu0
        %v6778 = vadd.f32 0.0, %v6777
        %v6779 = vpop.f32.mrb[0].mxu0
        %6780 = vmatprep.mubr.bf16.mxu0 0
        %6781 = vmatmul.mubr.bf16.gmra.mrb[0].mxu0 %v6430
        %v6782 = vpop.f32.mrb[0].mxu0
        %v6783 = vadd.f32 0.0, %v6782
        %v6784 = vpop.f32.mrb[0].mxu0
        %v6785 = vpop.f32.mrb[0].mxu0
        %v6786 = vadd.f32 0.0, %v6785
        %v6787 = vpop.f32.mrb[0].mxu0
        %6788 = vmatprep.mubr.bf16.mxu0 0
        %6789 = vmatmul.mubr.bf16.gmra.mrb[0].mxu0 %v6433
        %v6790 = vpop.f32.mrb[0].mxu0
        %v6791 = vadd.f32 0.0, %v6790
        %v6792 = vpop.f32.mrb[0].mxu0
        %v6793 = vpop.f32.mrb[0].mxu0
        %v6794 = vadd.f32 0.0, %v6793
        %v6795 = vpop.f32.mrb[0].mxu0
        %6796 = vmatprep.mubr.bf16.mxu0 0
        %6797 = vmatmul.mubr.bf16.gmra.mrb[0].mxu0 %v6436
        %v6798 = vpop.f32.mrb[0].mxu0
        %v6799 = vadd.f32 0.0, %v6798
        %v6800 = vpop.f32.mrb[0].mxu0
        %v6801 = vpop.f32.mrb[0].mxu0
        %v6802 = vadd.f32 0.0, %v6801
        %v6803 = vpop.f32.mrb[0].mxu0
        %6804 = vmatprep.mubr.bf16.mxu0 0
        %6805 = vmatmul.mubr.bf16.gmra.mrb[0].mxu0 %v6439
        %v6806 = vpop.f32.mrb[0].mxu0
        %v6807 = vadd.f32 0.0, %v6806
        %v6808 = vpop.f32.mrb[0].mxu0
        %v6809 = vpop.f32.mrb[0].mxu0
        %v6810 = vadd.f32 0.0, %v6809
        %v6811 = vpop.f32.mrb[0].mxu0
        %6812 = vmatprep.mubr.bf16.mxu0 0
        %6813 = vmatmul.mubr.bf16.gmra.mrb[0].mxu0 %v6442
        %v6814 = vpop.f32.mrb[0].mxu0
        %v6815 = vadd.f32 0.0, %v6814
        %v6816 = vpop.f32.mrb[0].mxu0
        %v6817 = vpop.f32.mrb[0].mxu0
        %v6818 = vadd.f32 0.0, %v6817
        %v6819 = vpop.f32.mrb[0].mxu0
        %6820 = vdwg.mxu0
        %v6821 = vadd.f32 %v5811, %v6479
        %v6822 = vadd.f32 %v5814, %v6482
        %v6823 = vadd.f32 %v5819, %v6487
        %v6824 = vadd.f32 %v5822, %v6490
        %v6825 = vadd.f32 %v5827, %v6495
        %v6826 = vadd.f32 %v5830, %v6498
        %v6827 = vadd.f32 %v5835, %v6503
        %v6828 = vadd.f32 %v5838, %v6506
        %v6829 = vadd.f32 %v5843, %v6511
        %v6830 = vadd.f32 %v5846, %v6514
        %v6831 = vadd.f32 %v5851, %v6519
        %v6832 = vadd.f32 %v5854, %v6522
        %v6833 = vadd.f32 %v5859, %v6527
        %v6834 = vadd.f32 %v5862, %v6530
        %v6835 = vadd.f32 %v5867, %v6535
        %v6836 = vadd.f32 %v5870, %v6538
        %v6837 = vadd.f32 %v5875, %v6543
        %v6838 = vadd.f32 %v5878, %v6546
        %v6839 = vadd.f32 %v5883, %v6551
        %v6840 = vadd.f32 %v5886, %v6554
        %v6841 = vadd.f32 %v5891, %v6559
        %v6842 = vadd.f32 %v5894, %v6562
        %v6843 = vadd.f32 %v5899, %v6567
        %v6844 = vadd.f32 %v5902, %v6570
        %v6845 = vadd.f32 %v5907, %v6575
        %v6846 = vadd.f32 %v5910, %v6578
        %v6847 = vadd.f32 %v5915, %v6583
        %v6848 = vadd.f32 %v5918, %v6586
        %v6849 = vadd.f32 %v5923, %v6591
        %v6850 = vadd.f32 %v5926, %v6594
        %v6851 = vadd.f32 %v5931, %v6599
        %v6852 = vadd.f32 %v5934, %v6602
        %v6853 = vadd.f32 %v5939, %v6607
        %v6854 = vadd.f32 %v5942, %v6610
        %v6855 = vadd.f32 %v5947, %v6615
        %v6856 = vadd.f32 %v5950, %v6618
        %v6857 = vadd.f32 %v5955, %v6623
        %v6858 = vadd.f32 %v5958, %v6626
        %v6859 = vadd.f32 %v5963, %v6631
        %v6860 = vadd.f32 %v5966, %v6634
        %v6861 = vadd.f32 %v5971, %v6639
        %v6862 = vadd.f32 %v5974, %v6642
        %v6863 = vadd.f32 %v5979, %v6647
        %v6864 = vadd.f32 %v5982, %v6650
        %v6865 = vadd.f32 %v5987, %v6655
        %v6866 = vadd.f32 %v5990, %v6658
        %v6867 = vadd.f32 %v5995, %v6663
        %v6868 = vadd.f32 %v5998, %v6666
        %v6869 = vadd.f32 %v6003, %v6671
        %v6870 = vadd.f32 %v6006, %v6674
        %v6871 = vadd.f32 %v6011, %v6679
        %v6872 = vadd.f32 %v6014, %v6682
        %v6873 = vadd.f32 %v6019, %v6687
        %v6874 = vadd.f32 %v6022, %v6690
        %v6875 = vadd.f32 %v6027, %v6695
        %v6876 = vadd.f32 %v6030, %v6698
        %v6877 = vadd.f32 %v6035, %v6703
        %v6878 = vadd.f32 %v6038, %v6706
        %v6879 = vadd.f32 %v6043, %v6711
        %v6880 = vadd.f32 %v6046, %v6714
        %v6881 = vadd.f32 %v6051, %v6719
        %v6882 = vadd.f32 %v6054, %v6722
        %v6883 = vadd.f32 %v6059, %v6727
        %v6884 = vadd.f32 %v6062, %v6730
        %v6885 = vadd.f32 %v6067, %v6735
        %v6886 = vadd.f32 %v6070, %v6738
        %v6887 = vadd.f32 %v6075, %v6743
        %v6888 = vadd.f32 %v6078, %v6746
        %v6889 = vadd.f32 %v6083, %v6751
        %v6890 = vadd.f32 %v6086, %v6754
        %v6891 = vadd.f32 %v6091, %v6759
        %v6892 = vadd.f32 %v6094, %v6762
        %v6893 = vadd.f32 %v6099, %v6767
        %v6894 = vadd.f32 %v6102, %v6770
        %v6895 = vadd.f32 %v6107, %v6775
        %v6896 = vadd.f32 %v6110, %v6778
        %v6897 = vadd.f32 %v6115, %v6783
        %v6898 = vadd.f32 %v6118, %v6786
        %v6899 = vadd.f32 %v6123, %v6791
        %v6900 = vadd.f32 %v6126, %v6794
        %v6901 = vadd.f32 %v6131, %v6799
        %v6902 = vadd.f32 %v6134, %v6802
        %v6903 = vadd.f32 %v6139, %v6807
        %v6904 = vadd.f32 %v6142, %v6810
        %v6905 = vadd.f32 %v6147, %v6815
        %v6906 = vadd.f32 %v6150, %v6818
        %v6907 = vlaneseq
        %v6908 = vshrl.u32 %v6907, 7
        %v6909 = vsub.s32 0, %v6908
        %v6910 = vrot.slane %v4817, %v6909
        %v6911 = vadd.f32 %v6821, %v6910
        %v6912 = vadd.f32 %v6822, %v6910
        %v6913 = vadd.f32 %v6823, %v6910
        %v6914 = vadd.f32 %v6824, %v6910
        %v6915 = vadd.f32 %v6825, %v6910
        %v6916 = vadd.f32 %v6826, %v6910
        %v6917 = vadd.f32 %v6827, %v6910
        %v6918 = vadd.f32 %v6828, %v6910
        %v6919 = vadd.f32 %v6829, %v6910
        %v6920 = vadd.f32 %v6830, %v6910
        %v6921 = vadd.f32 %v6831, %v6910
        %v6922 = vadd.f32 %v6832, %v6910
        %v6923 = vadd.f32 %v6833, %v6910
        %v6924 = vadd.f32 %v6834, %v6910
        %v6925 = vadd.f32 %v6835, %v6910
        %v6926 = vadd.f32 %v6836, %v6910
        %v6927 = vadd.f32 %v6837, %v6910
        %v6928 = vadd.f32 %v6838, %v6910
        %v6929 = vadd.f32 %v6839, %v6910
        %v6930 = vadd.f32 %v6840, %v6910
        %v6931 = vadd.f32 %v6841, %v6910
        %v6932 = vadd.f32 %v6842, %v6910
        %v6933 = vadd.f32 %v6843, %v6910
        %v6934 = vadd.f32 %v6844, %v6910
        %v6935 = vadd.f32 %v6845, %v6910
        %v6936 = vadd.f32 %v6846, %v6910
        %v6937 = vadd.f32 %v6847, %v6910
        %v6938 = vadd.f32 %v6848, %v6910
        %v6939 = vadd.f32 %v6849, %v6910
        %v6940 = vadd.f32 %v6850, %v6910
        %v6941 = vadd.f32 %v6851, %v6910
        %v6942 = vadd.f32 %v6852, %v6910
        %v6943 = vadd.f32 %v6853, %v6910
        %v6944 = vadd.f32 %v6854, %v6910
        %v6945 = vadd.f32 %v6855, %v6910
        %v6946 = vadd.f32 %v6856, %v6910
        %v6947 = vadd.f32 %v6857, %v6910
        %v6948 = vadd.f32 %v6858, %v6910
        %v6949 = vadd.f32 %v6859, %v6910
        %v6950 = vadd.f32 %v6860, %v6910
        %v6951 = vadd.f32 %v6861, %v6910
        %v6952 = vadd.f32 %v6862, %v6910
        %v6953 = vadd.f32 %v6863, %v6910
        %v6954 = vadd.f32 %v6864, %v6910
        %v6955 = vadd.f32 %v6865, %v6910
        %v6956 = vadd.f32 %v6866, %v6910
        %v6957 = vadd.f32 %v6867, %v6910
        %v6958 = vadd.f32 %v6868, %v6910
        %v6959 = vadd.f32 %v6869, %v6910
        %v6960 = vadd.f32 %v6870, %v6910
        %v6961 = vadd.f32 %v6871, %v6910
        %v6962 = vadd.f32 %v6872, %v6910
        %v6963 = vadd.f32 %v6873, %v6910
        %v6964 = vadd.f32 %v6874, %v6910
        %v6965 = vadd.f32 %v6875, %v6910
        %v6966 = vadd.f32 %v6876, %v6910
        %v6967 = vadd.f32 %v6877, %v6910
        %v6968 = vadd.f32 %v6878, %v6910
        %v6969 = vadd.f32 %v6879, %v6910
        %v6970 = vadd.f32 %v6880, %v6910
        %v6971 = vadd.f32 %v6881, %v6910
        %v6972 = vadd.f32 %v6882, %v6910
        %v6973 = vadd.f32 %v6883, %v6910
        %v6974 = vadd.f32 %v6884, %v6910
        %v6975 = vadd.f32 %v6885, %v6910
        %v6976 = vadd.f32 %v6886, %v6910
        %v6977 = vadd.f32 %v6887, %v6910
        %v6978 = vadd.f32 %v6888, %v6910
        %v6979 = vadd.f32 %v6889, %v6910
        %v6980 = vadd.f32 %v6890, %v6910
        %v6981 = vadd.f32 %v6891, %v6910
        %v6982 = vadd.f32 %v6892, %v6910
        %v6983 = vadd.f32 %v6893, %v6910
        %v6984 = vadd.f32 %v6894, %v6910
        %v6985 = vadd.f32 %v6895, %v6910
        %v6986 = vadd.f32 %v6896, %v6910
        %v6987 = vadd.f32 %v6897, %v6910
        %v6988 = vadd.f32 %v6898, %v6910
        %v6989 = vadd.f32 %v6899, %v6910
        %v6990 = vadd.f32 %v6900, %v6910
        %v6991 = vadd.f32 %v6901, %v6910
        %v6992 = vadd.f32 %v6902, %v6910
        %v6993 = vadd.f32 %v6903, %v6910
        %v6994 = vadd.f32 %v6904, %v6910
        %v6995 = vadd.f32 %v6905, %v6910
        %v6996 = vadd.f32 %v6906, %v6910
        %v6997 = vmax.f32 %v6911, 0.0
        %v6998 = vmax.f32 %v6912, 0.0
        %v6999 = vmax.f32 %v6913, 0.0
        %v7000 = vmax.f32 %v6914, 0.0
        %v7001 = vmax.f32 %v6915, 0.0
        %v7002 = vmax.f32 %v6916, 0.0
        %v7003 = vmax.f32 %v6917, 0.0
        %v7004 = vmax.f32 %v6918, 0.0
        %v7005 = vmax.f32 %v6919, 0.0
        %v7006 = vmax.f32 %v6920, 0.0
        %v7007 = vmax.f32 %v6921, 0.0
        %v7008 = vmax.f32 %v6922, 0.0
        %v7009 = vmax.f32 %v6923, 0.0
        %v7010 = vmax.f32 %v6924, 0.0
        %v7011 = vmax.f32 %v6925, 0.0
        %v7012 = vmax.f32 %v6926, 0.0
        %v7013 = vmax.f32 %v6927, 0.0
        %v7014 = vmax.f32 %v6928, 0.0
        %v7015 = vmax.f32 %v6929, 0.0
        %v7016 = vmax.f32 %v6930, 0.0
        %v7017 = vmax.f32 %v6931, 0.0
        %v7018 = vmax.f32 %v6932, 0.0
        %v7019 = vmax.f32 %v6933, 0.0
        %v7020 = vmax.f32 %v6934, 0.0
        %v7021 = vmax.f32 %v6935, 0.0
        %v7022 = vmax.f32 %v6936, 0.0
        %v7023 = vmax.f32 %v6937, 0.0
        %v7024 = vmax.f32 %v6938, 0.0
        %v7025 = vmax.f32 %v6939, 0.0
        %v7026 = vmax.f32 %v6940, 0.0
        %v7027 = vmax.f32 %v6941, 0.0
        %v7028 = vmax.f32 %v6942, 0.0
        %v7029 = vmax.f32 %v6943, 0.0
        %v7030 = vmax.f32 %v6944, 0.0
        %v7031 = vmax.f32 %v6945, 0.0
        %v7032 = vmax.f32 %v6946, 0.0
        %v7033 = vmax.f32 %v6947, 0.0
        %v7034 = vmax.f32 %v6948, 0.0
        %v7035 = vmax.f32 %v6949, 0.0
        %v7036 = vmax.f32 %v6950, 0.0
        %v7037 = vmax.f32 %v6951, 0.0
        %v7038 = vmax.f32 %v6952, 0.0
        %v7039 = vmax.f32 %v6953, 0.0
        %v7040 = vmax.f32 %v6954, 0.0
        %v7041 = vmax.f32 %v6955, 0.0
        %v7042 = vmax.f32 %v6956, 0.0
        %v7043 = vmax.f32 %v6957, 0.0
        %v7044 = vmax.f32 %v6958, 0.0
        %v7045 = vmax.f32 %v6959, 0.0
        %v7046 = vmax.f32 %v6960, 0.0
        %v7047 = vmax.f32 %v6961, 0.0
        %v7048 = vmax.f32 %v6962, 0.0
        %v7049 = vmax.f32 %v6963, 0.0
        %v7050 = vmax.f32 %v6964, 0.0
        %v7051 = vmax.f32 %v6965, 0.0
        %v7052 = vmax.f32 %v6966, 0.0
        %v7053 = vmax.f32 %v6967, 0.0
        %v7054 = vmax.f32 %v6968, 0.0
        %v7055 = vmax.f32 %v6969, 0.0
        %v7056 = vmax.f32 %v6970, 0.0
        %v7057 = vmax.f32 %v6971, 0.0
        %v7058 = vmax.f32 %v6972, 0.0
        %v7059 = vmax.f32 %v6973, 0.0
        %v7060 = vmax.f32 %v6974, 0.0
        %v7061 = vmax.f32 %v6975, 0.0
        %v7062 = vmax.f32 %v6976, 0.0
        %v7063 = vmax.f32 %v6977, 0.0
        %v7064 = vmax.f32 %v6978, 0.0
        %v7065 = vmax.f32 %v6979, 0.0
        %v7066 = vmax.f32 %v6980, 0.0
        %v7067 = vmax.f32 %v6981, 0.0
        %v7068 = vmax.f32 %v6982, 0.0
        %v7069 = vmax.f32 %v6983, 0.0
        %v7070 = vmax.f32 %v6984, 0.0
        %v7071 = vmax.f32 %v6985, 0.0
        %v7072 = vmax.f32 %v6986, 0.0
        %v7073 = vmax.f32 %v6987, 0.0
        %v7074 = vmax.f32 %v6988, 0.0
        %v7075 = vmax.f32 %v6989, 0.0
        %v7076 = vmax.f32 %v6990, 0.0
        %v7077 = vmax.f32 %v6991, 0.0
        %v7078 = vmax.f32 %v6992, 0.0
        %v7079 = vmax.f32 %v6993, 0.0
        %v7080 = vmax.f32 %v6994, 0.0
        %v7081 = vmax.f32 %v6995, 0.0
        %v7082 = vmax.f32 %v6996, 0.0
        %7083 = vst.msk [vmem:[#allocation2] sm:$0xff] %vm4561, %v6997
        %7084 = vst.msk [vmem:[#allocation2 + $0x8] sm:$0xff] %vm4561, %v6998
        %7085 = vst.msk [vmem:[#allocation2 + $0x10] sm:$0xff] %vm4561, %v6999
        %7086 = vst.msk [vmem:[#allocation2 + $0x18] sm:$0xff] %vm4561, %v7000
        %7087 = vst.msk [vmem:[#allocation2 + $0x20] sm:$0xff] %vm4561, %v7001
        %7088 = vst.msk [vmem:[#allocation2 + $0x28] sm:$0xff] %vm4561, %v7002
        %7089 = vst.msk [vmem:[#allocation2 + $0x30] sm:$0xff] %vm4561, %v7003
        %7090 = vst.msk [vmem:[#allocation2 + $0x38] sm:$0xff] %vm4561, %v7004
        %7091 = vst.msk [vmem:[#allocation2 + $0x40] sm:$0xff] %vm4561, %v7005
        %7092 = vst.msk [vmem:[#allocation2 + $0x48] sm:$0xff] %vm4561, %v7006
        %7093 = vst.msk [vmem:[#allocation2 + $0x50] sm:$0xff] %vm4561, %v7007
        %7094 = vst.msk [vmem:[#allocation2 + $0x58] sm:$0xff] %vm4561, %v7008
        %7095 = vst.msk [vmem:[#allocation2 + $0x60] sm:$0xff] %vm4561, %v7009
        %7096 = vst.msk [vmem:[#allocation2 + $0x68] sm:$0xff] %vm4561, %v7010
        %7097 = vst.msk [vmem:[#allocation2 + $0x70] sm:$0xff] %vm4561, %v7011
        %7098 = vst.msk [vmem:[#allocation2 + $0x78] sm:$0xff] %vm4561, %v7012
        %7099 = vst.msk [vmem:[#allocation2 + $0x80] sm:$0xff] %vm4561, %v7013
        %7100 = vst.msk [vmem:[#allocation2 + $0x88] sm:$0xff] %vm4561, %v7014
        %7101 = vst.msk [vmem:[#allocation2 + $0x90] sm:$0xff] %vm4561, %v7015
        %7102 = vst.msk [vmem:[#allocation2 + $0x98] sm:$0xff] %vm4561, %v7016
        %7103 = vst.msk [vmem:[#allocation2 + $0xa0] sm:$0xff] %vm4561, %v7017
        %7104 = vst.msk [vmem:[#allocation2 + $0xa8] sm:$0xff] %vm4561, %v7018
        %7105 = vst.msk [vmem:[#allocation2 + $0xb0] sm:$0xff] %vm4561, %v7019
        %7106 = vst.msk [vmem:[#allocation2 + $0xb8] sm:$0xff] %vm4561, %v7020
        %7107 = vst.msk [vmem:[#allocation2 + $0xc0] sm:$0xff] %vm4561, %v7021
        %7108 = vst.msk [vmem:[#allocation2 + $0xc8] sm:$0xff] %vm4561, %v7022
        %7109 = vst.msk [vmem:[#allocation2 + $0xd0] sm:$0xff] %vm4561, %v7023
        %7110 = vst.msk [vmem:[#allocation2 + $0xd8] sm:$0xff] %vm4561, %v7024
        %7111 = vst.msk [vmem:[#allocation2 + $0xe0] sm:$0xff] %vm4561, %v7025
        %7112 = vst.msk [vmem:[#allocation2 + $0xe8] sm:$0xff] %vm4561, %v7026
        %7113 = vst.msk [vmem:[#allocation2 + $0xf0] sm:$0xff] %vm4561, %v7027
        %7114 = vst.msk [vmem:[#allocation2 + $0xf8] sm:$0xff] %vm4561, %v7028
        %7115 = vst.msk [vmem:[#allocation2 + $0x100] sm:$0xff] %vm4561, %v7029
        %7116 = vst.msk [vmem:[#allocation2 + $0x108] sm:$0xff] %vm4561, %v7030
        %7117 = vst.msk [vmem:[#allocation2 + $0x110] sm:$0xff] %vm4561, %v7031
        %7118 = vst.msk [vmem:[#allocation2 + $0x118] sm:$0xff] %vm4561, %v7032
        %7119 = vst.msk [vmem:[#allocation2 + $0x120] sm:$0xff] %vm4561, %v7033
        %7120 = vst.msk [vmem:[#allocation2 + $0x128] sm:$0xff] %vm4561, %v7034
        %7121 = vst.msk [vmem:[#allocation2 + $0x130] sm:$0xff] %vm4561, %v7035
        %7122 = vst.msk [vmem:[#allocation2 + $0x138] sm:$0xff] %vm4561, %v7036
        %7123 = vst.msk [vmem:[#allocation2 + $0x140] sm:$0xff] %vm4561, %v7037
        %7124 = vst.msk [vmem:[#allocation2 + $0x148] sm:$0xff] %vm4561, %v7038
        %7125 = vst.msk [vmem:[#allocation2 + $0x150] sm:$0xff] %vm4561, %v7039
        %7126 = vst.msk [vmem:[#allocation2 + $0x158] sm:$0xff] %vm4561, %v7040
        %7127 = vst.msk [vmem:[#allocation2 + $0x160] sm:$0xff] %vm4561, %v7041
        %7128 = vst.msk [vmem:[#allocation2 + $0x168] sm:$0xff] %vm4561, %v7042
        %7129 = vst.msk [vmem:[#allocation2 + $0x170] sm:$0xff] %vm4561, %v7043
        %7130 = vst.msk [vmem:[#allocation2 + $0x178] sm:$0xff] %vm4561, %v7044
        %7131 = vst.msk [vmem:[#allocation2 + $0x180] sm:$0xff] %vm4561, %v7045
        %7132 = vst.msk [vmem:[#allocation2 + $0x188] sm:$0xff] %vm4561, %v7046
        %7133 = vst.msk [vmem:[#allocation2 + $0x190] sm:$0xff] %vm4561, %v7047
        %7134 = vst.msk [vmem:[#allocation2 + $0x198] sm:$0xff] %vm4561, %v7048
        %7135 = vst.msk [vmem:[#allocation2 + $0x1a0] sm:$0xff] %vm4561, %v7049
        %7136 = vst.msk [vmem:[#allocation2 + $0x1a8] sm:$0xff] %vm4561, %v7050
        %7137 = vst.msk [vmem:[#allocation2 + $0x1b0] sm:$0xff] %vm4561, %v7051
        %7138 = vst.msk [vmem:[#allocation2 + $0x1b8] sm:$0xff] %vm4561, %v7052
        %7139 = vst.msk [vmem:[#allocation2 + $0x1c0] sm:$0xff] %vm4561, %v7053
        %7140 = vst.msk [vmem:[#allocation2 + $0x1c8] sm:$0xff] %vm4561, %v7054
        %7141 = vst.msk [vmem:[#allocation2 + $0x1d0] sm:$0xff] %vm4561, %v7055
        %7142 = vst.msk [vmem:[#allocation2 + $0x1d8] sm:$0xff] %vm4561, %v7056
        %7143 = vst.msk [vmem:[#allocation2 + $0x1e0] sm:$0xff] %vm4561, %v7057
        %7144 = vst.msk [vmem:[#allocation2 + $0x1e8] sm:$0xff] %vm4561, %v7058
        %7145 = vst.msk [vmem:[#allocation2 + $0x1f0] sm:$0xff] %vm4561, %v7059
        %7146 = vst.msk [vmem:[#allocation2 + $0x1f8] sm:$0xff] %vm4561, %v7060
        %7147 = vst.msk [vmem:[#allocation2 + $0x200] sm:$0xff] %vm4561, %v7061
        %7148 = vst.msk [vmem:[#allocation2 + $0x208] sm:$0xff] %vm4561, %v7062
        %7149 = vst.msk [vmem:[#allocation2 + $0x210] sm:$0xff] %vm4561, %v7063
        %7150 = vst.msk [vmem:[#allocation2 + $0x218] sm:$0xff] %vm4561, %v7064
        %7151 = vst.msk [vmem:[#allocation2 + $0x220] sm:$0xff] %vm4561, %v7065
        %7152 = vst.msk [vmem:[#allocation2 + $0x228] sm:$0xff] %vm4561, %v7066
        %7153 = vst.msk [vmem:[#allocation2 + $0x230] sm:$0xff] %vm4561, %v7067
        %7154 = vst.msk [vmem:[#allocation2 + $0x238] sm:$0xff] %vm4561, %v7068
        %7155 = vst.msk [vmem:[#allocation2 + $0x240] sm:$0xff] %vm4561, %v7069
        %7156 = vst.msk [vmem:[#allocation2 + $0x248] sm:$0xff] %vm4561, %v7070
        %7157 = vst.msk [vmem:[#allocation2 + $0x250] sm:$0xff] %vm4561, %v7071
        %7158 = vst.msk [vmem:[#allocation2 + $0x258] sm:$0xff] %vm4561, %v7072
        %7159 = vst.msk [vmem:[#allocation2 + $0x260] sm:$0xff] %vm4561, %v7073
        %7160 = vst.msk [vmem:[#allocation2 + $0x268] sm:$0xff] %vm4561, %v7074
        %7161 = vst.msk [vmem:[#allocation2 + $0x270] sm:$0xff] %vm4561, %v7075
        %7162 = vst.msk [vmem:[#allocation2 + $0x278] sm:$0xff] %vm4561, %v7076
        %7163 = vst.msk [vmem:[#allocation2 + $0x280] sm:$0xff] %vm4561, %v7077
        %7164 = vst.msk [vmem:[#allocation2 + $0x288] sm:$0xff] %vm4561, %v7078
        %7165 = vst.msk [vmem:[#allocation2 + $0x290] sm:$0xff] %vm4561, %v7079
        %7166 = vst.msk [vmem:[#allocation2 + $0x298] sm:$0xff] %vm4561, %v7080
        %7167 = vst.msk [vmem:[#allocation2 + $0x2a0] sm:$0xff] %vm4561, %v7081
        %7168 = vst.msk [vmem:[#allocation2 + $0x2a8] sm:$0x3f] %vm4731, %v7082
        loop: start=0, step=1, limit=8
        $region68: #{_lambda_.1} parent=59 // loop_pre_header
          _
        $region69: #{_lambda_.1} parent=59 // loop_header
          %s7170 = sphi 0, %s7174
          %p7171 = scmp.ge.s32.totalorder %s7170, 8
        $region70: #{_lambda_.1} parent=59 // loop_header_branch
          %7173 = sbr.rel (%p7171) target = $region74
        $region71: #{_lambda_.1} parent=59 // loop_body
          %s7175 = smul.u32 %s7170, 86
          %s7176 = smul.u32 %s7170, 44
          %s7177 = scalar_lea.vmem [#allocation2], %s7175
          %v7178 = vld [vmem:[%s7177] ss:$2 sm:$0xff]
          %s7179 = scalar_lea.vmem %s7177, 16 [#allocation2]
          %v7180 = vld [vmem:[%s7179] ss:$2 sm:$0xff]
          %s7181 = scalar_lea.vmem %s7177, 32 [#allocation2]
          %v7182 = vld [vmem:[%s7181] ss:$2 sm:$0xff]
          %s7183 = scalar_lea.vmem %s7177, 48 [#allocation2]
          %v7184 = vld [vmem:[%s7183] ss:$2 sm:$0xff]
          %s7185 = scalar_lea.vmem %s7177, 64 [#allocation2]
          %v7186 = vld [vmem:[%s7185] ss:$2 sm:$0xff]
          %s7187 = scalar_lea.vmem %s7177, 80 [#allocation2]
          %v7188 = vld [vmem:[%s7187] ss:$2 sm:$0x3]
          %s7189 = sadd.s32 %s7175, 1
          %s7190 = scalar_lea.vmem [#allocation2], %s7189
          %v7191 = vld [vmem:[%s7190] ss:$2 sm:$0xff]
          %s7192 = scalar_lea.vmem %s7190, 16 [#allocation2]
          %v7193 = vld [vmem:[%s7192] ss:$2 sm:$0xff]
          %s7194 = scalar_lea.vmem %s7190, 32 [#allocation2]
          %v7195 = vld [vmem:[%s7194] ss:$2 sm:$0xff]
          %s7196 = scalar_lea.vmem %s7190, 48 [#allocation2]
          %v7197 = vld [vmem:[%s7196] ss:$2 sm:$0xff]
          %s7198 = scalar_lea.vmem %s7190, 64 [#allocation2]
          %v7199 = vld [vmem:[%s7198] ss:$2 sm:$0xff]
          %s7200 = scalar_lea.vmem %s7190, 80 [#allocation2]
          %v7201 = vld [vmem:[%s7200] ss:$2 sm:$0x3]
          %s7202 = scalar_lea.vmem [#allocation4], %s7176
          %vm7203 = vcmask 516096
          %7204 = vst.msk [vmem:[%s7202] sm:$0x1] %vm7203, 0.0
          %v7205 = vmax.f32 %v7178, %v7191
          %v7206 = vmax.f32 %v7180, %v7193
          %v7207 = vmax.f32 %v7182, %v7195
          %v7208 = vmax.f32 %v7184, %v7197
          %v7209 = vmax.f32 %v7186, %v7199
          %v7210 = vmax.f32 %v7188, %v7201
          %s7211 = sadd.s32 %s7176, 1
          %s7212 = scalar_lea.vmem [#allocation4], %s7211
          %7213 = vst.msk [vmem:[%s7212] sm:$0xff] %vm4561, %v7205
          %7214 = vst.msk [vmem:[%s7212 + $0x8] sm:$0xff] %vm4561, %v7206
          %7215 = vst.msk [vmem:[%s7212 + $0x10] sm:$0xff] %vm4561, %v7207
          %7216 = vst.msk [vmem:[%s7212 + $0x18] sm:$0xff] %vm4561, %v7208
          %7217 = vst.msk [vmem:[%s7212 + $0x20] sm:$0xff] %vm4561, %v7209
          %vm7218 = vcmask 517120
          %7219 = vst.msk [vmem:[%s7212 + $0x28] sm:$0x3] %vm7218, %v7210
          %s7220 = sadd.s32 %s7176, 43
          %s7221 = scalar_lea.vmem [#allocation4], %s7220
          %7222 = vst.msk [vmem:[%s7221] sm:$0x1] %vm7203, 0.0
        $region72: #{_lambda_.1} parent=59 // loop_footer
          %s7174 = sadd.s32 1, %s7170
        $region73: #{_lambda_.1} parent=59 // loop_footer_branch
          %7169 = sbr.rel target = $region69
        $region74: #{_lambda_.1} parent=59 // loop_exit
          _
        %v7223 = vld [vmem:[%s4 + $0x2] sm:$0x1]
        %v7224 = vld [vmem:[#allocation4] sm:$0xff]
        %v7225 = vld [vmem:[#allocation4 + $0x8] sm:$0xff]
        %v7226 = vld [vmem:[#allocation4 + $0x10] sm:$0xff]
        %v7227 = vld [vmem:[#allocation4 + $0x18] sm:$0xff]
        %v7228 = vld [vmem:[#allocation4 + $0x20] sm:$0xff]
        %v7229 = vld [vmem:[#allocation4 + $0x28] sm:$0xff]
        %v7230 = vld [vmem:[#allocation4 + $0x30] sm:$0xff]
        %v7231 = vld [vmem:[#allocation4 + $0x38] sm:$0xff]
        %v7232 = vld [vmem:[#allocation4 + $0x40] sm:$0xff]
        %v7233 = vld [vmem:[#allocation4 + $0x48] sm:$0xff]
        %v7234 = vld [vmem:[#allocation4 + $0x50] sm:$0xff]
        %v7235 = vld [vmem:[#allocation4 + $0x58] sm:$0xff]
        %v7236 = vld [vmem:[#allocation4 + $0x60] sm:$0xff]
        %v7237 = vld [vmem:[#allocation4 + $0x68] sm:$0xff]
        %v7238 = vld [vmem:[#allocation4 + $0x70] sm:$0xff]
        %v7239 = vld [vmem:[#allocation4 + $0x78] sm:$0xff]
        %v7240 = vld [vmem:[#allocation4 + $0x80] sm:$0xff]
        %v7241 = vld [vmem:[#allocation4 + $0x88] sm:$0xff]
        %v7242 = vld [vmem:[#allocation4 + $0x90] sm:$0xff]
        %v7243 = vld [vmem:[#allocation4 + $0x98] sm:$0xff]
        %v7244 = vld [vmem:[#allocation4 + $0xa0] sm:$0xff]
        %v7245 = vld [vmem:[#allocation4 + $0xa8] sm:$0xff]
        %v7246 = vld [vmem:[#allocation4 + $0xb0] sm:$0xff]
        %v7247 = vld [vmem:[#allocation4 + $0xb8] sm:$0xff]
        %v7248 = vld [vmem:[#allocation4 + $0xc0] sm:$0xff]
        %v7249 = vld [vmem:[#allocation4 + $0xc8] sm:$0xff]
        %v7250 = vld [vmem:[#allocation4 + $0xd0] sm:$0xff]
        %v7251 = vld [vmem:[#allocation4 + $0xd8] sm:$0xff]
        %v7252 = vld [vmem:[#allocation4 + $0xe0] sm:$0xff]
        %v7253 = vld [vmem:[#allocation4 + $0xe8] sm:$0xff]
        %v7254 = vld [vmem:[#allocation4 + $0xf0] sm:$0xff]
        %v7255 = vld [vmem:[#allocation4 + $0xf8] sm:$0xff]
        %v7256 = vld [vmem:[#allocation4 + $0x100] sm:$0xff]
        %v7257 = vld [vmem:[#allocation4 + $0x108] sm:$0xff]
        %v7258 = vld [vmem:[#allocation4 + $0x110] sm:$0xff]
        %v7259 = vld [vmem:[#allocation4 + $0x118] sm:$0xff]
        %v7260 = vld [vmem:[#allocation4 + $0x120] sm:$0xff]
        %v7261 = vld [vmem:[#allocation4 + $0x128] sm:$0xff]
        %v7262 = vld [vmem:[#allocation4 + $0x130] sm:$0xff]
        %v7263 = vld [vmem:[#allocation4 + $0x138] sm:$0xff]
        %v7264 = vld [vmem:[#allocation4 + $0x140] sm:$0xff]
        %v7265 = vld [vmem:[#allocation4 + $0x148] sm:$0xff]
        %v7266 = vld [vmem:[#allocation4 + $0x150] sm:$0xff]
        %v7267 = vld [vmem:[#allocation4 + $0x158] sm:$0x3f]
        %v7268 = vpack.c.bf16 %v7225, %v7224
        %v7269 = vpack.c.bf16 %v7227, %v7226
        %v7270 = vpack.c.bf16 %v7229, %v7228
        %v7271 = vpack.c.bf16 %v7231, %v7230
        %v7272 = vpack.c.bf16 %v7233, %v7232
        %v7273 = vpack.c.bf16 %v7235, %v7234
        %v7274 = vpack.c.bf16 %v7237, %v7236
        %v7275 = vpack.c.bf16 %v7239, %v7238
        %v7276 = vpack.c.bf16 %v7241, %v7240
        %v7277 = vpack.c.bf16 %v7243, %v7242
        %v7278 = vpack.c.bf16 %v7245, %v7244
        %v7279 = vpack.c.bf16 %v7247, %v7246
        %v7280 = vpack.c.bf16 %v7249, %v7248
        %v7281 = vpack.c.bf16 %v7251, %v7250
        %v7282 = vpack.c.bf16 %v7253, %v7252
        %v7283 = vpack.c.bf16 %v7255, %v7254
        %v7284 = vpack.c.bf16 %v7257, %v7256
        %v7285 = vpack.c.bf16 %v7259, %v7258
        %v7286 = vpack.c.bf16 %v7261, %v7260
        %v7287 = vpack.c.bf16 %v7263, %v7262
        %v7288 = vpack.c.bf16 %v7265, %v7264
        %v7289 = vpack.c.bf16 %v7267, %v7266
        %v7290 = vld [vmem:[%s3] sm:$0xf]
        %v7291 = vld [vmem:[%s3 + $0x4] sm:$0xf]
        %v7292 = vld [vmem:[%s3 + $0x8] sm:$0xf]
        %v7293 = vld [vmem:[%s3 + $0xc] sm:$0xf]
        %v7294 = vld [vmem:[%s3 + $0x10] sm:$0xf]
        %v7295 = vld [vmem:[%s3 + $0x14] sm:$0xf]
        %v7296 = vld [vmem:[%s3 + $0x18] sm:$0xf]
        %v7297 = vld [vmem:[%s3 + $0x1c] sm:$0xf]
        %v7298 = vld [vmem:[#allocation4 + $0x1] sm:$0xff]
        %v7299 = vld [vmem:[#allocation4 + $0x9] sm:$0xff]
        %v7300 = vld [vmem:[#allocation4 + $0x11] sm:$0xff]
        %v7301 = vld [vmem:[#allocation4 + $0x19] sm:$0xff]
        %v7302 = vld [vmem:[#allocation4 + $0x21] sm:$0xff]
        %v7303 = vld [vmem:[#allocation4 + $0x29] sm:$0xff]
        %v7304 = vld [vmem:[#allocation4 + $0x31] sm:$0xff]
        %v7305 = vld [vmem:[#allocation4 + $0x39] sm:$0xff]
        %v7306 = vld [vmem:[#allocation4 + $0x41] sm:$0xff]
        %v7307 = vld [vmem:[#allocation4 + $0x49] sm:$0xff]
        %v7308 = vld [vmem:[#allocation4 + $0x51] sm:$0xff]
        %v7309 = vld [vmem:[#allocation4 + $0x59] sm:$0xff]
        %v7310 = vld [vmem:[#allocation4 + $0x61] sm:$0xff]
        %v7311 = vld [vmem:[#allocation4 + $0x69] sm:$0xff]
        %v7312 = vld [vmem:[#allocation4 + $0x71] sm:$0xff]
        %v7313 = vld [vmem:[#allocation4 + $0x79] sm:$0xff]
        %v7314 = vld [vmem:[#allocation4 + $0x81] sm:$0xff]
        %v7315 = vld [vmem:[#allocation4 + $0x89] sm:$0xff]
        %v7316 = vld [vmem:[#allocation4 + $0x91] sm:$0xff]
        %v7317 = vld [vmem:[#allocation4 + $0x99] sm:$0xff]
        %v7318 = vld [vmem:[#allocation4 + $0xa1] sm:$0xff]
        %v7319 = vld [vmem:[#allocation4 + $0xa9] sm:$0xff]
        %v7320 = vld [vmem:[#allocation4 + $0xb1] sm:$0xff]
        %v7321 = vld [vmem:[#allocation4 + $0xb9] sm:$0xff]
        %v7322 = vld [vmem:[#allocation4 + $0xc1] sm:$0xff]
        %v7323 = vld [vmem:[#allocation4 + $0xc9] sm:$0xff]
        %v7324 = vld [vmem:[#allocation4 + $0xd1] sm:$0xff]
        %v7325 = vld [vmem:[#allocation4 + $0xd9] sm:$0xff]
        %v7326 = vld [vmem:[#allocation4 + $0xe1] sm:$0xff]
        %v7327 = vld [vmem:[#allocation4 + $0xe9] sm:$0xff]
        %v7328 = vld [vmem:[#allocation4 + $0xf1] sm:$0xff]
        %v7329 = vld [vmem:[#allocation4 + $0xf9] sm:$0xff]
        %v7330 = vld [vmem:[#allocation4 + $0x101] sm:$0xff]
        %v7331 = vld [vmem:[#allocation4 + $0x109] sm:$0xff]
        %v7332 = vld [vmem:[#allocation4 + $0x111] sm:$0xff]
        %v7333 = vld [vmem:[#allocation4 + $0x119] sm:$0xff]
        %v7334 = vld [vmem:[#allocation4 + $0x121] sm:$0xff]
        %v7335 = vld [vmem:[#allocation4 + $0x129] sm:$0xff]
        %v7336 = vld [vmem:[#allocation4 + $0x131] sm:$0xff]
        %v7337 = vld [vmem:[#allocation4 + $0x139] sm:$0xff]
        %v7338 = vld [vmem:[#allocation4 + $0x141] sm:$0xff]
        %v7339 = vld [vmem:[#allocation4 + $0x149] sm:$0xff]
        %v7340 = vld [vmem:[#allocation4 + $0x151] sm:$0xff]
        %v7341 = vld [vmem:[#allocation4 + $0x159] sm:$0x3f]
        %v7342 = vpack.c.bf16 %v7299, %v7298
        %v7343 = vpack.c.bf16 %v7301, %v7300
        %v7344 = vpack.c.bf16 %v7303, %v7302
        %v7345 = vpack.c.bf16 %v7305, %v7304
        %v7346 = vpack.c.bf16 %v7307, %v7306
        %v7347 = vpack.c.bf16 %v7309, %v7308
        %v7348 = vpack.c.bf16 %v7311, %v7310
        %v7349 = vpack.c.bf16 %v7313, %v7312
        %v7350 = vpack.c.bf16 %v7315, %v7314
        %v7351 = vpack.c.bf16 %v7317, %v7316
        %v7352 = vpack.c.bf16 %v7319, %v7318
        %v7353 = vpack.c.bf16 %v7321, %v7320
        %v7354 = vpack.c.bf16 %v7323, %v7322
        %v7355 = vpack.c.bf16 %v7325, %v7324
        %v7356 = vpack.c.bf16 %v7327, %v7326
        %v7357 = vpack.c.bf16 %v7329, %v7328
        %v7358 = vpack.c.bf16 %v7331, %v7330
        %v7359 = vpack.c.bf16 %v7333, %v7332
        %v7360 = vpack.c.bf16 %v7335, %v7334
        %v7361 = vpack.c.bf16 %v7337, %v7336
        %v7362 = vpack.c.bf16 %v7339, %v7338
        %v7363 = vpack.c.bf16 %v7341, %v7340
        %s7364 = scalar_lea.vmem %s3, 32
        %v7365 = vld [vmem:[%s7364] sm:$0xf]
        %v7366 = vld [vmem:[%s7364 + $0x4] sm:$0xf]
        %v7367 = vld [vmem:[%s7364 + $0x8] sm:$0xf]
        %v7368 = vld [vmem:[%s7364 + $0xc] sm:$0xf]
        %v7369 = vld [vmem:[%s7364 + $0x10] sm:$0xf]
        %v7370 = vld [vmem:[%s7364 + $0x14] sm:$0xf]
        %v7371 = vld [vmem:[%s7364 + $0x18] sm:$0xf]
        %v7372 = vld [vmem:[%s7364 + $0x1c] sm:$0xf]
        %v7381 = vunpack.c.l.b16 %v7365
        %v7382 = vunpack.c.l.b16 %v7366
        %v7383 = vunpack.c.l.b16 %v7367
        %v7384 = vunpack.c.l.b16 %v7368
        %v7385 = vunpack.c.l.b16 %v7369
        %v7386 = vunpack.c.l.b16 %v7370
        %v7387 = vunpack.c.l.b16 %v7371
        %v7388 = vunpack.c.l.b16 %v7372
        %v7389 = vpack.c.b16 %v7382, %v7381
        %v7390 = vpack.c.b16 %v7384, %v7383
        %v7391 = vpack.c.b16 %v7386, %v7385
        %v7392 = vpack.c.b16 %v7388, %v7387
        %v7398 = vsel %vm4561, %v7342, 0
        %v7401 = vsel %vm4561, %v7343, 0
        %v7404 = vsel %vm4561, %v7344, 0
        %v7407 = vsel %vm4561, %v7345, 0
        %v7410 = vsel %vm4561, %v7346, 0
        %v7413 = vsel %vm4561, %v7347, 0
        %v7416 = vsel %vm4561, %v7348, 0
        %v7419 = vsel %vm4561, %v7349, 0
        %v7422 = vsel %vm4561, %v7350, 0
        %v7425 = vsel %vm4561, %v7351, 0
        %v7428 = vsel %vm4561, %v7352, 0
        %v7431 = vsel %vm4561, %v7353, 0
        %v7434 = vsel %vm4561, %v7354, 0
        %v7437 = vsel %vm4561, %v7355, 0
        %v7440 = vsel %vm4561, %v7356, 0
        %v7443 = vsel %vm4561, %v7357, 0
        %v7446 = vsel %vm4561, %v7358, 0
        %v7449 = vsel %vm4561, %v7359, 0
        %v7452 = vsel %vm4561, %v7360, 0
        %v7455 = vsel %vm4561, %v7361, 0
        %v7458 = vsel %vm4561, %v7362, 0
        %v7461 = vsel %vm4561, %v7363, 0
        %7463 = vmatprep.subr.bf16.mxu0 0
        %7464 = vmatpush1.bf16.msra.mxu0 %v7389
        %7465 = vmatprep.subr.bf16.mxu0 0
        %7466 = vmatpush1.bf16.msra.mxu0 %v7390
        %7467 = vmatprep.subr.bf16.mxu0 0
        %7468 = vmatpush1.bf16.msra.mxu0 %v7391
        %7469 = vmatprep.subr.bf16.mxu0 0
        %7470 = vmatpush1.bf16.msra.mxu0 %v7392
        %7471 = vmatprep.subr.bf16.mxu0 0
        %7472 = vmatpush1.bf16.msra.mxu0 0
        %7473 = vmatprep.subr.bf16.mxu0 0
        %7474 = vmatpush1.bf16.msra.mxu0 0
        %7475 = vmatprep.subr.bf16.mxu0 0
        %7476 = vmatpush1.bf16.msra.mxu0 0
        %7477 = vmatprep.subr.bf16.mxu0 0
        %7478 = vmatpush1.bf16.msra.mxu0 0
        %7479 = vmatprep.subr.bf16.mxu0 0
        %7480 = vmatpush1.bf16.msra.mxu0 0
        %7481 = vmatprep.subr.bf16.mxu0 0
        %7482 = vmatpush1.bf16.msra.mxu0 0
        %7483 = vmatprep.subr.bf16.mxu0 0
        %7484 = vmatpush1.bf16.msra.mxu0 0
        %7485 = vmatprep.subr.bf16.mxu0 0
        %7486 = vmatpush1.bf16.msra.mxu0 0
        %7487 = vmatprep.subr.bf16.mxu0 0
        %7488 = vmatpush1.bf16.msra.mxu0 0
        %7489 = vmatprep.subr.bf16.mxu0 0
        %7490 = vmatpush1.bf16.msra.mxu0 0
        %7491 = vmatprep.subr.bf16.mxu0 0
        %7492 = vmatpush1.bf16.msra.mxu0 0
        %7493 = vmatprep.subr.bf16.mxu0 0
        %7494 = vmatpush1.bf16.msra.mxu0 0
        %7495 = vmatprep.mubr.bf16.mxu0 0
        %7496 = vmatmul.mubr.bf16.gmra.mrb[0].mxu0 %v7398
        %v7497 = vpop.f32.mrb[0].mxu0
        %v7498 = vadd.f32 0.0, %v7497
        %v7499 = vpop.f32.mrb[0].mxu0
        %v7500 = vpop.f32.mrb[0].mxu0
        %v7501 = vadd.f32 0.0, %v7500
        %v7502 = vpop.f32.mrb[0].mxu0
        %7503 = vmatprep.mubr.bf16.mxu0 0
        %7504 = vmatmul.mubr.bf16.gmra.mrb[0].mxu0 %v7401
        %v7505 = vpop.f32.mrb[0].mxu0
        %v7506 = vadd.f32 0.0, %v7505
        %v7507 = vpop.f32.mrb[0].mxu0
        %v7508 = vpop.f32.mrb[0].mxu0
        %v7509 = vadd.f32 0.0, %v7508
        %v7510 = vpop.f32.mrb[0].mxu0
        %7511 = vmatprep.mubr.bf16.mxu0 0
        %7512 = vmatmul.mubr.bf16.gmra.mrb[0].mxu0 %v7404
        %v7513 = vpop.f32.mrb[0].mxu0
        %v7514 = vadd.f32 0.0, %v7513
        %v7515 = vpop.f32.mrb[0].mxu0
        %v7516 = vpop.f32.mrb[0].mxu0
        %v7517 = vadd.f32 0.0, %v7516
        %v7518 = vpop.f32.mrb[0].mxu0
        %7519 = vmatprep.mubr.bf16.mxu0 0
        %7520 = vmatmul.mubr.bf16.gmra.mrb[0].mxu0 %v7407
        %v7521 = vpop.f32.mrb[0].mxu0
        %v7522 = vadd.f32 0.0, %v7521
        %v7523 = vpop.f32.mrb[0].mxu0
        %v7524 = vpop.f32.mrb[0].mxu0
        %v7525 = vadd.f32 0.0, %v7524
        %v7526 = vpop.f32.mrb[0].mxu0
        %7527 = vmatprep.mubr.bf16.mxu0 0
        %7528 = vmatmul.mubr.bf16.gmra.mrb[0].mxu0 %v7410
        %v7529 = vpop.f32.mrb[0].mxu0
        %v7530 = vadd.f32 0.0, %v7529
        %v7531 = vpop.f32.mrb[0].mxu0
        %v7532 = vpop.f32.mrb[0].mxu0
        %v7533 = vadd.f32 0.0, %v7532
        %v7534 = vpop.f32.mrb[0].mxu0
        %7535 = vmatprep.mubr.bf16.mxu0 0
        %7536 = vmatmul.mubr.bf16.gmra.mrb[0].mxu0 %v7413
        %v7537 = vpop.f32.mrb[0].mxu0
        %v7538 = vadd.f32 0.0, %v7537
        %v7539 = vpop.f32.mrb[0].mxu0
        %v7540 = vpop.f32.mrb[0].mxu0
        %v7541 = vadd.f32 0.0, %v7540
        %v7542 = vpop.f32.mrb[0].mxu0
        %7543 = vmatprep.mubr.bf16.mxu0 0
        %7544 = vmatmul.mubr.bf16.gmra.mrb[0].mxu0 %v7416
        %v7545 = vpop.f32.mrb[0].mxu0
        %v7546 = vadd.f32 0.0, %v7545
        %v7547 = vpop.f32.mrb[0].mxu0
        %v7548 = vpop.f32.mrb[0].mxu0
        %v7549 = vadd.f32 0.0, %v7548
        %v7550 = vpop.f32.mrb[0].mxu0
        %7551 = vmatprep.mubr.bf16.mxu0 0
        %7552 = vmatmul.mubr.bf16.gmra.mrb[0].mxu0 %v7419
        %v7553 = vpop.f32.mrb[0].mxu0
        %v7554 = vadd.f32 0.0, %v7553
        %v7555 = vpop.f32.mrb[0].mxu0
        %v7556 = vpop.f32.mrb[0].mxu0
        %v7557 = vadd.f32 0.0, %v7556
        %v7558 = vpop.f32.mrb[0].mxu0
        %7559 = vmatprep.mubr.bf16.mxu0 0
        %7560 = vmatmul.mubr.bf16.gmra.mrb[0].mxu0 %v7422
        %v7561 = vpop.f32.mrb[0].mxu0
        %v7562 = vadd.f32 0.0, %v7561
        %v7563 = vpop.f32.mrb[0].mxu0
        %v7564 = vpop.f32.mrb[0].mxu0
        %v7565 = vadd.f32 0.0, %v7564
        %v7566 = vpop.f32.mrb[0].mxu0
        %7567 = vmatprep.mubr.bf16.mxu0 0
        %7568 = vmatmul.mubr.bf16.gmra.mrb[0].mxu0 %v7425
        %v7569 = vpop.f32.mrb[0].mxu0
        %v7570 = vadd.f32 0.0, %v7569
        %v7571 = vpop.f32.mrb[0].mxu0
        %v7572 = vpop.f32.mrb[0].mxu0
        %v7573 = vadd.f32 0.0, %v7572
        %v7574 = vpop.f32.mrb[0].mxu0
        %7575 = vmatprep.mubr.bf16.mxu0 0
        %7576 = vmatmul.mubr.bf16.gmra.mrb[0].mxu0 %v7428
        %v7577 = vpop.f32.mrb[0].mxu0
        %v7578 = vadd.f32 0.0, %v7577
        %v7579 = vpop.f32.mrb[0].mxu0
        %v7580 = vpop.f32.mrb[0].mxu0
        %v7581 = vadd.f32 0.0, %v7580
        %v7582 = vpop.f32.mrb[0].mxu0
        %7583 = vmatprep.mubr.bf16.mxu0 0
        %7584 = vmatmul.mubr.bf16.gmra.mrb[0].mxu0 %v7431
        %v7585 = vpop.f32.mrb[0].mxu0
        %v7586 = vadd.f32 0.0, %v7585
        %v7587 = vpop.f32.mrb[0].mxu0
        %v7588 = vpop.f32.mrb[0].mxu0
        %v7589 = vadd.f32 0.0, %v7588
        %v7590 = vpop.f32.mrb[0].mxu0
        %7591 = vmatprep.mubr.bf16.mxu0 0
        %7592 = vmatmul.mubr.bf16.gmra.mrb[0].mxu0 %v7434
        %v7593 = vpop.f32.mrb[0].mxu0
        %v7594 = vadd.f32 0.0, %v7593
        %v7595 = vpop.f32.mrb[0].mxu0
        %v7596 = vpop.f32.mrb[0].mxu0
        %v7597 = vadd.f32 0.0, %v7596
        %v7598 = vpop.f32.mrb[0].mxu0
        %7599 = vmatprep.mubr.bf16.mxu0 0
        %7600 = vmatmul.mubr.bf16.gmra.mrb[0].mxu0 %v7437
        %v7601 = vpop.f32.mrb[0].mxu0
        %v7602 = vadd.f32 0.0, %v7601
        %v7603 = vpop.f32.mrb[0].mxu0
        %v7604 = vpop.f32.mrb[0].mxu0
        %v7605 = vadd.f32 0.0, %v7604
        %v7606 = vpop.f32.mrb[0].mxu0
        %7607 = vmatprep.mubr.bf16.mxu0 0
        %7608 = vmatmul.mubr.bf16.gmra.mrb[0].mxu0 %v7440
        %v7609 = vpop.f32.mrb[0].mxu0
        %v7610 = vadd.f32 0.0, %v7609
        %v7611 = vpop.f32.mrb[0].mxu0
        %v7612 = vpop.f32.mrb[0].mxu0
        %v7613 = vadd.f32 0.0, %v7612
        %v7614 = vpop.f32.mrb[0].mxu0
        %7615 = vmatprep.mubr.bf16.mxu0 0
        %7616 = vmatmul.mubr.bf16.gmra.mrb[0].mxu0 %v7443
        %v7617 = vpop.f32.mrb[0].mxu0
        %v7618 = vadd.f32 0.0, %v7617
        %v7619 = vpop.f32.mrb[0].mxu0
        %v7620 = vpop.f32.mrb[0].mxu0
        %v7621 = vadd.f32 0.0, %v7620
        %v7622 = vpop.f32.mrb[0].mxu0
        %7623 = vmatprep.mubr.bf16.mxu0 0
        %7624 = vmatmul.mubr.bf16.gmra.mrb[0].mxu0 %v7446
        %v7625 = vpop.f32.mrb[0].mxu0
        %v7626 = vadd.f32 0.0, %v7625
        %v7627 = vpop.f32.mrb[0].mxu0
        %v7628 = vpop.f32.mrb[0].mxu0
        %v7629 = vadd.f32 0.0, %v7628
        %v7630 = vpop.f32.mrb[0].mxu0
        %7631 = vmatprep.mubr.bf16.mxu0 0
        %7632 = vmatmul.mubr.bf16.gmra.mrb[0].mxu0 %v7449
        %v7633 = vpop.f32.mrb[0].mxu0
        %v7634 = vadd.f32 0.0, %v7633
        %v7635 = vpop.f32.mrb[0].mxu0
        %v7636 = vpop.f32.mrb[0].mxu0
        %v7637 = vadd.f32 0.0, %v7636
        %v7638 = vpop.f32.mrb[0].mxu0
        %7639 = vmatprep.mubr.bf16.mxu0 0
        %7640 = vmatmul.mubr.bf16.gmra.mrb[0].mxu0 %v7452
        %v7641 = vpop.f32.mrb[0].mxu0
        %v7642 = vadd.f32 0.0, %v7641
        %v7643 = vpop.f32.mrb[0].mxu0
        %v7644 = vpop.f32.mrb[0].mxu0
        %v7645 = vadd.f32 0.0, %v7644
        %v7646 = vpop.f32.mrb[0].mxu0
        %7647 = vmatprep.mubr.bf16.mxu0 0
        %7648 = vmatmul.mubr.bf16.gmra.mrb[0].mxu0 %v7455
        %v7649 = vpop.f32.mrb[0].mxu0
        %v7650 = vadd.f32 0.0, %v7649
        %v7651 = vpop.f32.mrb[0].mxu0
        %v7652 = vpop.f32.mrb[0].mxu0
        %v7653 = vadd.f32 0.0, %v7652
        %v7654 = vpop.f32.mrb[0].mxu0
        %7655 = vmatprep.mubr.bf16.mxu0 0
        %7656 = vmatmul.mubr.bf16.gmra.mrb[0].mxu0 %v7458
        %v7657 = vpop.f32.mrb[0].mxu0
        %v7658 = vadd.f32 0.0, %v7657
        %v7659 = vpop.f32.mrb[0].mxu0
        %v7660 = vpop.f32.mrb[0].mxu0
        %v7661 = vadd.f32 0.0, %v7660
        %v7662 = vpop.f32.mrb[0].mxu0
        %7663 = vmatprep.mubr.bf16.mxu0 0
        %7664 = vmatmul.mubr.bf16.gmra.mrb[0].mxu0 %v7461
        %v7665 = vpop.f32.mrb[0].mxu0
        %v7666 = vadd.f32 0.0, %v7665
        %v7667 = vpop.f32.mrb[0].mxu0
        %v7668 = vpop.f32.mrb[0].mxu0
        %v7669 = vadd.f32 0.0, %v7668
        %v7670 = vpop.f32.mrb[0].mxu0
        %7671 = vdwg.mxu0
        %v7680 = vunpack.c.l.b16 %v7290
        %v7681 = vunpack.c.l.b16 %v7291
        %v7682 = vunpack.c.l.b16 %v7292
        %v7683 = vunpack.c.l.b16 %v7293
        %v7684 = vunpack.c.l.b16 %v7294
        %v7685 = vunpack.c.l.b16 %v7295
        %v7686 = vunpack.c.l.b16 %v7296
        %v7687 = vunpack.c.l.b16 %v7297
        %v7688 = vpack.c.b16 %v7681, %v7680
        %v7689 = vpack.c.b16 %v7683, %v7682
        %v7690 = vpack.c.b16 %v7685, %v7684
        %v7691 = vpack.c.b16 %v7687, %v7686
        %v7697 = vsel %vm4561, %v7268, 0
        %v7700 = vsel %vm4561, %v7269, 0
        %v7703 = vsel %vm4561, %v7270, 0
        %v7706 = vsel %vm4561, %v7271, 0
        %v7709 = vsel %vm4561, %v7272, 0
        %v7712 = vsel %vm4561, %v7273, 0
        %v7715 = vsel %vm4561, %v7274, 0
        %v7718 = vsel %vm4561, %v7275, 0
        %v7721 = vsel %vm4561, %v7276, 0
        %v7724 = vsel %vm4561, %v7277, 0
        %v7727 = vsel %vm4561, %v7278, 0
        %v7730 = vsel %vm4561, %v7279, 0
        %v7733 = vsel %vm4561, %v7280, 0
        %v7736 = vsel %vm4561, %v7281, 0
        %v7739 = vsel %vm4561, %v7282, 0
        %v7742 = vsel %vm4561, %v7283, 0
        %v7745 = vsel %vm4561, %v7284, 0
        %v7748 = vsel %vm4561, %v7285, 0
        %v7751 = vsel %vm4561, %v7286, 0
        %v7754 = vsel %vm4561, %v7287, 0
        %v7757 = vsel %vm4561, %v7288, 0
        %v7760 = vsel %vm4561, %v7289, 0
        %7762 = vmatprep.subr.bf16.mxu0 0
        %7763 = vmatpush1.bf16.msra.mxu0 %v7688
        %7764 = vmatprep.subr.bf16.mxu0 0
        %7765 = vmatpush1.bf16.msra.mxu0 %v7689
        %7766 = vmatprep.subr.bf16.mxu0 0
        %7767 = vmatpush1.bf16.msra.mxu0 %v7690
        %7768 = vmatprep.subr.bf16.mxu0 0
        %7769 = vmatpush1.bf16.msra.mxu0 %v7691
        %7770 = vmatprep.subr.bf16.mxu0 0
        %7771 = vmatpush1.bf16.msra.mxu0 0
        %7772 = vmatprep.subr.bf16.mxu0 0
        %7773 = vmatpush1.bf16.msra.mxu0 0
        %7774 = vmatprep.subr.bf16.mxu0 0
        %7775 = vmatpush1.bf16.msra.mxu0 0
        %7776 = vmatprep.subr.bf16.mxu0 0
        %7777 = vmatpush1.bf16.msra.mxu0 0
        %7778 = vmatprep.subr.bf16.mxu0 0
        %7779 = vmatpush1.bf16.msra.mxu0 0
        %7780 = vmatprep.subr.bf16.mxu0 0
        %7781 = vmatpush1.bf16.msra.mxu0 0
        %7782 = vmatprep.subr.bf16.mxu0 0
        %7783 = vmatpush1.bf16.msra.mxu0 0
        %7784 = vmatprep.subr.bf16.mxu0 0
        %7785 = vmatpush1.bf16.msra.mxu0 0
        %7786 = vmatprep.subr.bf16.mxu0 0
        %7787 = vmatpush1.bf16.msra.mxu0 0
        %7788 = vmatprep.subr.bf16.mxu0 0
        %7789 = vmatpush1.bf16.msra.mxu0 0
        %7790 = vmatprep.subr.bf16.mxu0 0
        %7791 = vmatpush1.bf16.msra.mxu0 0
        %7792 = vmatprep.subr.bf16.mxu0 0
        %7793 = vmatpush1.bf16.msra.mxu0 0
        %7794 = vmatprep.mubr.bf16.mxu0 0
        %7795 = vmatmul.mubr.bf16.gmra.mrb[0].mxu0 %v7697
        %v7796 = vpop.f32.mrb[0].mxu0
        %v7797 = vadd.f32 %v7498, %v7796
        %v7798 = vpop.f32.mrb[0].mxu0
        %v7799 = vpop.f32.mrb[0].mxu0
        %v7800 = vadd.f32 %v7501, %v7799
        %v7801 = vpop.f32.mrb[0].mxu0
        %7802 = vmatprep.mubr.bf16.mxu0 0
        %7803 = vmatmul.mubr.bf16.gmra.mrb[0].mxu0 %v7700
        %v7804 = vpop.f32.mrb[0].mxu0
        %v7805 = vadd.f32 %v7506, %v7804
        %v7806 = vpop.f32.mrb[0].mxu0
        %v7807 = vpop.f32.mrb[0].mxu0
        %v7808 = vadd.f32 %v7509, %v7807
        %v7809 = vpop.f32.mrb[0].mxu0
        %7810 = vmatprep.mubr.bf16.mxu0 0
        %7811 = vmatmul.mubr.bf16.gmra.mrb[0].mxu0 %v7703
        %v7812 = vpop.f32.mrb[0].mxu0
        %v7813 = vadd.f32 %v7514, %v7812
        %v7814 = vpop.f32.mrb[0].mxu0
        %v7815 = vpop.f32.mrb[0].mxu0
        %v7816 = vadd.f32 %v7517, %v7815
        %v7817 = vpop.f32.mrb[0].mxu0
        %7818 = vmatprep.mubr.bf16.mxu0 0
        %7819 = vmatmul.mubr.bf16.gmra.mrb[0].mxu0 %v7706
        %v7820 = vpop.f32.mrb[0].mxu0
        %v7821 = vadd.f32 %v7522, %v7820
        %v7822 = vpop.f32.mrb[0].mxu0
        %v7823 = vpop.f32.mrb[0].mxu0
        %v7824 = vadd.f32 %v7525, %v7823
        %v7825 = vpop.f32.mrb[0].mxu0
        %7826 = vmatprep.mubr.bf16.mxu0 0
        %7827 = vmatmul.mubr.bf16.gmra.mrb[0].mxu0 %v7709
        %v7828 = vpop.f32.mrb[0].mxu0
        %v7829 = vadd.f32 %v7530, %v7828
        %v7830 = vpop.f32.mrb[0].mxu0
        %v7831 = vpop.f32.mrb[0].mxu0
        %v7832 = vadd.f32 %v7533, %v7831
        %v7833 = vpop.f32.mrb[0].mxu0
        %7834 = vmatprep.mubr.bf16.mxu0 0
        %7835 = vmatmul.mubr.bf16.gmra.mrb[0].mxu0 %v7712
        %v7836 = vpop.f32.mrb[0].mxu0
        %v7837 = vadd.f32 %v7538, %v7836
        %v7838 = vpop.f32.mrb[0].mxu0
        %v7839 = vpop.f32.mrb[0].mxu0
        %v7840 = vadd.f32 %v7541, %v7839
        %v7841 = vpop.f32.mrb[0].mxu0
        %7842 = vmatprep.mubr.bf16.mxu0 0
        %7843 = vmatmul.mubr.bf16.gmra.mrb[0].mxu0 %v7715
        %v7844 = vpop.f32.mrb[0].mxu0
        %v7845 = vadd.f32 %v7546, %v7844
        %v7846 = vpop.f32.mrb[0].mxu0
        %v7847 = vpop.f32.mrb[0].mxu0
        %v7848 = vadd.f32 %v7549, %v7847
        %v7849 = vpop.f32.mrb[0].mxu0
        %7850 = vmatprep.mubr.bf16.mxu0 0
        %7851 = vmatmul.mubr.bf16.gmra.mrb[0].mxu0 %v7718
        %v7852 = vpop.f32.mrb[0].mxu0
        %v7853 = vadd.f32 %v7554, %v7852
        %v7854 = vpop.f32.mrb[0].mxu0
        %v7855 = vpop.f32.mrb[0].mxu0
        %v7856 = vadd.f32 %v7557, %v7855
        %v7857 = vpop.f32.mrb[0].mxu0
        %7858 = vmatprep.mubr.bf16.mxu0 0
        %7859 = vmatmul.mubr.bf16.gmra.mrb[0].mxu0 %v7721
        %v7860 = vpop.f32.mrb[0].mxu0
        %v7861 = vadd.f32 %v7562, %v7860
        %v7862 = vpop.f32.mrb[0].mxu0
        %v7863 = vpop.f32.mrb[0].mxu0
        %v7864 = vadd.f32 %v7565, %v7863
        %v7865 = vpop.f32.mrb[0].mxu0
        %7866 = vmatprep.mubr.bf16.mxu0 0
        %7867 = vmatmul.mubr.bf16.gmra.mrb[0].mxu0 %v7724
        %v7868 = vpop.f32.mrb[0].mxu0
        %v7869 = vadd.f32 %v7570, %v7868
        %v7870 = vpop.f32.mrb[0].mxu0
        %v7871 = vpop.f32.mrb[0].mxu0
        %v7872 = vadd.f32 %v7573, %v7871
        %v7873 = vpop.f32.mrb[0].mxu0
        %7874 = vmatprep.mubr.bf16.mxu0 0
        %7875 = vmatmul.mubr.bf16.gmra.mrb[0].mxu0 %v7727
        %v7876 = vpop.f32.mrb[0].mxu0
        %v7877 = vadd.f32 %v7578, %v7876
        %v7878 = vpop.f32.mrb[0].mxu0
        %v7879 = vpop.f32.mrb[0].mxu0
        %v7880 = vadd.f32 %v7581, %v7879
        %v7881 = vpop.f32.mrb[0].mxu0
        %7882 = vmatprep.mubr.bf16.mxu0 0
        %7883 = vmatmul.mubr.bf16.gmra.mrb[0].mxu0 %v7730
        %v7884 = vpop.f32.mrb[0].mxu0
        %v7885 = vadd.f32 %v7586, %v7884
        %v7886 = vpop.f32.mrb[0].mxu0
        %v7887 = vpop.f32.mrb[0].mxu0
        %v7888 = vadd.f32 %v7589, %v7887
        %v7889 = vpop.f32.mrb[0].mxu0
        %7890 = vmatprep.mubr.bf16.mxu0 0
        %7891 = vmatmul.mubr.bf16.gmra.mrb[0].mxu0 %v7733
        %v7892 = vpop.f32.mrb[0].mxu0
        %v7893 = vadd.f32 %v7594, %v7892
        %v7894 = vpop.f32.mrb[0].mxu0
        %v7895 = vpop.f32.mrb[0].mxu0
        %v7896 = vadd.f32 %v7597, %v7895
        %v7897 = vpop.f32.mrb[0].mxu0
        %7898 = vmatprep.mubr.bf16.mxu0 0
        %7899 = vmatmul.mubr.bf16.gmra.mrb[0].mxu0 %v7736
        %v7900 = vpop.f32.mrb[0].mxu0
        %v7901 = vadd.f32 %v7602, %v7900
        %v7902 = vpop.f32.mrb[0].mxu0
        %v7903 = vpop.f32.mrb[0].mxu0
        %v7904 = vadd.f32 %v7605, %v7903
        %v7905 = vpop.f32.mrb[0].mxu0
        %7906 = vmatprep.mubr.bf16.mxu0 0
        %7907 = vmatmul.mubr.bf16.gmra.mrb[0].mxu0 %v7739
        %v7908 = vpop.f32.mrb[0].mxu0
        %v7909 = vadd.f32 %v7610, %v7908
        %v7910 = vpop.f32.mrb[0].mxu0
        %v7911 = vpop.f32.mrb[0].mxu0
        %v7912 = vadd.f32 %v7613, %v7911
        %v7913 = vpop.f32.mrb[0].mxu0
        %7914 = vmatprep.mubr.bf16.mxu0 0
        %7915 = vmatmul.mubr.bf16.gmra.mrb[0].mxu0 %v7742
        %v7916 = vpop.f32.mrb[0].mxu0
        %v7917 = vadd.f32 %v7618, %v7916
        %v7918 = vpop.f32.mrb[0].mxu0
        %v7919 = vpop.f32.mrb[0].mxu0
        %v7920 = vadd.f32 %v7621, %v7919
        %v7921 = vpop.f32.mrb[0].mxu0
        %7922 = vmatprep.mubr.bf16.mxu0 0
        %7923 = vmatmul.mubr.bf16.gmra.mrb[0].mxu0 %v7745
        %v7924 = vpop.f32.mrb[0].mxu0
        %v7925 = vadd.f32 %v7626, %v7924
        %v7926 = vpop.f32.mrb[0].mxu0
        %v7927 = vpop.f32.mrb[0].mxu0
        %v7928 = vadd.f32 %v7629, %v7927
        %v7929 = vpop.f32.mrb[0].mxu0
        %7930 = vmatprep.mubr.bf16.mxu0 0
        %7931 = vmatmul.mubr.bf16.gmra.mrb[0].mxu0 %v7748
        %v7932 = vpop.f32.mrb[0].mxu0
        %v7933 = vadd.f32 %v7634, %v7932
        %v7934 = vpop.f32.mrb[0].mxu0
        %v7935 = vpop.f32.mrb[0].mxu0
        %v7936 = vadd.f32 %v7637, %v7935
        %v7937 = vpop.f32.mrb[0].mxu0
        %7938 = vmatprep.mubr.bf16.mxu0 0
        %7939 = vmatmul.mubr.bf16.gmra.mrb[0].mxu0 %v7751
        %v7940 = vpop.f32.mrb[0].mxu0
        %v7941 = vadd.f32 %v7642, %v7940
        %v7942 = vpop.f32.mrb[0].mxu0
        %v7943 = vpop.f32.mrb[0].mxu0
        %v7944 = vadd.f32 %v7645, %v7943
        %v7945 = vpop.f32.mrb[0].mxu0
        %7946 = vmatprep.mubr.bf16.mxu0 0
        %7947 = vmatmul.mubr.bf16.gmra.mrb[0].mxu0 %v7754
        %v7948 = vpop.f32.mrb[0].mxu0
        %v7949 = vadd.f32 %v7650, %v7948
        %v7950 = vpop.f32.mrb[0].mxu0
        %v7951 = vpop.f32.mrb[0].mxu0
        %v7952 = vadd.f32 %v7653, %v7951
        %v7953 = vpop.f32.mrb[0].mxu0
        %7954 = vmatprep.mubr.bf16.mxu0 0
        %7955 = vmatmul.mubr.bf16.gmra.mrb[0].mxu0 %v7757
        %v7956 = vpop.f32.mrb[0].mxu0
        %v7957 = vadd.f32 %v7658, %v7956
        %v7958 = vpop.f32.mrb[0].mxu0
        %v7959 = vpop.f32.mrb[0].mxu0
        %v7960 = vadd.f32 %v7661, %v7959
        %v7961 = vpop.f32.mrb[0].mxu0
        %7962 = vmatprep.mubr.bf16.mxu0 0
        %7963 = vmatmul.mubr.bf16.gmra.mrb[0].mxu0 %v7760
        %v7964 = vpop.f32.mrb[0].mxu0
        %v7965 = vadd.f32 %v7666, %v7964
        %v7966 = vpop.f32.mrb[0].mxu0
        %v7967 = vpop.f32.mrb[0].mxu0
        %v7968 = vadd.f32 %v7669, %v7967
        %v7969 = vpop.f32.mrb[0].mxu0
        %7970 = vdwg.mxu0
        %v7971 = vld [vmem:[#allocation4 + $0x2] sm:$0xff]
        %v7972 = vld [vmem:[#allocation4 + $0xa] sm:$0xff]
        %v7973 = vld [vmem:[#allocation4 + $0x12] sm:$0xff]
        %v7974 = vld [vmem:[#allocation4 + $0x1a] sm:$0xff]
        %v7975 = vld [vmem:[#allocation4 + $0x22] sm:$0xff]
        %v7976 = vld [vmem:[#allocation4 + $0x2a] sm:$0xff]
        %v7977 = vld [vmem:[#allocation4 + $0x32] sm:$0xff]
        %v7978 = vld [vmem:[#allocation4 + $0x3a] sm:$0xff]
        %v7979 = vld [vmem:[#allocation4 + $0x42] sm:$0xff]
        %v7980 = vld [vmem:[#allocation4 + $0x4a] sm:$0xff]
        %v7981 = vld [vmem:[#allocation4 + $0x52] sm:$0xff]
        %v7982 = vld [vmem:[#allocation4 + $0x5a] sm:$0xff]
        %v7983 = vld [vmem:[#allocation4 + $0x62] sm:$0xff]
        %v7984 = vld [vmem:[#allocation4 + $0x6a] sm:$0xff]
        %v7985 = vld [vmem:[#allocation4 + $0x72] sm:$0xff]
        %v7986 = vld [vmem:[#allocation4 + $0x7a] sm:$0xff]
        %v7987 = vld [vmem:[#allocation4 + $0x82] sm:$0xff]
        %v7988 = vld [vmem:[#allocation4 + $0x8a] sm:$0xff]
        %v7989 = vld [vmem:[#allocation4 + $0x92] sm:$0xff]
        %v7990 = vld [vmem:[#allocation4 + $0x9a] sm:$0xff]
        %v7991 = vld [vmem:[#allocation4 + $0xa2] sm:$0xff]
        %v7992 = vld [vmem:[#allocation4 + $0xaa] sm:$0xff]
        %v7993 = vld [vmem:[#allocation4 + $0xb2] sm:$0xff]
        %v7994 = vld [vmem:[#allocation4 + $0xba] sm:$0xff]
        %v7995 = vld [vmem:[#allocation4 + $0xc2] sm:$0xff]
        %v7996 = vld [vmem:[#allocation4 + $0xca] sm:$0xff]
        %v7997 = vld [vmem:[#allocation4 + $0xd2] sm:$0xff]
        %v7998 = vld [vmem:[#allocation4 + $0xda] sm:$0xff]
        %v7999 = vld [vmem:[#allocation4 + $0xe2] sm:$0xff]
        %v8000 = vld [vmem:[#allocation4 + $0xea] sm:$0xff]
        %v8001 = vld [vmem:[#allocation4 + $0xf2] sm:$0xff]
        %v8002 = vld [vmem:[#allocation4 + $0xfa] sm:$0xff]
        %v8003 = vld [vmem:[#allocation4 + $0x102] sm:$0xff]
        %v8004 = vld [vmem:[#allocation4 + $0x10a] sm:$0xff]
        %v8005 = vld [vmem:[#allocation4 + $0x112] sm:$0xff]
        %v8006 = vld [vmem:[#allocation4 + $0x11a] sm:$0xff]
        %v8007 = vld [vmem:[#allocation4 + $0x122] sm:$0xff]
        %v8008 = vld [vmem:[#allocation4 + $0x12a] sm:$0xff]
        %v8009 = vld [vmem:[#allocation4 + $0x132] sm:$0xff]
        %v8010 = vld [vmem:[#allocation4 + $0x13a] sm:$0xff]
        %v8011 = vld [vmem:[#allocation4 + $0x142] sm:$0xff]
        %v8012 = vld [vmem:[#allocation4 + $0x14a] sm:$0xff]
        %v8013 = vld [vmem:[#allocation4 + $0x152] sm:$0xff]
        %v8014 = vld [vmem:[#allocation4 + $0x15a] sm:$0x3f]
        %v8015 = vpack.c.bf16 %v7972, %v7971
        %v8016 = vpack.c.bf16 %v7974, %v7973
        %v8017 = vpack.c.bf16 %v7976, %v7975
        %v8018 = vpack.c.bf16 %v7978, %v7977
        %v8019 = vpack.c.bf16 %v7980, %v7979
        %v8020 = vpack.c.bf16 %v7982, %v7981
        %v8021 = vpack.c.bf16 %v7984, %v7983
        %v8022 = vpack.c.bf16 %v7986, %v7985
        %v8023 = vpack.c.bf16 %v7988, %v7987
        %v8024 = vpack.c.bf16 %v7990, %v7989
        %v8025 = vpack.c.bf16 %v7992, %v7991
        %v8026 = vpack.c.bf16 %v7994, %v7993
        %v8027 = vpack.c.bf16 %v7996, %v7995
        %v8028 = vpack.c.bf16 %v7998, %v7997
        %v8029 = vpack.c.bf16 %v8000, %v7999
        %v8030 = vpack.c.bf16 %v8002, %v8001
        %v8031 = vpack.c.bf16 %v8004, %v8003
        %v8032 = vpack.c.bf16 %v8006, %v8005
        %v8033 = vpack.c.bf16 %v8008, %v8007
        %v8034 = vpack.c.bf16 %v8010, %v8009
        %v8035 = vpack.c.bf16 %v8012, %v8011
        %v8036 = vpack.c.bf16 %v8014, %v8013
        %s8037 = scalar_lea.vmem %s3, 64
        %v8038 = vld [vmem:[%s8037] sm:$0xf]
        %v8039 = vld [vmem:[%s8037 + $0x4] sm:$0xf]
        %v8040 = vld [vmem:[%s8037 + $0x8] sm:$0xf]
        %v8041 = vld [vmem:[%s8037 + $0xc] sm:$0xf]
        %v8042 = vld [vmem:[%s8037 + $0x10] sm:$0xf]
        %v8043 = vld [vmem:[%s8037 + $0x14] sm:$0xf]
        %v8044 = vld [vmem:[%s8037 + $0x18] sm:$0xf]
        %v8045 = vld [vmem:[%s8037 + $0x1c] sm:$0xf]
        %v8054 = vunpack.c.l.b16 %v8038
        %v8055 = vunpack.c.l.b16 %v8039
        %v8056 = vunpack.c.l.b16 %v8040
        %v8057 = vunpack.c.l.b16 %v8041
        %v8058 = vunpack.c.l.b16 %v8042
        %v8059 = vunpack.c.l.b16 %v8043
        %v8060 = vunpack.c.l.b16 %v8044
        %v8061 = vunpack.c.l.b16 %v8045
        %v8062 = vpack.c.b16 %v8055, %v8054
        %v8063 = vpack.c.b16 %v8057, %v8056
        %v8064 = vpack.c.b16 %v8059, %v8058
        %v8065 = vpack.c.b16 %v8061, %v8060
        %v8071 = vsel %vm4561, %v8015, 0
        %v8074 = vsel %vm4561, %v8016, 0
        %v8077 = vsel %vm4561, %v8017, 0
        %v8080 = vsel %vm4561, %v8018, 0
        %v8083 = vsel %vm4561, %v8019, 0
        %v8086 = vsel %vm4561, %v8020, 0
        %v8089 = vsel %vm4561, %v8021, 0
        %v8092 = vsel %vm4561, %v8022, 0
        %v8095 = vsel %vm4561, %v8023, 0
        %v8098 = vsel %vm4561, %v8024, 0
        %v8101 = vsel %vm4561, %v8025, 0
        %v8104 = vsel %vm4561, %v8026, 0
        %v8107 = vsel %vm4561, %v8027, 0
        %v8110 = vsel %vm4561, %v8028, 0
        %v8113 = vsel %vm4561, %v8029, 0
        %v8116 = vsel %vm4561, %v8030, 0
        %v8119 = vsel %vm4561, %v8031, 0
        %v8122 = vsel %vm4561, %v8032, 0
        %v8125 = vsel %vm4561, %v8033, 0
        %v8128 = vsel %vm4561, %v8034, 0
        %v8131 = vsel %vm4561, %v8035, 0
        %v8134 = vsel %vm4561, %v8036, 0
        %8136 = vmatprep.subr.bf16.mxu0 0
        %8137 = vmatpush1.bf16.msra.mxu0 %v8062
        %8138 = vmatprep.subr.bf16.mxu0 0
        %8139 = vmatpush1.bf16.msra.mxu0 %v8063
        %8140 = vmatprep.subr.bf16.mxu0 0
        %8141 = vmatpush1.bf16.msra.mxu0 %v8064
        %8142 = vmatprep.subr.bf16.mxu0 0
        %8143 = vmatpush1.bf16.msra.mxu0 %v8065
        %8144 = vmatprep.subr.bf16.mxu0 0
        %8145 = vmatpush1.bf16.msra.mxu0 0
        %8146 = vmatprep.subr.bf16.mxu0 0
        %8147 = vmatpush1.bf16.msra.mxu0 0
        %8148 = vmatprep.subr.bf16.mxu0 0
        %8149 = vmatpush1.bf16.msra.mxu0 0
        %8150 = vmatprep.subr.bf16.mxu0 0
        %8151 = vmatpush1.bf16.msra.mxu0 0
        %8152 = vmatprep.subr.bf16.mxu0 0
        %8153 = vmatpush1.bf16.msra.mxu0 0
        %8154 = vmatprep.subr.bf16.mxu0 0
        %8155 = vmatpush1.bf16.msra.mxu0 0
        %8156 = vmatprep.subr.bf16.mxu0 0
        %8157 = vmatpush1.bf16.msra.mxu0 0
        %8158 = vmatprep.subr.bf16.mxu0 0
        %8159 = vmatpush1.bf16.msra.mxu0 0
        %8160 = vmatprep.subr.bf16.mxu0 0
        %8161 = vmatpush1.bf16.msra.mxu0 0
        %8162 = vmatprep.subr.bf16.mxu0 0
        %8163 = vmatpush1.bf16.msra.mxu0 0
        %8164 = vmatprep.subr.bf16.mxu0 0
        %8165 = vmatpush1.bf16.msra.mxu0 0
        %8166 = vmatprep.subr.bf16.mxu0 0
        %8167 = vmatpush1.bf16.msra.mxu0 0
        %8168 = vmatprep.mubr.bf16.mxu0 0
        %8169 = vmatmul.mubr.bf16.gmra.mrb[0].mxu0 %v8071
        %v8170 = vpop.f32.mrb[0].mxu0
        %v8171 = vadd.f32 0.0, %v8170
        %v8172 = vpop.f32.mrb[0].mxu0
        %v8173 = vpop.f32.mrb[0].mxu0
        %v8174 = vadd.f32 0.0, %v8173
        %v8175 = vpop.f32.mrb[0].mxu0
        %8176 = vmatprep.mubr.bf16.mxu0 0
        %8177 = vmatmul.mubr.bf16.gmra.mrb[0].mxu0 %v8074
        %v8178 = vpop.f32.mrb[0].mxu0
        %v8179 = vadd.f32 0.0, %v8178
        %v8180 = vpop.f32.mrb[0].mxu0
        %v8181 = vpop.f32.mrb[0].mxu0
        %v8182 = vadd.f32 0.0, %v8181
        %v8183 = vpop.f32.mrb[0].mxu0
        %8184 = vmatprep.mubr.bf16.mxu0 0
        %8185 = vmatmul.mubr.bf16.gmra.mrb[0].mxu0 %v8077
        %v8186 = vpop.f32.mrb[0].mxu0
        %v8187 = vadd.f32 0.0, %v8186
        %v8188 = vpop.f32.mrb[0].mxu0
        %v8189 = vpop.f32.mrb[0].mxu0
        %v8190 = vadd.f32 0.0, %v8189
        %v8191 = vpop.f32.mrb[0].mxu0
        %8192 = vmatprep.mubr.bf16.mxu0 0
        %8193 = vmatmul.mubr.bf16.gmra.mrb[0].mxu0 %v8080
        %v8194 = vpop.f32.mrb[0].mxu0
        %v8195 = vadd.f32 0.0, %v8194
        %v8196 = vpop.f32.mrb[0].mxu0
        %v8197 = vpop.f32.mrb[0].mxu0
        %v8198 = vadd.f32 0.0, %v8197
        %v8199 = vpop.f32.mrb[0].mxu0
        %8200 = vmatprep.mubr.bf16.mxu0 0
        %8201 = vmatmul.mubr.bf16.gmra.mrb[0].mxu0 %v8083
        %v8202 = vpop.f32.mrb[0].mxu0
        %v8203 = vadd.f32 0.0, %v8202
        %v8204 = vpop.f32.mrb[0].mxu0
        %v8205 = vpop.f32.mrb[0].mxu0
        %v8206 = vadd.f32 0.0, %v8205
        %v8207 = vpop.f32.mrb[0].mxu0
        %8208 = vmatprep.mubr.bf16.mxu0 0
        %8209 = vmatmul.mubr.bf16.gmra.mrb[0].mxu0 %v8086
        %v8210 = vpop.f32.mrb[0].mxu0
        %v8211 = vadd.f32 0.0, %v8210
        %v8212 = vpop.f32.mrb[0].mxu0
        %v8213 = vpop.f32.mrb[0].mxu0
        %v8214 = vadd.f32 0.0, %v8213
        %v8215 = vpop.f32.mrb[0].mxu0
        %8216 = vmatprep.mubr.bf16.mxu0 0
        %8217 = vmatmul.mubr.bf16.gmra.mrb[0].mxu0 %v8089
        %v8218 = vpop.f32.mrb[0].mxu0
        %v8219 = vadd.f32 0.0, %v8218
        %v8220 = vpop.f32.mrb[0].mxu0
        %v8221 = vpop.f32.mrb[0].mxu0
        %v8222 = vadd.f32 0.0, %v8221
        %v8223 = vpop.f32.mrb[0].mxu0
        %8224 = vmatprep.mubr.bf16.mxu0 0
        %8225 = vmatmul.mubr.bf16.gmra.mrb[0].mxu0 %v8092
        %v8226 = vpop.f32.mrb[0].mxu0
        %v8227 = vadd.f32 0.0, %v8226
        %v8228 = vpop.f32.mrb[0].mxu0
        %v8229 = vpop.f32.mrb[0].mxu0
        %v8230 = vadd.f32 0.0, %v8229
        %v8231 = vpop.f32.mrb[0].mxu0
        %8232 = vmatprep.mubr.bf16.mxu0 0
        %8233 = vmatmul.mubr.bf16.gmra.mrb[0].mxu0 %v8095
        %v8234 = vpop.f32.mrb[0].mxu0
        %v8235 = vadd.f32 0.0, %v8234
        %v8236 = vpop.f32.mrb[0].mxu0
        %v8237 = vpop.f32.mrb[0].mxu0
        %v8238 = vadd.f32 0.0, %v8237
        %v8239 = vpop.f32.mrb[0].mxu0
        %8240 = vmatprep.mubr.bf16.mxu0 0
        %8241 = vmatmul.mubr.bf16.gmra.mrb[0].mxu0 %v8098
        %v8242 = vpop.f32.mrb[0].mxu0
        %v8243 = vadd.f32 0.0, %v8242
        %v8244 = vpop.f32.mrb[0].mxu0
        %v8245 = vpop.f32.mrb[0].mxu0
        %v8246 = vadd.f32 0.0, %v8245
        %v8247 = vpop.f32.mrb[0].mxu0
        %8248 = vmatprep.mubr.bf16.mxu0 0
        %8249 = vmatmul.mubr.bf16.gmra.mrb[0].mxu0 %v8101
        %v8250 = vpop.f32.mrb[0].mxu0
        %v8251 = vadd.f32 0.0, %v8250
        %v8252 = vpop.f32.mrb[0].mxu0
        %v8253 = vpop.f32.mrb[0].mxu0
        %v8254 = vadd.f32 0.0, %v8253
        %v8255 = vpop.f32.mrb[0].mxu0
        %8256 = vmatprep.mubr.bf16.mxu0 0
        %8257 = vmatmul.mubr.bf16.gmra.mrb[0].mxu0 %v8104
        %v8258 = vpop.f32.mrb[0].mxu0
        %v8259 = vadd.f32 0.0, %v8258
        %v8260 = vpop.f32.mrb[0].mxu0
        %v8261 = vpop.f32.mrb[0].mxu0
        %v8262 = vadd.f32 0.0, %v8261
        %v8263 = vpop.f32.mrb[0].mxu0
        %8264 = vmatprep.mubr.bf16.mxu0 0
        %8265 = vmatmul.mubr.bf16.gmra.mrb[0].mxu0 %v8107
        %v8266 = vpop.f32.mrb[0].mxu0
        %v8267 = vadd.f32 0.0, %v8266
        %v8268 = vpop.f32.mrb[0].mxu0
        %v8269 = vpop.f32.mrb[0].mxu0
        %v8270 = vadd.f32 0.0, %v8269
        %v8271 = vpop.f32.mrb[0].mxu0
        %8272 = vmatprep.mubr.bf16.mxu0 0
        %8273 = vmatmul.mubr.bf16.gmra.mrb[0].mxu0 %v8110
        %v8274 = vpop.f32.mrb[0].mxu0
        %v8275 = vadd.f32 0.0, %v8274
        %v8276 = vpop.f32.mrb[0].mxu0
        %v8277 = vpop.f32.mrb[0].mxu0
        %v8278 = vadd.f32 0.0, %v8277
        %v8279 = vpop.f32.mrb[0].mxu0
        %8280 = vmatprep.mubr.bf16.mxu0 0
        %8281 = vmatmul.mubr.bf16.gmra.mrb[0].mxu0 %v8113
        %v8282 = vpop.f32.mrb[0].mxu0
        %v8283 = vadd.f32 0.0, %v8282
        %v8284 = vpop.f32.mrb[0].mxu0
        %v8285 = vpop.f32.mrb[0].mxu0
        %v8286 = vadd.f32 0.0, %v8285
        %v8287 = vpop.f32.mrb[0].mxu0
        %8288 = vmatprep.mubr.bf16.mxu0 0
        %8289 = vmatmul.mubr.bf16.gmra.mrb[0].mxu0 %v8116
        %v8290 = vpop.f32.mrb[0].mxu0
        %v8291 = vadd.f32 0.0, %v8290
        %v8292 = vpop.f32.mrb[0].mxu0
        %v8293 = vpop.f32.mrb[0].mxu0
        %v8294 = vadd.f32 0.0, %v8293
        %v8295 = vpop.f32.mrb[0].mxu0
        %8296 = vmatprep.mubr.bf16.mxu0 0
        %8297 = vmatmul.mubr.bf16.gmra.mrb[0].mxu0 %v8119
        %v8298 = vpop.f32.mrb[0].mxu0
        %v8299 = vadd.f32 0.0, %v8298
        %v8300 = vpop.f32.mrb[0].mxu0
        %v8301 = vpop.f32.mrb[0].mxu0
        %v8302 = vadd.f32 0.0, %v8301
        %v8303 = vpop.f32.mrb[0].mxu0
        %8304 = vmatprep.mubr.bf16.mxu0 0
        %8305 = vmatmul.mubr.bf16.gmra.mrb[0].mxu0 %v8122
        %v8306 = vpop.f32.mrb[0].mxu0
        %v8307 = vadd.f32 0.0, %v8306
        %v8308 = vpop.f32.mrb[0].mxu0
        %v8309 = vpop.f32.mrb[0].mxu0
        %v8310 = vadd.f32 0.0, %v8309
        %v8311 = vpop.f32.mrb[0].mxu0
        %8312 = vmatprep.mubr.bf16.mxu0 0
        %8313 = vmatmul.mubr.bf16.gmra.mrb[0].mxu0 %v8125
        %v8314 = vpop.f32.mrb[0].mxu0
        %v8315 = vadd.f32 0.0, %v8314
        %v8316 = vpop.f32.mrb[0].mxu0
        %v8317 = vpop.f32.mrb[0].mxu0
        %v8318 = vadd.f32 0.0, %v8317
        %v8319 = vpop.f32.mrb[0].mxu0
        %8320 = vmatprep.mubr.bf16.mxu0 0
        %8321 = vmatmul.mubr.bf16.gmra.mrb[0].mxu0 %v8128
        %v8322 = vpop.f32.mrb[0].mxu0
        %v8323 = vadd.f32 0.0, %v8322
        %v8324 = vpop.f32.mrb[0].mxu0
        %v8325 = vpop.f32.mrb[0].mxu0
        %v8326 = vadd.f32 0.0, %v8325
        %v8327 = vpop.f32.mrb[0].mxu0
        %8328 = vmatprep.mubr.bf16.mxu0 0
        %8329 = vmatmul.mubr.bf16.gmra.mrb[0].mxu0 %v8131
        %v8330 = vpop.f32.mrb[0].mxu0
        %v8331 = vadd.f32 0.0, %v8330
        %v8332 = vpop.f32.mrb[0].mxu0
        %v8333 = vpop.f32.mrb[0].mxu0
        %v8334 = vadd.f32 0.0, %v8333
        %v8335 = vpop.f32.mrb[0].mxu0
        %8336 = vmatprep.mubr.bf16.mxu0 0
        %8337 = vmatmul.mubr.bf16.gmra.mrb[0].mxu0 %v8134
        %v8338 = vpop.f32.mrb[0].mxu0
        %v8339 = vadd.f32 0.0, %v8338
        %v8340 = vpop.f32.mrb[0].mxu0
        %v8341 = vpop.f32.mrb[0].mxu0
        %v8342 = vadd.f32 0.0, %v8341
        %v8343 = vpop.f32.mrb[0].mxu0
        %8344 = vdwg.mxu0
        %v8345 = vadd.f32 %v7797, %v8171
        %v8346 = vadd.f32 %v7800, %v8174
        %v8347 = vadd.f32 %v7805, %v8179
        %v8348 = vadd.f32 %v7808, %v8182
        %v8349 = vadd.f32 %v7813, %v8187
        %v8350 = vadd.f32 %v7816, %v8190
        %v8351 = vadd.f32 %v7821, %v8195
        %v8352 = vadd.f32 %v7824, %v8198
        %v8353 = vadd.f32 %v7829, %v8203
        %v8354 = vadd.f32 %v7832, %v8206
        %v8355 = vadd.f32 %v7837, %v8211
        %v8356 = vadd.f32 %v7840, %v8214
        %v8357 = vadd.f32 %v7845, %v8219
        %v8358 = vadd.f32 %v7848, %v8222
        %v8359 = vadd.f32 %v7853, %v8227
        %v8360 = vadd.f32 %v7856, %v8230
        %v8361 = vadd.f32 %v7861, %v8235
        %v8362 = vadd.f32 %v7864, %v8238
        %v8363 = vadd.f32 %v7869, %v8243
        %v8364 = vadd.f32 %v7872, %v8246
        %v8365 = vadd.f32 %v7877, %v8251
        %v8366 = vadd.f32 %v7880, %v8254
        %v8367 = vadd.f32 %v7885, %v8259
        %v8368 = vadd.f32 %v7888, %v8262
        %v8369 = vadd.f32 %v7893, %v8267
        %v8370 = vadd.f32 %v7896, %v8270
        %v8371 = vadd.f32 %v7901, %v8275
        %v8372 = vadd.f32 %v7904, %v8278
        %v8373 = vadd.f32 %v7909, %v8283
        %v8374 = vadd.f32 %v7912, %v8286
        %v8375 = vadd.f32 %v7917, %v8291
        %v8376 = vadd.f32 %v7920, %v8294
        %v8377 = vadd.f32 %v7925, %v8299
        %v8378 = vadd.f32 %v7928, %v8302
        %v8379 = vadd.f32 %v7933, %v8307
        %v8380 = vadd.f32 %v7936, %v8310
        %v8381 = vadd.f32 %v7941, %v8315
        %v8382 = vadd.f32 %v7944, %v8318
        %v8383 = vadd.f32 %v7949, %v8323
        %v8384 = vadd.f32 %v7952, %v8326
        %v8385 = vadd.f32 %v7957, %v8331
        %v8386 = vadd.f32 %v7960, %v8334
        %v8387 = vadd.f32 %v7965, %v8339
        %v8388 = vadd.f32 %v7968, %v8342
        %v8389 = vlaneseq
        %v8390 = vshrl.u32 %v8389, 7
        %v8391 = vsub.s32 0, %v8390
        %v8392 = vrot.slane %v7223, %v8391
        %v8393 = vadd.f32 %v8345, %v8392
        %v8394 = vadd.f32 %v8346, %v8392
        %v8395 = vadd.f32 %v8347, %v8392
        %v8396 = vadd.f32 %v8348, %v8392
        %v8397 = vadd.f32 %v8349, %v8392
        %v8398 = vadd.f32 %v8350, %v8392
        %v8399 = vadd.f32 %v8351, %v8392
        %v8400 = vadd.f32 %v8352, %v8392
        %v8401 = vadd.f32 %v8353, %v8392
        %v8402 = vadd.f32 %v8354, %v8392
        %v8403 = vadd.f32 %v8355, %v8392
        %v8404 = vadd.f32 %v8356, %v8392
        %v8405 = vadd.f32 %v8357, %v8392
        %v8406 = vadd.f32 %v8358, %v8392
        %v8407 = vadd.f32 %v8359, %v8392
        %v8408 = vadd.f32 %v8360, %v8392
        %v8409 = vadd.f32 %v8361, %v8392
        %v8410 = vadd.f32 %v8362, %v8392
        %v8411 = vadd.f32 %v8363, %v8392
        %v8412 = vadd.f32 %v8364, %v8392
        %v8413 = vadd.f32 %v8365, %v8392
        %v8414 = vadd.f32 %v8366, %v8392
        %v8415 = vadd.f32 %v8367, %v8392
        %v8416 = vadd.f32 %v8368, %v8392
        %v8417 = vadd.f32 %v8369, %v8392
        %v8418 = vadd.f32 %v8370, %v8392
        %v8419 = vadd.f32 %v8371, %v8392
        %v8420 = vadd.f32 %v8372, %v8392
        %v8421 = vadd.f32 %v8373, %v8392
        %v8422 = vadd.f32 %v8374, %v8392
        %v8423 = vadd.f32 %v8375, %v8392
        %v8424 = vadd.f32 %v8376, %v8392
        %v8425 = vadd.f32 %v8377, %v8392
        %v8426 = vadd.f32 %v8378, %v8392
        %v8427 = vadd.f32 %v8379, %v8392
        %v8428 = vadd.f32 %v8380, %v8392
        %v8429 = vadd.f32 %v8381, %v8392
        %v8430 = vadd.f32 %v8382, %v8392
        %v8431 = vadd.f32 %v8383, %v8392
        %v8432 = vadd.f32 %v8384, %v8392
        %v8433 = vadd.f32 %v8385, %v8392
        %v8434 = vadd.f32 %v8386, %v8392
        %v8435 = vadd.f32 %v8387, %v8392
        %v8436 = vadd.f32 %v8388, %v8392
        %v8437 = vmax.f32 %v8393, 0.0
        %v8438 = vmax.f32 %v8394, 0.0
        %v8439 = vmax.f32 %v8395, 0.0
        %v8440 = vmax.f32 %v8396, 0.0
        %v8441 = vmax.f32 %v8397, 0.0
        %v8442 = vmax.f32 %v8398, 0.0
        %v8443 = vmax.f32 %v8399, 0.0
        %v8444 = vmax.f32 %v8400, 0.0
        %v8445 = vmax.f32 %v8401, 0.0
        %v8446 = vmax.f32 %v8402, 0.0
        %v8447 = vmax.f32 %v8403, 0.0
        %v8448 = vmax.f32 %v8404, 0.0
        %v8449 = vmax.f32 %v8405, 0.0
        %v8450 = vmax.f32 %v8406, 0.0
        %v8451 = vmax.f32 %v8407, 0.0
        %v8452 = vmax.f32 %v8408, 0.0
        %v8453 = vmax.f32 %v8409, 0.0
        %v8454 = vmax.f32 %v8410, 0.0
        %v8455 = vmax.f32 %v8411, 0.0
        %v8456 = vmax.f32 %v8412, 0.0
        %v8457 = vmax.f32 %v8413, 0.0
        %v8458 = vmax.f32 %v8414, 0.0
        %v8459 = vmax.f32 %v8415, 0.0
        %v8460 = vmax.f32 %v8416, 0.0
        %v8461 = vmax.f32 %v8417, 0.0
        %v8462 = vmax.f32 %v8418, 0.0
        %v8463 = vmax.f32 %v8419, 0.0
        %v8464 = vmax.f32 %v8420, 0.0
        %v8465 = vmax.f32 %v8421, 0.0
        %v8466 = vmax.f32 %v8422, 0.0
        %v8467 = vmax.f32 %v8423, 0.0
        %v8468 = vmax.f32 %v8424, 0.0
        %v8469 = vmax.f32 %v8425, 0.0
        %v8470 = vmax.f32 %v8426, 0.0
        %v8471 = vmax.f32 %v8427, 0.0
        %v8472 = vmax.f32 %v8428, 0.0
        %v8473 = vmax.f32 %v8429, 0.0
        %v8474 = vmax.f32 %v8430, 0.0
        %v8475 = vmax.f32 %v8431, 0.0
        %v8476 = vmax.f32 %v8432, 0.0
        %v8477 = vmax.f32 %v8433, 0.0
        %v8478 = vmax.f32 %v8434, 0.0
        %v8479 = vmax.f32 %v8435, 0.0
        %v8480 = vmax.f32 %v8436, 0.0
        %8481 = vst.msk [vmem:[#allocation2] sm:$0xff] %vm4561, %v8437
        %8482 = vst.msk [vmem:[#allocation2 + $0x8] sm:$0xff] %vm4561, %v8438
        %8483 = vst.msk [vmem:[#allocation2 + $0x10] sm:$0xff] %vm4561, %v8439
        %8484 = vst.msk [vmem:[#allocation2 + $0x18] sm:$0xff] %vm4561, %v8440
        %8485 = vst.msk [vmem:[#allocation2 + $0x20] sm:$0xff] %vm4561, %v8441
        %8486 = vst.msk [vmem:[#allocation2 + $0x28] sm:$0xff] %vm4561, %v8442
        %8487 = vst.msk [vmem:[#allocation2 + $0x30] sm:$0xff] %vm4561, %v8443
        %8488 = vst.msk [vmem:[#allocation2 + $0x38] sm:$0xff] %vm4561, %v8444
        %8489 = vst.msk [vmem:[#allocation2 + $0x40] sm:$0xff] %vm4561, %v8445
        %8490 = vst.msk [vmem:[#allocation2 + $0x48] sm:$0xff] %vm4561, %v8446
        %8491 = vst.msk [vmem:[#allocation2 + $0x50] sm:$0xff] %vm4561, %v8447
        %8492 = vst.msk [vmem:[#allocation2 + $0x58] sm:$0xff] %vm4561, %v8448
        %8493 = vst.msk [vmem:[#allocation2 + $0x60] sm:$0xff] %vm4561, %v8449
        %8494 = vst.msk [vmem:[#allocation2 + $0x68] sm:$0xff] %vm4561, %v8450
        %8495 = vst.msk [vmem:[#allocation2 + $0x70] sm:$0xff] %vm4561, %v8451
        %8496 = vst.msk [vmem:[#allocation2 + $0x78] sm:$0xff] %vm4561, %v8452
        %8497 = vst.msk [vmem:[#allocation2 + $0x80] sm:$0xff] %vm4561, %v8453
        %8498 = vst.msk [vmem:[#allocation2 + $0x88] sm:$0xff] %vm4561, %v8454
        %8499 = vst.msk [vmem:[#allocation2 + $0x90] sm:$0xff] %vm4561, %v8455
        %8500 = vst.msk [vmem:[#allocation2 + $0x98] sm:$0xff] %vm4561, %v8456
        %8501 = vst.msk [vmem:[#allocation2 + $0xa0] sm:$0xff] %vm4561, %v8457
        %8502 = vst.msk [vmem:[#allocation2 + $0xa8] sm:$0xff] %vm4561, %v8458
        %8503 = vst.msk [vmem:[#allocation2 + $0xb0] sm:$0xff] %vm4561, %v8459
        %8504 = vst.msk [vmem:[#allocation2 + $0xb8] sm:$0xff] %vm4561, %v8460
        %8505 = vst.msk [vmem:[#allocation2 + $0xc0] sm:$0xff] %vm4561, %v8461
        %8506 = vst.msk [vmem:[#allocation2 + $0xc8] sm:$0xff] %vm4561, %v8462
        %8507 = vst.msk [vmem:[#allocation2 + $0xd0] sm:$0xff] %vm4561, %v8463
        %8508 = vst.msk [vmem:[#allocation2 + $0xd8] sm:$0xff] %vm4561, %v8464
        %8509 = vst.msk [vmem:[#allocation2 + $0xe0] sm:$0xff] %vm4561, %v8465
        %8510 = vst.msk [vmem:[#allocation2 + $0xe8] sm:$0xff] %vm4561, %v8466
        %8511 = vst.msk [vmem:[#allocation2 + $0xf0] sm:$0xff] %vm4561, %v8467
        %8512 = vst.msk [vmem:[#allocation2 + $0xf8] sm:$0xff] %vm4561, %v8468
        %8513 = vst.msk [vmem:[#allocation2 + $0x100] sm:$0xff] %vm4561, %v8469
        %8514 = vst.msk [vmem:[#allocation2 + $0x108] sm:$0xff] %vm4561, %v8470
        %8515 = vst.msk [vmem:[#allocation2 + $0x110] sm:$0xff] %vm4561, %v8471
        %8516 = vst.msk [vmem:[#allocation2 + $0x118] sm:$0xff] %vm4561, %v8472
        %8517 = vst.msk [vmem:[#allocation2 + $0x120] sm:$0xff] %vm4561, %v8473
        %8518 = vst.msk [vmem:[#allocation2 + $0x128] sm:$0xff] %vm4561, %v8474
        %8519 = vst.msk [vmem:[#allocation2 + $0x130] sm:$0xff] %vm4561, %v8475
        %8520 = vst.msk [vmem:[#allocation2 + $0x138] sm:$0xff] %vm4561, %v8476
        %8521 = vst.msk [vmem:[#allocation2 + $0x140] sm:$0xff] %vm4561, %v8477
        %8522 = vst.msk [vmem:[#allocation2 + $0x148] sm:$0xff] %vm4561, %v8478
        %8523 = vst.msk [vmem:[#allocation2 + $0x150] sm:$0xff] %vm4561, %v8479
        %8524 = vst.msk [vmem:[#allocation2 + $0x158] sm:$0x3f] %vm4731, %v8480
        %v8525 = vld [vmem:[#allocation2] ss:$44 sm:$0xff]
        %s8526 = scalar_lea.vmem [#allocation2], 1
        %v8527 = vld [vmem:[%s8526] ss:$44 sm:$0xff]
        %v8528 = vmax.f32 %v8525, %v8527
        %v8529 = vpack.c.bf16 %v8528, %v8528
        %v8530 = vld [vmem:[%s5] sm:$0xf]
        %v8531 = vld [vmem:[%s5 + $0x4] sm:$0xf]
        %v8532 = vld [vmem:[%s5 + $0x8] sm:$0xf]
        %v8533 = vld [vmem:[%s5 + $0xc] sm:$0xf]
        %v8534 = vld [vmem:[%s5 + $0x10] sm:$0xf]
        %v8535 = vld [vmem:[%s5 + $0x14] sm:$0xf]
        %v8536 = vld [vmem:[%s5 + $0x18] sm:$0xf]
        %v8537 = vld [vmem:[%s5 + $0x1c] sm:$0xf]
        %s8538 = scalar_lea.vmem [#allocation2], 2
        %v8539 = vld [vmem:[%s8538] ss:$44 sm:$0xff]
        %s8540 = scalar_lea.vmem [#allocation2], 3
        %v8541 = vld [vmem:[%s8540] ss:$44 sm:$0xff]
        %v8542 = vmax.f32 %v8539, %v8541
        %v8543 = vpack.c.bf16 %v8542, %v8542
        %v8544 = vld [vmem:[%s5 + $0x20] sm:$0xf]
        %v8545 = vld [vmem:[%s5 + $0x24] sm:$0xf]
        %v8546 = vld [vmem:[%s5 + $0x28] sm:$0xf]
        %v8547 = vld [vmem:[%s5 + $0x2c] sm:$0xf]
        %v8548 = vld [vmem:[%s5 + $0x30] sm:$0xf]
        %v8549 = vld [vmem:[%s5 + $0x34] sm:$0xf]
        %v8550 = vld [vmem:[%s5 + $0x38] sm:$0xf]
        %v8551 = vld [vmem:[%s5 + $0x3c] sm:$0xf]
        %v8560 = vunpack.c.l.b16 %v8544
        %v8561 = vunpack.c.l.b16 %v8545
        %v8562 = vunpack.c.l.b16 %v8546
        %v8563 = vunpack.c.l.b16 %v8547
        %v8564 = vunpack.c.l.b16 %v8548
        %v8565 = vunpack.c.l.b16 %v8549
        %v8566 = vunpack.c.l.b16 %v8550
        %v8567 = vunpack.c.l.b16 %v8551
        %v8568 = vpack.c.b16 %v8561, %v8560
        %v8569 = vpack.c.b16 %v8563, %v8562
        %v8570 = vpack.c.b16 %v8565, %v8564
        %v8571 = vpack.c.b16 %v8567, %v8566
        %v8577 = vsel %vm4561, %v8543, 0
        %8579 = vmatprep.subr.bf16.mxu0 0
        %8580 = vmatpush1.bf16.msra.mxu0 %v8568
        %8581 = vmatprep.subr.bf16.mxu0 0
        %8582 = vmatpush1.bf16.msra.mxu0 %v8569
        %8583 = vmatprep.subr.bf16.mxu0 0
        %8584 = vmatpush1.bf16.msra.mxu0 %v8570
        %8585 = vmatprep.subr.bf16.mxu0 0
        %8586 = vmatpush1.bf16.msra.mxu0 %v8571
        %8587 = vmatprep.subr.bf16.mxu0 0
        %8588 = vmatpush1.bf16.msra.mxu0 0
        %8589 = vmatprep.subr.bf16.mxu0 0
        %8590 = vmatpush1.bf16.msra.mxu0 0
        %8591 = vmatprep.subr.bf16.mxu0 0
        %8592 = vmatpush1.bf16.msra.mxu0 0
        %8593 = vmatprep.subr.bf16.mxu0 0
        %8594 = vmatpush1.bf16.msra.mxu0 0
        %8595 = vmatprep.subr.bf16.mxu0 0
        %8596 = vmatpush1.bf16.msra.mxu0 0
        %8597 = vmatprep.subr.bf16.mxu0 0
        %8598 = vmatpush1.bf16.msra.mxu0 0
        %8599 = vmatprep.subr.bf16.mxu0 0
        %8600 = vmatpush1.bf16.msra.mxu0 0
        %8601 = vmatprep.subr.bf16.mxu0 0
        %8602 = vmatpush1.bf16.msra.mxu0 0
        %8603 = vmatprep.subr.bf16.mxu0 0
        %8604 = vmatpush1.bf16.msra.mxu0 0
        %8605 = vmatprep.subr.bf16.mxu0 0
        %8606 = vmatpush1.bf16.msra.mxu0 0
        %8607 = vmatprep.subr.bf16.mxu0 0
        %8608 = vmatpush1.bf16.msra.mxu0 0
        %8609 = vmatprep.subr.bf16.mxu0 0
        %8610 = vmatpush1.bf16.msra.mxu0 0
        %8611 = vmatprep.mubr.bf16.mxu0 0
        %8612 = vmatmul.mubr.bf16.gmra.mrb[0].mxu0 %v8577
        %v8613 = vpop.f32.mrb[0].mxu0
        %v8614 = vadd.f32 0.0, %v8613
        %v8615 = vpop.f32.mrb[0].mxu0
        %v8616 = vpop.f32.mrb[0].mxu0
        %v8617 = vpop.f32.mrb[0].mxu0
        %8618 = vdwg.mxu0
        %v8627 = vunpack.c.l.b16 %v8530
        %v8628 = vunpack.c.l.b16 %v8531
        %v8629 = vunpack.c.l.b16 %v8532
        %v8630 = vunpack.c.l.b16 %v8533
        %v8631 = vunpack.c.l.b16 %v8534
        %v8632 = vunpack.c.l.b16 %v8535
        %v8633 = vunpack.c.l.b16 %v8536
        %v8634 = vunpack.c.l.b16 %v8537
        %v8635 = vpack.c.b16 %v8628, %v8627
        %v8636 = vpack.c.b16 %v8630, %v8629
        %v8637 = vpack.c.b16 %v8632, %v8631
        %v8638 = vpack.c.b16 %v8634, %v8633
        %v8644 = vsel %vm4561, %v8529, 0
        %8646 = vmatprep.subr.bf16.mxu0 0
        %8647 = vmatpush1.bf16.msra.mxu0 %v8635
        %8648 = vmatprep.subr.bf16.mxu0 0
        %8649 = vmatpush1.bf16.msra.mxu0 %v8636
        %8650 = vmatprep.subr.bf16.mxu0 0
        %8651 = vmatpush1.bf16.msra.mxu0 %v8637
        %8652 = vmatprep.subr.bf16.mxu0 0
        %8653 = vmatpush1.bf16.msra.mxu0 %v8638
        %8654 = vmatprep.subr.bf16.mxu0 0
        %8655 = vmatpush1.bf16.msra.mxu0 0
        %8656 = vmatprep.subr.bf16.mxu0 0
        %8657 = vmatpush1.bf16.msra.mxu0 0
        %8658 = vmatprep.subr.bf16.mxu0 0
        %8659 = vmatpush1.bf16.msra.mxu0 0
        %8660 = vmatprep.subr.bf16.mxu0 0
        %8661 = vmatpush1.bf16.msra.mxu0 0
        %8662 = vmatprep.subr.bf16.mxu0 0
        %8663 = vmatpush1.bf16.msra.mxu0 0
        %8664 = vmatprep.subr.bf16.mxu0 0
        %8665 = vmatpush1.bf16.msra.mxu0 0
        %8666 = vmatprep.subr.bf16.mxu0 0
        %8667 = vmatpush1.bf16.msra.mxu0 0
        %8668 = vmatprep.subr.bf16.mxu0 0
        %8669 = vmatpush1.bf16.msra.mxu0 0
        %8670 = vmatprep.subr.bf16.mxu0 0
        %8671 = vmatpush1.bf16.msra.mxu0 0
        %8672 = vmatprep.subr.bf16.mxu0 0
        %8673 = vmatpush1.bf16.msra.mxu0 0
        %8674 = vmatprep.subr.bf16.mxu0 0
        %8675 = vmatpush1.bf16.msra.mxu0 0
        %8676 = vmatprep.subr.bf16.mxu0 0
        %8677 = vmatpush1.bf16.msra.mxu0 0
        %8678 = vmatprep.mubr.bf16.mxu0 0
        %8679 = vmatmul.mubr.bf16.gmra.mrb[0].mxu0 %v8644
        %v8680 = vpop.f32.mrb[0].mxu0
        %v8681 = vadd.f32 %v8614, %v8680
        %v8682 = vpop.f32.mrb[0].mxu0
        %v8683 = vpop.f32.mrb[0].mxu0
        %v8684 = vpop.f32.mrb[0].mxu0
        %8685 = vdwg.mxu0
        %s8686 = scalar_lea.vmem [#allocation2], 4
        %v8687 = vld [vmem:[%s8686] ss:$44 sm:$0xff]
        %s8688 = scalar_lea.vmem [#allocation2], 5
        %v8689 = vld [vmem:[%s8688] ss:$44 sm:$0xff]
        %v8690 = vmax.f32 %v8687, %v8689
        %v8691 = vpack.c.bf16 %v8690, %v8690
        %v8692 = vld [vmem:[%s5 + $0x40] sm:$0xf]
        %v8693 = vld [vmem:[%s5 + $0x44] sm:$0xf]
        %v8694 = vld [vmem:[%s5 + $0x48] sm:$0xf]
        %v8695 = vld [vmem:[%s5 + $0x4c] sm:$0xf]
        %v8696 = vld [vmem:[%s5 + $0x50] sm:$0xf]
        %v8697 = vld [vmem:[%s5 + $0x54] sm:$0xf]
        %v8698 = vld [vmem:[%s5 + $0x58] sm:$0xf]
        %v8699 = vld [vmem:[%s5 + $0x5c] sm:$0xf]
        %v8708 = vunpack.c.l.b16 %v8692
        %v8709 = vunpack.c.l.b16 %v8693
        %v8710 = vunpack.c.l.b16 %v8694
        %v8711 = vunpack.c.l.b16 %v8695
        %v8712 = vunpack.c.l.b16 %v8696
        %v8713 = vunpack.c.l.b16 %v8697
        %v8714 = vunpack.c.l.b16 %v8698
        %v8715 = vunpack.c.l.b16 %v8699
        %v8716 = vpack.c.b16 %v8709, %v8708
        %v8717 = vpack.c.b16 %v8711, %v8710
        %v8718 = vpack.c.b16 %v8713, %v8712
        %v8719 = vpack.c.b16 %v8715, %v8714
        %v8725 = vsel %vm4561, %v8691, 0
        %8727 = vmatprep.subr.bf16.mxu0 0
        %8728 = vmatpush1.bf16.msra.mxu0 %v8716
        %8729 = vmatprep.subr.bf16.mxu0 0
        %8730 = vmatpush1.bf16.msra.mxu0 %v8717
        %8731 = vmatprep.subr.bf16.mxu0 0
        %8732 = vmatpush1.bf16.msra.mxu0 %v8718
        %8733 = vmatprep.subr.bf16.mxu0 0
        %8734 = vmatpush1.bf16.msra.mxu0 %v8719
        %8735 = vmatprep.subr.bf16.mxu0 0
        %8736 = vmatpush1.bf16.msra.mxu0 0
        %8737 = vmatprep.subr.bf16.mxu0 0
        %8738 = vmatpush1.bf16.msra.mxu0 0
        %8739 = vmatprep.subr.bf16.mxu0 0
        %8740 = vmatpush1.bf16.msra.mxu0 0
        %8741 = vmatprep.subr.bf16.mxu0 0
        %8742 = vmatpush1.bf16.msra.mxu0 0
        %8743 = vmatprep.subr.bf16.mxu0 0
        %8744 = vmatpush1.bf16.msra.mxu0 0
        %8745 = vmatprep.subr.bf16.mxu0 0
        %8746 = vmatpush1.bf16.msra.mxu0 0
        %8747 = vmatprep.subr.bf16.mxu0 0
        %8748 = vmatpush1.bf16.msra.mxu0 0
        %8749 = vmatprep.subr.bf16.mxu0 0
        %8750 = vmatpush1.bf16.msra.mxu0 0
        %8751 = vmatprep.subr.bf16.mxu0 0
        %8752 = vmatpush1.bf16.msra.mxu0 0
        %8753 = vmatprep.subr.bf16.mxu0 0
        %8754 = vmatpush1.bf16.msra.mxu0 0
        %8755 = vmatprep.subr.bf16.mxu0 0
        %8756 = vmatpush1.bf16.msra.mxu0 0
        %8757 = vmatprep.subr.bf16.mxu0 0
        %8758 = vmatpush1.bf16.msra.mxu0 0
        %8759 = vmatprep.mubr.bf16.mxu0 0
        %8760 = vmatmul.mubr.bf16.gmra.mrb[0].mxu0 %v8725
        %v8761 = vpop.f32.mrb[0].mxu0
        %v8762 = vadd.f32 0.0, %v8761
        %v8763 = vpop.f32.mrb[0].mxu0
        %v8764 = vpop.f32.mrb[0].mxu0
        %v8765 = vpop.f32.mrb[0].mxu0
        %8766 = vdwg.mxu0
        %v8767 = vadd.f32 %v8681, %v8762
        %s8768 = scalar_lea.vmem [#allocation2], 6
        %v8769 = vld [vmem:[%s8768] ss:$44 sm:$0xff]
        %s8770 = scalar_lea.vmem [#allocation2], 7
        %v8771 = vld [vmem:[%s8770] ss:$44 sm:$0xff]
        %v8772 = vmax.f32 %v8769, %v8771
        %v8773 = vpack.c.bf16 %v8772, %v8772
        %v8774 = vld [vmem:[%s5 + $0x60] sm:$0xf]
        %v8775 = vld [vmem:[%s5 + $0x64] sm:$0xf]
        %v8776 = vld [vmem:[%s5 + $0x68] sm:$0xf]
        %v8777 = vld [vmem:[%s5 + $0x6c] sm:$0xf]
        %v8778 = vld [vmem:[%s5 + $0x70] sm:$0xf]
        %v8779 = vld [vmem:[%s5 + $0x74] sm:$0xf]
        %v8780 = vld [vmem:[%s5 + $0x78] sm:$0xf]
        %v8781 = vld [vmem:[%s5 + $0x7c] sm:$0xf]
        %v8790 = vunpack.c.l.b16 %v8774
        %v8791 = vunpack.c.l.b16 %v8775
        %v8792 = vunpack.c.l.b16 %v8776
        %v8793 = vunpack.c.l.b16 %v8777
        %v8794 = vunpack.c.l.b16 %v8778
        %v8795 = vunpack.c.l.b16 %v8779
        %v8796 = vunpack.c.l.b16 %v8780
        %v8797 = vunpack.c.l.b16 %v8781
        %v8798 = vpack.c.b16 %v8791, %v8790
        %v8799 = vpack.c.b16 %v8793, %v8792
        %v8800 = vpack.c.b16 %v8795, %v8794
        %v8801 = vpack.c.b16 %v8797, %v8796
        %v8807 = vsel %vm4561, %v8773, 0
        %8809 = vmatprep.subr.bf16.mxu0 0
        %8810 = vmatpush1.bf16.msra.mxu0 %v8798
        %8811 = vmatprep.subr.bf16.mxu0 0
        %8812 = vmatpush1.bf16.msra.mxu0 %v8799
        %8813 = vmatprep.subr.bf16.mxu0 0
        %8814 = vmatpush1.bf16.msra.mxu0 %v8800
        %8815 = vmatprep.subr.bf16.mxu0 0
        %8816 = vmatpush1.bf16.msra.mxu0 %v8801
        %8817 = vmatprep.subr.bf16.mxu0 0
        %8818 = vmatpush1.bf16.msra.mxu0 0
        %8819 = vmatprep.subr.bf16.mxu0 0
        %8820 = vmatpush1.bf16.msra.mxu0 0
        %8821 = vmatprep.subr.bf16.mxu0 0
        %8822 = vmatpush1.bf16.msra.mxu0 0
        %8823 = vmatprep.subr.bf16.mxu0 0
        %8824 = vmatpush1.bf16.msra.mxu0 0
        %8825 = vmatprep.subr.bf16.mxu0 0
        %8826 = vmatpush1.bf16.msra.mxu0 0
        %8827 = vmatprep.subr.bf16.mxu0 0
        %8828 = vmatpush1.bf16.msra.mxu0 0
        %8829 = vmatprep.subr.bf16.mxu0 0
        %8830 = vmatpush1.bf16.msra.mxu0 0
        %8831 = vmatprep.subr.bf16.mxu0 0
        %8832 = vmatpush1.bf16.msra.mxu0 0
        %8833 = vmatprep.subr.bf16.mxu0 0
        %8834 = vmatpush1.bf16.msra.mxu0 0
        %8835 = vmatprep.subr.bf16.mxu0 0
        %8836 = vmatpush1.bf16.msra.mxu0 0
        %8837 = vmatprep.subr.bf16.mxu0 0
        %8838 = vmatpush1.bf16.msra.mxu0 0
        %8839 = vmatprep.subr.bf16.mxu0 0
        %8840 = vmatpush1.bf16.msra.mxu0 0
        %8841 = vmatprep.mubr.bf16.mxu0 0
        %8842 = vmatmul.mubr.bf16.gmra.mrb[0].mxu0 %v8807
        %v8843 = vpop.f32.mrb[0].mxu0
        %v8844 = vadd.f32 0.0, %v8843
        %v8845 = vpop.f32.mrb[0].mxu0
        %v8846 = vpop.f32.mrb[0].mxu0
        %v8847 = vpop.f32.mrb[0].mxu0
        %8848 = vdwg.mxu0
        %v8849 = vadd.f32 %v8767, %v8844
        %s8850 = scalar_lea.vmem [#allocation2], 8
        %v8851 = vld [vmem:[%s8850] ss:$44 sm:$0xff]
        %s8852 = scalar_lea.vmem [#allocation2], 9
        %v8853 = vld [vmem:[%s8852] ss:$44 sm:$0xff]
        %v8854 = vmax.f32 %v8851, %v8853
        %v8855 = vpack.c.bf16 %v8854, %v8854
        %v8856 = vld [vmem:[%s5 + $0x80] sm:$0xf]
        %v8857 = vld [vmem:[%s5 + $0x84] sm:$0xf]
        %v8858 = vld [vmem:[%s5 + $0x88] sm:$0xf]
        %v8859 = vld [vmem:[%s5 + $0x8c] sm:$0xf]
        %v8860 = vld [vmem:[%s5 + $0x90] sm:$0xf]
        %v8861 = vld [vmem:[%s5 + $0x94] sm:$0xf]
        %v8862 = vld [vmem:[%s5 + $0x98] sm:$0xf]
        %v8863 = vld [vmem:[%s5 + $0x9c] sm:$0xf]
        %v8872 = vunpack.c.l.b16 %v8856
        %v8873 = vunpack.c.l.b16 %v8857
        %v8874 = vunpack.c.l.b16 %v8858
        %v8875 = vunpack.c.l.b16 %v8859
        %v8876 = vunpack.c.l.b16 %v8860
        %v8877 = vunpack.c.l.b16 %v8861
        %v8878 = vunpack.c.l.b16 %v8862
        %v8879 = vunpack.c.l.b16 %v8863
        %v8880 = vpack.c.b16 %v8873, %v8872
        %v8881 = vpack.c.b16 %v8875, %v8874
        %v8882 = vpack.c.b16 %v8877, %v8876
        %v8883 = vpack.c.b16 %v8879, %v8878
        %v8889 = vsel %vm4561, %v8855, 0
        %8891 = vmatprep.subr.bf16.mxu0 0
        %8892 = vmatpush1.bf16.msra.mxu0 %v8880
        %8893 = vmatprep.subr.bf16.mxu0 0
        %8894 = vmatpush1.bf16.msra.mxu0 %v8881
        %8895 = vmatprep.subr.bf16.mxu0 0
        %8896 = vmatpush1.bf16.msra.mxu0 %v8882
        %8897 = vmatprep.subr.bf16.mxu0 0
        %8898 = vmatpush1.bf16.msra.mxu0 %v8883
        %8899 = vmatprep.subr.bf16.mxu0 0
        %8900 = vmatpush1.bf16.msra.mxu0 0
        %8901 = vmatprep.subr.bf16.mxu0 0
        %8902 = vmatpush1.bf16.msra.mxu0 0
        %8903 = vmatprep.subr.bf16.mxu0 0
        %8904 = vmatpush1.bf16.msra.mxu0 0
        %8905 = vmatprep.subr.bf16.mxu0 0
        %8906 = vmatpush1.bf16.msra.mxu0 0
        %8907 = vmatprep.subr.bf16.mxu0 0
        %8908 = vmatpush1.bf16.msra.mxu0 0
        %8909 = vmatprep.subr.bf16.mxu0 0
        %8910 = vmatpush1.bf16.msra.mxu0 0
        %8911 = vmatprep.subr.bf16.mxu0 0
        %8912 = vmatpush1.bf16.msra.mxu0 0
        %8913 = vmatprep.subr.bf16.mxu0 0
        %8914 = vmatpush1.bf16.msra.mxu0 0
        %8915 = vmatprep.subr.bf16.mxu0 0
        %8916 = vmatpush1.bf16.msra.mxu0 0
        %8917 = vmatprep.subr.bf16.mxu0 0
        %8918 = vmatpush1.bf16.msra.mxu0 0
        %8919 = vmatprep.subr.bf16.mxu0 0
        %8920 = vmatpush1.bf16.msra.mxu0 0
        %8921 = vmatprep.subr.bf16.mxu0 0
        %8922 = vmatpush1.bf16.msra.mxu0 0
        %8923 = vmatprep.mubr.bf16.mxu0 0
        %8924 = vmatmul.mubr.bf16.gmra.mrb[0].mxu0 %v8889
        %v8925 = vpop.f32.mrb[0].mxu0
        %v8926 = vadd.f32 0.0, %v8925
        %v8927 = vpop.f32.mrb[0].mxu0
        %v8928 = vpop.f32.mrb[0].mxu0
        %v8929 = vpop.f32.mrb[0].mxu0
        %8930 = vdwg.mxu0
        %v8931 = vadd.f32 %v8849, %v8926
        %s8932 = scalar_lea.vmem [#allocation2], 10
        %v8933 = vld [vmem:[%s8932] ss:$44 sm:$0xff]
        %s8934 = scalar_lea.vmem [#allocation2], 11
        %v8935 = vld [vmem:[%s8934] ss:$44 sm:$0xff]
        %v8936 = vmax.f32 %v8933, %v8935
        %v8937 = vpack.c.bf16 %v8936, %v8936
        %v8938 = vld [vmem:[%s5 + $0xa0] sm:$0xf]
        %v8939 = vld [vmem:[%s5 + $0xa4] sm:$0xf]
        %v8940 = vld [vmem:[%s5 + $0xa8] sm:$0xf]
        %v8941 = vld [vmem:[%s5 + $0xac] sm:$0xf]
        %v8942 = vld [vmem:[%s5 + $0xb0] sm:$0xf]
        %v8943 = vld [vmem:[%s5 + $0xb4] sm:$0xf]
        %v8944 = vld [vmem:[%s5 + $0xb8] sm:$0xf]
        %v8945 = vld [vmem:[%s5 + $0xbc] sm:$0xf]
        %v8954 = vunpack.c.l.b16 %v8938
        %v8955 = vunpack.c.l.b16 %v8939
        %v8956 = vunpack.c.l.b16 %v8940
        %v8957 = vunpack.c.l.b16 %v8941
        %v8958 = vunpack.c.l.b16 %v8942
        %v8959 = vunpack.c.l.b16 %v8943
        %v8960 = vunpack.c.l.b16 %v8944
        %v8961 = vunpack.c.l.b16 %v8945
        %v8962 = vpack.c.b16 %v8955, %v8954
        %v8963 = vpack.c.b16 %v8957, %v8956
        %v8964 = vpack.c.b16 %v8959, %v8958
        %v8965 = vpack.c.b16 %v8961, %v8960
        %v8971 = vsel %vm4561, %v8937, 0
        %8973 = vmatprep.subr.bf16.mxu0 0
        %8974 = vmatpush1.bf16.msra.mxu0 %v8962
        %8975 = vmatprep.subr.bf16.mxu0 0
        %8976 = vmatpush1.bf16.msra.mxu0 %v8963
        %8977 = vmatprep.subr.bf16.mxu0 0
        %8978 = vmatpush1.bf16.msra.mxu0 %v8964
        %8979 = vmatprep.subr.bf16.mxu0 0
        %8980 = vmatpush1.bf16.msra.mxu0 %v8965
        %8981 = vmatprep.subr.bf16.mxu0 0
        %8982 = vmatpush1.bf16.msra.mxu0 0
        %8983 = vmatprep.subr.bf16.mxu0 0
        %8984 = vmatpush1.bf16.msra.mxu0 0
        %8985 = vmatprep.subr.bf16.mxu0 0
        %8986 = vmatpush1.bf16.msra.mxu0 0
        %8987 = vmatprep.subr.bf16.mxu0 0
        %8988 = vmatpush1.bf16.msra.mxu0 0
        %8989 = vmatprep.subr.bf16.mxu0 0
        %8990 = vmatpush1.bf16.msra.mxu0 0
        %8991 = vmatprep.subr.bf16.mxu0 0
        %8992 = vmatpush1.bf16.msra.mxu0 0
        %8993 = vmatprep.subr.bf16.mxu0 0
        %8994 = vmatpush1.bf16.msra.mxu0 0
        %8995 = vmatprep.subr.bf16.mxu0 0
        %8996 = vmatpush1.bf16.msra.mxu0 0
        %8997 = vmatprep.subr.bf16.mxu0 0
        %8998 = vmatpush1.bf16.msra.mxu0 0
        %8999 = vmatprep.subr.bf16.mxu0 0
        %9000 = vmatpush1.bf16.msra.mxu0 0
        %9001 = vmatprep.subr.bf16.mxu0 0
        %9002 = vmatpush1.bf16.msra.mxu0 0
        %9003 = vmatprep.subr.bf16.mxu0 0
        %9004 = vmatpush1.bf16.msra.mxu0 0
        %9005 = vmatprep.mubr.bf16.mxu0 0
        %9006 = vmatmul.mubr.bf16.gmra.mrb[0].mxu0 %v8971
        %v9007 = vpop.f32.mrb[0].mxu0
        %v9008 = vadd.f32 0.0, %v9007
        %v9009 = vpop.f32.mrb[0].mxu0
        %v9010 = vpop.f32.mrb[0].mxu0
        %v9011 = vpop.f32.mrb[0].mxu0
        %9012 = vdwg.mxu0
        %v9013 = vadd.f32 %v8931, %v9008
        %s9014 = scalar_lea.vmem [#allocation2], 12
        %v9015 = vld [vmem:[%s9014] ss:$44 sm:$0xff]
        %s9016 = scalar_lea.vmem [#allocation2], 13
        %v9017 = vld [vmem:[%s9016] ss:$44 sm:$0xff]
        %v9018 = vmax.f32 %v9015, %v9017
        %v9019 = vpack.c.bf16 %v9018, %v9018
        %v9020 = vld [vmem:[%s5 + $0xc0] sm:$0xf]
        %v9021 = vld [vmem:[%s5 + $0xc4] sm:$0xf]
        %v9022 = vld [vmem:[%s5 + $0xc8] sm:$0xf]
        %v9023 = vld [vmem:[%s5 + $0xcc] sm:$0xf]
        %v9024 = vld [vmem:[%s5 + $0xd0] sm:$0xf]
        %v9025 = vld [vmem:[%s5 + $0xd4] sm:$0xf]
        %v9026 = vld [vmem:[%s5 + $0xd8] sm:$0xf]
        %v9027 = vld [vmem:[%s5 + $0xdc] sm:$0xf]
        %v9036 = vunpack.c.l.b16 %v9020
        %v9037 = vunpack.c.l.b16 %v9021
        %v9038 = vunpack.c.l.b16 %v9022
        %v9039 = vunpack.c.l.b16 %v9023
        %v9040 = vunpack.c.l.b16 %v9024
        %v9041 = vunpack.c.l.b16 %v9025
        %v9042 = vunpack.c.l.b16 %v9026
        %v9043 = vunpack.c.l.b16 %v9027
        %v9044 = vpack.c.b16 %v9037, %v9036
        %v9045 = vpack.c.b16 %v9039, %v9038
        %v9046 = vpack.c.b16 %v9041, %v9040
        %v9047 = vpack.c.b16 %v9043, %v9042
        %v9053 = vsel %vm4561, %v9019, 0
        %9055 = vmatprep.subr.bf16.mxu0 0
        %9056 = vmatpush1.bf16.msra.mxu0 %v9044
        %9057 = vmatprep.subr.bf16.mxu0 0
        %9058 = vmatpush1.bf16.msra.mxu0 %v9045
        %9059 = vmatprep.subr.bf16.mxu0 0
        %9060 = vmatpush1.bf16.msra.mxu0 %v9046
        %9061 = vmatprep.subr.bf16.mxu0 0
        %9062 = vmatpush1.bf16.msra.mxu0 %v9047
        %9063 = vmatprep.subr.bf16.mxu0 0
        %9064 = vmatpush1.bf16.msra.mxu0 0
        %9065 = vmatprep.subr.bf16.mxu0 0
        %9066 = vmatpush1.bf16.msra.mxu0 0
        %9067 = vmatprep.subr.bf16.mxu0 0
        %9068 = vmatpush1.bf16.msra.mxu0 0
        %9069 = vmatprep.subr.bf16.mxu0 0
        %9070 = vmatpush1.bf16.msra.mxu0 0
        %9071 = vmatprep.subr.bf16.mxu0 0
        %9072 = vmatpush1.bf16.msra.mxu0 0
        %9073 = vmatprep.subr.bf16.mxu0 0
        %9074 = vmatpush1.bf16.msra.mxu0 0
        %9075 = vmatprep.subr.bf16.mxu0 0
        %9076 = vmatpush1.bf16.msra.mxu0 0
        %9077 = vmatprep.subr.bf16.mxu0 0
        %9078 = vmatpush1.bf16.msra.mxu0 0
        %9079 = vmatprep.subr.bf16.mxu0 0
        %9080 = vmatpush1.bf16.msra.mxu0 0
        %9081 = vmatprep.subr.bf16.mxu0 0
        %9082 = vmatpush1.bf16.msra.mxu0 0
        %9083 = vmatprep.subr.bf16.mxu0 0
        %9084 = vmatpush1.bf16.msra.mxu0 0
        %9085 = vmatprep.subr.bf16.mxu0 0
        %9086 = vmatpush1.bf16.msra.mxu0 0
        %9087 = vmatprep.mubr.bf16.mxu0 0
        %9088 = vmatmul.mubr.bf16.gmra.mrb[0].mxu0 %v9053
        %v9089 = vpop.f32.mrb[0].mxu0
        %v9090 = vadd.f32 0.0, %v9089
        %v9091 = vpop.f32.mrb[0].mxu0
        %v9092 = vpop.f32.mrb[0].mxu0
        %v9093 = vpop.f32.mrb[0].mxu0
        %9094 = vdwg.mxu0
        %v9095 = vadd.f32 %v9013, %v9090
        %s9096 = scalar_lea.vmem [#allocation2], 14
        %v9097 = vld [vmem:[%s9096] ss:$44 sm:$0xff]
        %s9098 = scalar_lea.vmem [#allocation2], 15
        %v9099 = vld [vmem:[%s9098] ss:$44 sm:$0xff]
        %v9100 = vmax.f32 %v9097, %v9099
        %v9101 = vpack.c.bf16 %v9100, %v9100
        %v9102 = vld [vmem:[%s5 + $0xe0] sm:$0xf]
        %v9103 = vld [vmem:[%s5 + $0xe4] sm:$0xf]
        %v9104 = vld [vmem:[%s5 + $0xe8] sm:$0xf]
        %v9105 = vld [vmem:[%s5 + $0xec] sm:$0xf]
        %v9106 = vld [vmem:[%s5 + $0xf0] sm:$0xf]
        %v9107 = vld [vmem:[%s5 + $0xf4] sm:$0xf]
        %v9108 = vld [vmem:[%s5 + $0xf8] sm:$0xf]
        %v9109 = vld [vmem:[%s5 + $0xfc] sm:$0xf]
        %v9118 = vunpack.c.l.b16 %v9102
        %v9119 = vunpack.c.l.b16 %v9103
        %v9120 = vunpack.c.l.b16 %v9104
        %v9121 = vunpack.c.l.b16 %v9105
        %v9122 = vunpack.c.l.b16 %v9106
        %v9123 = vunpack.c.l.b16 %v9107
        %v9124 = vunpack.c.l.b16 %v9108
        %v9125 = vunpack.c.l.b16 %v9109
        %v9126 = vpack.c.b16 %v9119, %v9118
        %v9127 = vpack.c.b16 %v9121, %v9120
        %v9128 = vpack.c.b16 %v9123, %v9122
        %v9129 = vpack.c.b16 %v9125, %v9124
        %v9135 = vsel %vm4561, %v9101, 0
        %9137 = vmatprep.subr.bf16.mxu0 0
        %9138 = vmatpush1.bf16.msra.mxu0 %v9126
        %9139 = vmatprep.subr.bf16.mxu0 0
        %9140 = vmatpush1.bf16.msra.mxu0 %v9127
        %9141 = vmatprep.subr.bf16.mxu0 0
        %9142 = vmatpush1.bf16.msra.mxu0 %v9128
        %9143 = vmatprep.subr.bf16.mxu0 0
        %9144 = vmatpush1.bf16.msra.mxu0 %v9129
        %9145 = vmatprep.subr.bf16.mxu0 0
        %9146 = vmatpush1.bf16.msra.mxu0 0
        %9147 = vmatprep.subr.bf16.mxu0 0
        %9148 = vmatpush1.bf16.msra.mxu0 0
        %9149 = vmatprep.subr.bf16.mxu0 0
        %9150 = vmatpush1.bf16.msra.mxu0 0
        %9151 = vmatprep.subr.bf16.mxu0 0
        %9152 = vmatpush1.bf16.msra.mxu0 0
        %9153 = vmatprep.subr.bf16.mxu0 0
        %9154 = vmatpush1.bf16.msra.mxu0 0
        %9155 = vmatprep.subr.bf16.mxu0 0
        %9156 = vmatpush1.bf16.msra.mxu0 0
        %9157 = vmatprep.subr.bf16.mxu0 0
        %9158 = vmatpush1.bf16.msra.mxu0 0
        %9159 = vmatprep.subr.bf16.mxu0 0
        %9160 = vmatpush1.bf16.msra.mxu0 0
        %9161 = vmatprep.subr.bf16.mxu0 0
        %9162 = vmatpush1.bf16.msra.mxu0 0
        %9163 = vmatprep.subr.bf16.mxu0 0
        %9164 = vmatpush1.bf16.msra.mxu0 0
        %9165 = vmatprep.subr.bf16.mxu0 0
        %9166 = vmatpush1.bf16.msra.mxu0 0
        %9167 = vmatprep.subr.bf16.mxu0 0
        %9168 = vmatpush1.bf16.msra.mxu0 0
        %9169 = vmatprep.mubr.bf16.mxu0 0
        %9170 = vmatmul.mubr.bf16.gmra.mrb[0].mxu0 %v9135
        %v9171 = vpop.f32.mrb[0].mxu0
        %v9172 = vadd.f32 0.0, %v9171
        %v9173 = vpop.f32.mrb[0].mxu0
        %v9174 = vpop.f32.mrb[0].mxu0
        %v9175 = vpop.f32.mrb[0].mxu0
        %9176 = vdwg.mxu0
        %v9177 = vadd.f32 %v9095, %v9172
        %s9178 = scalar_lea.vmem [#allocation2], 16
        %v9179 = vld [vmem:[%s9178] ss:$44 sm:$0xff]
        %s9180 = scalar_lea.vmem [#allocation2], 17
        %v9181 = vld [vmem:[%s9180] ss:$44 sm:$0xff]
        %v9182 = vmax.f32 %v9179, %v9181
        %v9183 = vpack.c.bf16 %v9182, %v9182
        %v9184 = vld [vmem:[%s5 + $0x100] sm:$0xf]
        %v9185 = vld [vmem:[%s5 + $0x104] sm:$0xf]
        %v9186 = vld [vmem:[%s5 + $0x108] sm:$0xf]
        %v9187 = vld [vmem:[%s5 + $0x10c] sm:$0xf]
        %v9188 = vld [vmem:[%s5 + $0x110] sm:$0xf]
        %v9189 = vld [vmem:[%s5 + $0x114] sm:$0xf]
        %v9190 = vld [vmem:[%s5 + $0x118] sm:$0xf]
        %v9191 = vld [vmem:[%s5 + $0x11c] sm:$0xf]
        %v9200 = vunpack.c.l.b16 %v9184
        %v9201 = vunpack.c.l.b16 %v9185
        %v9202 = vunpack.c.l.b16 %v9186
        %v9203 = vunpack.c.l.b16 %v9187
        %v9204 = vunpack.c.l.b16 %v9188
        %v9205 = vunpack.c.l.b16 %v9189
        %v9206 = vunpack.c.l.b16 %v9190
        %v9207 = vunpack.c.l.b16 %v9191
        %v9208 = vpack.c.b16 %v9201, %v9200
        %v9209 = vpack.c.b16 %v9203, %v9202
        %v9210 = vpack.c.b16 %v9205, %v9204
        %v9211 = vpack.c.b16 %v9207, %v9206
        %v9217 = vsel %vm4561, %v9183, 0
        %9219 = vmatprep.subr.bf16.mxu0 0
        %9220 = vmatpush1.bf16.msra.mxu0 %v9208
        %9221 = vmatprep.subr.bf16.mxu0 0
        %9222 = vmatpush1.bf16.msra.mxu0 %v9209
        %9223 = vmatprep.subr.bf16.mxu0 0
        %9224 = vmatpush1.bf16.msra.mxu0 %v9210
        %9225 = vmatprep.subr.bf16.mxu0 0
        %9226 = vmatpush1.bf16.msra.mxu0 %v9211
        %9227 = vmatprep.subr.bf16.mxu0 0
        %9228 = vmatpush1.bf16.msra.mxu0 0
        %9229 = vmatprep.subr.bf16.mxu0 0
        %9230 = vmatpush1.bf16.msra.mxu0 0
        %9231 = vmatprep.subr.bf16.mxu0 0
        %9232 = vmatpush1.bf16.msra.mxu0 0
        %9233 = vmatprep.subr.bf16.mxu0 0
        %9234 = vmatpush1.bf16.msra.mxu0 0
        %9235 = vmatprep.subr.bf16.mxu0 0
        %9236 = vmatpush1.bf16.msra.mxu0 0
        %9237 = vmatprep.subr.bf16.mxu0 0
        %9238 = vmatpush1.bf16.msra.mxu0 0
        %9239 = vmatprep.subr.bf16.mxu0 0
        %9240 = vmatpush1.bf16.msra.mxu0 0
        %9241 = vmatprep.subr.bf16.mxu0 0
        %9242 = vmatpush1.bf16.msra.mxu0 0
        %9243 = vmatprep.subr.bf16.mxu0 0
        %9244 = vmatpush1.bf16.msra.mxu0 0
        %9245 = vmatprep.subr.bf16.mxu0 0
        %9246 = vmatpush1.bf16.msra.mxu0 0
        %9247 = vmatprep.subr.bf16.mxu0 0
        %9248 = vmatpush1.bf16.msra.mxu0 0
        %9249 = vmatprep.subr.bf16.mxu0 0
        %9250 = vmatpush1.bf16.msra.mxu0 0
        %9251 = vmatprep.mubr.bf16.mxu0 0
        %9252 = vmatmul.mubr.bf16.gmra.mrb[0].mxu0 %v9217
        %v9253 = vpop.f32.mrb[0].mxu0
        %v9254 = vadd.f32 0.0, %v9253
        %v9255 = vpop.f32.mrb[0].mxu0
        %v9256 = vpop.f32.mrb[0].mxu0
        %v9257 = vpop.f32.mrb[0].mxu0
        %9258 = vdwg.mxu0
        %v9259 = vadd.f32 %v9177, %v9254
        %s9260 = scalar_lea.vmem [#allocation2], 18
        %v9261 = vld [vmem:[%s9260] ss:$44 sm:$0xff]
        %s9262 = scalar_lea.vmem [#allocation2], 19
        %v9263 = vld [vmem:[%s9262] ss:$44 sm:$0xff]
        %v9264 = vmax.f32 %v9261, %v9263
        %v9265 = vpack.c.bf16 %v9264, %v9264
        %v9266 = vld [vmem:[%s5 + $0x120] sm:$0xf]
        %v9267 = vld [vmem:[%s5 + $0x124] sm:$0xf]
        %v9268 = vld [vmem:[%s5 + $0x128] sm:$0xf]
        %v9269 = vld [vmem:[%s5 + $0x12c] sm:$0xf]
        %v9270 = vld [vmem:[%s5 + $0x130] sm:$0xf]
        %v9271 = vld [vmem:[%s5 + $0x134] sm:$0xf]
        %v9272 = vld [vmem:[%s5 + $0x138] sm:$0xf]
        %v9273 = vld [vmem:[%s5 + $0x13c] sm:$0xf]
        %v9282 = vunpack.c.l.b16 %v9266
        %v9283 = vunpack.c.l.b16 %v9267
        %v9284 = vunpack.c.l.b16 %v9268
        %v9285 = vunpack.c.l.b16 %v9269
        %v9286 = vunpack.c.l.b16 %v9270
        %v9287 = vunpack.c.l.b16 %v9271
        %v9288 = vunpack.c.l.b16 %v9272
        %v9289 = vunpack.c.l.b16 %v9273
        %v9290 = vpack.c.b16 %v9283, %v9282
        %v9291 = vpack.c.b16 %v9285, %v9284
        %v9292 = vpack.c.b16 %v9287, %v9286
        %v9293 = vpack.c.b16 %v9289, %v9288
        %v9299 = vsel %vm4561, %v9265, 0
        %9301 = vmatprep.subr.bf16.mxu0 0
        %9302 = vmatpush1.bf16.msra.mxu0 %v9290
        %9303 = vmatprep.subr.bf16.mxu0 0
        %9304 = vmatpush1.bf16.msra.mxu0 %v9291
        %9305 = vmatprep.subr.bf16.mxu0 0
        %9306 = vmatpush1.bf16.msra.mxu0 %v9292
        %9307 = vmatprep.subr.bf16.mxu0 0
        %9308 = vmatpush1.bf16.msra.mxu0 %v9293
        %9309 = vmatprep.subr.bf16.mxu0 0
        %9310 = vmatpush1.bf16.msra.mxu0 0
        %9311 = vmatprep.subr.bf16.mxu0 0
        %9312 = vmatpush1.bf16.msra.mxu0 0
        %9313 = vmatprep.subr.bf16.mxu0 0
        %9314 = vmatpush1.bf16.msra.mxu0 0
        %9315 = vmatprep.subr.bf16.mxu0 0
        %9316 = vmatpush1.bf16.msra.mxu0 0
        %9317 = vmatprep.subr.bf16.mxu0 0
        %9318 = vmatpush1.bf16.msra.mxu0 0
        %9319 = vmatprep.subr.bf16.mxu0 0
        %9320 = vmatpush1.bf16.msra.mxu0 0
        %9321 = vmatprep.subr.bf16.mxu0 0
        %9322 = vmatpush1.bf16.msra.mxu0 0
        %9323 = vmatprep.subr.bf16.mxu0 0
        %9324 = vmatpush1.bf16.msra.mxu0 0
        %9325 = vmatprep.subr.bf16.mxu0 0
        %9326 = vmatpush1.bf16.msra.mxu0 0
        %9327 = vmatprep.subr.bf16.mxu0 0
        %9328 = vmatpush1.bf16.msra.mxu0 0
        %9329 = vmatprep.subr.bf16.mxu0 0
        %9330 = vmatpush1.bf16.msra.mxu0 0
        %9331 = vmatprep.subr.bf16.mxu0 0
        %9332 = vmatpush1.bf16.msra.mxu0 0
        %9333 = vmatprep.mubr.bf16.mxu0 0
        %9334 = vmatmul.mubr.bf16.gmra.mrb[0].mxu0 %v9299
        %v9335 = vpop.f32.mrb[0].mxu0
        %v9336 = vadd.f32 0.0, %v9335
        %v9337 = vpop.f32.mrb[0].mxu0
        %v9338 = vpop.f32.mrb[0].mxu0
        %v9339 = vpop.f32.mrb[0].mxu0
        %9340 = vdwg.mxu0
        %v9341 = vadd.f32 %v9259, %v9336
        %s9342 = scalar_lea.vmem [#allocation2], 20
        %v9343 = vld [vmem:[%s9342] ss:$44 sm:$0xff]
        %s9344 = scalar_lea.vmem [#allocation2], 21
        %v9345 = vld [vmem:[%s9344] ss:$44 sm:$0xff]
        %v9346 = vmax.f32 %v9343, %v9345
        %v9347 = vpack.c.bf16 %v9346, %v9346
        %v9348 = vld [vmem:[%s5 + $0x140] sm:$0xf]
        %v9349 = vld [vmem:[%s5 + $0x144] sm:$0xf]
        %v9350 = vld [vmem:[%s5 + $0x148] sm:$0xf]
        %v9351 = vld [vmem:[%s5 + $0x14c] sm:$0xf]
        %v9352 = vld [vmem:[%s5 + $0x150] sm:$0xf]
        %v9353 = vld [vmem:[%s5 + $0x154] sm:$0xf]
        %v9354 = vld [vmem:[%s5 + $0x158] sm:$0xf]
        %v9355 = vld [vmem:[%s5 + $0x15c] sm:$0xf]
        %v9364 = vunpack.c.l.b16 %v9348
        %v9365 = vunpack.c.l.b16 %v9349
        %v9366 = vunpack.c.l.b16 %v9350
        %v9367 = vunpack.c.l.b16 %v9351
        %v9368 = vunpack.c.l.b16 %v9352
        %v9369 = vunpack.c.l.b16 %v9353
        %v9370 = vunpack.c.l.b16 %v9354
        %v9371 = vunpack.c.l.b16 %v9355
        %v9372 = vpack.c.b16 %v9365, %v9364
        %v9373 = vpack.c.b16 %v9367, %v9366
        %v9374 = vpack.c.b16 %v9369, %v9368
        %v9375 = vpack.c.b16 %v9371, %v9370
        %v9381 = vsel %vm4561, %v9347, 0
        %9383 = vmatprep.subr.bf16.mxu0 0
        %9384 = vmatpush1.bf16.msra.mxu0 %v9372
        %9385 = vmatprep.subr.bf16.mxu0 0
        %9386 = vmatpush1.bf16.msra.mxu0 %v9373
        %9387 = vmatprep.subr.bf16.mxu0 0
        %9388 = vmatpush1.bf16.msra.mxu0 %v9374
        %9389 = vmatprep.subr.bf16.mxu0 0
        %9390 = vmatpush1.bf16.msra.mxu0 %v9375
        %9391 = vmatprep.subr.bf16.mxu0 0
        %9392 = vmatpush1.bf16.msra.mxu0 0
        %9393 = vmatprep.subr.bf16.mxu0 0
        %9394 = vmatpush1.bf16.msra.mxu0 0
        %9395 = vmatprep.subr.bf16.mxu0 0
        %9396 = vmatpush1.bf16.msra.mxu0 0
        %9397 = vmatprep.subr.bf16.mxu0 0
        %9398 = vmatpush1.bf16.msra.mxu0 0
        %9399 = vmatprep.subr.bf16.mxu0 0
        %9400 = vmatpush1.bf16.msra.mxu0 0
        %9401 = vmatprep.subr.bf16.mxu0 0
        %9402 = vmatpush1.bf16.msra.mxu0 0
        %9403 = vmatprep.subr.bf16.mxu0 0
        %9404 = vmatpush1.bf16.msra.mxu0 0
        %9405 = vmatprep.subr.bf16.mxu0 0
        %9406 = vmatpush1.bf16.msra.mxu0 0
        %9407 = vmatprep.subr.bf16.mxu0 0
        %9408 = vmatpush1.bf16.msra.mxu0 0
        %9409 = vmatprep.subr.bf16.mxu0 0
        %9410 = vmatpush1.bf16.msra.mxu0 0
        %9411 = vmatprep.subr.bf16.mxu0 0
        %9412 = vmatpush1.bf16.msra.mxu0 0
        %9413 = vmatprep.subr.bf16.mxu0 0
        %9414 = vmatpush1.bf16.msra.mxu0 0
        %9415 = vmatprep.mubr.bf16.mxu0 0
        %9416 = vmatmul.mubr.bf16.gmra.mrb[0].mxu0 %v9381
        %v9417 = vpop.f32.mrb[0].mxu0
        %v9418 = vadd.f32 0.0, %v9417
        %v9419 = vpop.f32.mrb[0].mxu0
        %v9420 = vpop.f32.mrb[0].mxu0
        %v9421 = vpop.f32.mrb[0].mxu0
        %9422 = vdwg.mxu0
        %v9423 = vadd.f32 %v9341, %v9418
        %s9424 = scalar_lea.vmem [#allocation2], 22
        %v9425 = vld [vmem:[%s9424] ss:$44 sm:$0xff]
        %s9426 = scalar_lea.vmem [#allocation2], 23
        %v9427 = vld [vmem:[%s9426] ss:$44 sm:$0xff]
        %v9428 = vmax.f32 %v9425, %v9427
        %v9429 = vpack.c.bf16 %v9428, %v9428
        %v9430 = vld [vmem:[%s5 + $0x160] sm:$0xf]
        %v9431 = vld [vmem:[%s5 + $0x164] sm:$0xf]
        %v9432 = vld [vmem:[%s5 + $0x168] sm:$0xf]
        %v9433 = vld [vmem:[%s5 + $0x16c] sm:$0xf]
        %v9434 = vld [vmem:[%s5 + $0x170] sm:$0xf]
        %v9435 = vld [vmem:[%s5 + $0x174] sm:$0xf]
        %v9436 = vld [vmem:[%s5 + $0x178] sm:$0xf]
        %v9437 = vld [vmem:[%s5 + $0x17c] sm:$0xf]
        %v9446 = vunpack.c.l.b16 %v9430
        %v9447 = vunpack.c.l.b16 %v9431
        %v9448 = vunpack.c.l.b16 %v9432
        %v9449 = vunpack.c.l.b16 %v9433
        %v9450 = vunpack.c.l.b16 %v9434
        %v9451 = vunpack.c.l.b16 %v9435
        %v9452 = vunpack.c.l.b16 %v9436
        %v9453 = vunpack.c.l.b16 %v9437
        %v9454 = vpack.c.b16 %v9447, %v9446
        %v9455 = vpack.c.b16 %v9449, %v9448
        %v9456 = vpack.c.b16 %v9451, %v9450
        %v9457 = vpack.c.b16 %v9453, %v9452
        %v9463 = vsel %vm4561, %v9429, 0
        %9465 = vmatprep.subr.bf16.mxu0 0
        %9466 = vmatpush1.bf16.msra.mxu0 %v9454
        %9467 = vmatprep.subr.bf16.mxu0 0
        %9468 = vmatpush1.bf16.msra.mxu0 %v9455
        %9469 = vmatprep.subr.bf16.mxu0 0
        %9470 = vmatpush1.bf16.msra.mxu0 %v9456
        %9471 = vmatprep.subr.bf16.mxu0 0
        %9472 = vmatpush1.bf16.msra.mxu0 %v9457
        %9473 = vmatprep.subr.bf16.mxu0 0
        %9474 = vmatpush1.bf16.msra.mxu0 0
        %9475 = vmatprep.subr.bf16.mxu0 0
        %9476 = vmatpush1.bf16.msra.mxu0 0
        %9477 = vmatprep.subr.bf16.mxu0 0
        %9478 = vmatpush1.bf16.msra.mxu0 0
        %9479 = vmatprep.subr.bf16.mxu0 0
        %9480 = vmatpush1.bf16.msra.mxu0 0
        %9481 = vmatprep.subr.bf16.mxu0 0
        %9482 = vmatpush1.bf16.msra.mxu0 0
        %9483 = vmatprep.subr.bf16.mxu0 0
        %9484 = vmatpush1.bf16.msra.mxu0 0
        %9485 = vmatprep.subr.bf16.mxu0 0
        %9486 = vmatpush1.bf16.msra.mxu0 0
        %9487 = vmatprep.subr.bf16.mxu0 0
        %9488 = vmatpush1.bf16.msra.mxu0 0
        %9489 = vmatprep.subr.bf16.mxu0 0
        %9490 = vmatpush1.bf16.msra.mxu0 0
        %9491 = vmatprep.subr.bf16.mxu0 0
        %9492 = vmatpush1.bf16.msra.mxu0 0
        %9493 = vmatprep.subr.bf16.mxu0 0
        %9494 = vmatpush1.bf16.msra.mxu0 0
        %9495 = vmatprep.subr.bf16.mxu0 0
        %9496 = vmatpush1.bf16.msra.mxu0 0
        %9497 = vmatprep.mubr.bf16.mxu0 0
        %9498 = vmatmul.mubr.bf16.gmra.mrb[0].mxu0 %v9463
        %v9499 = vpop.f32.mrb[0].mxu0
        %v9500 = vadd.f32 0.0, %v9499
        %v9501 = vpop.f32.mrb[0].mxu0
        %v9502 = vpop.f32.mrb[0].mxu0
        %v9503 = vpop.f32.mrb[0].mxu0
        %9504 = vdwg.mxu0
        %v9505 = vadd.f32 %v9423, %v9500
        %s9506 = scalar_lea.vmem [#allocation2], 24
        %v9507 = vld [vmem:[%s9506] ss:$44 sm:$0xff]
        %s9508 = scalar_lea.vmem [#allocation2], 25
        %v9509 = vld [vmem:[%s9508] ss:$44 sm:$0xff]
        %v9510 = vmax.f32 %v9507, %v9509
        %v9511 = vpack.c.bf16 %v9510, %v9510
        %v9512 = vld [vmem:[%s5 + $0x180] sm:$0xf]
        %v9513 = vld [vmem:[%s5 + $0x184] sm:$0xf]
        %v9514 = vld [vmem:[%s5 + $0x188] sm:$0xf]
        %v9515 = vld [vmem:[%s5 + $0x18c] sm:$0xf]
        %v9516 = vld [vmem:[%s5 + $0x190] sm:$0xf]
        %v9517 = vld [vmem:[%s5 + $0x194] sm:$0xf]
        %v9518 = vld [vmem:[%s5 + $0x198] sm:$0xf]
        %v9519 = vld [vmem:[%s5 + $0x19c] sm:$0xf]
        %v9528 = vunpack.c.l.b16 %v9512
        %v9529 = vunpack.c.l.b16 %v9513
        %v9530 = vunpack.c.l.b16 %v9514
        %v9531 = vunpack.c.l.b16 %v9515
        %v9532 = vunpack.c.l.b16 %v9516
        %v9533 = vunpack.c.l.b16 %v9517
        %v9534 = vunpack.c.l.b16 %v9518
        %v9535 = vunpack.c.l.b16 %v9519
        %v9536 = vpack.c.b16 %v9529, %v9528
        %v9537 = vpack.c.b16 %v9531, %v9530
        %v9538 = vpack.c.b16 %v9533, %v9532
        %v9539 = vpack.c.b16 %v9535, %v9534
        %v9545 = vsel %vm4561, %v9511, 0
        %9547 = vmatprep.subr.bf16.mxu0 0
        %9548 = vmatpush1.bf16.msra.mxu0 %v9536
        %9549 = vmatprep.subr.bf16.mxu0 0
        %9550 = vmatpush1.bf16.msra.mxu0 %v9537
        %9551 = vmatprep.subr.bf16.mxu0 0
        %9552 = vmatpush1.bf16.msra.mxu0 %v9538
        %9553 = vmatprep.subr.bf16.mxu0 0
        %9554 = vmatpush1.bf16.msra.mxu0 %v9539
        %9555 = vmatprep.subr.bf16.mxu0 0
        %9556 = vmatpush1.bf16.msra.mxu0 0
        %9557 = vmatprep.subr.bf16.mxu0 0
        %9558 = vmatpush1.bf16.msra.mxu0 0
        %9559 = vmatprep.subr.bf16.mxu0 0
        %9560 = vmatpush1.bf16.msra.mxu0 0
        %9561 = vmatprep.subr.bf16.mxu0 0
        %9562 = vmatpush1.bf16.msra.mxu0 0
        %9563 = vmatprep.subr.bf16.mxu0 0
        %9564 = vmatpush1.bf16.msra.mxu0 0
        %9565 = vmatprep.subr.bf16.mxu0 0
        %9566 = vmatpush1.bf16.msra.mxu0 0
        %9567 = vmatprep.subr.bf16.mxu0 0
        %9568 = vmatpush1.bf16.msra.mxu0 0
        %9569 = vmatprep.subr.bf16.mxu0 0
        %9570 = vmatpush1.bf16.msra.mxu0 0
        %9571 = vmatprep.subr.bf16.mxu0 0
        %9572 = vmatpush1.bf16.msra.mxu0 0
        %9573 = vmatprep.subr.bf16.mxu0 0
        %9574 = vmatpush1.bf16.msra.mxu0 0
        %9575 = vmatprep.subr.bf16.mxu0 0
        %9576 = vmatpush1.bf16.msra.mxu0 0
        %9577 = vmatprep.subr.bf16.mxu0 0
        %9578 = vmatpush1.bf16.msra.mxu0 0
        %9579 = vmatprep.mubr.bf16.mxu0 0
        %9580 = vmatmul.mubr.bf16.gmra.mrb[0].mxu0 %v9545
        %v9581 = vpop.f32.mrb[0].mxu0
        %v9582 = vadd.f32 0.0, %v9581
        %v9583 = vpop.f32.mrb[0].mxu0
        %v9584 = vpop.f32.mrb[0].mxu0
        %v9585 = vpop.f32.mrb[0].mxu0
        %9586 = vdwg.mxu0
        %v9587 = vadd.f32 %v9505, %v9582
        %s9588 = scalar_lea.vmem [#allocation2], 26
        %v9589 = vld [vmem:[%s9588] ss:$44 sm:$0xff]
        %s9590 = scalar_lea.vmem [#allocation2], 27
        %v9591 = vld [vmem:[%s9590] ss:$44 sm:$0xff]
        %v9592 = vmax.f32 %v9589, %v9591
        %v9593 = vpack.c.bf16 %v9592, %v9592
        %v9594 = vld [vmem:[%s5 + $0x1a0] sm:$0xf]
        %v9595 = vld [vmem:[%s5 + $0x1a4] sm:$0xf]
        %v9596 = vld [vmem:[%s5 + $0x1a8] sm:$0xf]
        %v9597 = vld [vmem:[%s5 + $0x1ac] sm:$0xf]
        %v9598 = vld [vmem:[%s5 + $0x1b0] sm:$0xf]
        %v9599 = vld [vmem:[%s5 + $0x1b4] sm:$0xf]
        %v9600 = vld [vmem:[%s5 + $0x1b8] sm:$0xf]
        %v9601 = vld [vmem:[%s5 + $0x1bc] sm:$0xf]
        %v9610 = vunpack.c.l.b16 %v9594
        %v9611 = vunpack.c.l.b16 %v9595
        %v9612 = vunpack.c.l.b16 %v9596
        %v9613 = vunpack.c.l.b16 %v9597
        %v9614 = vunpack.c.l.b16 %v9598
        %v9615 = vunpack.c.l.b16 %v9599
        %v9616 = vunpack.c.l.b16 %v9600
        %v9617 = vunpack.c.l.b16 %v9601
        %v9618 = vpack.c.b16 %v9611, %v9610
        %v9619 = vpack.c.b16 %v9613, %v9612
        %v9620 = vpack.c.b16 %v9615, %v9614
        %v9621 = vpack.c.b16 %v9617, %v9616
        %v9627 = vsel %vm4561, %v9593, 0
        %9629 = vmatprep.subr.bf16.mxu0 0
        %9630 = vmatpush1.bf16.msra.mxu0 %v9618
        %9631 = vmatprep.subr.bf16.mxu0 0
        %9632 = vmatpush1.bf16.msra.mxu0 %v9619
        %9633 = vmatprep.subr.bf16.mxu0 0
        %9634 = vmatpush1.bf16.msra.mxu0 %v9620
        %9635 = vmatprep.subr.bf16.mxu0 0
        %9636 = vmatpush1.bf16.msra.mxu0 %v9621
        %9637 = vmatprep.subr.bf16.mxu0 0
        %9638 = vmatpush1.bf16.msra.mxu0 0
        %9639 = vmatprep.subr.bf16.mxu0 0
        %9640 = vmatpush1.bf16.msra.mxu0 0
        %9641 = vmatprep.subr.bf16.mxu0 0
        %9642 = vmatpush1.bf16.msra.mxu0 0
        %9643 = vmatprep.subr.bf16.mxu0 0
        %9644 = vmatpush1.bf16.msra.mxu0 0
        %9645 = vmatprep.subr.bf16.mxu0 0
        %9646 = vmatpush1.bf16.msra.mxu0 0
        %9647 = vmatprep.subr.bf16.mxu0 0
        %9648 = vmatpush1.bf16.msra.mxu0 0
        %9649 = vmatprep.subr.bf16.mxu0 0
        %9650 = vmatpush1.bf16.msra.mxu0 0
        %9651 = vmatprep.subr.bf16.mxu0 0
        %9652 = vmatpush1.bf16.msra.mxu0 0
        %9653 = vmatprep.subr.bf16.mxu0 0
        %9654 = vmatpush1.bf16.msra.mxu0 0
        %9655 = vmatprep.subr.bf16.mxu0 0
        %9656 = vmatpush1.bf16.msra.mxu0 0
        %9657 = vmatprep.subr.bf16.mxu0 0
        %9658 = vmatpush1.bf16.msra.mxu0 0
        %9659 = vmatprep.subr.bf16.mxu0 0
        %9660 = vmatpush1.bf16.msra.mxu0 0
        %9661 = vmatprep.mubr.bf16.mxu0 0
        %9662 = vmatmul.mubr.bf16.gmra.mrb[0].mxu0 %v9627
        %v9663 = vpop.f32.mrb[0].mxu0
        %v9664 = vadd.f32 0.0, %v9663
        %v9665 = vpop.f32.mrb[0].mxu0
        %v9666 = vpop.f32.mrb[0].mxu0
        %v9667 = vpop.f32.mrb[0].mxu0
        %9668 = vdwg.mxu0
        %v9669 = vadd.f32 %v9587, %v9664
        %s9670 = scalar_lea.vmem [#allocation2], 28
        %v9671 = vld [vmem:[%s9670] ss:$44 sm:$0xff]
        %s9672 = scalar_lea.vmem [#allocation2], 29
        %v9673 = vld [vmem:[%s9672] ss:$44 sm:$0xff]
        %v9674 = vmax.f32 %v9671, %v9673
        %v9675 = vpack.c.bf16 %v9674, %v9674
        %v9676 = vld [vmem:[%s5 + $0x1c0] sm:$0xf]
        %v9677 = vld [vmem:[%s5 + $0x1c4] sm:$0xf]
        %v9678 = vld [vmem:[%s5 + $0x1c8] sm:$0xf]
        %v9679 = vld [vmem:[%s5 + $0x1cc] sm:$0xf]
        %v9680 = vld [vmem:[%s5 + $0x1d0] sm:$0xf]
        %v9681 = vld [vmem:[%s5 + $0x1d4] sm:$0xf]
        %v9682 = vld [vmem:[%s5 + $0x1d8] sm:$0xf]
        %v9683 = vld [vmem:[%s5 + $0x1dc] sm:$0xf]
        %v9692 = vunpack.c.l.b16 %v9676
        %v9693 = vunpack.c.l.b16 %v9677
        %v9694 = vunpack.c.l.b16 %v9678
        %v9695 = vunpack.c.l.b16 %v9679
        %v9696 = vunpack.c.l.b16 %v9680
        %v9697 = vunpack.c.l.b16 %v9681
        %v9698 = vunpack.c.l.b16 %v9682
        %v9699 = vunpack.c.l.b16 %v9683
        %v9700 = vpack.c.b16 %v9693, %v9692
        %v9701 = vpack.c.b16 %v9695, %v9694
        %v9702 = vpack.c.b16 %v9697, %v9696
        %v9703 = vpack.c.b16 %v9699, %v9698
        %v9709 = vsel %vm4561, %v9675, 0
        %9711 = vmatprep.subr.bf16.mxu0 0
        %9712 = vmatpush1.bf16.msra.mxu0 %v9700
        %9713 = vmatprep.subr.bf16.mxu0 0
        %9714 = vmatpush1.bf16.msra.mxu0 %v9701
        %9715 = vmatprep.subr.bf16.mxu0 0
        %9716 = vmatpush1.bf16.msra.mxu0 %v9702
        %9717 = vmatprep.subr.bf16.mxu0 0
        %9718 = vmatpush1.bf16.msra.mxu0 %v9703
        %9719 = vmatprep.subr.bf16.mxu0 0
        %9720 = vmatpush1.bf16.msra.mxu0 0
        %9721 = vmatprep.subr.bf16.mxu0 0
        %9722 = vmatpush1.bf16.msra.mxu0 0
        %9723 = vmatprep.subr.bf16.mxu0 0
        %9724 = vmatpush1.bf16.msra.mxu0 0
        %9725 = vmatprep.subr.bf16.mxu0 0
        %9726 = vmatpush1.bf16.msra.mxu0 0
        %9727 = vmatprep.subr.bf16.mxu0 0
        %9728 = vmatpush1.bf16.msra.mxu0 0
        %9729 = vmatprep.subr.bf16.mxu0 0
        %9730 = vmatpush1.bf16.msra.mxu0 0
        %9731 = vmatprep.subr.bf16.mxu0 0
        %9732 = vmatpush1.bf16.msra.mxu0 0
        %9733 = vmatprep.subr.bf16.mxu0 0
        %9734 = vmatpush1.bf16.msra.mxu0 0
        %9735 = vmatprep.subr.bf16.mxu0 0
        %9736 = vmatpush1.bf16.msra.mxu0 0
        %9737 = vmatprep.subr.bf16.mxu0 0
        %9738 = vmatpush1.bf16.msra.mxu0 0
        %9739 = vmatprep.subr.bf16.mxu0 0
        %9740 = vmatpush1.bf16.msra.mxu0 0
        %9741 = vmatprep.subr.bf16.mxu0 0
        %9742 = vmatpush1.bf16.msra.mxu0 0
        %9743 = vmatprep.mubr.bf16.mxu0 0
        %9744 = vmatmul.mubr.bf16.gmra.mrb[0].mxu0 %v9709
        %v9745 = vpop.f32.mrb[0].mxu0
        %v9746 = vadd.f32 0.0, %v9745
        %v9747 = vpop.f32.mrb[0].mxu0
        %v9748 = vpop.f32.mrb[0].mxu0
        %v9749 = vpop.f32.mrb[0].mxu0
        %9750 = vdwg.mxu0
        %v9751 = vadd.f32 %v9669, %v9746
        %s9752 = scalar_lea.vmem [#allocation2], 30
        %v9753 = vld [vmem:[%s9752] ss:$44 sm:$0xff]
        %s9754 = scalar_lea.vmem [#allocation2], 31
        %v9755 = vld [vmem:[%s9754] ss:$44 sm:$0xff]
        %v9756 = vmax.f32 %v9753, %v9755
        %v9757 = vpack.c.bf16 %v9756, %v9756
        %v9758 = vld [vmem:[%s5 + $0x1e0] sm:$0xf]
        %v9759 = vld [vmem:[%s5 + $0x1e4] sm:$0xf]
        %v9760 = vld [vmem:[%s5 + $0x1e8] sm:$0xf]
        %v9761 = vld [vmem:[%s5 + $0x1ec] sm:$0xf]
        %v9762 = vld [vmem:[%s5 + $0x1f0] sm:$0xf]
        %v9763 = vld [vmem:[%s5 + $0x1f4] sm:$0xf]
        %v9764 = vld [vmem:[%s5 + $0x1f8] sm:$0xf]
        %v9765 = vld [vmem:[%s5 + $0x1fc] sm:$0xf]
        %v9774 = vunpack.c.l.b16 %v9758
        %v9775 = vunpack.c.l.b16 %v9759
        %v9776 = vunpack.c.l.b16 %v9760
        %v9777 = vunpack.c.l.b16 %v9761
        %v9778 = vunpack.c.l.b16 %v9762
        %v9779 = vunpack.c.l.b16 %v9763
        %v9780 = vunpack.c.l.b16 %v9764
        %v9781 = vunpack.c.l.b16 %v9765
        %v9782 = vpack.c.b16 %v9775, %v9774
        %v9783 = vpack.c.b16 %v9777, %v9776
        %v9784 = vpack.c.b16 %v9779, %v9778
        %v9785 = vpack.c.b16 %v9781, %v9780
        %v9791 = vsel %vm4561, %v9757, 0
        %9793 = vmatprep.subr.bf16.mxu0 0
        %9794 = vmatpush1.bf16.msra.mxu0 %v9782
        %9795 = vmatprep.subr.bf16.mxu0 0
        %9796 = vmatpush1.bf16.msra.mxu0 %v9783
        %9797 = vmatprep.subr.bf16.mxu0 0
        %9798 = vmatpush1.bf16.msra.mxu0 %v9784
        %9799 = vmatprep.subr.bf16.mxu0 0
        %9800 = vmatpush1.bf16.msra.mxu0 %v9785
        %9801 = vmatprep.subr.bf16.mxu0 0
        %9802 = vmatpush1.bf16.msra.mxu0 0
        %9803 = vmatprep.subr.bf16.mxu0 0
        %9804 = vmatpush1.bf16.msra.mxu0 0
        %9805 = vmatprep.subr.bf16.mxu0 0
        %9806 = vmatpush1.bf16.msra.mxu0 0
        %9807 = vmatprep.subr.bf16.mxu0 0
        %9808 = vmatpush1.bf16.msra.mxu0 0
        %9809 = vmatprep.subr.bf16.mxu0 0
        %9810 = vmatpush1.bf16.msra.mxu0 0
        %9811 = vmatprep.subr.bf16.mxu0 0
        %9812 = vmatpush1.bf16.msra.mxu0 0
        %9813 = vmatprep.subr.bf16.mxu0 0
        %9814 = vmatpush1.bf16.msra.mxu0 0
        %9815 = vmatprep.subr.bf16.mxu0 0
        %9816 = vmatpush1.bf16.msra.mxu0 0
        %9817 = vmatprep.subr.bf16.mxu0 0
        %9818 = vmatpush1.bf16.msra.mxu0 0
        %9819 = vmatprep.subr.bf16.mxu0 0
        %9820 = vmatpush1.bf16.msra.mxu0 0
        %9821 = vmatprep.subr.bf16.mxu0 0
        %9822 = vmatpush1.bf16.msra.mxu0 0
        %9823 = vmatprep.subr.bf16.mxu0 0
        %9824 = vmatpush1.bf16.msra.mxu0 0
        %9825 = vmatprep.mubr.bf16.mxu0 0
        %9826 = vmatmul.mubr.bf16.gmra.mrb[0].mxu0 %v9791
        %v9827 = vpop.f32.mrb[0].mxu0
        %v9828 = vadd.f32 0.0, %v9827
        %v9829 = vpop.f32.mrb[0].mxu0
        %v9830 = vpop.f32.mrb[0].mxu0
        %v9831 = vpop.f32.mrb[0].mxu0
        %9832 = vdwg.mxu0
        %v9833 = vadd.f32 %v9751, %v9828
        %s9834 = scalar_lea.vmem [#allocation2], 32
        %v9835 = vld [vmem:[%s9834] ss:$44 sm:$0xff]
        %s9836 = scalar_lea.vmem [#allocation2], 33
        %v9837 = vld [vmem:[%s9836] ss:$44 sm:$0xff]
        %v9838 = vmax.f32 %v9835, %v9837
        %v9839 = vpack.c.bf16 %v9838, %v9838
        %v9840 = vld [vmem:[%s5 + $0x200] sm:$0xf]
        %v9841 = vld [vmem:[%s5 + $0x204] sm:$0xf]
        %v9842 = vld [vmem:[%s5 + $0x208] sm:$0xf]
        %v9843 = vld [vmem:[%s5 + $0x20c] sm:$0xf]
        %v9844 = vld [vmem:[%s5 + $0x210] sm:$0xf]
        %v9845 = vld [vmem:[%s5 + $0x214] sm:$0xf]
        %v9846 = vld [vmem:[%s5 + $0x218] sm:$0xf]
        %v9847 = vld [vmem:[%s5 + $0x21c] sm:$0xf]
        %v9856 = vunpack.c.l.b16 %v9840
        %v9857 = vunpack.c.l.b16 %v9841
        %v9858 = vunpack.c.l.b16 %v9842
        %v9859 = vunpack.c.l.b16 %v9843
        %v9860 = vunpack.c.l.b16 %v9844
        %v9861 = vunpack.c.l.b16 %v9845
        %v9862 = vunpack.c.l.b16 %v9846
        %v9863 = vunpack.c.l.b16 %v9847
        %v9864 = vpack.c.b16 %v9857, %v9856
        %v9865 = vpack.c.b16 %v9859, %v9858
        %v9866 = vpack.c.b16 %v9861, %v9860
        %v9867 = vpack.c.b16 %v9863, %v9862
        %v9873 = vsel %vm4561, %v9839, 0
        %9875 = vmatprep.subr.bf16.mxu0 0
        %9876 = vmatpush1.bf16.msra.mxu0 %v9864
        %9877 = vmatprep.subr.bf16.mxu0 0
        %9878 = vmatpush1.bf16.msra.mxu0 %v9865
        %9879 = vmatprep.subr.bf16.mxu0 0
        %9880 = vmatpush1.bf16.msra.mxu0 %v9866
        %9881 = vmatprep.subr.bf16.mxu0 0
        %9882 = vmatpush1.bf16.msra.mxu0 %v9867
        %9883 = vmatprep.subr.bf16.mxu0 0
        %9884 = vmatpush1.bf16.msra.mxu0 0
        %9885 = vmatprep.subr.bf16.mxu0 0
        %9886 = vmatpush1.bf16.msra.mxu0 0
        %9887 = vmatprep.subr.bf16.mxu0 0
        %9888 = vmatpush1.bf16.msra.mxu0 0
        %9889 = vmatprep.subr.bf16.mxu0 0
        %9890 = vmatpush1.bf16.msra.mxu0 0
        %9891 = vmatprep.subr.bf16.mxu0 0
        %9892 = vmatpush1.bf16.msra.mxu0 0
        %9893 = vmatprep.subr.bf16.mxu0 0
        %9894 = vmatpush1.bf16.msra.mxu0 0
        %9895 = vmatprep.subr.bf16.mxu0 0
        %9896 = vmatpush1.bf16.msra.mxu0 0
        %9897 = vmatprep.subr.bf16.mxu0 0
        %9898 = vmatpush1.bf16.msra.mxu0 0
        %9899 = vmatprep.subr.bf16.mxu0 0
        %9900 = vmatpush1.bf16.msra.mxu0 0
        %9901 = vmatprep.subr.bf16.mxu0 0
        %9902 = vmatpush1.bf16.msra.mxu0 0
        %9903 = vmatprep.subr.bf16.mxu0 0
        %9904 = vmatpush1.bf16.msra.mxu0 0
        %9905 = vmatprep.subr.bf16.mxu0 0
        %9906 = vmatpush1.bf16.msra.mxu0 0
        %9907 = vmatprep.mubr.bf16.mxu0 0
        %9908 = vmatmul.mubr.bf16.gmra.mrb[0].mxu0 %v9873
        %v9909 = vpop.f32.mrb[0].mxu0
        %v9910 = vadd.f32 0.0, %v9909
        %v9911 = vpop.f32.mrb[0].mxu0
        %v9912 = vpop.f32.mrb[0].mxu0
        %v9913 = vpop.f32.mrb[0].mxu0
        %9914 = vdwg.mxu0
        %v9915 = vadd.f32 %v9833, %v9910
        %s9916 = scalar_lea.vmem [#allocation2], 34
        %v9917 = vld [vmem:[%s9916] ss:$44 sm:$0xff]
        %s9918 = scalar_lea.vmem [#allocation2], 35
        %v9919 = vld [vmem:[%s9918] ss:$44 sm:$0xff]
        %v9920 = vmax.f32 %v9917, %v9919
        %v9921 = vpack.c.bf16 %v9920, %v9920
        %v9922 = vld [vmem:[%s5 + $0x220] sm:$0xf]
        %v9923 = vld [vmem:[%s5 + $0x224] sm:$0xf]
        %v9924 = vld [vmem:[%s5 + $0x228] sm:$0xf]
        %v9925 = vld [vmem:[%s5 + $0x22c] sm:$0xf]
        %v9926 = vld [vmem:[%s5 + $0x230] sm:$0xf]
        %v9927 = vld [vmem:[%s5 + $0x234] sm:$0xf]
        %v9928 = vld [vmem:[%s5 + $0x238] sm:$0xf]
        %v9929 = vld [vmem:[%s5 + $0x23c] sm:$0xf]
        %v9938 = vunpack.c.l.b16 %v9922
        %v9939 = vunpack.c.l.b16 %v9923
        %v9940 = vunpack.c.l.b16 %v9924
        %v9941 = vunpack.c.l.b16 %v9925
        %v9942 = vunpack.c.l.b16 %v9926
        %v9943 = vunpack.c.l.b16 %v9927
        %v9944 = vunpack.c.l.b16 %v9928
        %v9945 = vunpack.c.l.b16 %v9929
        %v9946 = vpack.c.b16 %v9939, %v9938
        %v9947 = vpack.c.b16 %v9941, %v9940
        %v9948 = vpack.c.b16 %v9943, %v9942
        %v9949 = vpack.c.b16 %v9945, %v9944
        %v9955 = vsel %vm4561, %v9921, 0
        %9957 = vmatprep.subr.bf16.mxu0 0
        %9958 = vmatpush1.bf16.msra.mxu0 %v9946
        %9959 = vmatprep.subr.bf16.mxu0 0
        %9960 = vmatpush1.bf16.msra.mxu0 %v9947
        %9961 = vmatprep.subr.bf16.mxu0 0
        %9962 = vmatpush1.bf16.msra.mxu0 %v9948
        %9963 = vmatprep.subr.bf16.mxu0 0
        %9964 = vmatpush1.bf16.msra.mxu0 %v9949
        %9965 = vmatprep.subr.bf16.mxu0 0
        %9966 = vmatpush1.bf16.msra.mxu0 0
        %9967 = vmatprep.subr.bf16.mxu0 0
        %9968 = vmatpush1.bf16.msra.mxu0 0
        %9969 = vmatprep.subr.bf16.mxu0 0
        %9970 = vmatpush1.bf16.msra.mxu0 0
        %9971 = vmatprep.subr.bf16.mxu0 0
        %9972 = vmatpush1.bf16.msra.mxu0 0
        %9973 = vmatprep.subr.bf16.mxu0 0
        %9974 = vmatpush1.bf16.msra.mxu0 0
        %9975 = vmatprep.subr.bf16.mxu0 0
        %9976 = vmatpush1.bf16.msra.mxu0 0
        %9977 = vmatprep.subr.bf16.mxu0 0
        %9978 = vmatpush1.bf16.msra.mxu0 0
        %9979 = vmatprep.subr.bf16.mxu0 0
        %9980 = vmatpush1.bf16.msra.mxu0 0
        %9981 = vmatprep.subr.bf16.mxu0 0
        %9982 = vmatpush1.bf16.msra.mxu0 0
        %9983 = vmatprep.subr.bf16.mxu0 0
        %9984 = vmatpush1.bf16.msra.mxu0 0
        %9985 = vmatprep.subr.bf16.mxu0 0
        %9986 = vmatpush1.bf16.msra.mxu0 0
        %9987 = vmatprep.subr.bf16.mxu0 0
        %9988 = vmatpush1.bf16.msra.mxu0 0
        %9989 = vmatprep.mubr.bf16.mxu0 0
        %9990 = vmatmul.mubr.bf16.gmra.mrb[0].mxu0 %v9955
        %v9991 = vpop.f32.mrb[0].mxu0
        %v9992 = vadd.f32 0.0, %v9991
        %v9993 = vpop.f32.mrb[0].mxu0
        %v9994 = vpop.f32.mrb[0].mxu0
        %v9995 = vpop.f32.mrb[0].mxu0
        %9996 = vdwg.mxu0
        %v9997 = vadd.f32 %v9915, %v9992
        %s9998 = scalar_lea.vmem [#allocation2], 36
        %v9999 = vld [vmem:[%s9998] ss:$44 sm:$0xff]
        %s10000 = scalar_lea.vmem [#allocation2], 37
        %v10001 = vld [vmem:[%s10000] ss:$44 sm:$0xff]
        %v10002 = vmax.f32 %v9999, %v10001
        %v10003 = vpack.c.bf16 %v10002, %v10002
        %v10004 = vld [vmem:[%s5 + $0x240] sm:$0xf]
        %v10005 = vld [vmem:[%s5 + $0x244] sm:$0xf]
        %v10006 = vld [vmem:[%s5 + $0x248] sm:$0xf]
        %v10007 = vld [vmem:[%s5 + $0x24c] sm:$0xf]
        %v10008 = vld [vmem:[%s5 + $0x250] sm:$0xf]
        %v10009 = vld [vmem:[%s5 + $0x254] sm:$0xf]
        %v10010 = vld [vmem:[%s5 + $0x258] sm:$0xf]
        %v10011 = vld [vmem:[%s5 + $0x25c] sm:$0xf]
        %v10020 = vunpack.c.l.b16 %v10004
        %v10021 = vunpack.c.l.b16 %v10005
        %v10022 = vunpack.c.l.b16 %v10006
        %v10023 = vunpack.c.l.b16 %v10007
        %v10024 = vunpack.c.l.b16 %v10008
        %v10025 = vunpack.c.l.b16 %v10009
        %v10026 = vunpack.c.l.b16 %v10010
        %v10027 = vunpack.c.l.b16 %v10011
        %v10028 = vpack.c.b16 %v10021, %v10020
        %v10029 = vpack.c.b16 %v10023, %v10022
        %v10030 = vpack.c.b16 %v10025, %v10024
        %v10031 = vpack.c.b16 %v10027, %v10026
        %v10037 = vsel %vm4561, %v10003, 0
        %10039 = vmatprep.subr.bf16.mxu0 0
        %10040 = vmatpush1.bf16.msra.mxu0 %v10028
        %10041 = vmatprep.subr.bf16.mxu0 0
        %10042 = vmatpush1.bf16.msra.mxu0 %v10029
        %10043 = vmatprep.subr.bf16.mxu0 0
        %10044 = vmatpush1.bf16.msra.mxu0 %v10030
        %10045 = vmatprep.subr.bf16.mxu0 0
        %10046 = vmatpush1.bf16.msra.mxu0 %v10031
        %10047 = vmatprep.subr.bf16.mxu0 0
        %10048 = vmatpush1.bf16.msra.mxu0 0
        %10049 = vmatprep.subr.bf16.mxu0 0
        %10050 = vmatpush1.bf16.msra.mxu0 0
        %10051 = vmatprep.subr.bf16.mxu0 0
        %10052 = vmatpush1.bf16.msra.mxu0 0
        %10053 = vmatprep.subr.bf16.mxu0 0
        %10054 = vmatpush1.bf16.msra.mxu0 0
        %10055 = vmatprep.subr.bf16.mxu0 0
        %10056 = vmatpush1.bf16.msra.mxu0 0
        %10057 = vmatprep.subr.bf16.mxu0 0
        %10058 = vmatpush1.bf16.msra.mxu0 0
        %10059 = vmatprep.subr.bf16.mxu0 0
        %10060 = vmatpush1.bf16.msra.mxu0 0
        %10061 = vmatprep.subr.bf16.mxu0 0
        %10062 = vmatpush1.bf16.msra.mxu0 0
        %10063 = vmatprep.subr.bf16.mxu0 0
        %10064 = vmatpush1.bf16.msra.mxu0 0
        %10065 = vmatprep.subr.bf16.mxu0 0
        %10066 = vmatpush1.bf16.msra.mxu0 0
        %10067 = vmatprep.subr.bf16.mxu0 0
        %10068 = vmatpush1.bf16.msra.mxu0 0
        %10069 = vmatprep.subr.bf16.mxu0 0
        %10070 = vmatpush1.bf16.msra.mxu0 0
        %10071 = vmatprep.mubr.bf16.mxu0 0
        %10072 = vmatmul.mubr.bf16.gmra.mrb[0].mxu0 %v10037
        %v10073 = vpop.f32.mrb[0].mxu0
        %v10074 = vadd.f32 0.0, %v10073
        %v10075 = vpop.f32.mrb[0].mxu0
        %v10076 = vpop.f32.mrb[0].mxu0
        %v10077 = vpop.f32.mrb[0].mxu0
        %10078 = vdwg.mxu0
        %v10079 = vadd.f32 %v9997, %v10074
        %s10080 = scalar_lea.vmem [#allocation2], 38
        %v10081 = vld [vmem:[%s10080] ss:$44 sm:$0xff]
        %s10082 = scalar_lea.vmem [#allocation2], 39
        %v10083 = vld [vmem:[%s10082] ss:$44 sm:$0xff]
        %v10084 = vmax.f32 %v10081, %v10083
        %v10085 = vpack.c.bf16 %v10084, %v10084
        %v10086 = vld [vmem:[%s5 + $0x260] sm:$0xf]
        %v10087 = vld [vmem:[%s5 + $0x264] sm:$0xf]
        %v10088 = vld [vmem:[%s5 + $0x268] sm:$0xf]
        %v10089 = vld [vmem:[%s5 + $0x26c] sm:$0xf]
        %v10090 = vld [vmem:[%s5 + $0x270] sm:$0xf]
        %v10091 = vld [vmem:[%s5 + $0x274] sm:$0xf]
        %v10092 = vld [vmem:[%s5 + $0x278] sm:$0xf]
        %v10093 = vld [vmem:[%s5 + $0x27c] sm:$0xf]
        %v10102 = vunpack.c.l.b16 %v10086
        %v10103 = vunpack.c.l.b16 %v10087
        %v10104 = vunpack.c.l.b16 %v10088
        %v10105 = vunpack.c.l.b16 %v10089
        %v10106 = vunpack.c.l.b16 %v10090
        %v10107 = vunpack.c.l.b16 %v10091
        %v10108 = vunpack.c.l.b16 %v10092
        %v10109 = vunpack.c.l.b16 %v10093
        %v10110 = vpack.c.b16 %v10103, %v10102
        %v10111 = vpack.c.b16 %v10105, %v10104
        %v10112 = vpack.c.b16 %v10107, %v10106
        %v10113 = vpack.c.b16 %v10109, %v10108
        %v10119 = vsel %vm4561, %v10085, 0
        %10121 = vmatprep.subr.bf16.mxu0 0
        %10122 = vmatpush1.bf16.msra.mxu0 %v10110
        %10123 = vmatprep.subr.bf16.mxu0 0
        %10124 = vmatpush1.bf16.msra.mxu0 %v10111
        %10125 = vmatprep.subr.bf16.mxu0 0
        %10126 = vmatpush1.bf16.msra.mxu0 %v10112
        %10127 = vmatprep.subr.bf16.mxu0 0
        %10128 = vmatpush1.bf16.msra.mxu0 %v10113
        %10129 = vmatprep.subr.bf16.mxu0 0
        %10130 = vmatpush1.bf16.msra.mxu0 0
        %10131 = vmatprep.subr.bf16.mxu0 0
        %10132 = vmatpush1.bf16.msra.mxu0 0
        %10133 = vmatprep.subr.bf16.mxu0 0
        %10134 = vmatpush1.bf16.msra.mxu0 0
        %10135 = vmatprep.subr.bf16.mxu0 0
        %10136 = vmatpush1.bf16.msra.mxu0 0
        %10137 = vmatprep.subr.bf16.mxu0 0
        %10138 = vmatpush1.bf16.msra.mxu0 0
        %10139 = vmatprep.subr.bf16.mxu0 0
        %10140 = vmatpush1.bf16.msra.mxu0 0
        %10141 = vmatprep.subr.bf16.mxu0 0
        %10142 = vmatpush1.bf16.msra.mxu0 0
        %10143 = vmatprep.subr.bf16.mxu0 0
        %10144 = vmatpush1.bf16.msra.mxu0 0
        %10145 = vmatprep.subr.bf16.mxu0 0
        %10146 = vmatpush1.bf16.msra.mxu0 0
        %10147 = vmatprep.subr.bf16.mxu0 0
        %10148 = vmatpush1.bf16.msra.mxu0 0
        %10149 = vmatprep.subr.bf16.mxu0 0
        %10150 = vmatpush1.bf16.msra.mxu0 0
        %10151 = vmatprep.subr.bf16.mxu0 0
        %10152 = vmatpush1.bf16.msra.mxu0 0
        %10153 = vmatprep.mubr.bf16.mxu0 0
        %10154 = vmatmul.mubr.bf16.gmra.mrb[0].mxu0 %v10119
        %v10155 = vpop.f32.mrb[0].mxu0
        %v10156 = vadd.f32 0.0, %v10155
        %v10157 = vpop.f32.mrb[0].mxu0
        %v10158 = vpop.f32.mrb[0].mxu0
        %v10159 = vpop.f32.mrb[0].mxu0
        %10160 = vdwg.mxu0
        %v10161 = vadd.f32 %v10079, %v10156
        %s10162 = scalar_lea.vmem [#allocation2], 40
        %v10163 = vld [vmem:[%s10162] ss:$44 sm:$0xff]
        %s10164 = scalar_lea.vmem [#allocation2], 41
        %v10165 = vld [vmem:[%s10164] ss:$44 sm:$0xff]
        %v10166 = vmax.f32 %v10163, %v10165
        %v10167 = vpack.c.bf16 %v10166, %v10166
        %v10168 = vld [vmem:[%s5 + $0x280] sm:$0xf]
        %v10169 = vld [vmem:[%s5 + $0x284] sm:$0xf]
        %v10170 = vld [vmem:[%s5 + $0x288] sm:$0xf]
        %v10171 = vld [vmem:[%s5 + $0x28c] sm:$0xf]
        %v10172 = vld [vmem:[%s5 + $0x290] sm:$0xf]
        %v10173 = vld [vmem:[%s5 + $0x294] sm:$0xf]
        %v10174 = vld [vmem:[%s5 + $0x298] sm:$0xf]
        %v10175 = vld [vmem:[%s5 + $0x29c] sm:$0xf]
        %v10184 = vunpack.c.l.b16 %v10168
        %v10185 = vunpack.c.l.b16 %v10169
        %v10186 = vunpack.c.l.b16 %v10170
        %v10187 = vunpack.c.l.b16 %v10171
        %v10188 = vunpack.c.l.b16 %v10172
        %v10189 = vunpack.c.l.b16 %v10173
        %v10190 = vunpack.c.l.b16 %v10174
        %v10191 = vunpack.c.l.b16 %v10175
        %v10192 = vpack.c.b16 %v10185, %v10184
        %v10193 = vpack.c.b16 %v10187, %v10186
        %v10194 = vpack.c.b16 %v10189, %v10188
        %v10195 = vpack.c.b16 %v10191, %v10190
        %v10201 = vsel %vm4561, %v10167, 0
        %10203 = vmatprep.subr.bf16.mxu0 0
        %10204 = vmatpush1.bf16.msra.mxu0 %v10192
        %10205 = vmatprep.subr.bf16.mxu0 0
        %10206 = vmatpush1.bf16.msra.mxu0 %v10193
        %10207 = vmatprep.subr.bf16.mxu0 0
        %10208 = vmatpush1.bf16.msra.mxu0 %v10194
        %10209 = vmatprep.subr.bf16.mxu0 0
        %10210 = vmatpush1.bf16.msra.mxu0 %v10195
        %10211 = vmatprep.subr.bf16.mxu0 0
        %10212 = vmatpush1.bf16.msra.mxu0 0
        %10213 = vmatprep.subr.bf16.mxu0 0
        %10214 = vmatpush1.bf16.msra.mxu0 0
        %10215 = vmatprep.subr.bf16.mxu0 0
        %10216 = vmatpush1.bf16.msra.mxu0 0
        %10217 = vmatprep.subr.bf16.mxu0 0
        %10218 = vmatpush1.bf16.msra.mxu0 0
        %10219 = vmatprep.subr.bf16.mxu0 0
        %10220 = vmatpush1.bf16.msra.mxu0 0
        %10221 = vmatprep.subr.bf16.mxu0 0
        %10222 = vmatpush1.bf16.msra.mxu0 0
        %10223 = vmatprep.subr.bf16.mxu0 0
        %10224 = vmatpush1.bf16.msra.mxu0 0
        %10225 = vmatprep.subr.bf16.mxu0 0
        %10226 = vmatpush1.bf16.msra.mxu0 0
        %10227 = vmatprep.subr.bf16.mxu0 0
        %10228 = vmatpush1.bf16.msra.mxu0 0
        %10229 = vmatprep.subr.bf16.mxu0 0
        %10230 = vmatpush1.bf16.msra.mxu0 0
        %10231 = vmatprep.subr.bf16.mxu0 0
        %10232 = vmatpush1.bf16.msra.mxu0 0
        %10233 = vmatprep.subr.bf16.mxu0 0
        %10234 = vmatpush1.bf16.msra.mxu0 0
        %10235 = vmatprep.mubr.bf16.mxu0 0
        %10236 = vmatmul.mubr.bf16.gmra.mrb[0].mxu0 %v10201
        %v10237 = vpop.f32.mrb[0].mxu0
        %v10238 = vadd.f32 0.0, %v10237
        %v10239 = vpop.f32.mrb[0].mxu0
        %v10240 = vpop.f32.mrb[0].mxu0
        %v10241 = vpop.f32.mrb[0].mxu0
        %10242 = vdwg.mxu0
        %v10243 = vadd.f32 %v10161, %v10238
        %v10244 = vld [vmem:[%s6] sm:$0x1]
        %v10246 = vlaneseq
        %v10247 = vshrl.u32 %v10246, 7
        %v10248 = vsub.s32 0, %v10247
        %v10249 = vrot.slane %v10244, %v10248
        %v10251 = vadd.f32 %v10243, %v10249
        %v10252 = vmax.f32 %v10251, 0.0
        %v10253 = vpack.c.bf16 %v10252, %v10252
        %v10254 = vld [vmem:[%s7] sm:$0xf]
        %v10255 = vld [vmem:[%s7 + $0x4] sm:$0xf]
        %v10256 = vld [vmem:[%s7 + $0x8] sm:$0xf]
        %v10257 = vld [vmem:[%s7 + $0xc] sm:$0xf]
        %v10258 = vld [vmem:[%s7 + $0x10] sm:$0xf]
        %v10259 = vld [vmem:[%s7 + $0x14] sm:$0xf]
        %v10260 = vld [vmem:[%s7 + $0x18] sm:$0xf]
        %v10261 = vld [vmem:[%s7 + $0x1c] sm:$0xf]
        %v10262 = vld [vmem:[%s7 + $0x20] sm:$0xf]
        %v10263 = vld [vmem:[%s7 + $0x24] sm:$0xf]
        %v10264 = vld [vmem:[%s7 + $0x28] sm:$0xf]
        %v10265 = vld [vmem:[%s7 + $0x2c] sm:$0xf]
        %v10266 = vld [vmem:[%s7 + $0x30] sm:$0xf]
        %v10267 = vld [vmem:[%s7 + $0x34] sm:$0xf]
        %v10268 = vld [vmem:[%s7 + $0x38] sm:$0xf]
        %v10269 = vld [vmem:[%s7 + $0x3c] sm:$0xf]
        %v10270 = vld [vmem:[%s4 + $0x3] sm:$0x1]
        %v10271 = vlaneseq
        %v10272 = vshrl.u32 %v10271, 7
        %v10273 = vsub.s32 0, %v10272
        %v10274 = vrot.slane %v10270, %v10273
        %v10291 = vunpack.c.l.b16 %v10254
        %v10292 = vunpack.c.l.b16 %v10255
        %v10293 = vunpack.c.l.b16 %v10256
        %v10294 = vunpack.c.l.b16 %v10257
        %v10295 = vunpack.c.l.b16 %v10258
        %v10296 = vunpack.c.l.b16 %v10259
        %v10297 = vunpack.c.l.b16 %v10260
        %v10298 = vunpack.c.l.b16 %v10261
        %v10299 = vunpack.c.l.b16 %v10262
        %v10300 = vunpack.c.l.b16 %v10263
        %v10301 = vunpack.c.l.b16 %v10264
        %v10302 = vunpack.c.l.b16 %v10265
        %v10303 = vunpack.c.l.b16 %v10266
        %v10304 = vunpack.c.l.b16 %v10267
        %v10305 = vunpack.c.l.b16 %v10268
        %v10306 = vunpack.c.l.b16 %v10269
        %v10307 = vpack.c.b16 %v10292, %v10291
        %v10308 = vpack.c.b16 %v10294, %v10293
        %v10309 = vpack.c.b16 %v10296, %v10295
        %v10310 = vpack.c.b16 %v10298, %v10297
        %v10311 = vpack.c.b16 %v10300, %v10299
        %v10312 = vpack.c.b16 %v10302, %v10301
        %v10313 = vpack.c.b16 %v10304, %v10303
        %v10314 = vpack.c.b16 %v10306, %v10305
        %10323 = vmatprep.subr.bf16.mxu0 0
        %10324 = vmatpush1.bf16.msra.mxu0 %v10307
        %10325 = vmatprep.subr.bf16.mxu0 0
        %10326 = vmatpush1.bf16.msra.mxu0 %v10308
        %10327 = vmatprep.subr.bf16.mxu0 0
        %10328 = vmatpush1.bf16.msra.mxu0 %v10309
        %10329 = vmatprep.subr.bf16.mxu0 0
        %10330 = vmatpush1.bf16.msra.mxu0 %v10310
        %10331 = vmatprep.subr.bf16.mxu0 0
        %10332 = vmatpush1.bf16.msra.mxu0 %v10311
        %10333 = vmatprep.subr.bf16.mxu0 0
        %10334 = vmatpush1.bf16.msra.mxu0 %v10312
        %10335 = vmatprep.subr.bf16.mxu0 0
        %10336 = vmatpush1.bf16.msra.mxu0 %v10313
        %10337 = vmatprep.subr.bf16.mxu0 0
        %10338 = vmatpush1.bf16.msra.mxu0 %v10314
        %10339 = vmatprep.subr.bf16.mxu0 0
        %10340 = vmatpush1.bf16.msra.mxu0 0
        %10341 = vmatprep.subr.bf16.mxu0 0
        %10342 = vmatpush1.bf16.msra.mxu0 0
        %10343 = vmatprep.subr.bf16.mxu0 0
        %10344 = vmatpush1.bf16.msra.mxu0 0
        %10345 = vmatprep.subr.bf16.mxu0 0
        %10346 = vmatpush1.bf16.msra.mxu0 0
        %10347 = vmatprep.subr.bf16.mxu0 0
        %10348 = vmatpush1.bf16.msra.mxu0 0
        %10349 = vmatprep.subr.bf16.mxu0 0
        %10350 = vmatpush1.bf16.msra.mxu0 0
        %10351 = vmatprep.subr.bf16.mxu0 0
        %10352 = vmatpush1.bf16.msra.mxu0 0
        %10353 = vmatprep.subr.bf16.mxu0 0
        %10354 = vmatpush1.bf16.msra.mxu0 0
        %10355 = vmatprep.mubr.bf16.mxu0 0
        %10356 = vmatmul.mubr.bf16.gmra.mrb[0].mxu0 %v10253
        %v10357 = vpop.f32.mrb[0].mxu0
        %v10358 = vadd.f32 %v10274, %v10357
        %v10359 = vpop.f32.mrb[0].mxu0
        %v10360 = vpop.f32.mrb[0].mxu0
        %v10361 = vpop.f32.mrb[0].mxu0
        %10362 = vdwg.mxu0
        %v10363 = vmax.f32 %v10358, 0.0
        %v10364 = vsel %vm4561, %v10363, 0.0
        %10365 = vadd.xlane.f32.xlu0 %v10364
        %v10366 = vpop.xlane.xlu0 %10365
        %v10367 = vrcp.pop 64.0
        %v10368 = vmul.f32 %v10366, %v10367
        %v10369 = vsub.f32 %v10363, %v10368
        %v10370 = vmul.f32 %v10369, %v10369
        %v10371 = vsel %vm4561, %v10370, 0.0
        %10372 = vadd.xlane.f32.xlu0 %v10371
        %v10373 = vpop.xlane.xlu0 %10372
        %v10374 = vmul.f32 %v10373, %v10367
        %v10375 = vadd.f32 %v10374, 1e-05
        %v10376 = vrsqrt.pop %v10375
        %v10377 = vmul.f32 %v10369, %v10376
        %v10378 = vld [vmem:[%s4 + $0x4] sm:$0x1]
        %v10379 = vlaneseq
        %v10380 = vshrl.u32 %v10379, 7
        %v10381 = vsub.s32 0, %v10380
        %v10382 = vrot.slane %v10378, %v10381
        %v10383 = vmul.f32 %v10377, %v10382
        %v10384 = vld [vmem:[%s4 + $0x5] sm:$0x1]
        %v10385 = vlaneseq
        %v10386 = vshrl.u32 %v10385, 7
        %v10387 = vsub.s32 0, %v10386
        %v10388 = vrot.slane %v10384, %v10387
        %v10389 = vadd.f32 %v10383, %v10388
        %v10390 = vpack.c.bf16 %v10389, %v10389
        %v10391 = vld [vmem:[%s8] sm:$0xf]
        %v10392 = vld [vmem:[%s8 + $0x4] sm:$0xf]
        %v10393 = vld [vmem:[%s8 + $0x8] sm:$0xf]
        %v10394 = vld [vmem:[%s8 + $0xc] sm:$0xf]
        %v10395 = vld [vmem:[%s8 + $0x10] sm:$0xf]
        %v10396 = vld [vmem:[%s8 + $0x14] sm:$0xf]
        %v10397 = vld [vmem:[%s8 + $0x18] sm:$0xf]
        %v10398 = vld [vmem:[%s8 + $0x1c] sm:$0xf]
        %v10399 = vld [vmem:[%s9] sm:$0x1]
        %v10401 = vlaneseq
        %v10402 = vshrl.u32 %v10401, 7
        %v10403 = vsub.s32 0, %v10402
        %v10404 = vrot.slane %v10399, %v10403
        %v10414 = vunpack.c.l.b16 %v10391
        %v10415 = vunpack.c.l.b16 %v10392
        %v10416 = vunpack.c.l.b16 %v10393
        %v10417 = vunpack.c.l.b16 %v10394
        %v10418 = vunpack.c.l.b16 %v10395
        %v10419 = vunpack.c.l.b16 %v10396
        %v10420 = vunpack.c.l.b16 %v10397
        %v10421 = vunpack.c.l.b16 %v10398
        %v10422 = vpack.c.b16 %v10415, %v10414
        %v10423 = vpack.c.b16 %v10417, %v10416
        %v10424 = vpack.c.b16 %v10419, %v10418
        %v10425 = vpack.c.b16 %v10421, %v10420
        %v10431 = vsel %vm4561, %v10390, 0
        %10433 = vmatprep.subr.bf16.mxu0 0
        %10434 = vmatpush1.bf16.msra.mxu0 %v10422
        %10435 = vmatprep.subr.bf16.mxu0 0
        %10436 = vmatpush1.bf16.msra.mxu0 %v10423
        %10437 = vmatprep.subr.bf16.mxu0 0
        %10438 = vmatpush1.bf16.msra.mxu0 %v10424
        %10439 = vmatprep.subr.bf16.mxu0 0
        %10440 = vmatpush1.bf16.msra.mxu0 %v10425
        %10441 = vmatprep.subr.bf16.mxu0 0
        %10442 = vmatpush1.bf16.msra.mxu0 0
        %10443 = vmatprep.subr.bf16.mxu0 0
        %10444 = vmatpush1.bf16.msra.mxu0 0
        %10445 = vmatprep.subr.bf16.mxu0 0
        %10446 = vmatpush1.bf16.msra.mxu0 0
        %10447 = vmatprep.subr.bf16.mxu0 0
        %10448 = vmatpush1.bf16.msra.mxu0 0
        %10449 = vmatprep.subr.bf16.mxu0 0
        %10450 = vmatpush1.bf16.msra.mxu0 0
        %10451 = vmatprep.subr.bf16.mxu0 0
        %10452 = vmatpush1.bf16.msra.mxu0 0
        %10453 = vmatprep.subr.bf16.mxu0 0
        %10454 = vmatpush1.bf16.msra.mxu0 0
        %10455 = vmatprep.subr.bf16.mxu0 0
        %10456 = vmatpush1.bf16.msra.mxu0 0
        %10457 = vmatprep.subr.bf16.mxu0 0
        %10458 = vmatpush1.bf16.msra.mxu0 0
        %10459 = vmatprep.subr.bf16.mxu0 0
        %10460 = vmatpush1.bf16.msra.mxu0 0
        %10461 = vmatprep.subr.bf16.mxu0 0
        %10462 = vmatpush1.bf16.msra.mxu0 0
        %10463 = vmatprep.subr.bf16.mxu0 0
        %10464 = vmatpush1.bf16.msra.mxu0 0
        %10465 = vmatprep.mubr.bf16.mxu0 0
        %10466 = vmatmul.mubr.bf16.gmra.mrb[0].mxu0 %v10431
        %v10467 = vpop.f32.mrb[0].mxu0
        %v10468 = vadd.f32 %v10404, %v10467
        %v10469 = vpop.f32.mrb[0].mxu0
        %v10470 = vpop.f32.mrb[0].mxu0
        %v10471 = vpop.f32.mrb[0].mxu0
        %10472 = vdwg.mxu0
        %vm10473 = vcmask 392192
        %10474 = vst.msk [vmem:[%s353] sm:$0xff] %vm10473, %v10468
        %s10475 = sand.u32 %s247, 1
        %s10476 = scalar_lea.sflag [#allocation6], %s10475
        %s10477 = sand.u32 %s247, 1
        %s10478 = smul.addr %s10477, 8
        %s10479 = scalar_lea.vmem [#allocation5], %s10478
        // Predicated region
        $region75: #{_lambda_.1} parent=59 // pred_check
          %p10480 = pneg %p257
        $region76: #{_lambda_.1} parent=59 // pred_check_branch
          %10482 = sbr.rel (%p10480) target = $region78
        $region77: #{_lambda_.1} parent=59 // pred_region
          %s10484 = ssub.s32 128, 128
          %10485 = vsyncadd %s10476, %s10484
          %s10486 = smul.addr %s24, 128
          %s10487 = scalar_lea.hbm %s10, %s10486
          %s10489 = sshll.u32 %s10479, 4
          %s10490 = int_to_ptr.vmem [resolvable:$true] %s10489
          %10492 = dma.vmem_to_hbm [thread:$0]  %s10490, 128, %s10487, %s10476
        $region78: #{_lambda_.1} parent=59 // pred_fallthru
          _
      $region60: #{_lambda_.1} parent=5 // pred_fallthru
        _
      %p10493 = scmp.le.s32.totalorder 2, %s19
      // Predicated region
      $region79: #{_lambda_.1} parent=5 // pred_check
        %p10494 = pneg %p10493
      $region80: #{_lambda_.1} parent=5 // pred_check_branch
        %10496 = sbr.rel (%p10494) target = $region82
      $region81: #{_lambda_.1} parent=5 // pred_region
        %s10497 = ssub.s32 %s19, 2
        // Predicated region
        $region83: #{_lambda_.1} parent=81 // pred_check
          %p10498 = pneg %p263
        $region84: #{_lambda_.1} parent=81 // pred_check_branch
          %10500 = sbr.rel (%p10498) target = $region86
        $region85: #{_lambda_.1} parent=81 // pred_region
          %s10501 = sand.u32 %s248, 1
          %s10502 = scalar_lea.sflag [#allocation6], %s10501
          %s10503 = sand.u32 %s248, 1
          %s10504 = smul.addr %s10503, 8
          %s10505 = scalar_lea.vmem [#allocation5], %s10504
          %10506 = dma.done %s10502, 128
        $region86: #{_lambda_.1} parent=81 // pred_fallthru
          _
      $region82: #{_lambda_.1} parent=5 // pred_fallthru
        _
    $region6: #{_lambda_.1} parent=1 // loop_footer
      %s23 = sadd.s32 1, %s19
    $region7: #{_lambda_.1} parent=1 // loop_footer_branch
      %18 = sbr.rel target = $region3
    $region8: #{_lambda_.1} parent=1 // loop_exit
      _
    %10507 = vsyncpa [#allocation6], 1
    %s10508 = scalar_lea.sflag [#allocation6], 1
    %10509 = vsyncpa %s10508, 1

</llo_original>
